<compile_context>
chip_gen: v7x
topology: tpu7x:2x2x1
jax: 0.10.0
libtpu: 0.0.40
codegen_flags: <defaults>
</compile_context>

<pallas_src>
import functools

import numpy as np
import jax
import jax.numpy as jnp
from jax.experimental import pallas as pl
from jax.experimental.pallas import tpu as pltpu

LEAKY_SLOPE = 0.01       # PyTorch nn.LeakyReLU default
BN_EPS = 1e-5            # PyTorch BatchNorm default
CDTYPE = jnp.bfloat16    # dtype fed to the MXU; accumulation stays f32


def _leaky(x):
    return jnp.maximum(x, LEAKY_SLOPE * x)


# ----------------------------------------------------------------------------
# Single fused kernel: conv stack (gather-matmul form) + MLP + head
# ----------------------------------------------------------------------------
def _colchecker_kernel(*refs, bs, ns, conv_meta, n_extra):
    it = iter(refs)
    p0_ref, start_ref, samp_ref = next(it), next(it), next(it)
    wc1_ref, bc1_ref = next(it), next(it)
    conv_refs = [(next(it), next(it), next(it)) for _ in conv_meta]
    wf_ref, wst_ref, wsa_ref, b1_ref = next(it), next(it), next(it), next(it)
    mlp_refs = [(next(it), next(it)) for _ in range(n_extra)]
    wh1_ref, bh1_ref, wh2_ref, bh2_ref = next(it), next(it), next(it), next(it)
    out_ref = next(it)

    # bs is tiny & static here -> unrolled Python loop.
    # TODO(synk): grid over batch with dimension_semantics=('parallel',) at scale.
    for b in range(bs):
        # ---------------- CNN encoder (channels-last) ----------------------
        # conv1: wrapper already did im2col of the raw grid -> one GEMM.
        y = jnp.dot(p0_ref[b].astype(CDTYPE), wc1_ref[...],
                    preferred_element_type=jnp.float32) + bc1_ref[...]
        x = _leaky(y).astype(CDTYPE)                       # (Ho*Wo, C)

        # conv2..4: patch gather = G @ x, then per-tap weight contraction.
        for (g_ref, w_ref, bb_ref), (kk, cin, hw_out, cout) in zip(conv_refs,
                                                                   conv_meta):
            px = jnp.dot(g_ref[...], x,
                         preferred_element_type=jnp.float32).astype(CDTYPE)
            acc = jnp.zeros((hw_out, cout), jnp.float32)
            for t in range(kk):
                acc = acc + jnp.dot(px[t * hw_out:(t + 1) * hw_out, :],
                                    w_ref[t * cin:(t + 1) * cin, :],
                                    preferred_element_type=jnp.float32)
            x = _leaky(acc + bb_ref[...]).astype(CDTYPE)   # (hw_out, cout)
        feat = x                                           # (1, flat_fts)

        # ------------- Linear1 (+BN folded), W1 split ----------------------
        s_b = start_ref[b:b + 1, :].astype(CDTYPE)         # (1, state_dim)
        z_env = (jnp.dot(feat, wf_ref[...], preferred_element_type=jnp.float32)
                 + jnp.dot(s_b, wst_ref[...], preferred_element_type=jnp.float32)
                 + b1_ref[...])                            # (1, h_dim)
        smp = samp_ref[b * ns:(b + 1) * ns, :].astype(CDTYPE)   # (ns, state_dim)
        h = _leaky(jnp.dot(smp, wsa_ref[...],
                           preferred_element_type=jnp.float32) + z_env)

        # ------------- remaining (Linear + BN + LeakyReLU) blocks ----------
        for (w_ref, bb_ref) in mlp_refs:
            h = _leaky(jnp.dot(h.astype(CDTYPE), w_ref[...],
                               preferred_element_type=jnp.float32) + bb_ref[...])

        # ------------- head: Linear -> LeakyReLU -> Linear -> Sigmoid ------
        h = _leaky(jnp.dot(h.astype(CDTYPE), wh1_ref[...],
                           preferred_element_type=jnp.float32) + bh1_ref[...])
        # final Linear has a single output -> row-reduction instead of N=1 GEMM
        logit = (jnp.sum(h * wh2_ref[...].astype(jnp.float32),
                         axis=-1, keepdims=True) + bh2_ref[...])   # (ns, 1)
        logit = jnp.clip(logit, -30.0, 30.0)
        prob = pl.reciprocal(1.0 + jnp.exp(-logit), approx=True)
        out_ref[b * ns:(b + 1) * ns, :] = prob.astype(out_ref.dtype)


# ----------------------------------------------------------------------------
# Host-side helpers
# ----------------------------------------------------------------------------
def _build_gather_matrix(h_in, w_in, k, stride, pad):
    """0/1 matrix G: (k*k*Ho*Wo, h_in*w_in); rows ordered (tap, out_pos).
    Row is all-zero when the tap hits padding (so no jnp.pad is needed)."""
    ho = (h_in + 2 * pad - k) // stride + 1
    wo = (w_in + 2 * pad - k) // stride + 1
    g = np.zeros((k * k * ho * wo, h_in * w_in), np.float32)
    for ti in range(k):
        for tj in range(k):
            t = ti * k + tj
            for oy in range(ho):
                for ox in range(wo):
                    iy = oy * stride - pad + ti
                    ix = ox * stride - pad + tj
                    if 0 <= iy < h_in and 0 <= ix < w_in:
                        g[t * ho * wo + oy * wo + ox, iy * w_in + ix] = 1.0
    return g, ho, wo


def _im2col_first(occ, k, s, p):
    """(bs, 1, H, W) -> (bs, Ho*Wo, k*k) patch matrix (tap-major cols, Cin=1)."""
    bsz, _, H, W = occ.shape
    xp = jnp.pad(occ[:, 0], ((0, 0), (p, p), (p, p)))
    ho = (H + 2 * p - k) // s + 1
    wo = (W + 2 * p - k) // s + 1
    cols = []
    for ti in range(k):
        for tj in range(k):
            cols.append(xp[:, ti:ti + s * ho:s, tj:tj + s * wo:s])  # (bs,ho,wo)
    pt = jnp.stack(cols, axis=-1)                                   # (bs,ho,wo,k*k)
    return pt.reshape(bsz, ho * wo, k * k)


def _cost_estimate(params, bs, ns, inputs, out_nbytes):
    h_dim = params["w_feat"].shape[1]
    sd = params["w_start"].shape[0]
    flat = params["w_feat"].shape[0]
    flops = 0
    for c in params["convs"]:
        flops += 2 * c["hw_out"] * c["kk"] * c["cin"] * c["cout"]
        if c["G"] is not None:
            flops += 2 * c["G"].shape[0] * c["G"].shape[1] * c["cin"]
    flops += 2 * (flat + sd) * h_dim                 # env/start projected once
    flops += ns * 2 * sd * h_dim                     # per-sample projection
    flops += len(params["mlp_extra"]) * ns * 2 * h_dim * h_dim
    flops += ns * 2 * h_dim * 256 + ns * 2 * 256
    flops *= bs
    bytes_accessed = sum(int(x.size) * x.dtype.itemsize for x in inputs) + out_nbytes
    return pl.CostEstimate(flops=int(flops), transcendentals=int(bs * ns),
                           bytes_accessed=int(bytes_accessed))


# ----------------------------------------------------------------------------
# Deterministic synthetic parameters (PyTorch layout, then converted/folded)
# ----------------------------------------------------------------------------
def init_params(key, state_dim=8, occ_grid_size=16, h_dim=128, linear_depth=2):
    keys = iter(jax.random.split(key, 64))

    def nrm(shape, scale):
        return scale * jax.random.normal(next(keys), shape, jnp.float32)

    def bn(c):
        gamma = 1.0 + 0.1 * jax.random.normal(next(keys), (c,), jnp.float32)
        beta = nrm((c,), 0.1)
        mean = nrm((c,), 0.1)
        var = 1.0 + 0.1 * jax.random.uniform(next(keys), (c,), jnp.float32)
        return gamma, beta, mean, var

    cm = 16  # channel_mult
    conv_cfg = [
        dict(cin=1,      cout=cm,     k=4, s=2, p=1, bn=False),
        dict(cin=cm,     cout=cm * 2, k=3, s=2, p=1, bn=True),
        dict(cin=cm * 2, cout=cm * 4, k=3, s=2, p=1, bn=True),
        dict(cin=cm * 4, cout=cm * 8, k=4, s=2, p=1, bn=True),
    ]
    convs = []
    H = occ_grid_size
    for li, cfg in enumerate(conv_cfg):
        cin, cout, k, s, p = cfg["cin"], cfg["cout"], cfg["k"], cfg["s"], cfg["p"]
        w = nrm((cout, cin, k, k), 1.0 / (cin * k * k) ** 0.5)   # OIHW (PyTorch)
        b = nrm((cout,), 0.1)
        if cfg["bn"]:                                            # fold eval-mode BN
            gamma, beta, mean, var = bn(cout)
            scale = gamma / jnp.sqrt(var + BN_EPS)
            w = w * scale[:, None, None, None]
            b = (b - mean) * scale + beta
        # tap-major GEMM layout: rows ordered (tap, cin)
        w_mat = jnp.transpose(w, (2, 3, 1, 0)).reshape(k * k * cin, cout)
        if li == 0:
            g_mat = None
            ho = (H + 2 * p - k) // s + 1
        else:
            g_np, ho, _ = _build_gather_matrix(H, H, k, s, p)
            g_mat = jnp.asarray(g_np, CDTYPE)
        convs.append(dict(G=g_mat, w=w_mat.astype(CDTYPE),
                          b=b.reshape(1, cout).astype(jnp.float32),
                          k=k, s=s, p=p,
                          kk=k * k, cin=cin, hw_out=ho * ho, cout=cout))
        H = ho
    final_hw = H * H
    final_c = conv_cfg[-1]["cout"]
    flat_fts = final_c * final_hw

    def linear_bn(din, dout):
        w = nrm((din, dout), 1.0 / din ** 0.5)
        b = nrm((dout,), 0.1)
        gamma, beta, mean, var = bn(dout)
        scale = gamma / jnp.sqrt(var + BN_EPS)
        return w * scale[None, :], ((b - mean) * scale + beta).reshape(1, dout)

    # first Linear(2*state_dim + flat_fts, h_dim) (+BN folded); PyTorch concat
    # order is (features(CHW-flatten), start, samples) -> split + reorder rows.
    w1, b1 = linear_bn(2 * state_dim + flat_fts, h_dim)
    w_feat_torch = w1[:flat_fts, :]
    w_start = w1[flat_fts:flat_fts + state_dim, :]
    w_samp = w1[flat_fts + state_dim:, :]
    # kernel's feature flatten order is (spatial, channel); PyTorch is (C,H,W)
    perm = np.array([(i % final_c) * final_hw + (i // final_c)
                     for i in range(flat_fts)], np.int32)
    w_feat = w_feat_torch[perm, :]

    mlp_extra = []
    for _ in range(linear_depth):
        w, b = linear_bn(h_dim, h_dim)
        mlp_extra.append((w.astype(CDTYPE), b))

    def linear_plain(din, dout):
        return nrm((din, dout), 1.0 / din ** 0.5), nrm((dout,), 0.1).reshape(1, dout)

    wh1, bh1 = linear_plain(h_dim, 256)
    wh2, bh2 = linear_plain(256, 1)
    wh2_row = wh2.T                                   # (1, 256) for row-reduction

    return dict(convs=convs,
                w_feat=w_feat.astype(CDTYPE), w_start=w_start.astype(CDTYPE),
                w_samp=w_samp.astype(CDTYPE), b1=b1,
                mlp_extra=mlp_extra,
                wh1=wh1.astype(CDTYPE), bh1=bh1,
                wh2=wh2_row.astype(CDTYPE), bh2=bh2,
                flat_fts=flat_fts, state_dim=state_dim)


# ----------------------------------------------------------------------------
# Full ColChecker forward (fixed_env=True), one fused pallas_call
# ----------------------------------------------------------------------------
def col_checker_forward(params, occ_grid, start, samples):
    """occ_grid: (bs,1,H,H)  start: (bs,dim)  samples: (bs,ns,dim) -> (bs,ns)"""
    bs = occ_grid.shape[0]
    ns = samples.shape[1]
    convs = params["convs"]
    c1 = convs[0]

    patches0 = _im2col_first(occ_grid, c1["k"], c1["s"], c1["p"])
    samples2d = samples.reshape(bs * ns, -1)

    inputs = [patches0, start, samples2d, c1["w"], c1["b"]]
    for c in convs[1:]:
        inputs += [c["G"], c["w"], c["b"]]
    inputs += [params["w_feat"], params["w_start"], params["w_samp"], params["b1"]]
    for (w, b) in params["mlp_extra"]:
        inputs += [w, b]
    inputs += [params["wh1"], params["bh1"], params["wh2"], params["bh2"]]

    conv_meta = tuple((c["kk"], c["cin"], c["hw_out"], c["cout"]) for c in convs[1:])
    kernel = functools.partial(_colchecker_kernel, bs=bs, ns=ns,
                               conv_meta=conv_meta,
                               n_extra=len(params["mlp_extra"]))
    cost = _cost_estimate(params, bs, ns, inputs, out_nbytes=bs * ns * 4)

    y = pl.pallas_call(
        kernel,
        out_shape=jax.ShapeDtypeStruct((bs * ns, 1), jnp.float32),
        in_specs=[pl.BlockSpec(memory_space=pltpu.MemorySpace.VMEM)] * len(inputs),
        out_specs=pl.BlockSpec(memory_space=pltpu.MemorySpace.VMEM),
        cost_estimate=cost,
    )(*inputs)
    return y.reshape(bs, ns)


if __name__ == "__main__":
    key = jax.random.PRNGKey(0)
    k_param, k_occ, k_start, k_samp = jax.random.split(key, 4)

    state_dim = 8        # model_8d
    occ_grid_size = 16   # small occ grid (module default is 40)
    h_dim = 128          # small hidden dim (module default is 1024)
    bs, ns = 2, 4

    params = init_params(k_param, state_dim, occ_grid_size, h_dim, linear_depth=2)

    occ_grid = jax.random.uniform(k_occ, (bs, 1, occ_grid_size, occ_grid_size),
                                  jnp.float32)
    start = jax.random.normal(k_start, (bs, state_dim), jnp.float32)
    samples = jax.random.normal(k_samp, (bs, ns, state_dim), jnp.float32)

    fwd = jax.jit(functools.partial(col_checker_forward, params))
    y = fwd(occ_grid, start, samples)
    y = jax.block_until_ready(y)

    assert y.shape == (bs, ns)
    assert bool(jnp.all(jnp.isfinite(y)))
    # approx reciprocal in the in-kernel sigmoid -> allow a tiny tolerance
    assert bool(jnp.all((y >= -1e-3) & (y <= 1.0 + 1e-3)))
    print("KERNEL_OK")
</pallas_src>

<mosaic_0001>
module attributes {stable_mosaic.version = 11 : i64} {
  func.func @_colchecker_kernel(%arg0: memref<2x64x16xf32, #tpu.memory_space<vmem>>, %arg1: memref<2x8xf32, #tpu.memory_space<vmem>>, %arg2: memref<8x8xf32, #tpu.memory_space<vmem>>, %arg3: memref<16x16xbf16, #tpu.memory_space<vmem>>, %arg4: memref<1x16xf32, #tpu.memory_space<vmem>>, %arg5: memref<144x64xbf16, #tpu.memory_space<vmem>>, %arg6: memref<144x32xbf16, #tpu.memory_space<vmem>>, %arg7: memref<1x32xf32, #tpu.memory_space<vmem>>, %arg8: memref<36x16xbf16, #tpu.memory_space<vmem>>, %arg9: memref<288x64xbf16, #tpu.memory_space<vmem>>, %arg10: memref<1x64xf32, #tpu.memory_space<vmem>>, %arg11: memref<16x4xbf16, #tpu.memory_space<vmem>>, %arg12: memref<1024x128xbf16, #tpu.memory_space<vmem>>, %arg13: memref<1x128xf32, #tpu.memory_space<vmem>>, %arg14: memref<128x128xbf16, #tpu.memory_space<vmem>>, %arg15: memref<8x128xbf16, #tpu.memory_space<vmem>>, %arg16: memref<8x128xbf16, #tpu.memory_space<vmem>>, %arg17: memref<1x128xf32, #tpu.memory_space<vmem>>, %arg18: memref<128x128xbf16, #tpu.memory_space<vmem>>, %arg19: memref<1x128xf32, #tpu.memory_space<vmem>>, %arg20: memref<128x128xbf16, #tpu.memory_space<vmem>>, %arg21: memref<1x128xf32, #tpu.memory_space<vmem>>, %arg22: memref<128x256xbf16, #tpu.memory_space<vmem>>, %arg23: memref<1x256xf32, #tpu.memory_space<vmem>>, %arg24: memref<1x256xbf16, #tpu.memory_space<vmem>>, %arg25: memref<1x1xf32, #tpu.memory_space<vmem>>, %arg26: memref<8x1xf32, #tpu.memory_space<vmem>>) attributes {dimension_semantics = [], scalar_prefetch = 0 : i64, scratch_operands = 0 : i64, tpu.core_type = #tpu.core_type<tc>} {
    %c0 = arith.constant 0 : index
    %c0_0 = arith.constant 0 : index
    %c0_1 = arith.constant 0 : index
    %0 = vector.load %arg0[%c0, %c0_0, %c0_1] : memref<2x64x16xf32, #tpu.memory_space<vmem>>, vector<1x64x16xf32>
    %1 = vector.shape_cast %0 : vector<1x64x16xf32> to vector<64x16xf32>
    %2 = arith.truncf %1 : vector<64x16xf32> to vector<64x16xbf16>
    %c0_2 = arith.constant 0 : index
    %c0_3 = arith.constant 0 : index
    %3 = vector.load %arg3[%c0_2, %c0_3] : memref<16x16xbf16, #tpu.memory_space<vmem>>, vector<16x16xbf16>
    %cst = arith.constant dense<0.000000e+00> : vector<64x16xf32>
    %4 = tpu.matmul %2, %3, %cst {dimension_numbers = #tpu.dot_dimension_numbers<[1], [0], [0], [1], [0, 0, 1, 1], [], []>} : vector<64x16xbf16>, vector<16x16xbf16>, vector<64x16xf32> -> vector<64x16xf32>
    %c0_4 = arith.constant 0 : index
    %c0_5 = arith.constant 0 : index
    %5 = vector.load %arg4[%c0_4, %c0_5] : memref<1x16xf32, #tpu.memory_space<vmem>>, vector<1x16xf32>
    %6 = vector.broadcast %5 : vector<1x16xf32> to vector<64x16xf32>
    %7 = arith.addf %4, %6 : vector<64x16xf32>
    %cst_6 = arith.constant 0.00999999977 : f32
    %8 = vector.broadcast %cst_6 : f32 to vector<64x16xf32>
    %9 = arith.mulf %8, %7 : vector<64x16xf32>
    %10 = arith.maximumf %7, %9 : vector<64x16xf32>
    %11 = arith.truncf %10 : vector<64x16xf32> to vector<64x16xbf16>
    %c0_7 = arith.constant 0 : index
    %c0_8 = arith.constant 0 : index
    %12 = vector.load %arg5[%c0_7, %c0_8] : memref<144x64xbf16, #tpu.memory_space<vmem>>, vector<144x64xbf16>
    %cst_9 = arith.constant dense<0.000000e+00> : vector<144x16xf32>
    %13 = tpu.matmul %12, %11, %cst_9 {dimension_numbers = #tpu.dot_dimension_numbers<[1], [0], [0], [1], [0, 0, 1, 1], [], []>} : vector<144x64xbf16>, vector<64x16xbf16>, vector<144x16xf32> -> vector<144x16xf32>
    %14 = arith.truncf %13 : vector<144x16xf32> to vector<144x16xbf16>
    %cst_10 = arith.constant 0.000000e+00 : f32
    %15 = vector.broadcast %cst_10 : f32 to vector<16x32xf32>
    %16 = vector.extract_strided_slice %14 {offsets = [0, 0], sizes = [16, 16], strides = [1, 1]} : vector<144x16xbf16> to vector<16x16xbf16>
    %c0_11 = arith.constant 0 : index
    %c0_12 = arith.constant 0 : index
    %17 = vector.load %arg6[%c0_11, %c0_12] : memref<144x32xbf16, #tpu.memory_space<vmem>>, vector<16x32xbf16>
    %cst_13 = arith.constant dense<0.000000e+00> : vector<16x32xf32>
    %18 = tpu.matmul %16, %17, %cst_13 {dimension_numbers = #tpu.dot_dimension_numbers<[1], [0], [0], [1], [0, 0, 1, 1], [], []>} : vector<16x16xbf16>, vector<16x32xbf16>, vector<16x32xf32> -> vector<16x32xf32>
    %19 = arith.addf %15, %18 : vector<16x32xf32>
    %20 = vector.extract_strided_slice %14 {offsets = [16, 0], sizes = [16, 16], strides = [1, 1]} : vector<144x16xbf16> to vector<16x16xbf16>
    %c16 = arith.constant 16 : index
    %c0_14 = arith.constant 0 : index
    %21 = vector.load %arg6[%c16, %c0_14] : memref<144x32xbf16, #tpu.memory_space<vmem>>, vector<16x32xbf16>
    %cst_15 = arith.constant dense<0.000000e+00> : vector<16x32xf32>
    %22 = tpu.matmul %20, %21, %cst_15 {dimension_numbers = #tpu.dot_dimension_numbers<[1], [0], [0], [1], [0, 0, 1, 1], [], []>} : vector<16x16xbf16>, vector<16x32xbf16>, vector<16x32xf32> -> vector<16x32xf32>
    %23 = arith.addf %19, %22 : vector<16x32xf32>
    %24 = vector.extract_strided_slice %14 {offsets = [32, 0], sizes = [16, 16], strides = [1, 1]} : vector<144x16xbf16> to vector<16x16xbf16>
    %c32 = arith.constant 32 : index
    %c0_16 = arith.constant 0 : index
    %25 = vector.load %arg6[%c32, %c0_16] : memref<144x32xbf16, #tpu.memory_space<vmem>>, vector<16x32xbf16>
    %cst_17 = arith.constant dense<0.000000e+00> : vector<16x32xf32>
    %26 = tpu.matmul %24, %25, %cst_17 {dimension_numbers = #tpu.dot_dimension_numbers<[1], [0], [0], [1], [0, 0, 1, 1], [], []>} : vector<16x16xbf16>, vector<16x32xbf16>, vector<16x32xf32> -> vector<16x32xf32>
    %27 = arith.addf %23, %26 : vector<16x32xf32>
    %28 = vector.extract_strided_slice %14 {offsets = [48, 0], sizes = [16, 16], strides = [1, 1]} : vector<144x16xbf16> to vector<16x16xbf16>
    %c48 = arith.constant 48 : index
    %c0_18 = arith.constant 0 : index
    %29 = vector.load %arg6[%c48, %c0_18] : memref<144x32xbf16, #tpu.memory_space<vmem>>, vector<16x32xbf16>
    %cst_19 = arith.constant dense<0.000000e+00> : vector<16x32xf32>
    %30 = tpu.matmul %28, %29, %cst_19 {dimension_numbers = #tpu.dot_dimension_numbers<[1], [0], [0], [1], [0, 0, 1, 1], [], []>} : vector<16x16xbf16>, vector<16x32xbf16>, vector<16x32xf32> -> vector<16x32xf32>
    %31 = arith.addf %27, %30 : vector<16x32xf32>
    %32 = vector.extract_strided_slice %14 {offsets = [64, 0], sizes = [16, 16], strides = [1, 1]} : vector<144x16xbf16> to vector<16x16xbf16>
    %c64 = arith.constant 64 : index
    %c0_20 = arith.constant 0 : index
    %33 = vector.load %arg6[%c64, %c0_20] : memref<144x32xbf16, #tpu.memory_space<vmem>>, vector<16x32xbf16>
    %cst_21 = arith.constant dense<0.000000e+00> : vector<16x32xf32>
    %34 = tpu.matmul %32, %33, %cst_21 {dimension_numbers = #tpu.dot_dimension_numbers<[1], [0], [0], [1], [0, 0, 1, 1], [], []>} : vector<16x16xbf16>, vector<16x32xbf16>, vector<16x32xf32> -> vector<16x32xf32>
    %35 = arith.addf %31, %34 : vector<16x32xf32>
    %36 = vector.extract_strided_slice %14 {offsets = [80, 0], sizes = [16, 16], strides = [1, 1]} : vector<144x16xbf16> to vector<16x16xbf16>
    %c80 = arith.constant 80 : index
    %c0_22 = arith.constant 0 : index
    %37 = vector.load %arg6[%c80, %c0_22] : memref<144x32xbf16, #tpu.memory_space<vmem>>, vector<16x32xbf16>
    %cst_23 = arith.constant dense<0.000000e+00> : vector<16x32xf32>
    %38 = tpu.matmul %36, %37, %cst_23 {dimension_numbers = #tpu.dot_dimension_numbers<[1], [0], [0], [1], [0, 0, 1, 1], [], []>} : vector<16x16xbf16>, vector<16x32xbf16>, vector<16x32xf32> -> vector<16x32xf32>
    %39 = arith.addf %35, %38 : vector<16x32xf32>
    %40 = vector.extract_strided_slice %14 {offsets = [96, 0], sizes = [16, 16], strides = [1, 1]} : vector<144x16xbf16> to vector<16x16xbf16>
    %c96 = arith.constant 96 : index
    %c0_24 = arith.constant 0 : index
    %41 = vector.load %arg6[%c96, %c0_24] : memref<144x32xbf16, #tpu.memory_space<vmem>>, vector<16x32xbf16>
    %cst_25 = arith.constant dense<0.000000e+00> : vector<16x32xf32>
    %42 = tpu.matmul %40, %41, %cst_25 {dimension_numbers = #tpu.dot_dimension_numbers<[1], [0], [0], [1], [0, 0, 1, 1], [], []>} : vector<16x16xbf16>, vector<16x32xbf16>, vector<16x32xf32> -> vector<16x32xf32>
    %43 = arith.addf %39, %42 : vector<16x32xf32>
    %44 = vector.extract_strided_slice %14 {offsets = [112, 0], sizes = [16, 16], strides = [1, 1]} : vector<144x16xbf16> to vector<16x16xbf16>
    %c112 = arith.constant 112 : index
    %c0_26 = arith.constant 0 : index
    %45 = vector.load %arg6[%c112, %c0_26] : memref<144x32xbf16, #tpu.memory_space<vmem>>, vector<16x32xbf16>
    %cst_27 = arith.constant dense<0.000000e+00> : vector<16x32xf32>
    %46 = tpu.matmul %44, %45, %cst_27 {dimension_numbers = #tpu.dot_dimension_numbers<[1], [0], [0], [1], [0, 0, 1, 1], [], []>} : vector<16x16xbf16>, vector<16x32xbf16>, vector<16x32xf32> -> vector<16x32xf32>
    %47 = arith.addf %43, %46 : vector<16x32xf32>
    %48 = vector.extract_strided_slice %14 {offsets = [128, 0], sizes = [16, 16], strides = [1, 1]} : vector<144x16xbf16> to vector<16x16xbf16>
    %c128 = arith.constant 128 : index
    %c0_28 = arith.constant 0 : index
    %49 = vector.load %arg6[%c128, %c0_28] : memref<144x32xbf16, #tpu.memory_space<vmem>>, vector<16x32xbf16>
    %cst_29 = arith.constant dense<0.000000e+00> : vector<16x32xf32>
    %50 = tpu.matmul %48, %49, %cst_29 {dimension_numbers = #tpu.dot_dimension_numbers<[1], [0], [0], [1], [0, 0, 1, 1], [], []>} : vector<16x16xbf16>, vector<16x32xbf16>, vector<16x32xf32> -> vector<16x32xf32>
    %51 = arith.addf %47, %50 : vector<16x32xf32>
    %c0_30 = arith.constant 0 : index
    %c0_31 = arith.constant 0 : index
    %52 = vector.load %arg7[%c0_30, %c0_31] : memref<1x32xf32, #tpu.memory_space<vmem>>, vector<1x32xf32>
    %53 = vector.broadcast %52 : vector<1x32xf32> to vector<16x32xf32>
    %54 = arith.addf %51, %53 : vector<16x32xf32>
    %cst_32 = arith.constant 0.00999999977 : f32
    %55 = vector.broadcast %cst_32 : f32 to vector<16x32xf32>
    %56 = arith.mulf %55, %54 : vector<16x32xf32>
    %57 = arith.maximumf %54, %56 : vector<16x32xf32>
    %58 = arith.truncf %57 : vector<16x32xf32> to vector<16x32xbf16>
    %c0_33 = arith.constant 0 : index
    %c0_34 = arith.constant 0 : index
    %59 = vector.load %arg8[%c0_33, %c0_34] : memref<36x16xbf16, #tpu.memory_space<vmem>>, vector<36x16xbf16>
    %cst_35 = arith.constant dense<0.000000e+00> : vector<36x32xf32>
    %60 = tpu.matmul %59, %58, %cst_35 {dimension_numbers = #tpu.dot_dimension_numbers<[1], [0], [0], [1], [0, 0, 1, 1], [], []>} : vector<36x16xbf16>, vector<16x32xbf16>, vector<36x32xf32> -> vector<36x32xf32>
    %61 = arith.truncf %60 : vector<36x32xf32> to vector<36x32xbf16>
    %cst_36 = arith.constant 0.000000e+00 : f32
    %62 = vector.broadcast %cst_36 : f32 to vector<4x64xf32>
    %63 = vector.extract_strided_slice %61 {offsets = [0, 0], sizes = [4, 32], strides = [1, 1]} : vector<36x32xbf16> to vector<4x32xbf16>
    %c0_37 = arith.constant 0 : index
    %c0_38 = arith.constant 0 : index
    %64 = vector.load %arg9[%c0_37, %c0_38] : memref<288x64xbf16, #tpu.memory_space<vmem>>, vector<32x64xbf16>
    %cst_39 = arith.constant dense<0.000000e+00> : vector<4x64xf32>
    %65 = tpu.matmul %63, %64, %cst_39 {dimension_numbers = #tpu.dot_dimension_numbers<[1], [0], [0], [1], [0, 0, 1, 1], [], []>} : vector<4x32xbf16>, vector<32x64xbf16>, vector<4x64xf32> -> vector<4x64xf32>
    %66 = arith.addf %62, %65 : vector<4x64xf32>
    %67 = vector.extract_strided_slice %61 {offsets = [4, 0], sizes = [4, 32], strides = [1, 1]} : vector<36x32xbf16> to vector<4x32xbf16>
    %c32_40 = arith.constant 32 : index
    %c0_41 = arith.constant 0 : index
    %68 = vector.load %arg9[%c32_40, %c0_41] : memref<288x64xbf16, #tpu.memory_space<vmem>>, vector<32x64xbf16>
    %cst_42 = arith.constant dense<0.000000e+00> : vector<4x64xf32>
    %69 = tpu.matmul %67, %68, %cst_42 {dimension_numbers = #tpu.dot_dimension_numbers<[1], [0], [0], [1], [0, 0, 1, 1], [], []>} : vector<4x32xbf16>, vector<32x64xbf16>, vector<4x64xf32> -> vector<4x64xf32>
    %70 = arith.addf %66, %69 : vector<4x64xf32>
    %71 = vector.extract_strided_slice %61 {offsets = [8, 0], sizes = [4, 32], strides = [1, 1]} : vector<36x32xbf16> to vector<4x32xbf16>
    %c64_43 = arith.constant 64 : index
    %c0_44 = arith.constant 0 : index
    %72 = vector.load %arg9[%c64_43, %c0_44] : memref<288x64xbf16, #tpu.memory_space<vmem>>, vector<32x64xbf16>
    %cst_45 = arith.constant dense<0.000000e+00> : vector<4x64xf32>
    %73 = tpu.matmul %71, %72, %cst_45 {dimension_numbers = #tpu.dot_dimension_numbers<[1], [0], [0], [1], [0, 0, 1, 1], [], []>} : vector<4x32xbf16>, vector<32x64xbf16>, vector<4x64xf32> -> vector<4x64xf32>
    %74 = arith.addf %70, %73 : vector<4x64xf32>
    %75 = vector.extract_strided_slice %61 {offsets = [12, 0], sizes = [4, 32], strides = [1, 1]} : vector<36x32xbf16> to vector<4x32xbf16>
    %c96_46 = arith.constant 96 : index
    %c0_47 = arith.constant 0 : index
    %76 = vector.load %arg9[%c96_46, %c0_47] : memref<288x64xbf16, #tpu.memory_space<vmem>>, vector<32x64xbf16>
    %cst_48 = arith.constant dense<0.000000e+00> : vector<4x64xf32>
    %77 = tpu.matmul %75, %76, %cst_48 {dimension_numbers = #tpu.dot_dimension_numbers<[1], [0], [0], [1], [0, 0, 1, 1], [], []>} : vector<4x32xbf16>, vector<32x64xbf16>, vector<4x64xf32> -> vector<4x64xf32>
    %78 = arith.addf %74, %77 : vector<4x64xf32>
    %79 = vector.extract_strided_slice %61 {offsets = [16, 0], sizes = [4, 32], strides = [1, 1]} : vector<36x32xbf16> to vector<4x32xbf16>
    %c128_49 = arith.constant 128 : index
    %c0_50 = arith.constant 0 : index
    %80 = vector.load %arg9[%c128_49, %c0_50] : memref<288x64xbf16, #tpu.memory_space<vmem>>, vector<32x64xbf16>
    %cst_51 = arith.constant dense<0.000000e+00> : vector<4x64xf32>
    %81 = tpu.matmul %79, %80, %cst_51 {dimension_numbers = #tpu.dot_dimension_numbers<[1], [0], [0], [1], [0, 0, 1, 1], [], []>} : vector<4x32xbf16>, vector<32x64xbf16>, vector<4x64xf32> -> vector<4x64xf32>
    %82 = arith.addf %78, %81 : vector<4x64xf32>
    %83 = vector.extract_strided_slice %61 {offsets = [20, 0], sizes = [4, 32], strides = [1, 1]} : vector<36x32xbf16> to vector<4x32xbf16>
    %c160 = arith.constant 160 : index
    %c0_52 = arith.constant 0 : index
    %84 = vector.load %arg9[%c160, %c0_52] : memref<288x64xbf16, #tpu.memory_space<vmem>>, vector<32x64xbf16>
    %cst_53 = arith.constant dense<0.000000e+00> : vector<4x64xf32>
    %85 = tpu.matmul %83, %84, %cst_53 {dimension_numbers = #tpu.dot_dimension_numbers<[1], [0], [0], [1], [0, 0, 1, 1], [], []>} : vector<4x32xbf16>, vector<32x64xbf16>, vector<4x64xf32> -> vector<4x64xf32>
    %86 = arith.addf %82, %85 : vector<4x64xf32>
    %87 = vector.extract_strided_slice %61 {offsets = [24, 0], sizes = [4, 32], strides = [1, 1]} : vector<36x32xbf16> to vector<4x32xbf16>
    %c192 = arith.constant 192 : index
    %c0_54 = arith.constant 0 : index
    %88 = vector.load %arg9[%c192, %c0_54] : memref<288x64xbf16, #tpu.memory_space<vmem>>, vector<32x64xbf16>
    %cst_55 = arith.constant dense<0.000000e+00> : vector<4x64xf32>
    %89 = tpu.matmul %87, %88, %cst_55 {dimension_numbers = #tpu.dot_dimension_numbers<[1], [0], [0], [1], [0, 0, 1, 1], [], []>} : vector<4x32xbf16>, vector<32x64xbf16>, vector<4x64xf32> -> vector<4x64xf32>
    %90 = arith.addf %86, %89 : vector<4x64xf32>
    %91 = vector.extract_strided_slice %61 {offsets = [28, 0], sizes = [4, 32], strides = [1, 1]} : vector<36x32xbf16> to vector<4x32xbf16>
    %c224 = arith.constant 224 : index
    %c0_56 = arith.constant 0 : index
    %92 = vector.load %arg9[%c224, %c0_56] : memref<288x64xbf16, #tpu.memory_space<vmem>>, vector<32x64xbf16>
    %cst_57 = arith.constant dense<0.000000e+00> : vector<4x64xf32>
    %93 = tpu.matmul %91, %92, %cst_57 {dimension_numbers = #tpu.dot_dimension_numbers<[1], [0], [0], [1], [0, 0, 1, 1], [], []>} : vector<4x32xbf16>, vector<32x64xbf16>, vector<4x64xf32> -> vector<4x64xf32>
    %94 = arith.addf %90, %93 : vector<4x64xf32>
    %95 = vector.extract_strided_slice %61 {offsets = [32, 0], sizes = [4, 32], strides = [1, 1]} : vector<36x32xbf16> to vector<4x32xbf16>
    %c256 = arith.constant 256 : index
    %c0_58 = arith.constant 0 : index
    %96 = vector.load %arg9[%c256, %c0_58] : memref<288x64xbf16, #tpu.memory_space<vmem>>, vector<32x64xbf16>
    %cst_59 = arith.constant dense<0.000000e+00> : vector<4x64xf32>
    %97 = tpu.matmul %95, %96, %cst_59 {dimension_numbers = #tpu.dot_dimension_numbers<[1], [0], [0], [1], [0, 0, 1, 1], [], []>} : vector<4x32xbf16>, vector<32x64xbf16>, vector<4x64xf32> -> vector<4x64xf32>
    %98 = arith.addf %94, %97 : vector<4x64xf32>
    %c0_60 = arith.constant 0 : index
    %c0_61 = arith.constant 0 : index
    %99 = vector.load %arg10[%c0_60, %c0_61] : memref<1x64xf32, #tpu.memory_space<vmem>>, vector<1x64xf32>
    %100 = vector.broadcast %99 : vector<1x64xf32> to vector<4x64xf32>
    %101 = arith.addf %98, %100 : vector<4x64xf32>
    %cst_62 = arith.constant 0.00999999977 : f32
    %102 = vector.broadcast %cst_62 : f32 to vector<4x64xf32>
    %103 = arith.mulf %102, %101 : vector<4x64xf32>
    %104 = arith.maximumf %101, %103 : vector<4x64xf32>
    %105 = arith.truncf %104 : vector<4x64xf32> to vector<4x64xbf16>
    %c0_63 = arith.constant 0 : index
    %c0_64 = arith.constant 0 : index
    %106 = vector.load %arg11[%c0_63, %c0_64] : memref<16x4xbf16, #tpu.memory_space<vmem>>, vector<16x4xbf16>
    %cst_65 = arith.constant dense<0.000000e+00> : vector<16x64xf32>
    %107 = tpu.matmul %106, %105, %cst_65 {dimension_numbers = #tpu.dot_dimension_numbers<[1], [0], [0], [1], [0, 0, 1, 1], [], []>} : vector<16x4xbf16>, vector<4x64xbf16>, vector<16x64xf32> -> vector<16x64xf32>
    %108 = arith.truncf %107 : vector<16x64xf32> to vector<16x64xbf16>
    %cst_66 = arith.constant 0.000000e+00 : f32
    %109 = vector.broadcast %cst_66 : f32 to vector<1x128xf32>
    %110 = vector.extract_strided_slice %108 {offsets = [0, 0], sizes = [1, 64], strides = [1, 1]} : vector<16x64xbf16> to vector<1x64xbf16>
    %c0_67 = arith.constant 0 : index
    %c0_68 = arith.constant 0 : index
    %111 = vector.load %arg12[%c0_67, %c0_68] : memref<1024x128xbf16, #tpu.memory_space<vmem>>, vector<64x128xbf16>
    %cst_69 = arith.constant dense<0.000000e+00> : vector<1x128xf32>
    %112 = tpu.matmul %110, %111, %cst_69 {dimension_numbers = #tpu.dot_dimension_numbers<[1], [0], [0], [1], [0, 0, 1, 1], [], []>} : vector<1x64xbf16>, vector<64x128xbf16>, vector<1x128xf32> -> vector<1x128xf32>
    %113 = arith.addf %109, %112 : vector<1x128xf32>
    %114 = vector.extract_strided_slice %108 {offsets = [1, 0], sizes = [1, 64], strides = [1, 1]} : vector<16x64xbf16> to vector<1x64xbf16>
    %c64_70 = arith.constant 64 : index
    %c0_71 = arith.constant 0 : index
    %115 = vector.load %arg12[%c64_70, %c0_71] : memref<1024x128xbf16, #tpu.memory_space<vmem>>, vector<64x128xbf16>
    %cst_72 = arith.constant dense<0.000000e+00> : vector<1x128xf32>
    %116 = tpu.matmul %114, %115, %cst_72 {dimension_numbers = #tpu.dot_dimension_numbers<[1], [0], [0], [1], [0, 0, 1, 1], [], []>} : vector<1x64xbf16>, vector<64x128xbf16>, vector<1x128xf32> -> vector<1x128xf32>
    %117 = arith.addf %113, %116 : vector<1x128xf32>
    %118 = vector.extract_strided_slice %108 {offsets = [2, 0], sizes = [1, 64], strides = [1, 1]} : vector<16x64xbf16> to vector<1x64xbf16>
    %c128_73 = arith.constant 128 : index
    %c0_74 = arith.constant 0 : index
    %119 = vector.load %arg12[%c128_73, %c0_74] : memref<1024x128xbf16, #tpu.memory_space<vmem>>, vector<64x128xbf16>
    %cst_75 = arith.constant dense<0.000000e+00> : vector<1x128xf32>
    %120 = tpu.matmul %118, %119, %cst_75 {dimension_numbers = #tpu.dot_dimension_numbers<[1], [0], [0], [1], [0, 0, 1, 1], [], []>} : vector<1x64xbf16>, vector<64x128xbf16>, vector<1x128xf32> -> vector<1x128xf32>
    %121 = arith.addf %117, %120 : vector<1x128xf32>
    %122 = vector.extract_strided_slice %108 {offsets = [3, 0], sizes = [1, 64], strides = [1, 1]} : vector<16x64xbf16> to vector<1x64xbf16>
    %c192_76 = arith.constant 192 : index
    %c0_77 = arith.constant 0 : index
    %123 = vector.load %arg12[%c192_76, %c0_77] : memref<1024x128xbf16, #tpu.memory_space<vmem>>, vector<64x128xbf16>
    %cst_78 = arith.constant dense<0.000000e+00> : vector<1x128xf32>
    %124 = tpu.matmul %122, %123, %cst_78 {dimension_numbers = #tpu.dot_dimension_numbers<[1], [0], [0], [1], [0, 0, 1, 1], [], []>} : vector<1x64xbf16>, vector<64x128xbf16>, vector<1x128xf32> -> vector<1x128xf32>
    %125 = arith.addf %121, %124 : vector<1x128xf32>
    %126 = vector.extract_strided_slice %108 {offsets = [4, 0], sizes = [1, 64], strides = [1, 1]} : vector<16x64xbf16> to vector<1x64xbf16>
    %c256_79 = arith.constant 256 : index
    %c0_80 = arith.constant 0 : index
    %127 = vector.load %arg12[%c256_79, %c0_80] : memref<1024x128xbf16, #tpu.memory_space<vmem>>, vector<64x128xbf16>
    %cst_81 = arith.constant dense<0.000000e+00> : vector<1x128xf32>
    %128 = tpu.matmul %126, %127, %cst_81 {dimension_numbers = #tpu.dot_dimension_numbers<[1], [0], [0], [1], [0, 0, 1, 1], [], []>} : vector<1x64xbf16>, vector<64x128xbf16>, vector<1x128xf32> -> vector<1x128xf32>
    %129 = arith.addf %125, %128 : vector<1x128xf32>
    %130 = vector.extract_strided_slice %108 {offsets = [5, 0], sizes = [1, 64], strides = [1, 1]} : vector<16x64xbf16> to vector<1x64xbf16>
    %c320 = arith.constant 320 : index
    %c0_82 = arith.constant 0 : index
    %131 = vector.load %arg12[%c320, %c0_82] : memref<1024x128xbf16, #tpu.memory_space<vmem>>, vector<64x128xbf16>
    %cst_83 = arith.constant dense<0.000000e+00> : vector<1x128xf32>
    %132 = tpu.matmul %130, %131, %cst_83 {dimension_numbers = #tpu.dot_dimension_numbers<[1], [0], [0], [1], [0, 0, 1, 1], [], []>} : vector<1x64xbf16>, vector<64x128xbf16>, vector<1x128xf32> -> vector<1x128xf32>
    %133 = arith.addf %129, %132 : vector<1x128xf32>
    %134 = vector.extract_strided_slice %108 {offsets = [6, 0], sizes = [1, 64], strides = [1, 1]} : vector<16x64xbf16> to vector<1x64xbf16>
    %c384 = arith.constant 384 : index
    %c0_84 = arith.constant 0 : index
    %135 = vector.load %arg12[%c384, %c0_84] : memref<1024x128xbf16, #tpu.memory_space<vmem>>, vector<64x128xbf16>
    %cst_85 = arith.constant dense<0.000000e+00> : vector<1x128xf32>
    %136 = tpu.matmul %134, %135, %cst_85 {dimension_numbers = #tpu.dot_dimension_numbers<[1], [0], [0], [1], [0, 0, 1, 1], [], []>} : vector<1x64xbf16>, vector<64x128xbf16>, vector<1x128xf32> -> vector<1x128xf32>
    %137 = arith.addf %133, %136 : vector<1x128xf32>
    %138 = vector.extract_strided_slice %108 {offsets = [7, 0], sizes = [1, 64], strides = [1, 1]} : vector<16x64xbf16> to vector<1x64xbf16>
    %c448 = arith.constant 448 : index
    %c0_86 = arith.constant 0 : index
    %139 = vector.load %arg12[%c448, %c0_86] : memref<1024x128xbf16, #tpu.memory_space<vmem>>, vector<64x128xbf16>
    %cst_87 = arith.constant dense<0.000000e+00> : vector<1x128xf32>
    %140 = tpu.matmul %138, %139, %cst_87 {dimension_numbers = #tpu.dot_dimension_numbers<[1], [0], [0], [1], [0, 0, 1, 1], [], []>} : vector<1x64xbf16>, vector<64x128xbf16>, vector<1x128xf32> -> vector<1x128xf32>
    %141 = arith.addf %137, %140 : vector<1x128xf32>
    %142 = vector.extract_strided_slice %108 {offsets = [8, 0], sizes = [1, 64], strides = [1, 1]} : vector<16x64xbf16> to vector<1x64xbf16>
    %c512 = arith.constant 512 : index
    %c0_88 = arith.constant 0 : index
    %143 = vector.load %arg12[%c512, %c0_88] : memref<1024x128xbf16, #tpu.memory_space<vmem>>, vector<64x128xbf16>
    %cst_89 = arith.constant dense<0.000000e+00> : vector<1x128xf32>
    %144 = tpu.matmul %142, %143, %cst_89 {dimension_numbers = #tpu.dot_dimension_numbers<[1], [0], [0], [1], [0, 0, 1, 1], [], []>} : vector<1x64xbf16>, vector<64x128xbf16>, vector<1x128xf32> -> vector<1x128xf32>
    %145 = arith.addf %141, %144 : vector<1x128xf32>
    %146 = vector.extract_strided_slice %108 {offsets = [9, 0], sizes = [1, 64], strides = [1, 1]} : vector<16x64xbf16> to vector<1x64xbf16>
    %c576 = arith.constant 576 : index
    %c0_90 = arith.constant 0 : index
    %147 = vector.load %arg12[%c576, %c0_90] : memref<1024x128xbf16, #tpu.memory_space<vmem>>, vector<64x128xbf16>
    %cst_91 = arith.constant dense<0.000000e+00> : vector<1x128xf32>
    %148 = tpu.matmul %146, %147, %cst_91 {dimension_numbers = #tpu.dot_dimension_numbers<[1], [0], [0], [1], [0, 0, 1, 1], [], []>} : vector<1x64xbf16>, vector<64x128xbf16>, vector<1x128xf32> -> vector<1x128xf32>
    %149 = arith.addf %145, %148 : vector<1x128xf32>
    %150 = vector.extract_strided_slice %108 {offsets = [10, 0], sizes = [1, 64], strides = [1, 1]} : vector<16x64xbf16> to vector<1x64xbf16>
    %c640 = arith.constant 640 : index
    %c0_92 = arith.constant 0 : index
    %151 = vector.load %arg12[%c640, %c0_92] : memref<1024x128xbf16, #tpu.memory_space<vmem>>, vector<64x128xbf16>
    %cst_93 = arith.constant dense<0.000000e+00> : vector<1x128xf32>
    %152 = tpu.matmul %150, %151, %cst_93 {dimension_numbers = #tpu.dot_dimension_numbers<[1], [0], [0], [1], [0, 0, 1, 1], [], []>} : vector<1x64xbf16>, vector<64x128xbf16>, vector<1x128xf32> -> vector<1x128xf32>
    %153 = arith.addf %149, %152 : vector<1x128xf32>
    %154 = vector.extract_strided_slice %108 {offsets = [11, 0], sizes = [1, 64], strides = [1, 1]} : vector<16x64xbf16> to vector<1x64xbf16>
    %c704 = arith.constant 704 : index
    %c0_94 = arith.constant 0 : index
    %155 = vector.load %arg12[%c704, %c0_94] : memref<1024x128xbf16, #tpu.memory_space<vmem>>, vector<64x128xbf16>
    %cst_95 = arith.constant dense<0.000000e+00> : vector<1x128xf32>
    %156 = tpu.matmul %154, %155, %cst_95 {dimension_numbers = #tpu.dot_dimension_numbers<[1], [0], [0], [1], [0, 0, 1, 1], [], []>} : vector<1x64xbf16>, vector<64x128xbf16>, vector<1x128xf32> -> vector<1x128xf32>
    %157 = arith.addf %153, %156 : vector<1x128xf32>
    %158 = vector.extract_strided_slice %108 {offsets = [12, 0], sizes = [1, 64], strides = [1, 1]} : vector<16x64xbf16> to vector<1x64xbf16>
    %c768 = arith.constant 768 : index
    %c0_96 = arith.constant 0 : index
    %159 = vector.load %arg12[%c768, %c0_96] : memref<1024x128xbf16, #tpu.memory_space<vmem>>, vector<64x128xbf16>
    %cst_97 = arith.constant dense<0.000000e+00> : vector<1x128xf32>
    %160 = tpu.matmul %158, %159, %cst_97 {dimension_numbers = #tpu.dot_dimension_numbers<[1], [0], [0], [1], [0, 0, 1, 1], [], []>} : vector<1x64xbf16>, vector<64x128xbf16>, vector<1x128xf32> -> vector<1x128xf32>
    %161 = arith.addf %157, %160 : vector<1x128xf32>
    %162 = vector.extract_strided_slice %108 {offsets = [13, 0], sizes = [1, 64], strides = [1, 1]} : vector<16x64xbf16> to vector<1x64xbf16>
    %c832 = arith.constant 832 : index
    %c0_98 = arith.constant 0 : index
    %163 = vector.load %arg12[%c832, %c0_98] : memref<1024x128xbf16, #tpu.memory_space<vmem>>, vector<64x128xbf16>
    %cst_99 = arith.constant dense<0.000000e+00> : vector<1x128xf32>
    %164 = tpu.matmul %162, %163, %cst_99 {dimension_numbers = #tpu.dot_dimension_numbers<[1], [0], [0], [1], [0, 0, 1, 1], [], []>} : vector<1x64xbf16>, vector<64x128xbf16>, vector<1x128xf32> -> vector<1x128xf32>
    %165 = arith.addf %161, %164 : vector<1x128xf32>
    %166 = vector.extract_strided_slice %108 {offsets = [14, 0], sizes = [1, 64], strides = [1, 1]} : vector<16x64xbf16> to vector<1x64xbf16>
    %c896 = arith.constant 896 : index
    %c0_100 = arith.constant 0 : index
    %167 = vector.load %arg12[%c896, %c0_100] : memref<1024x128xbf16, #tpu.memory_space<vmem>>, vector<64x128xbf16>
    %cst_101 = arith.constant dense<0.000000e+00> : vector<1x128xf32>
    %168 = tpu.matmul %166, %167, %cst_101 {dimension_numbers = #tpu.dot_dimension_numbers<[1], [0], [0], [1], [0, 0, 1, 1], [], []>} : vector<1x64xbf16>, vector<64x128xbf16>, vector<1x128xf32> -> vector<1x128xf32>
    %169 = arith.addf %165, %168 : vector<1x128xf32>
    %170 = vector.extract_strided_slice %108 {offsets = [15, 0], sizes = [1, 64], strides = [1, 1]} : vector<16x64xbf16> to vector<1x64xbf16>
    %c960 = arith.constant 960 : index
    %c0_102 = arith.constant 0 : index
    %171 = vector.load %arg12[%c960, %c0_102] : memref<1024x128xbf16, #tpu.memory_space<vmem>>, vector<64x128xbf16>
    %cst_103 = arith.constant dense<0.000000e+00> : vector<1x128xf32>
    %172 = tpu.matmul %170, %171, %cst_103 {dimension_numbers = #tpu.dot_dimension_numbers<[1], [0], [0], [1], [0, 0, 1, 1], [], []>} : vector<1x64xbf16>, vector<64x128xbf16>, vector<1x128xf32> -> vector<1x128xf32>
    %173 = arith.addf %169, %172 : vector<1x128xf32>
    %c0_104 = arith.constant 0 : index
    %c0_105 = arith.constant 0 : index
    %174 = vector.load %arg13[%c0_104, %c0_105] : memref<1x128xf32, #tpu.memory_space<vmem>>, vector<1x128xf32>
    %175 = arith.addf %173, %174 : vector<1x128xf32>
    %cst_106 = arith.constant 0.00999999977 : f32
    %176 = vector.broadcast %cst_106 : f32 to vector<1x128xf32>
    %177 = arith.mulf %176, %175 : vector<1x128xf32>
    %178 = arith.maximumf %175, %177 : vector<1x128xf32>
    %179 = arith.truncf %178 : vector<1x128xf32> to vector<1x128xbf16>
    %c0_107 = arith.constant 0 : index
    %c0_108 = arith.constant 0 : index
    %180 = vector.load %arg1[%c0_107, %c0_108] : memref<2x8xf32, #tpu.memory_space<vmem>>, vector<1x8xf32>
    %181 = arith.truncf %180 : vector<1x8xf32> to vector<1x8xbf16>
    %c0_109 = arith.constant 0 : index
    %c0_110 = arith.constant 0 : index
    %182 = vector.load %arg14[%c0_109, %c0_110] : memref<128x128xbf16, #tpu.memory_space<vmem>>, vector<128x128xbf16>
    %cst_111 = arith.constant dense<0.000000e+00> : vector<1x128xf32>
    %183 = tpu.matmul %179, %182, %cst_111 {dimension_numbers = #tpu.dot_dimension_numbers<[1], [0], [0], [1], [0, 0, 1, 1], [], []>} : vector<1x128xbf16>, vector<128x128xbf16>, vector<1x128xf32> -> vector<1x128xf32>
    %c0_112 = arith.constant 0 : index
    %c0_113 = arith.constant 0 : index
    %184 = vector.load %arg15[%c0_112, %c0_113] : memref<8x128xbf16, #tpu.memory_space<vmem>>, vector<8x128xbf16>
    %cst_114 = arith.constant dense<0.000000e+00> : vector<1x128xf32>
    %185 = tpu.matmul %181, %184, %cst_114 {dimension_numbers = #tpu.dot_dimension_numbers<[1], [0], [0], [1], [0, 0, 1, 1], [], []>} : vector<1x8xbf16>, vector<8x128xbf16>, vector<1x128xf32> -> vector<1x128xf32>
    %186 = arith.addf %183, %185 : vector<1x128xf32>
    %c0_115 = arith.constant 0 : index
    %c0_116 = arith.constant 0 : index
    %187 = vector.load %arg17[%c0_115, %c0_116] : memref<1x128xf32, #tpu.memory_space<vmem>>, vector<1x128xf32>
    %188 = arith.addf %186, %187 : vector<1x128xf32>
    %c0_117 = arith.constant 0 : index
    %c0_118 = arith.constant 0 : index
    %189 = vector.load %arg2[%c0_117, %c0_118] : memref<8x8xf32, #tpu.memory_space<vmem>>, vector<4x8xf32>
    %190 = arith.truncf %189 : vector<4x8xf32> to vector<4x8xbf16>
    %c0_119 = arith.constant 0 : index
    %c0_120 = arith.constant 0 : index
    %191 = vector.load %arg16[%c0_119, %c0_120] : memref<8x128xbf16, #tpu.memory_space<vmem>>, vector<8x128xbf16>
    %cst_121 = arith.constant dense<0.000000e+00> : vector<4x128xf32>
    %192 = tpu.matmul %190, %191, %cst_121 {dimension_numbers = #tpu.dot_dimension_numbers<[1], [0], [0], [1], [0, 0, 1, 1], [], []>} : vector<4x8xbf16>, vector<8x128xbf16>, vector<4x128xf32> -> vector<4x128xf32>
    %193 = vector.broadcast %188 : vector<1x128xf32> to vector<4x128xf32>
    %194 = arith.addf %192, %193 : vector<4x128xf32>
    %cst_122 = arith.constant 0.00999999977 : f32
    %195 = vector.broadcast %cst_122 : f32 to vector<4x128xf32>
    %196 = arith.mulf %195, %194 : vector<4x128xf32>
    %197 = arith.maximumf %194, %196 : vector<4x128xf32>
    %198 = arith.truncf %197 : vector<4x128xf32> to vector<4x128xbf16>
    %c0_123 = arith.constant 0 : index
    %c0_124 = arith.constant 0 : index
    %199 = vector.load %arg18[%c0_123, %c0_124] : memref<128x128xbf16, #tpu.memory_space<vmem>>, vector<128x128xbf16>
    %cst_125 = arith.constant dense<0.000000e+00> : vector<4x128xf32>
    %200 = tpu.matmul %198, %199, %cst_125 {dimension_numbers = #tpu.dot_dimension_numbers<[1], [0], [0], [1], [0, 0, 1, 1], [], []>} : vector<4x128xbf16>, vector<128x128xbf16>, vector<4x128xf32> -> vector<4x128xf32>
    %c0_126 = arith.constant 0 : index
    %c0_127 = arith.constant 0 : index
    %201 = vector.load %arg19[%c0_126, %c0_127] : memref<1x128xf32, #tpu.memory_space<vmem>>, vector<1x128xf32>
    %202 = vector.broadcast %201 : vector<1x128xf32> to vector<4x128xf32>
    %203 = arith.addf %200, %202 : vector<4x128xf32>
    %cst_128 = arith.constant 0.00999999977 : f32
    %204 = vector.broadcast %cst_128 : f32 to vector<4x128xf32>
    %205 = arith.mulf %204, %203 : vector<4x128xf32>
    %206 = arith.maximumf %203, %205 : vector<4x128xf32>
    %207 = arith.truncf %206 : vector<4x128xf32> to vector<4x128xbf16>
    %c0_129 = arith.constant 0 : index
    %c0_130 = arith.constant 0 : index
    %208 = vector.load %arg20[%c0_129, %c0_130] : memref<128x128xbf16, #tpu.memory_space<vmem>>, vector<128x128xbf16>
    %cst_131 = arith.constant dense<0.000000e+00> : vector<4x128xf32>
    %209 = tpu.matmul %207, %208, %cst_131 {dimension_numbers = #tpu.dot_dimension_numbers<[1], [0], [0], [1], [0, 0, 1, 1], [], []>} : vector<4x128xbf16>, vector<128x128xbf16>, vector<4x128xf32> -> vector<4x128xf32>
    %c0_132 = arith.constant 0 : index
    %c0_133 = arith.constant 0 : index
    %210 = vector.load %arg21[%c0_132, %c0_133] : memref<1x128xf32, #tpu.memory_space<vmem>>, vector<1x128xf32>
    %211 = vector.broadcast %210 : vector<1x128xf32> to vector<4x128xf32>
    %212 = arith.addf %209, %211 : vector<4x128xf32>
    %cst_134 = arith.constant 0.00999999977 : f32
    %213 = vector.broadcast %cst_134 : f32 to vector<4x128xf32>
    %214 = arith.mulf %213, %212 : vector<4x128xf32>
    %215 = arith.maximumf %212, %214 : vector<4x128xf32>
    %216 = arith.truncf %215 : vector<4x128xf32> to vector<4x128xbf16>
    %c0_135 = arith.constant 0 : index
    %c0_136 = arith.constant 0 : index
    %217 = vector.load %arg22[%c0_135, %c0_136] : memref<128x256xbf16, #tpu.memory_space<vmem>>, vector<128x256xbf16>
    %cst_137 = arith.constant dense<0.000000e+00> : vector<4x256xf32>
    %218 = tpu.matmul %216, %217, %cst_137 {dimension_numbers = #tpu.dot_dimension_numbers<[1], [0], [0], [1], [0, 0, 1, 1], [], []>} : vector<4x128xbf16>, vector<128x256xbf16>, vector<4x256xf32> -> vector<4x256xf32>
    %c0_138 = arith.constant 0 : index
    %c0_139 = arith.constant 0 : index
    %219 = vector.load %arg23[%c0_138, %c0_139] : memref<1x256xf32, #tpu.memory_space<vmem>>, vector<1x256xf32>
    %220 = vector.broadcast %219 : vector<1x256xf32> to vector<4x256xf32>
    %221 = arith.addf %218, %220 : vector<4x256xf32>
    %cst_140 = arith.constant 0.00999999977 : f32
    %222 = vector.broadcast %cst_140 : f32 to vector<4x256xf32>
    %223 = arith.mulf %222, %221 : vector<4x256xf32>
    %224 = arith.maximumf %221, %223 : vector<4x256xf32>
    %c0_141 = arith.constant 0 : index
    %c0_142 = arith.constant 0 : index
    %225 = vector.load %arg24[%c0_141, %c0_142] : memref<1x256xbf16, #tpu.memory_space<vmem>>, vector<1x256xbf16>
    %226 = arith.extf %225 : vector<1x256xbf16> to vector<1x256xf32>
    %227 = vector.broadcast %226 : vector<1x256xf32> to vector<4x256xf32>
    %228 = arith.mulf %224, %227 : vector<4x256xf32>
    %cst_143 = arith.constant dense<0.000000e+00> : vector<4xf32>
    %229 = vector.multi_reduction <add>, %228, %cst_143 [1] : vector<4x256xf32> to vector<4xf32>
    %230 = vector.shape_cast %229 : vector<4xf32> to vector<4x1xf32>
    %c0_144 = arith.constant 0 : index
    %c0_145 = arith.constant 0 : index
    %231 = vector.load %arg25[%c0_144, %c0_145] : memref<1x1xf32, #tpu.memory_space<vmem>>, vector<1x1xf32>
    %232 = vector.broadcast %231 : vector<1x1xf32> to vector<4x1xf32>
    %233 = arith.addf %230, %232 : vector<4x1xf32>
    %cst_146 = arith.constant -3.000000e+01 : f32
    %cst_147 = arith.constant 3.000000e+01 : f32
    %234 = vector.broadcast %cst_146 : f32 to vector<4x1xf32>
    %235 = arith.maximumf %234, %233 : vector<4x1xf32>
    %236 = vector.broadcast %cst_147 : f32 to vector<4x1xf32>
    %237 = arith.minimumf %236, %235 : vector<4x1xf32>
    %cst_148 = arith.constant 0.000000e+00 : f32
    %238 = vector.broadcast %cst_148 : f32 to vector<4x1xf32>
    %239 = arith.subf %238, %237 : vector<4x1xf32>
    %240 = math.exp %239 : vector<4x1xf32>
    %cst_149 = arith.constant 1.000000e+00 : f32
    %241 = vector.broadcast %cst_149 : f32 to vector<4x1xf32>
    %242 = arith.addf %241, %240 : vector<4x1xf32>
    %243 = tpu.reciprocal %242 {approx = true} : vector<4x1xf32> -> vector<4x1xf32>
    %c0_150 = arith.constant 0 : index
    %c0_151 = arith.constant 0 : index
    %244 = vector.load %arg26[%c0_150, %c0_151] : memref<8x1xf32, #tpu.memory_space<vmem>>, vector<4x1xf32>
    tpu.vector_store %arg26[%c0_150, %c0_151], %243 {strides = array<i32>} : memref<8x1xf32, #tpu.memory_space<vmem>>, vector<4x1xf32>,
    %c1 = arith.constant 1 : index
    %c0_152 = arith.constant 0 : index
    %c0_153 = arith.constant 0 : index
    %245 = vector.load %arg0[%c1, %c0_152, %c0_153] : memref<2x64x16xf32, #tpu.memory_space<vmem>>, vector<1x64x16xf32>
    %246 = vector.shape_cast %245 : vector<1x64x16xf32> to vector<64x16xf32>
    %247 = arith.truncf %246 : vector<64x16xf32> to vector<64x16xbf16>
    %c0_154 = arith.constant 0 : index
    %c0_155 = arith.constant 0 : index
    %248 = vector.load %arg3[%c0_154, %c0_155] : memref<16x16xbf16, #tpu.memory_space<vmem>>, vector<16x16xbf16>
    %cst_156 = arith.constant dense<0.000000e+00> : vector<64x16xf32>
    %249 = tpu.matmul %247, %248, %cst_156 {dimension_numbers = #tpu.dot_dimension_numbers<[1], [0], [0], [1], [0, 0, 1, 1], [], []>} : vector<64x16xbf16>, vector<16x16xbf16>, vector<64x16xf32> -> vector<64x16xf32>
    %c0_157 = arith.constant 0 : index
    %c0_158 = arith.constant 0 : index
    %250 = vector.load %arg4[%c0_157, %c0_158] : memref<1x16xf32, #tpu.memory_space<vmem>>, vector<1x16xf32>
    %251 = vector.broadcast %250 : vector<1x16xf32> to vector<64x16xf32>
    %252 = arith.addf %249, %251 : vector<64x16xf32>
    %cst_159 = arith.constant 0.00999999977 : f32
    %253 = vector.broadcast %cst_159 : f32 to vector<64x16xf32>
    %254 = arith.mulf %253, %252 : vector<64x16xf32>
    %255 = arith.maximumf %252, %254 : vector<64x16xf32>
    %256 = arith.truncf %255 : vector<64x16xf32> to vector<64x16xbf16>
    %c0_160 = arith.constant 0 : index
    %c0_161 = arith.constant 0 : index
    %257 = vector.load %arg5[%c0_160, %c0_161] : memref<144x64xbf16, #tpu.memory_space<vmem>>, vector<144x64xbf16>
    %cst_162 = arith.constant dense<0.000000e+00> : vector<144x16xf32>
    %258 = tpu.matmul %257, %256, %cst_162 {dimension_numbers = #tpu.dot_dimension_numbers<[1], [0], [0], [1], [0, 0, 1, 1], [], []>} : vector<144x64xbf16>, vector<64x16xbf16>, vector<144x16xf32> -> vector<144x16xf32>
    %259 = arith.truncf %258 : vector<144x16xf32> to vector<144x16xbf16>
    %cst_163 = arith.constant 0.000000e+00 : f32
    %260 = vector.broadcast %cst_163 : f32 to vector<16x32xf32>
    %261 = vector.extract_strided_slice %259 {offsets = [0, 0], sizes = [16, 16], strides = [1, 1]} : vector<144x16xbf16> to vector<16x16xbf16>
    %c0_164 = arith.constant 0 : index
    %c0_165 = arith.constant 0 : index
    %262 = vector.load %arg6[%c0_164, %c0_165] : memref<144x32xbf16, #tpu.memory_space<vmem>>, vector<16x32xbf16>
    %cst_166 = arith.constant dense<0.000000e+00> : vector<16x32xf32>
    %263 = tpu.matmul %261, %262, %cst_166 {dimension_numbers = #tpu.dot_dimension_numbers<[1], [0], [0], [1], [0, 0, 1, 1], [], []>} : vector<16x16xbf16>, vector<16x32xbf16>, vector<16x32xf32> -> vector<16x32xf32>
    %264 = arith.addf %260, %263 : vector<16x32xf32>
    %265 = vector.extract_strided_slice %259 {offsets = [16, 0], sizes = [16, 16], strides = [1, 1]} : vector<144x16xbf16> to vector<16x16xbf16>
    %c16_167 = arith.constant 16 : index
    %c0_168 = arith.constant 0 : index
    %266 = vector.load %arg6[%c16_167, %c0_168] : memref<144x32xbf16, #tpu.memory_space<vmem>>, vector<16x32xbf16>
    %cst_169 = arith.constant dense<0.000000e+00> : vector<16x32xf32>
    %267 = tpu.matmul %265, %266, %cst_169 {dimension_numbers = #tpu.dot_dimension_numbers<[1], [0], [0], [1], [0, 0, 1, 1], [], []>} : vector<16x16xbf16>, vector<16x32xbf16>, vector<16x32xf32> -> vector<16x32xf32>
    %268 = arith.addf %264, %267 : vector<16x32xf32>
    %269 = vector.extract_strided_slice %259 {offsets = [32, 0], sizes = [16, 16], strides = [1, 1]} : vector<144x16xbf16> to vector<16x16xbf16>
    %c32_170 = arith.constant 32 : index
    %c0_171 = arith.constant 0 : index
    %270 = vector.load %arg6[%c32_170, %c0_171] : memref<144x32xbf16, #tpu.memory_space<vmem>>, vector<16x32xbf16>
    %cst_172 = arith.constant dense<0.000000e+00> : vector<16x32xf32>
    %271 = tpu.matmul %269, %270, %cst_172 {dimension_numbers = #tpu.dot_dimension_numbers<[1], [0], [0], [1], [0, 0, 1, 1], [], []>} : vector<16x16xbf16>, vector<16x32xbf16>, vector<16x32xf32> -> vector<16x32xf32>
    %272 = arith.addf %268, %271 : vector<16x32xf32>
    %273 = vector.extract_strided_slice %259 {offsets = [48, 0], sizes = [16, 16], strides = [1, 1]} : vector<144x16xbf16> to vector<16x16xbf16>
    %c48_173 = arith.constant 48 : index
    %c0_174 = arith.constant 0 : index
    %274 = vector.load %arg6[%c48_173, %c0_174] : memref<144x32xbf16, #tpu.memory_space<vmem>>, vector<16x32xbf16>
    %cst_175 = arith.constant dense<0.000000e+00> : vector<16x32xf32>
    %275 = tpu.matmul %273, %274, %cst_175 {dimension_numbers = #tpu.dot_dimension_numbers<[1], [0], [0], [1], [0, 0, 1, 1], [], []>} : vector<16x16xbf16>, vector<16x32xbf16>, vector<16x32xf32> -> vector<16x32xf32>
    %276 = arith.addf %272, %275 : vector<16x32xf32>
    %277 = vector.extract_strided_slice %259 {offsets = [64, 0], sizes = [16, 16], strides = [1, 1]} : vector<144x16xbf16> to vector<16x16xbf16>
    %c64_176 = arith.constant 64 : index
    %c0_177 = arith.constant 0 : index
    %278 = vector.load %arg6[%c64_176, %c0_177] : memref<144x32xbf16, #tpu.memory_space<vmem>>, vector<16x32xbf16>
    %cst_178 = arith.constant dense<0.000000e+00> : vector<16x32xf32>
    %279 = tpu.matmul %277, %278, %cst_178 {dimension_numbers = #tpu.dot_dimension_numbers<[1], [0], [0], [1], [0, 0, 1, 1], [], []>} : vector<16x16xbf16>, vector<16x32xbf16>, vector<16x32xf32> -> vector<16x32xf32>
    %280 = arith.addf %276, %279 : vector<16x32xf32>
    %281 = vector.extract_strided_slice %259 {offsets = [80, 0], sizes = [16, 16], strides = [1, 1]} : vector<144x16xbf16> to vector<16x16xbf16>
    %c80_179 = arith.constant 80 : index
    %c0_180 = arith.constant 0 : index
    %282 = vector.load %arg6[%c80_179, %c0_180] : memref<144x32xbf16, #tpu.memory_space<vmem>>, vector<16x32xbf16>
    %cst_181 = arith.constant dense<0.000000e+00> : vector<16x32xf32>
    %283 = tpu.matmul %281, %282, %cst_181 {dimension_numbers = #tpu.dot_dimension_numbers<[1], [0], [0], [1], [0, 0, 1, 1], [], []>} : vector<16x16xbf16>, vector<16x32xbf16>, vector<16x32xf32> -> vector<16x32xf32>
    %284 = arith.addf %280, %283 : vector<16x32xf32>
    %285 = vector.extract_strided_slice %259 {offsets = [96, 0], sizes = [16, 16], strides = [1, 1]} : vector<144x16xbf16> to vector<16x16xbf16>
    %c96_182 = arith.constant 96 : index
    %c0_183 = arith.constant 0 : index
    %286 = vector.load %arg6[%c96_182, %c0_183] : memref<144x32xbf16, #tpu.memory_space<vmem>>, vector<16x32xbf16>
    %cst_184 = arith.constant dense<0.000000e+00> : vector<16x32xf32>
    %287 = tpu.matmul %285, %286, %cst_184 {dimension_numbers = #tpu.dot_dimension_numbers<[1], [0], [0], [1], [0, 0, 1, 1], [], []>} : vector<16x16xbf16>, vector<16x32xbf16>, vector<16x32xf32> -> vector<16x32xf32>
    %288 = arith.addf %284, %287 : vector<16x32xf32>
    %289 = vector.extract_strided_slice %259 {offsets = [112, 0], sizes = [16, 16], strides = [1, 1]} : vector<144x16xbf16> to vector<16x16xbf16>
    %c112_185 = arith.constant 112 : index
    %c0_186 = arith.constant 0 : index
    %290 = vector.load %arg6[%c112_185, %c0_186] : memref<144x32xbf16, #tpu.memory_space<vmem>>, vector<16x32xbf16>
    %cst_187 = arith.constant dense<0.000000e+00> : vector<16x32xf32>
    %291 = tpu.matmul %289, %290, %cst_187 {dimension_numbers = #tpu.dot_dimension_numbers<[1], [0], [0], [1], [0, 0, 1, 1], [], []>} : vector<16x16xbf16>, vector<16x32xbf16>, vector<16x32xf32> -> vector<16x32xf32>
    %292 = arith.addf %288, %291 : vector<16x32xf32>
    %293 = vector.extract_strided_slice %259 {offsets = [128, 0], sizes = [16, 16], strides = [1, 1]} : vector<144x16xbf16> to vector<16x16xbf16>
    %c128_188 = arith.constant 128 : index
    %c0_189 = arith.constant 0 : index
    %294 = vector.load %arg6[%c128_188, %c0_189] : memref<144x32xbf16, #tpu.memory_space<vmem>>, vector<16x32xbf16>
    %cst_190 = arith.constant dense<0.000000e+00> : vector<16x32xf32>
    %295 = tpu.matmul %293, %294, %cst_190 {dimension_numbers = #tpu.dot_dimension_numbers<[1], [0], [0], [1], [0, 0, 1, 1], [], []>} : vector<16x16xbf16>, vector<16x32xbf16>, vector<16x32xf32> -> vector<16x32xf32>
    %296 = arith.addf %292, %295 : vector<16x32xf32>
    %c0_191 = arith.constant 0 : index
    %c0_192 = arith.constant 0 : index
    %297 = vector.load %arg7[%c0_191, %c0_192] : memref<1x32xf32, #tpu.memory_space<vmem>>, vector<1x32xf32>
    %298 = vector.broadcast %297 : vector<1x32xf32> to vector<16x32xf32>
    %299 = arith.addf %296, %298 : vector<16x32xf32>
    %cst_193 = arith.constant 0.00999999977 : f32
    %300 = vector.broadcast %cst_193 : f32 to vector<16x32xf32>
    %301 = arith.mulf %300, %299 : vector<16x32xf32>
    %302 = arith.maximumf %299, %301 : vector<16x32xf32>
    %303 = arith.truncf %302 : vector<16x32xf32> to vector<16x32xbf16>
    %c0_194 = arith.constant 0 : index
    %c0_195 = arith.constant 0 : index
    %304 = vector.load %arg8[%c0_194, %c0_195] : memref<36x16xbf16, #tpu.memory_space<vmem>>, vector<36x16xbf16>
    %cst_196 = arith.constant dense<0.000000e+00> : vector<36x32xf32>
    %305 = tpu.matmul %304, %303, %cst_196 {dimension_numbers = #tpu.dot_dimension_numbers<[1], [0], [0], [1], [0, 0, 1, 1], [], []>} : vector<36x16xbf16>, vector<16x32xbf16>, vector<36x32xf32> -> vector<36x32xf32>
    %306 = arith.truncf %305 : vector<36x32xf32> to vector<36x32xbf16>
    %cst_197 = arith.constant 0.000000e+00 : f32
    %307 = vector.broadcast %cst_197 : f32 to vector<4x64xf32>
    %308 = vector.extract_strided_slice %306 {offsets = [0, 0], sizes = [4, 32], strides = [1, 1]} : vector<36x32xbf16> to vector<4x32xbf16>
    %c0_198 = arith.constant 0 : index
    %c0_199 = arith.constant 0 : index
    %309 = vector.load %arg9[%c0_198, %c0_199] : memref<288x64xbf16, #tpu.memory_space<vmem>>, vector<32x64xbf16>
    %cst_200 = arith.constant dense<0.000000e+00> : vector<4x64xf32>
    %310 = tpu.matmul %308, %309, %cst_200 {dimension_numbers = #tpu.dot_dimension_numbers<[1], [0], [0], [1], [0, 0, 1, 1], [], []>} : vector<4x32xbf16>, vector<32x64xbf16>, vector<4x64xf32> -> vector<4x64xf32>
    %311 = arith.addf %307, %310 : vector<4x64xf32>
    %312 = vector.extract_strided_slice %306 {offsets = [4, 0], sizes = [4, 32], strides = [1, 1]} : vector<36x32xbf16> to vector<4x32xbf16>
    %c32_201 = arith.constant 32 : index
    %c0_202 = arith.constant 0 : index
    %313 = vector.load %arg9[%c32_201, %c0_202] : memref<288x64xbf16, #tpu.memory_space<vmem>>, vector<32x64xbf16>
    %cst_203 = arith.constant dense<0.000000e+00> : vector<4x64xf32>
    %314 = tpu.matmul %312, %313, %cst_203 {dimension_numbers = #tpu.dot_dimension_numbers<[1], [0], [0], [1], [0, 0, 1, 1], [], []>} : vector<4x32xbf16>, vector<32x64xbf16>, vector<4x64xf32> -> vector<4x64xf32>
    %315 = arith.addf %311, %314 : vector<4x64xf32>
    %316 = vector.extract_strided_slice %306 {offsets = [8, 0], sizes = [4, 32], strides = [1, 1]} : vector<36x32xbf16> to vector<4x32xbf16>
    %c64_204 = arith.constant 64 : index
    %c0_205 = arith.constant 0 : index
    %317 = vector.load %arg9[%c64_204, %c0_205] : memref<288x64xbf16, #tpu.memory_space<vmem>>, vector<32x64xbf16>
    %cst_206 = arith.constant dense<0.000000e+00> : vector<4x64xf32>
    %318 = tpu.matmul %316, %317, %cst_206 {dimension_numbers = #tpu.dot_dimension_numbers<[1], [0], [0], [1], [0, 0, 1, 1], [], []>} : vector<4x32xbf16>, vector<32x64xbf16>, vector<4x64xf32> -> vector<4x64xf32>
    %319 = arith.addf %315, %318 : vector<4x64xf32>
    %320 = vector.extract_strided_slice %306 {offsets = [12, 0], sizes = [4, 32], strides = [1, 1]} : vector<36x32xbf16> to vector<4x32xbf16>
    %c96_207 = arith.constant 96 : index
    %c0_208 = arith.constant 0 : index
    %321 = vector.load %arg9[%c96_207, %c0_208] : memref<288x64xbf16, #tpu.memory_space<vmem>>, vector<32x64xbf16>
    %cst_209 = arith.constant dense<0.000000e+00> : vector<4x64xf32>
    %322 = tpu.matmul %320, %321, %cst_209 {dimension_numbers = #tpu.dot_dimension_numbers<[1], [0], [0], [1], [0, 0, 1, 1], [], []>} : vector<4x32xbf16>, vector<32x64xbf16>, vector<4x64xf32> -> vector<4x64xf32>
    %323 = arith.addf %319, %322 : vector<4x64xf32>
    %324 = vector.extract_strided_slice %306 {offsets = [16, 0], sizes = [4, 32], strides = [1, 1]} : vector<36x32xbf16> to vector<4x32xbf16>
    %c128_210 = arith.constant 128 : index
    %c0_211 = arith.constant 0 : index
    %325 = vector.load %arg9[%c128_210, %c0_211] : memref<288x64xbf16, #tpu.memory_space<vmem>>, vector<32x64xbf16>
    %cst_212 = arith.constant dense<0.000000e+00> : vector<4x64xf32>
    %326 = tpu.matmul %324, %325, %cst_212 {dimension_numbers = #tpu.dot_dimension_numbers<[1], [0], [0], [1], [0, 0, 1, 1], [], []>} : vector<4x32xbf16>, vector<32x64xbf16>, vector<4x64xf32> -> vector<4x64xf32>
    %327 = arith.addf %323, %326 : vector<4x64xf32>
    %328 = vector.extract_strided_slice %306 {offsets = [20, 0], sizes = [4, 32], strides = [1, 1]} : vector<36x32xbf16> to vector<4x32xbf16>
    %c160_213 = arith.constant 160 : index
    %c0_214 = arith.constant 0 : index
    %329 = vector.load %arg9[%c160_213, %c0_214] : memref<288x64xbf16, #tpu.memory_space<vmem>>, vector<32x64xbf16>
    %cst_215 = arith.constant dense<0.000000e+00> : vector<4x64xf32>
    %330 = tpu.matmul %328, %329, %cst_215 {dimension_numbers = #tpu.dot_dimension_numbers<[1], [0], [0], [1], [0, 0, 1, 1], [], []>} : vector<4x32xbf16>, vector<32x64xbf16>, vector<4x64xf32> -> vector<4x64xf32>
    %331 = arith.addf %327, %330 : vector<4x64xf32>
    %332 = vector.extract_strided_slice %306 {offsets = [24, 0], sizes = [4, 32], strides = [1, 1]} : vector<36x32xbf16> to vector<4x32xbf16>
    %c192_216 = arith.constant 192 : index
    %c0_217 = arith.constant 0 : index
    %333 = vector.load %arg9[%c192_216, %c0_217] : memref<288x64xbf16, #tpu.memory_space<vmem>>, vector<32x64xbf16>
    %cst_218 = arith.constant dense<0.000000e+00> : vector<4x64xf32>
    %334 = tpu.matmul %332, %333, %cst_218 {dimension_numbers = #tpu.dot_dimension_numbers<[1], [0], [0], [1], [0, 0, 1, 1], [], []>} : vector<4x32xbf16>, vector<32x64xbf16>, vector<4x64xf32> -> vector<4x64xf32>
    %335 = arith.addf %331, %334 : vector<4x64xf32>
    %336 = vector.extract_strided_slice %306 {offsets = [28, 0], sizes = [4, 32], strides = [1, 1]} : vector<36x32xbf16> to vector<4x32xbf16>
    %c224_219 = arith.constant 224 : index
    %c0_220 = arith.constant 0 : index
    %337 = vector.load %arg9[%c224_219, %c0_220] : memref<288x64xbf16, #tpu.memory_space<vmem>>, vector<32x64xbf16>
    %cst_221 = arith.constant dense<0.000000e+00> : vector<4x64xf32>
    %338 = tpu.matmul %336, %337, %cst_221 {dimension_numbers = #tpu.dot_dimension_numbers<[1], [0], [0], [1], [0, 0, 1, 1], [], []>} : vector<4x32xbf16>, vector<32x64xbf16>, vector<4x64xf32> -> vector<4x64xf32>
    %339 = arith.addf %335, %338 : vector<4x64xf32>
    %340 = vector.extract_strided_slice %306 {offsets = [32, 0], sizes = [4, 32], strides = [1, 1]} : vector<36x32xbf16> to vector<4x32xbf16>
    %c256_222 = arith.constant 256 : index
    %c0_223 = arith.constant 0 : index
    %341 = vector.load %arg9[%c256_222, %c0_223] : memref<288x64xbf16, #tpu.memory_space<vmem>>, vector<32x64xbf16>
    %cst_224 = arith.constant dense<0.000000e+00> : vector<4x64xf32>
    %342 = tpu.matmul %340, %341, %cst_224 {dimension_numbers = #tpu.dot_dimension_numbers<[1], [0], [0], [1], [0, 0, 1, 1], [], []>} : vector<4x32xbf16>, vector<32x64xbf16>, vector<4x64xf32> -> vector<4x64xf32>
    %343 = arith.addf %339, %342 : vector<4x64xf32>
    %c0_225 = arith.constant 0 : index
    %c0_226 = arith.constant 0 : index
    %344 = vector.load %arg10[%c0_225, %c0_226] : memref<1x64xf32, #tpu.memory_space<vmem>>, vector<1x64xf32>
    %345 = vector.broadcast %344 : vector<1x64xf32> to vector<4x64xf32>
    %346 = arith.addf %343, %345 : vector<4x64xf32>
    %cst_227 = arith.constant 0.00999999977 : f32
    %347 = vector.broadcast %cst_227 : f32 to vector<4x64xf32>
    %348 = arith.mulf %347, %346 : vector<4x64xf32>
    %349 = arith.maximumf %346, %348 : vector<4x64xf32>
    %350 = arith.truncf %349 : vector<4x64xf32> to vector<4x64xbf16>
    %c0_228 = arith.constant 0 : index
    %c0_229 = arith.constant 0 : index
    %351 = vector.load %arg11[%c0_228, %c0_229] : memref<16x4xbf16, #tpu.memory_space<vmem>>, vector<16x4xbf16>
    %cst_230 = arith.constant dense<0.000000e+00> : vector<16x64xf32>
    %352 = tpu.matmul %351, %350, %cst_230 {dimension_numbers = #tpu.dot_dimension_numbers<[1], [0], [0], [1], [0, 0, 1, 1], [], []>} : vector<16x4xbf16>, vector<4x64xbf16>, vector<16x64xf32> -> vector<16x64xf32>
    %353 = arith.truncf %352 : vector<16x64xf32> to vector<16x64xbf16>
    %cst_231 = arith.constant 0.000000e+00 : f32
    %354 = vector.broadcast %cst_231 : f32 to vector<1x128xf32>
    %355 = vector.extract_strided_slice %353 {offsets = [0, 0], sizes = [1, 64], strides = [1, 1]} : vector<16x64xbf16> to vector<1x64xbf16>
    %c0_232 = arith.constant 0 : index
    %c0_233 = arith.constant 0 : index
    %356 = vector.load %arg12[%c0_232, %c0_233] : memref<1024x128xbf16, #tpu.memory_space<vmem>>, vector<64x128xbf16>
    %cst_234 = arith.constant dense<0.000000e+00> : vector<1x128xf32>
    %357 = tpu.matmul %355, %356, %cst_234 {dimension_numbers = #tpu.dot_dimension_numbers<[1], [0], [0], [1], [0, 0, 1, 1], [], []>} : vector<1x64xbf16>, vector<64x128xbf16>, vector<1x128xf32> -> vector<1x128xf32>
    %358 = arith.addf %354, %357 : vector<1x128xf32>
    %359 = vector.extract_strided_slice %353 {offsets = [1, 0], sizes = [1, 64], strides = [1, 1]} : vector<16x64xbf16> to vector<1x64xbf16>
    %c64_235 = arith.constant 64 : index
    %c0_236 = arith.constant 0 : index
    %360 = vector.load %arg12[%c64_235, %c0_236] : memref<1024x128xbf16, #tpu.memory_space<vmem>>, vector<64x128xbf16>
    %cst_237 = arith.constant dense<0.000000e+00> : vector<1x128xf32>
    %361 = tpu.matmul %359, %360, %cst_237 {dimension_numbers = #tpu.dot_dimension_numbers<[1], [0], [0], [1], [0, 0, 1, 1], [], []>} : vector<1x64xbf16>, vector<64x128xbf16>, vector<1x128xf32> -> vector<1x128xf32>
    %362 = arith.addf %358, %361 : vector<1x128xf32>
    %363 = vector.extract_strided_slice %353 {offsets = [2, 0], sizes = [1, 64], strides = [1, 1]} : vector<16x64xbf16> to vector<1x64xbf16>
    %c128_238 = arith.constant 128 : index
    %c0_239 = arith.constant 0 : index
    %364 = vector.load %arg12[%c128_238, %c0_239] : memref<1024x128xbf16, #tpu.memory_space<vmem>>, vector<64x128xbf16>
    %cst_240 = arith.constant dense<0.000000e+00> : vector<1x128xf32>
    %365 = tpu.matmul %363, %364, %cst_240 {dimension_numbers = #tpu.dot_dimension_numbers<[1], [0], [0], [1], [0, 0, 1, 1], [], []>} : vector<1x64xbf16>, vector<64x128xbf16>, vector<1x128xf32> -> vector<1x128xf32>
    %366 = arith.addf %362, %365 : vector<1x128xf32>
    %367 = vector.extract_strided_slice %353 {offsets = [3, 0], sizes = [1, 64], strides = [1, 1]} : vector<16x64xbf16> to vector<1x64xbf16>
    %c192_241 = arith.constant 192 : index
    %c0_242 = arith.constant 0 : index
    %368 = vector.load %arg12[%c192_241, %c0_242] : memref<1024x128xbf16, #tpu.memory_space<vmem>>, vector<64x128xbf16>
    %cst_243 = arith.constant dense<0.000000e+00> : vector<1x128xf32>
    %369 = tpu.matmul %367, %368, %cst_243 {dimension_numbers = #tpu.dot_dimension_numbers<[1], [0], [0], [1], [0, 0, 1, 1], [], []>} : vector<1x64xbf16>, vector<64x128xbf16>, vector<1x128xf32> -> vector<1x128xf32>
    %370 = arith.addf %366, %369 : vector<1x128xf32>
    %371 = vector.extract_strided_slice %353 {offsets = [4, 0], sizes = [1, 64], strides = [1, 1]} : vector<16x64xbf16> to vector<1x64xbf16>
    %c256_244 = arith.constant 256 : index
    %c0_245 = arith.constant 0 : index
    %372 = vector.load %arg12[%c256_244, %c0_245] : memref<1024x128xbf16, #tpu.memory_space<vmem>>, vector<64x128xbf16>
    %cst_246 = arith.constant dense<0.000000e+00> : vector<1x128xf32>
    %373 = tpu.matmul %371, %372, %cst_246 {dimension_numbers = #tpu.dot_dimension_numbers<[1], [0], [0], [1], [0, 0, 1, 1], [], []>} : vector<1x64xbf16>, vector<64x128xbf16>, vector<1x128xf32> -> vector<1x128xf32>
    %374 = arith.addf %370, %373 : vector<1x128xf32>
    %375 = vector.extract_strided_slice %353 {offsets = [5, 0], sizes = [1, 64], strides = [1, 1]} : vector<16x64xbf16> to vector<1x64xbf16>
    %c320_247 = arith.constant 320 : index
    %c0_248 = arith.constant 0 : index
    %376 = vector.load %arg12[%c320_247, %c0_248] : memref<1024x128xbf16, #tpu.memory_space<vmem>>, vector<64x128xbf16>
    %cst_249 = arith.constant dense<0.000000e+00> : vector<1x128xf32>
    %377 = tpu.matmul %375, %376, %cst_249 {dimension_numbers = #tpu.dot_dimension_numbers<[1], [0], [0], [1], [0, 0, 1, 1], [], []>} : vector<1x64xbf16>, vector<64x128xbf16>, vector<1x128xf32> -> vector<1x128xf32>
    %378 = arith.addf %374, %377 : vector<1x128xf32>
    %379 = vector.extract_strided_slice %353 {offsets = [6, 0], sizes = [1, 64], strides = [1, 1]} : vector<16x64xbf16> to vector<1x64xbf16>
    %c384_250 = arith.constant 384 : index
    %c0_251 = arith.constant 0 : index
    %380 = vector.load %arg12[%c384_250, %c0_251] : memref<1024x128xbf16, #tpu.memory_space<vmem>>, vector<64x128xbf16>
    %cst_252 = arith.constant dense<0.000000e+00> : vector<1x128xf32>
    %381 = tpu.matmul %379, %380, %cst_252 {dimension_numbers = #tpu.dot_dimension_numbers<[1], [0], [0], [1], [0, 0, 1, 1], [], []>} : vector<1x64xbf16>, vector<64x128xbf16>, vector<1x128xf32> -> vector<1x128xf32>
    %382 = arith.addf %378, %381 : vector<1x128xf32>
    %383 = vector.extract_strided_slice %353 {offsets = [7, 0], sizes = [1, 64], strides = [1, 1]} : vector<16x64xbf16> to vector<1x64xbf16>
    %c448_253 = arith.constant 448 : index
    %c0_254 = arith.constant 0 : index
    %384 = vector.load %arg12[%c448_253, %c0_254] : memref<1024x128xbf16, #tpu.memory_space<vmem>>, vector<64x128xbf16>
    %cst_255 = arith.constant dense<0.000000e+00> : vector<1x128xf32>
    %385 = tpu.matmul %383, %384, %cst_255 {dimension_numbers = #tpu.dot_dimension_numbers<[1], [0], [0], [1], [0, 0, 1, 1], [], []>} : vector<1x64xbf16>, vector<64x128xbf16>, vector<1x128xf32> -> vector<1x128xf32>
    %386 = arith.addf %382, %385 : vector<1x128xf32>
    %387 = vector.extract_strided_slice %353 {offsets = [8, 0], sizes = [1, 64], strides = [1, 1]} : vector<16x64xbf16> to vector<1x64xbf16>
    %c512_256 = arith.constant 512 : index
    %c0_257 = arith.constant 0 : index
    %388 = vector.load %arg12[%c512_256, %c0_257] : memref<1024x128xbf16, #tpu.memory_space<vmem>>, vector<64x128xbf16>
    %cst_258 = arith.constant dense<0.000000e+00> : vector<1x128xf32>
    %389 = tpu.matmul %387, %388, %cst_258 {dimension_numbers = #tpu.dot_dimension_numbers<[1], [0], [0], [1], [0, 0, 1, 1], [], []>} : vector<1x64xbf16>, vector<64x128xbf16>, vector<1x128xf32> -> vector<1x128xf32>
    %390 = arith.addf %386, %389 : vector<1x128xf32>
    %391 = vector.extract_strided_slice %353 {offsets = [9, 0], sizes = [1, 64], strides = [1, 1]} : vector<16x64xbf16> to vector<1x64xbf16>
    %c576_259 = arith.constant 576 : index
    %c0_260 = arith.constant 0 : index
    %392 = vector.load %arg12[%c576_259, %c0_260] : memref<1024x128xbf16, #tpu.memory_space<vmem>>, vector<64x128xbf16>
    %cst_261 = arith.constant dense<0.000000e+00> : vector<1x128xf32>
    %393 = tpu.matmul %391, %392, %cst_261 {dimension_numbers = #tpu.dot_dimension_numbers<[1], [0], [0], [1], [0, 0, 1, 1], [], []>} : vector<1x64xbf16>, vector<64x128xbf16>, vector<1x128xf32> -> vector<1x128xf32>
    %394 = arith.addf %390, %393 : vector<1x128xf32>
    %395 = vector.extract_strided_slice %353 {offsets = [10, 0], sizes = [1, 64], strides = [1, 1]} : vector<16x64xbf16> to vector<1x64xbf16>
    %c640_262 = arith.constant 640 : index
    %c0_263 = arith.constant 0 : index
    %396 = vector.load %arg12[%c640_262, %c0_263] : memref<1024x128xbf16, #tpu.memory_space<vmem>>, vector<64x128xbf16>
    %cst_264 = arith.constant dense<0.000000e+00> : vector<1x128xf32>
    %397 = tpu.matmul %395, %396, %cst_264 {dimension_numbers = #tpu.dot_dimension_numbers<[1], [0], [0], [1], [0, 0, 1, 1], [], []>} : vector<1x64xbf16>, vector<64x128xbf16>, vector<1x128xf32> -> vector<1x128xf32>
    %398 = arith.addf %394, %397 : vector<1x128xf32>
    %399 = vector.extract_strided_slice %353 {offsets = [11, 0], sizes = [1, 64], strides = [1, 1]} : vector<16x64xbf16> to vector<1x64xbf16>
    %c704_265 = arith.constant 704 : index
    %c0_266 = arith.constant 0 : index
    %400 = vector.load %arg12[%c704_265, %c0_266] : memref<1024x128xbf16, #tpu.memory_space<vmem>>, vector<64x128xbf16>
    %cst_267 = arith.constant dense<0.000000e+00> : vector<1x128xf32>
    %401 = tpu.matmul %399, %400, %cst_267 {dimension_numbers = #tpu.dot_dimension_numbers<[1], [0], [0], [1], [0, 0, 1, 1], [], []>} : vector<1x64xbf16>, vector<64x128xbf16>, vector<1x128xf32> -> vector<1x128xf32>
    %402 = arith.addf %398, %401 : vector<1x128xf32>
    %403 = vector.extract_strided_slice %353 {offsets = [12, 0], sizes = [1, 64], strides = [1, 1]} : vector<16x64xbf16> to vector<1x64xbf16>
    %c768_268 = arith.constant 768 : index
    %c0_269 = arith.constant 0 : index
    %404 = vector.load %arg12[%c768_268, %c0_269] : memref<1024x128xbf16, #tpu.memory_space<vmem>>, vector<64x128xbf16>
    %cst_270 = arith.constant dense<0.000000e+00> : vector<1x128xf32>
    %405 = tpu.matmul %403, %404, %cst_270 {dimension_numbers = #tpu.dot_dimension_numbers<[1], [0], [0], [1], [0, 0, 1, 1], [], []>} : vector<1x64xbf16>, vector<64x128xbf16>, vector<1x128xf32> -> vector<1x128xf32>
    %406 = arith.addf %402, %405 : vector<1x128xf32>
    %407 = vector.extract_strided_slice %353 {offsets = [13, 0], sizes = [1, 64], strides = [1, 1]} : vector<16x64xbf16> to vector<1x64xbf16>
    %c832_271 = arith.constant 832 : index
    %c0_272 = arith.constant 0 : index
    %408 = vector.load %arg12[%c832_271, %c0_272] : memref<1024x128xbf16, #tpu.memory_space<vmem>>, vector<64x128xbf16>
    %cst_273 = arith.constant dense<0.000000e+00> : vector<1x128xf32>
    %409 = tpu.matmul %407, %408, %cst_273 {dimension_numbers = #tpu.dot_dimension_numbers<[1], [0], [0], [1], [0, 0, 1, 1], [], []>} : vector<1x64xbf16>, vector<64x128xbf16>, vector<1x128xf32> -> vector<1x128xf32>
    %410 = arith.addf %406, %409 : vector<1x128xf32>
    %411 = vector.extract_strided_slice %353 {offsets = [14, 0], sizes = [1, 64], strides = [1, 1]} : vector<16x64xbf16> to vector<1x64xbf16>
    %c896_274 = arith.constant 896 : index
    %c0_275 = arith.constant 0 : index
    %412 = vector.load %arg12[%c896_274, %c0_275] : memref<1024x128xbf16, #tpu.memory_space<vmem>>, vector<64x128xbf16>
    %cst_276 = arith.constant dense<0.000000e+00> : vector<1x128xf32>
    %413 = tpu.matmul %411, %412, %cst_276 {dimension_numbers = #tpu.dot_dimension_numbers<[1], [0], [0], [1], [0, 0, 1, 1], [], []>} : vector<1x64xbf16>, vector<64x128xbf16>, vector<1x128xf32> -> vector<1x128xf32>
    %414 = arith.addf %410, %413 : vector<1x128xf32>
    %415 = vector.extract_strided_slice %353 {offsets = [15, 0], sizes = [1, 64], strides = [1, 1]} : vector<16x64xbf16> to vector<1x64xbf16>
    %c960_277 = arith.constant 960 : index
    %c0_278 = arith.constant 0 : index
    %416 = vector.load %arg12[%c960_277, %c0_278] : memref<1024x128xbf16, #tpu.memory_space<vmem>>, vector<64x128xbf16>
    %cst_279 = arith.constant dense<0.000000e+00> : vector<1x128xf32>
    %417 = tpu.matmul %415, %416, %cst_279 {dimension_numbers = #tpu.dot_dimension_numbers<[1], [0], [0], [1], [0, 0, 1, 1], [], []>} : vector<1x64xbf16>, vector<64x128xbf16>, vector<1x128xf32> -> vector<1x128xf32>
    %418 = arith.addf %414, %417 : vector<1x128xf32>
    %c0_280 = arith.constant 0 : index
    %c0_281 = arith.constant 0 : index
    %419 = vector.load %arg13[%c0_280, %c0_281] : memref<1x128xf32, #tpu.memory_space<vmem>>, vector<1x128xf32>
    %420 = arith.addf %418, %419 : vector<1x128xf32>
    %cst_282 = arith.constant 0.00999999977 : f32
    %421 = vector.broadcast %cst_282 : f32 to vector<1x128xf32>
    %422 = arith.mulf %421, %420 : vector<1x128xf32>
    %423 = arith.maximumf %420, %422 : vector<1x128xf32>
    %424 = arith.truncf %423 : vector<1x128xf32> to vector<1x128xbf16>
    %c1_283 = arith.constant 1 : index
    %c0_284 = arith.constant 0 : index
    %425 = vector.load %arg1[%c1_283, %c0_284] : memref<2x8xf32, #tpu.memory_space<vmem>>, vector<1x8xf32>
    %426 = arith.truncf %425 : vector<1x8xf32> to vector<1x8xbf16>
    %c0_285 = arith.constant 0 : index
    %c0_286 = arith.constant 0 : index
    %427 = vector.load %arg14[%c0_285, %c0_286] : memref<128x128xbf16, #tpu.memory_space<vmem>>, vector<128x128xbf16>
    %cst_287 = arith.constant dense<0.000000e+00> : vector<1x128xf32>
    %428 = tpu.matmul %424, %427, %cst_287 {dimension_numbers = #tpu.dot_dimension_numbers<[1], [0], [0], [1], [0, 0, 1, 1], [], []>} : vector<1x128xbf16>, vector<128x128xbf16>, vector<1x128xf32> -> vector<1x128xf32>
    %c0_288 = arith.constant 0 : index
    %c0_289 = arith.constant 0 : index
    %429 = vector.load %arg15[%c0_288, %c0_289] : memref<8x128xbf16, #tpu.memory_space<vmem>>, vector<8x128xbf16>
    %cst_290 = arith.constant dense<0.000000e+00> : vector<1x128xf32>
    %430 = tpu.matmul %426, %429, %cst_290 {dimension_numbers = #tpu.dot_dimension_numbers<[1], [0], [0], [1], [0, 0, 1, 1], [], []>} : vector<1x8xbf16>, vector<8x128xbf16>, vector<1x128xf32> -> vector<1x128xf32>
    %431 = arith.addf %428, %430 : vector<1x128xf32>
    %c0_291 = arith.constant 0 : index
    %c0_292 = arith.constant 0 : index
    %432 = vector.load %arg17[%c0_291, %c0_292] : memref<1x128xf32, #tpu.memory_space<vmem>>, vector<1x128xf32>
    %433 = arith.addf %431, %432 : vector<1x128xf32>
    %c4 = arith.constant 4 : index
    %c0_293 = arith.constant 0 : index
    %434 = vector.load %arg2[%c4, %c0_293] : memref<8x8xf32, #tpu.memory_space<vmem>>, vector<4x8xf32>
    %435 = arith.truncf %434 : vector<4x8xf32> to vector<4x8xbf16>
    %c0_294 = arith.constant 0 : index
    %c0_295 = arith.constant 0 : index
    %436 = vector.load %arg16[%c0_294, %c0_295] : memref<8x128xbf16, #tpu.memory_space<vmem>>, vector<8x128xbf16>
    %cst_296 = arith.constant dense<0.000000e+00> : vector<4x128xf32>
    %437 = tpu.matmul %435, %436, %cst_296 {dimension_numbers = #tpu.dot_dimension_numbers<[1], [0], [0], [1], [0, 0, 1, 1], [], []>} : vector<4x8xbf16>, vector<8x128xbf16>, vector<4x128xf32> -> vector<4x128xf32>
    %438 = vector.broadcast %433 : vector<1x128xf32> to vector<4x128xf32>
    %439 = arith.addf %437, %438 : vector<4x128xf32>
    %cst_297 = arith.constant 0.00999999977 : f32
    %440 = vector.broadcast %cst_297 : f32 to vector<4x128xf32>
    %441 = arith.mulf %440, %439 : vector<4x128xf32>
    %442 = arith.maximumf %439, %441 : vector<4x128xf32>
    %443 = arith.truncf %442 : vector<4x128xf32> to vector<4x128xbf16>
    %c0_298 = arith.constant 0 : index
    %c0_299 = arith.constant 0 : index
    %444 = vector.load %arg18[%c0_298, %c0_299] : memref<128x128xbf16, #tpu.memory_space<vmem>>, vector<128x128xbf16>
    %cst_300 = arith.constant dense<0.000000e+00> : vector<4x128xf32>
    %445 = tpu.matmul %443, %444, %cst_300 {dimension_numbers = #tpu.dot_dimension_numbers<[1], [0], [0], [1], [0, 0, 1, 1], [], []>} : vector<4x128xbf16>, vector<128x128xbf16>, vector<4x128xf32> -> vector<4x128xf32>
    %c0_301 = arith.constant 0 : index
    %c0_302 = arith.constant 0 : index
    %446 = vector.load %arg19[%c0_301, %c0_302] : memref<1x128xf32, #tpu.memory_space<vmem>>, vector<1x128xf32>
    %447 = vector.broadcast %446 : vector<1x128xf32> to vector<4x128xf32>
    %448 = arith.addf %445, %447 : vector<4x128xf32>
    %cst_303 = arith.constant 0.00999999977 : f32
    %449 = vector.broadcast %cst_303 : f32 to vector<4x128xf32>
    %450 = arith.mulf %449, %448 : vector<4x128xf32>
    %451 = arith.maximumf %448, %450 : vector<4x128xf32>
    %452 = arith.truncf %451 : vector<4x128xf32> to vector<4x128xbf16>
    %c0_304 = arith.constant 0 : index
    %c0_305 = arith.constant 0 : index
    %453 = vector.load %arg20[%c0_304, %c0_305] : memref<128x128xbf16, #tpu.memory_space<vmem>>, vector<128x128xbf16>
    %cst_306 = arith.constant dense<0.000000e+00> : vector<4x128xf32>
    %454 = tpu.matmul %452, %453, %cst_306 {dimension_numbers = #tpu.dot_dimension_numbers<[1], [0], [0], [1], [0, 0, 1, 1], [], []>} : vector<4x128xbf16>, vector<128x128xbf16>, vector<4x128xf32> -> vector<4x128xf32>
    %c0_307 = arith.constant 0 : index
    %c0_308 = arith.constant 0 : index
    %455 = vector.load %arg21[%c0_307, %c0_308] : memref<1x128xf32, #tpu.memory_space<vmem>>, vector<1x128xf32>
    %456 = vector.broadcast %455 : vector<1x128xf32> to vector<4x128xf32>
    %457 = arith.addf %454, %456 : vector<4x128xf32>
    %cst_309 = arith.constant 0.00999999977 : f32
    %458 = vector.broadcast %cst_309 : f32 to vector<4x128xf32>
    %459 = arith.mulf %458, %457 : vector<4x128xf32>
    %460 = arith.maximumf %457, %459 : vector<4x128xf32>
    %461 = arith.truncf %460 : vector<4x128xf32> to vector<4x128xbf16>
    %c0_310 = arith.constant 0 : index
    %c0_311 = arith.constant 0 : index
    %462 = vector.load %arg22[%c0_310, %c0_311] : memref<128x256xbf16, #tpu.memory_space<vmem>>, vector<128x256xbf16>
    %cst_312 = arith.constant dense<0.000000e+00> : vector<4x256xf32>
    %463 = tpu.matmul %461, %462, %cst_312 {dimension_numbers = #tpu.dot_dimension_numbers<[1], [0], [0], [1], [0, 0, 1, 1], [], []>} : vector<4x128xbf16>, vector<128x256xbf16>, vector<4x256xf32> -> vector<4x256xf32>
    %c0_313 = arith.constant 0 : index
    %c0_314 = arith.constant 0 : index
    %464 = vector.load %arg23[%c0_313, %c0_314] : memref<1x256xf32, #tpu.memory_space<vmem>>, vector<1x256xf32>
    %465 = vector.broadcast %464 : vector<1x256xf32> to vector<4x256xf32>
    %466 = arith.addf %463, %465 : vector<4x256xf32>
    %cst_315 = arith.constant 0.00999999977 : f32
    %467 = vector.broadcast %cst_315 : f32 to vector<4x256xf32>
    %468 = arith.mulf %467, %466 : vector<4x256xf32>
    %469 = arith.maximumf %466, %468 : vector<4x256xf32>
    %c0_316 = arith.constant 0 : index
    %c0_317 = arith.constant 0 : index
    %470 = vector.load %arg24[%c0_316, %c0_317] : memref<1x256xbf16, #tpu.memory_space<vmem>>, vector<1x256xbf16>
    %471 = arith.extf %470 : vector<1x256xbf16> to vector<1x256xf32>
    %472 = vector.broadcast %471 : vector<1x256xf32> to vector<4x256xf32>
    %473 = arith.mulf %469, %472 : vector<4x256xf32>
    %cst_318 = arith.constant dense<0.000000e+00> : vector<4xf32>
    %474 = vector.multi_reduction <add>, %473, %cst_318 [1] : vector<4x256xf32> to vector<4xf32>
    %475 = vector.shape_cast %474 : vector<4xf32> to vector<4x1xf32>
    %c0_319 = arith.constant 0 : index
    %c0_320 = arith.constant 0 : index
    %476 = vector.load %arg25[%c0_319, %c0_320] : memref<1x1xf32, #tpu.memory_space<vmem>>, vector<1x1xf32>
    %477 = vector.broadcast %476 : vector<1x1xf32> to vector<4x1xf32>
    %478 = arith.addf %475, %477 : vector<4x1xf32>
    %cst_321 = arith.constant -3.000000e+01 : f32
    %cst_322 = arith.constant 3.000000e+01 : f32
    %479 = vector.broadcast %cst_321 : f32 to vector<4x1xf32>
    %480 = arith.maximumf %479, %478 : vector<4x1xf32>
    %481 = vector.broadcast %cst_322 : f32 to vector<4x1xf32>
    %482 = arith.minimumf %481, %480 : vector<4x1xf32>
    %cst_323 = arith.constant 0.000000e+00 : f32
    %483 = vector.broadcast %cst_323 : f32 to vector<4x1xf32>
    %484 = arith.subf %483, %482 : vector<4x1xf32>
    %485 = math.exp %484 : vector<4x1xf32>
    %cst_324 = arith.constant 1.000000e+00 : f32
    %486 = vector.broadcast %cst_324 : f32 to vector<4x1xf32>
    %487 = arith.addf %486, %485 : vector<4x1xf32>
    %488 = tpu.reciprocal %487 {approx = true} : vector<4x1xf32> -> vector<4x1xf32>
    %c4_325 = arith.constant 4 : index
    %c0_326 = arith.constant 0 : index
    %489 = vector.load %arg26[%c4_325, %c0_326] : memref<8x1xf32, #tpu.memory_space<vmem>>, vector<4x1xf32>
    tpu.vector_store %arg26[%c4_325, %c0_326], %488 {strides = array<i32>} : memref<8x1xf32, #tpu.memory_space<vmem>>, vector<4x1xf32>,
    return
  }
}

</mosaic_0001>

<llo_original>
// kernel: col_checker_forward.1
$region0: #{col_checker_forward.1}
  #allocation0 [shape = 'u32[]', space=smem, size = 0x4, offset = 0x4, fixed_abs, tag = 'smem constant byte address 0x4 - core index']
  #allocation1 [shape = 'u32[144,128]{1,0:T(1,128)}', space=vmem, size = 0x12000, scoped, tag = 'internal scratch']
  #allocation2 [shape = 'f32[1,1]{1,0:T(1,128)S(1)}', space=vmem, size = 0x200, scoped, tag = 'scoped memory for col_checker_forward.1']
  %s0 = inlined_call_operand.vmem [shape: f32[2,64,16], index: 0, kind: input, shape index: {}]
  %s1 = inlined_call_operand.vmem [shape: f32[2,8], index: 1, kind: input, shape index: {}]
  %s2 = inlined_call_operand.vmem [shape: f32[8,8], index: 2, kind: input, shape index: {}]
  %s3 = inlined_call_operand.vmem [shape: bf16[16,16], index: 3, kind: input, shape index: {}]
  %s4 = inlined_call_operand.vmem [shape: f32[1,16], index: 4, kind: input, shape index: {}]
  %s5 = inlined_call_operand.vmem [shape: bf16[144,64], index: 5, kind: input, shape index: {}]
  %s6 = inlined_call_operand.vmem [shape: bf16[144,32], index: 6, kind: input, shape index: {}]
  %s7 = inlined_call_operand.vmem [shape: f32[1,32], index: 7, kind: input, shape index: {}]
  %s8 = inlined_call_operand.vmem [shape: bf16[36,16], index: 8, kind: input, shape index: {}]
  %s9 = inlined_call_operand.vmem [shape: bf16[288,64], index: 9, kind: input, shape index: {}]
  %s10 = inlined_call_operand.vmem [shape: f32[1,64], index: 10, kind: input, shape index: {}]
  %s11 = inlined_call_operand.vmem [shape: bf16[16,4], index: 11, kind: input, shape index: {}]
  %s12 = inlined_call_operand.vmem [shape: bf16[1024,128], index: 12, kind: input, shape index: {}]
  %s13 = inlined_call_operand.vmem [shape: f32[1,128], index: 13, kind: input, shape index: {}]
  %s14 = inlined_call_operand.vmem [shape: bf16[128,128], index: 14, kind: input, shape index: {}]
  %s15 = inlined_call_operand.vmem [shape: bf16[8,128], index: 15, kind: input, shape index: {}]
  %s16 = inlined_call_operand.vmem [shape: bf16[8,128], index: 16, kind: input, shape index: {}]
  %s17 = inlined_call_operand.vmem [shape: f32[1,128], index: 17, kind: input, shape index: {}]
  %s18 = inlined_call_operand.vmem [shape: bf16[128,128], index: 18, kind: input, shape index: {}]
  %s19 = inlined_call_operand.vmem [shape: f32[1,128], index: 19, kind: input, shape index: {}]
  %s20 = inlined_call_operand.vmem [shape: bf16[128,128], index: 20, kind: input, shape index: {}]
  %s21 = inlined_call_operand.vmem [shape: f32[1,128], index: 21, kind: input, shape index: {}]
  %s22 = inlined_call_operand.vmem [shape: bf16[128,256], index: 22, kind: input, shape index: {}]
  %s23 = inlined_call_operand.vmem [shape: f32[1,256], index: 23, kind: input, shape index: {}]
  %s24 = inlined_call_operand.vmem [shape: bf16[1,256], index: 24, kind: input, shape index: {}]
  %s25 = inlined_call_operand.<no memory space> [shape: f32[1,1], index: 25, kind: input, shape index: {}]
  %s26 = inlined_call_operand.vmem [shape: f32[8,1], index: 26, kind: output, shape index: {}]
  %s27 = sld [smem:[#allocation0]]
  $region114: #{col_checker_forward.1} parent=0
    _
  %s29 = ssub.s32 1, %s27
  %s30 = scalar_select 0, %s29, %s27
  %v31 = vstv %s25
  %32 = vst [vmem:[#allocation2] sm:$0x1] %v31
  // Predicated region
  $region2: #{col_checker_forward.1} parent=0 // pred_check
    _
  $region3: #{col_checker_forward.1} parent=0 // pred_check_branch
    %34 = sbr.rel (0) target = $region5
  $region4: #{col_checker_forward.1} parent=0 // pred_region
    _
  $region5: #{col_checker_forward.1} parent=0 // pred_fallthru
    _
  // Predicated region
  $region6: #{col_checker_forward.1} parent=0 // pred_check
    _
  $region7: #{col_checker_forward.1} parent=0 // pred_check_branch
    %36 = sbr.rel (0) target = $region9
  $region8: #{col_checker_forward.1} parent=0 // pred_region
    _
  $region9: #{col_checker_forward.1} parent=0 // pred_fallthru
    _
  // Predicated region
  $region10: #{col_checker_forward.1} parent=0 // pred_check
    _
  $region11: #{col_checker_forward.1} parent=0 // pred_check_branch
    %38 = sbr.rel (0) target = $region13
  $region12: #{col_checker_forward.1} parent=0 // pred_region
    _
  $region13: #{col_checker_forward.1} parent=0 // pred_fallthru
    _
  // Predicated region
  $region14: #{col_checker_forward.1} parent=0 // pred_check
    _
  $region15: #{col_checker_forward.1} parent=0 // pred_check_branch
    %40 = sbr.rel (0) target = $region17
  $region16: #{col_checker_forward.1} parent=0 // pred_region
    _
  $region17: #{col_checker_forward.1} parent=0 // pred_fallthru
    _
  // Predicated region
  $region18: #{col_checker_forward.1} parent=0 // pred_check
    _
  $region19: #{col_checker_forward.1} parent=0 // pred_check_branch
    %42 = sbr.rel (0) target = $region21
  $region20: #{col_checker_forward.1} parent=0 // pred_region
    _
  $region21: #{col_checker_forward.1} parent=0 // pred_fallthru
    _
  // Predicated region
  $region22: #{col_checker_forward.1} parent=0 // pred_check
    _
  $region23: #{col_checker_forward.1} parent=0 // pred_check_branch
    %44 = sbr.rel (0) target = $region25
  $region24: #{col_checker_forward.1} parent=0 // pred_region
    _
  $region25: #{col_checker_forward.1} parent=0 // pred_fallthru
    _
  // Predicated region
  $region26: #{col_checker_forward.1} parent=0 // pred_check
    _
  $region27: #{col_checker_forward.1} parent=0 // pred_check_branch
    %46 = sbr.rel (0) target = $region29
  $region28: #{col_checker_forward.1} parent=0 // pred_region
    _
  $region29: #{col_checker_forward.1} parent=0 // pred_fallthru
    _
  // Predicated region
  $region30: #{col_checker_forward.1} parent=0 // pred_check
    _
  $region31: #{col_checker_forward.1} parent=0 // pred_check_branch
    %48 = sbr.rel (0) target = $region33
  $region32: #{col_checker_forward.1} parent=0 // pred_region
    _
  $region33: #{col_checker_forward.1} parent=0 // pred_fallthru
    _
  // Predicated region
  $region34: #{col_checker_forward.1} parent=0 // pred_check
    _
  $region35: #{col_checker_forward.1} parent=0 // pred_check_branch
    %50 = sbr.rel (0) target = $region37
  $region36: #{col_checker_forward.1} parent=0 // pred_region
    _
  $region37: #{col_checker_forward.1} parent=0 // pred_fallthru
    _
  // Predicated region
  $region38: #{col_checker_forward.1} parent=0 // pred_check
    _
  $region39: #{col_checker_forward.1} parent=0 // pred_check_branch
    %52 = sbr.rel (0) target = $region41
  $region40: #{col_checker_forward.1} parent=0 // pred_region
    _
  $region41: #{col_checker_forward.1} parent=0 // pred_fallthru
    _
  // Predicated region
  $region42: #{col_checker_forward.1} parent=0 // pred_check
    _
  $region43: #{col_checker_forward.1} parent=0 // pred_check_branch
    %54 = sbr.rel (0) target = $region45
  $region44: #{col_checker_forward.1} parent=0 // pred_region
    _
  $region45: #{col_checker_forward.1} parent=0 // pred_fallthru
    _
  // Predicated region
  $region46: #{col_checker_forward.1} parent=0 // pred_check
    _
  $region47: #{col_checker_forward.1} parent=0 // pred_check_branch
    %56 = sbr.rel (0) target = $region49
  $region48: #{col_checker_forward.1} parent=0 // pred_region
    _
  $region49: #{col_checker_forward.1} parent=0 // pred_fallthru
    _
  // Predicated region
  $region50: #{col_checker_forward.1} parent=0 // pred_check
    _
  $region51: #{col_checker_forward.1} parent=0 // pred_check_branch
    %58 = sbr.rel (0) target = $region53
  $region52: #{col_checker_forward.1} parent=0 // pred_region
    _
  $region53: #{col_checker_forward.1} parent=0 // pred_fallthru
    _
  // Predicated region
  $region54: #{col_checker_forward.1} parent=0 // pred_check
    _
  $region55: #{col_checker_forward.1} parent=0 // pred_check_branch
    %60 = sbr.rel (0) target = $region57
  $region56: #{col_checker_forward.1} parent=0 // pred_region
    _
  $region57: #{col_checker_forward.1} parent=0 // pred_fallthru
    _
  // Predicated region
  $region58: #{col_checker_forward.1} parent=0 // pred_check
    _
  $region59: #{col_checker_forward.1} parent=0 // pred_check_branch
    %62 = sbr.rel (0) target = $region61
  $region60: #{col_checker_forward.1} parent=0 // pred_region
    _
  $region61: #{col_checker_forward.1} parent=0 // pred_fallthru
    _
  // Predicated region
  $region62: #{col_checker_forward.1} parent=0 // pred_check
    _
  $region63: #{col_checker_forward.1} parent=0 // pred_check_branch
    %64 = sbr.rel (0) target = $region65
  $region64: #{col_checker_forward.1} parent=0 // pred_region
    _
  $region65: #{col_checker_forward.1} parent=0 // pred_fallthru
    _
  // Predicated region
  $region66: #{col_checker_forward.1} parent=0 // pred_check
    _
  $region67: #{col_checker_forward.1} parent=0 // pred_check_branch
    %66 = sbr.rel (0) target = $region69
  $region68: #{col_checker_forward.1} parent=0 // pred_region
    _
  $region69: #{col_checker_forward.1} parent=0 // pred_fallthru
    _
  // Predicated region
  $region70: #{col_checker_forward.1} parent=0 // pred_check
    _
  $region71: #{col_checker_forward.1} parent=0 // pred_check_branch
    %68 = sbr.rel (0) target = $region73
  $region72: #{col_checker_forward.1} parent=0 // pred_region
    _
  $region73: #{col_checker_forward.1} parent=0 // pred_fallthru
    _
  // Predicated region
  $region74: #{col_checker_forward.1} parent=0 // pred_check
    _
  $region75: #{col_checker_forward.1} parent=0 // pred_check_branch
    %70 = sbr.rel (0) target = $region77
  $region76: #{col_checker_forward.1} parent=0 // pred_region
    _
  $region77: #{col_checker_forward.1} parent=0 // pred_fallthru
    _
  // Predicated region
  $region78: #{col_checker_forward.1} parent=0 // pred_check
    _
  $region79: #{col_checker_forward.1} parent=0 // pred_check_branch
    %72 = sbr.rel (0) target = $region81
  $region80: #{col_checker_forward.1} parent=0 // pred_region
    _
  $region81: #{col_checker_forward.1} parent=0 // pred_fallthru
    _
  // Predicated region
  $region82: #{col_checker_forward.1} parent=0 // pred_check
    _
  $region83: #{col_checker_forward.1} parent=0 // pred_check_branch
    %74 = sbr.rel (0) target = $region85
  $region84: #{col_checker_forward.1} parent=0 // pred_region
    _
  $region85: #{col_checker_forward.1} parent=0 // pred_fallthru
    _
  // Predicated region
  $region86: #{col_checker_forward.1} parent=0 // pred_check
    _
  $region87: #{col_checker_forward.1} parent=0 // pred_check_branch
    %76 = sbr.rel (0) target = $region89
  $region88: #{col_checker_forward.1} parent=0 // pred_region
    _
  $region89: #{col_checker_forward.1} parent=0 // pred_fallthru
    _
  // Predicated region
  $region90: #{col_checker_forward.1} parent=0 // pred_check
    _
  $region91: #{col_checker_forward.1} parent=0 // pred_check_branch
    %78 = sbr.rel (0) target = $region93
  $region92: #{col_checker_forward.1} parent=0 // pred_region
    _
  $region93: #{col_checker_forward.1} parent=0 // pred_fallthru
    _
  // Predicated region
  $region94: #{col_checker_forward.1} parent=0 // pred_check
    _
  $region95: #{col_checker_forward.1} parent=0 // pred_check_branch
    %80 = sbr.rel (0) target = $region97
  $region96: #{col_checker_forward.1} parent=0 // pred_region
    _
  $region97: #{col_checker_forward.1} parent=0 // pred_fallthru
    _
  // Predicated region
  $region98: #{col_checker_forward.1} parent=0 // pred_check
    _
  $region99: #{col_checker_forward.1} parent=0 // pred_check_branch
    %82 = sbr.rel (0) target = $region101
  $region100: #{col_checker_forward.1} parent=0 // pred_region
    _
  $region101: #{col_checker_forward.1} parent=0 // pred_fallthru
    _
  // Predicated region
  $region102: #{col_checker_forward.1} parent=0 // pred_check
    _
  $region103: #{col_checker_forward.1} parent=0 // pred_check_branch
    %84 = sbr.rel (0) target = $region105
  $region104: #{col_checker_forward.1} parent=0 // pred_region
    _
  $region105: #{col_checker_forward.1} parent=0 // pred_fallthru
    _
  %v86 = vld [vmem:[%s0] sm:$0xff]
  %v87 = vld [vmem:[%s0 + $0x8] sm:$0xff]
  %v88 = vld [vmem:[%s0 + $0x10] sm:$0xff]
  %v89 = vld [vmem:[%s0 + $0x18] sm:$0xff]
  %v90 = vld [vmem:[%s0 + $0x20] sm:$0xff]
  %v91 = vld [vmem:[%s0 + $0x28] sm:$0xff]
  %v92 = vld [vmem:[%s0 + $0x30] sm:$0xff]
  %v93 = vld [vmem:[%s0 + $0x38] sm:$0xff]
  %v94 = vpack.c.bf16 %v87, %v86
  %v95 = vpack.c.bf16 %v89, %v88
  %v96 = vpack.c.bf16 %v91, %v90
  %v97 = vpack.c.bf16 %v93, %v92
  %v98 = vld [vmem:[%s3] sm:$0xf]
  %v99 = vld [vmem:[%s3 + $0x4] sm:$0xf]
  %v100 = vld [vmem:[%s4] sm:$0x1]
  %v102 = vlaneseq
  %v103 = vshrl.u32 %v102, 7
  %v104 = vsub.s32 0, %v103
  %v105 = vrot.slane %v100, %v104
  %v109 = vunpack.c.l.b16 %v98
  %v110 = vunpack.c.l.b16 %v99
  %v111 = vpack.c.b16 %v110, %v109
  %vm113 = vcmask 130048
  %v115 = vsel %vm113, %v94, 0
  %v118 = vsel %vm113, %v95, 0
  %v121 = vsel %vm113, %v96, 0
  %v124 = vsel %vm113, %v97, 0
  %126 = vmatprep.subr.bf16.mxu0 0
  %127 = vmatpush1.bf16.msra.mxu0 %v111
  %128 = vmatprep.subr.bf16.mxu0 0
  %129 = vmatpush1.bf16.msra.mxu0 0
  %130 = vmatprep.subr.bf16.mxu0 0
  %131 = vmatpush1.bf16.msra.mxu0 0
  %132 = vmatprep.subr.bf16.mxu0 0
  %133 = vmatpush1.bf16.msra.mxu0 0
  %134 = vmatprep.subr.bf16.mxu0 0
  %135 = vmatpush1.bf16.msra.mxu0 0
  %136 = vmatprep.subr.bf16.mxu0 0
  %137 = vmatpush1.bf16.msra.mxu0 0
  %138 = vmatprep.subr.bf16.mxu0 0
  %139 = vmatpush1.bf16.msra.mxu0 0
  %140 = vmatprep.subr.bf16.mxu0 0
  %141 = vmatpush1.bf16.msra.mxu0 0
  %142 = vmatprep.subr.bf16.mxu0 0
  %143 = vmatpush1.bf16.msra.mxu0 0
  %144 = vmatprep.subr.bf16.mxu0 0
  %145 = vmatpush1.bf16.msra.mxu0 0
  %146 = vmatprep.subr.bf16.mxu0 0
  %147 = vmatpush1.bf16.msra.mxu0 0
  %148 = vmatprep.subr.bf16.mxu0 0
  %149 = vmatpush1.bf16.msra.mxu0 0
  %150 = vmatprep.subr.bf16.mxu0 0
  %151 = vmatpush1.bf16.msra.mxu0 0
  %152 = vmatprep.subr.bf16.mxu0 0
  %153 = vmatpush1.bf16.msra.mxu0 0
  %154 = vmatprep.subr.bf16.mxu0 0
  %155 = vmatpush1.bf16.msra.mxu0 0
  %156 = vmatprep.subr.bf16.mxu0 0
  %157 = vmatpush1.bf16.msra.mxu0 0
  %158 = vmatprep.mubr.bf16.mxu0 0
  %159 = vmatmul.mubr.bf16.gmra.mrb[0].mxu0 %v115
  %v160 = vpop.f32.mrb[0].mxu0
  %v161 = vadd.f32 %v105, %v160
  %v162 = vpop.f32.mrb[0].mxu0
  %v163 = vpop.f32.mrb[0].mxu0
  %v164 = vadd.f32 %v105, %v163
  %v165 = vpop.f32.mrb[0].mxu0
  %166 = vmatprep.mubr.bf16.mxu0 0
  %167 = vmatmul.mubr.bf16.gmra.mrb[0].mxu0 %v118
  %v168 = vpop.f32.mrb[0].mxu0
  %v169 = vadd.f32 %v105, %v168
  %v170 = vpop.f32.mrb[0].mxu0
  %v171 = vpop.f32.mrb[0].mxu0
  %v172 = vadd.f32 %v105, %v171
  %v173 = vpop.f32.mrb[0].mxu0
  %174 = vmatprep.mubr.bf16.mxu0 0
  %175 = vmatmul.mubr.bf16.gmra.mrb[0].mxu0 %v121
  %v176 = vpop.f32.mrb[0].mxu0
  %v177 = vadd.f32 %v105, %v176
  %v178 = vpop.f32.mrb[0].mxu0
  %v179 = vpop.f32.mrb[0].mxu0
  %v180 = vadd.f32 %v105, %v179
  %v181 = vpop.f32.mrb[0].mxu0
  %182 = vmatprep.mubr.bf16.mxu0 0
  %183 = vmatmul.mubr.bf16.gmra.mrb[0].mxu0 %v124
  %v184 = vpop.f32.mrb[0].mxu0
  %v185 = vadd.f32 %v105, %v184
  %v186 = vpop.f32.mrb[0].mxu0
  %v187 = vpop.f32.mrb[0].mxu0
  %v188 = vadd.f32 %v105, %v187
  %v189 = vpop.f32.mrb[0].mxu0
  %190 = vdwg.mxu0
  %v191 = vmul.f32 %v161, 0.01
  %v192 = vmul.f32 %v164, 0.01
  %v193 = vmul.f32 %v169, 0.01
  %v194 = vmul.f32 %v172, 0.01
  %v195 = vmul.f32 %v177, 0.01
  %v196 = vmul.f32 %v180, 0.01
  %v197 = vmul.f32 %v185, 0.01
  %v198 = vmul.f32 %v188, 0.01
  %v199 = vmax.f32 %v161, %v191
  %v200 = vmax.f32 %v164, %v192
  %v201 = vmax.f32 %v169, %v193
  %v202 = vmax.f32 %v172, %v194
  %v203 = vmax.f32 %v177, %v195
  %v204 = vmax.f32 %v180, %v196
  %v205 = vmax.f32 %v185, %v197
  %v206 = vmax.f32 %v188, %v198
  %v207 = vpack.c.bf16 %v200, %v199
  %v208 = vpack.c.bf16 %v202, %v201
  %v209 = vpack.c.bf16 %v204, %v203
  %v210 = vpack.c.bf16 %v206, %v205
  %v211 = vld [vmem:[%s5] sm:$0xf]
  %v212 = vld [vmem:[%s5 + $0x4] sm:$0xf]
  %v213 = vld [vmem:[%s5 + $0x8] sm:$0xf]
  %v214 = vld [vmem:[%s5 + $0xc] sm:$0xf]
  %v215 = vld [vmem:[%s5 + $0x10] sm:$0xf]
  %v216 = vld [vmem:[%s5 + $0x14] sm:$0xf]
  %v217 = vld [vmem:[%s5 + $0x18] sm:$0xf]
  %v218 = vld [vmem:[%s5 + $0x1c] sm:$0xf]
  %v219 = vld [vmem:[%s5 + $0x20] sm:$0xf]
  %v220 = vld [vmem:[%s5 + $0x24] sm:$0xf]
  %v221 = vld [vmem:[%s5 + $0x28] sm:$0xf]
  %v222 = vld [vmem:[%s5 + $0x2c] sm:$0xf]
  %v223 = vld [vmem:[%s5 + $0x30] sm:$0xf]
  %v224 = vld [vmem:[%s5 + $0x34] sm:$0xf]
  %v225 = vld [vmem:[%s5 + $0x38] sm:$0xf]
  %v226 = vld [vmem:[%s5 + $0x3c] sm:$0xf]
  %v227 = vld [vmem:[%s5 + $0x40] sm:$0xf]
  %v228 = vld [vmem:[%s5 + $0x44] sm:$0xf]
  %v247 = vunpack.c.l.b16 %v211
  %v248 = vunpack.c.l.b16 %v212
  %v249 = vunpack.c.l.b16 %v213
  %v250 = vunpack.c.l.b16 %v214
  %v251 = vunpack.c.l.b16 %v215
  %v252 = vunpack.c.l.b16 %v216
  %v253 = vunpack.c.l.b16 %v217
  %v254 = vunpack.c.l.b16 %v218
  %v255 = vunpack.c.l.b16 %v219
  %v256 = vunpack.c.l.b16 %v220
  %v257 = vunpack.c.l.b16 %v221
  %v258 = vunpack.c.l.b16 %v222
  %v259 = vunpack.c.l.b16 %v223
  %v260 = vunpack.c.l.b16 %v224
  %v261 = vunpack.c.l.b16 %v225
  %v262 = vunpack.c.l.b16 %v226
  %v263 = vunpack.c.l.b16 %v227
  %v264 = vunpack.c.l.b16 %v228
  %v265 = vpack.c.b16 %v248, %v247
  %v266 = vpack.c.b16 %v250, %v249
  %v267 = vpack.c.b16 %v252, %v251
  %v268 = vpack.c.b16 %v254, %v253
  %v269 = vpack.c.b16 %v256, %v255
  %v270 = vpack.c.b16 %v258, %v257
  %v271 = vpack.c.b16 %v260, %v259
  %v272 = vpack.c.b16 %v262, %v261
  %v273 = vpack.c.b16 %v264, %v263
  %vm274 = vcmask 523264
  %v276 = vsel %vm274, %v265, 0
  %v279 = vsel %vm274, %v266, 0
  %v282 = vsel %vm274, %v267, 0
  %v285 = vsel %vm274, %v268, 0
  %v288 = vsel %vm274, %v269, 0
  %v291 = vsel %vm274, %v270, 0
  %v294 = vsel %vm274, %v271, 0
  %v297 = vsel %vm274, %v272, 0
  %v300 = vsel %vm274, %v273, 0
  %302 = vmatprep.subr.bf16.mxu0 0
  %303 = vmatpush1.bf16.msra.mxu0 %v207
  %304 = vmatprep.subr.bf16.mxu0 0
  %305 = vmatpush1.bf16.msra.mxu0 %v208
  %306 = vmatprep.subr.bf16.mxu0 0
  %307 = vmatpush1.bf16.msra.mxu0 %v209
  %308 = vmatprep.subr.bf16.mxu0 0
  %309 = vmatpush1.bf16.msra.mxu0 %v210
  %310 = vmatprep.subr.bf16.mxu0 0
  %311 = vmatpush1.bf16.msra.mxu0 0
  %312 = vmatprep.subr.bf16.mxu0 0
  %313 = vmatpush1.bf16.msra.mxu0 0
  %314 = vmatprep.subr.bf16.mxu0 0
  %315 = vmatpush1.bf16.msra.mxu0 0
  %316 = vmatprep.subr.bf16.mxu0 0
  %317 = vmatpush1.bf16.msra.mxu0 0
  %318 = vmatprep.subr.bf16.mxu0 0
  %319 = vmatpush1.bf16.msra.mxu0 0
  %320 = vmatprep.subr.bf16.mxu0 0
  %321 = vmatpush1.bf16.msra.mxu0 0
  %322 = vmatprep.subr.bf16.mxu0 0
  %323 = vmatpush1.bf16.msra.mxu0 0
  %324 = vmatprep.subr.bf16.mxu0 0
  %325 = vmatpush1.bf16.msra.mxu0 0
  %326 = vmatprep.subr.bf16.mxu0 0
  %327 = vmatpush1.bf16.msra.mxu0 0
  %328 = vmatprep.subr.bf16.mxu0 0
  %329 = vmatpush1.bf16.msra.mxu0 0
  %330 = vmatprep.subr.bf16.mxu0 0
  %331 = vmatpush1.bf16.msra.mxu0 0
  %332 = vmatprep.subr.bf16.mxu0 0
  %333 = vmatpush1.bf16.msra.mxu0 0
  %334 = vmatprep.mubr.bf16.mxu0 0
  %335 = vmatmul.mubr.bf16.gmra.mrb[0].mxu0 %v276
  %v336 = vpop.f32.mrb[0].mxu0
  %v337 = vadd.f32 0.0, %v336
  %v338 = vpop.f32.mrb[0].mxu0
  %v339 = vpop.f32.mrb[0].mxu0
  %v340 = vadd.f32 0.0, %v339
  %v341 = vpop.f32.mrb[0].mxu0
  %342 = vmatprep.mubr.bf16.mxu0 0
  %343 = vmatmul.mubr.bf16.gmra.mrb[0].mxu0 %v279
  %v344 = vpop.f32.mrb[0].mxu0
  %v345 = vadd.f32 0.0, %v344
  %v346 = vpop.f32.mrb[0].mxu0
  %v347 = vpop.f32.mrb[0].mxu0
  %v348 = vadd.f32 0.0, %v347
  %v349 = vpop.f32.mrb[0].mxu0
  %350 = vmatprep.mubr.bf16.mxu0 0
  %351 = vmatmul.mubr.bf16.gmra.mrb[0].mxu0 %v282
  %v352 = vpop.f32.mrb[0].mxu0
  %v353 = vadd.f32 0.0, %v352
  %v354 = vpop.f32.mrb[0].mxu0
  %v355 = vpop.f32.mrb[0].mxu0
  %v356 = vadd.f32 0.0, %v355
  %v357 = vpop.f32.mrb[0].mxu0
  %358 = vmatprep.mubr.bf16.mxu0 0
  %359 = vmatmul.mubr.bf16.gmra.mrb[0].mxu0 %v285
  %v360 = vpop.f32.mrb[0].mxu0
  %v361 = vadd.f32 0.0, %v360
  %v362 = vpop.f32.mrb[0].mxu0
  %v363 = vpop.f32.mrb[0].mxu0
  %v364 = vadd.f32 0.0, %v363
  %v365 = vpop.f32.mrb[0].mxu0
  %366 = vmatprep.mubr.bf16.mxu0 0
  %367 = vmatmul.mubr.bf16.gmra.mrb[0].mxu0 %v288
  %v368 = vpop.f32.mrb[0].mxu0
  %v369 = vadd.f32 0.0, %v368
  %v370 = vpop.f32.mrb[0].mxu0
  %v371 = vpop.f32.mrb[0].mxu0
  %v372 = vadd.f32 0.0, %v371
  %v373 = vpop.f32.mrb[0].mxu0
  %374 = vmatprep.mubr.bf16.mxu0 0
  %375 = vmatmul.mubr.bf16.gmra.mrb[0].mxu0 %v291
  %v376 = vpop.f32.mrb[0].mxu0
  %v377 = vadd.f32 0.0, %v376
  %v378 = vpop.f32.mrb[0].mxu0
  %v379 = vpop.f32.mrb[0].mxu0
  %v380 = vadd.f32 0.0, %v379
  %v381 = vpop.f32.mrb[0].mxu0
  %382 = vmatprep.mubr.bf16.mxu0 0
  %383 = vmatmul.mubr.bf16.gmra.mrb[0].mxu0 %v294
  %v384 = vpop.f32.mrb[0].mxu0
  %v385 = vadd.f32 0.0, %v384
  %v386 = vpop.f32.mrb[0].mxu0
  %v387 = vpop.f32.mrb[0].mxu0
  %v388 = vadd.f32 0.0, %v387
  %v389 = vpop.f32.mrb[0].mxu0
  %390 = vmatprep.mubr.bf16.mxu0 0
  %391 = vmatmul.mubr.bf16.gmra.mrb[0].mxu0 %v297
  %v392 = vpop.f32.mrb[0].mxu0
  %v393 = vadd.f32 0.0, %v392
  %v394 = vpop.f32.mrb[0].mxu0
  %v395 = vpop.f32.mrb[0].mxu0
  %v396 = vadd.f32 0.0, %v395
  %v397 = vpop.f32.mrb[0].mxu0
  %398 = vmatprep.mubr.bf16.mxu0 0
  %399 = vmatmul.mubr.bf16.gmra.mrb[0].mxu0 %v300
  %v400 = vpop.f32.mrb[0].mxu0
  %v401 = vadd.f32 0.0, %v400
  %v402 = vpop.f32.mrb[0].mxu0
  %v403 = vpop.f32.mrb[0].mxu0
  %v404 = vadd.f32 0.0, %v403
  %v405 = vpop.f32.mrb[0].mxu0
  %406 = vdwg.mxu0
  %v407 = vpack.c.bf16 %v340, %v337
  %v408 = vpack.c.bf16 %v348, %v345
  %v409 = vpack.c.bf16 %v356, %v353
  %v410 = vpack.c.bf16 %v364, %v361
  %v411 = vpack.c.bf16 %v372, %v369
  %v412 = vpack.c.bf16 %v380, %v377
  %v413 = vpack.c.bf16 %v388, %v385
  %v414 = vpack.c.bf16 %v396, %v393
  %v415 = vpack.c.bf16 %v404, %v401
  %v416 = vld [vmem:[%s6] sm:$0xf]
  %v417 = vld [vmem:[%s6 + $0x4] sm:$0xf]
  %v418 = vld [vmem:[%s6 + $0x8] sm:$0xf]
  %v419 = vld [vmem:[%s6 + $0xc] sm:$0xf]
  %v422 = vunpack.c.l.b16 %v418
  %v423 = vunpack.c.l.b16 %v419
  %v424 = vpack.c.b16 %v423, %v422
  %v427 = vsel %vm113, %v408, 0
  %429 = vmatprep.subr.bf16.mxu0 0
  %430 = vmatpush1.bf16.msra.mxu0 %v424
  %431 = vmatprep.subr.bf16.mxu0 0
  %432 = vmatpush1.bf16.msra.mxu0 0
  %433 = vmatprep.subr.bf16.mxu0 0
  %434 = vmatpush1.bf16.msra.mxu0 0
  %435 = vmatprep.subr.bf16.mxu0 0
  %436 = vmatpush1.bf16.msra.mxu0 0
  %437 = vmatprep.subr.bf16.mxu0 0
  %438 = vmatpush1.bf16.msra.mxu0 0
  %439 = vmatprep.subr.bf16.mxu0 0
  %440 = vmatpush1.bf16.msra.mxu0 0
  %441 = vmatprep.subr.bf16.mxu0 0
  %442 = vmatpush1.bf16.msra.mxu0 0
  %443 = vmatprep.subr.bf16.mxu0 0
  %444 = vmatpush1.bf16.msra.mxu0 0
  %445 = vmatprep.subr.bf16.mxu0 0
  %446 = vmatpush1.bf16.msra.mxu0 0
  %447 = vmatprep.subr.bf16.mxu0 0
  %448 = vmatpush1.bf16.msra.mxu0 0
  %449 = vmatprep.subr.bf16.mxu0 0
  %450 = vmatpush1.bf16.msra.mxu0 0
  %451 = vmatprep.subr.bf16.mxu0 0
  %452 = vmatpush1.bf16.msra.mxu0 0
  %453 = vmatprep.subr.bf16.mxu0 0
  %454 = vmatpush1.bf16.msra.mxu0 0
  %455 = vmatprep.subr.bf16.mxu0 0
  %456 = vmatpush1.bf16.msra.mxu0 0
  %457 = vmatprep.subr.bf16.mxu0 0
  %458 = vmatpush1.bf16.msra.mxu0 0
  %459 = vmatprep.subr.bf16.mxu0 0
  %460 = vmatpush1.bf16.msra.mxu0 0
  %461 = vmatprep.mubr.bf16.mxu0 0
  %462 = vmatmul.mubr.bf16.gmra.mrb[0].mxu0 %v427
  %v463 = vpop.f32.mrb[0].mxu0
  %v464 = vadd.f32 0.0, %v463
  %v465 = vpop.f32.mrb[0].mxu0
  %v466 = vpop.f32.mrb[0].mxu0
  %v467 = vadd.f32 0.0, %v466
  %v468 = vpop.f32.mrb[0].mxu0
  %469 = vdwg.mxu0
  %v472 = vunpack.c.l.b16 %v416
  %v473 = vunpack.c.l.b16 %v417
  %v474 = vpack.c.b16 %v473, %v472
  %v477 = vsel %vm113, %v407, 0
  %479 = vmatprep.subr.bf16.mxu0 0
  %480 = vmatpush1.bf16.msra.mxu0 %v474
  %481 = vmatprep.subr.bf16.mxu0 0
  %482 = vmatpush1.bf16.msra.mxu0 0
  %483 = vmatprep.subr.bf16.mxu0 0
  %484 = vmatpush1.bf16.msra.mxu0 0
  %485 = vmatprep.subr.bf16.mxu0 0
  %486 = vmatpush1.bf16.msra.mxu0 0
  %487 = vmatprep.subr.bf16.mxu0 0
  %488 = vmatpush1.bf16.msra.mxu0 0
  %489 = vmatprep.subr.bf16.mxu0 0
  %490 = vmatpush1.bf16.msra.mxu0 0
  %491 = vmatprep.subr.bf16.mxu0 0
  %492 = vmatpush1.bf16.msra.mxu0 0
  %493 = vmatprep.subr.bf16.mxu0 0
  %494 = vmatpush1.bf16.msra.mxu0 0
  %495 = vmatprep.subr.bf16.mxu0 0
  %496 = vmatpush1.bf16.msra.mxu0 0
  %497 = vmatprep.subr.bf16.mxu0 0
  %498 = vmatpush1.bf16.msra.mxu0 0
  %499 = vmatprep.subr.bf16.mxu0 0
  %500 = vmatpush1.bf16.msra.mxu0 0
  %501 = vmatprep.subr.bf16.mxu0 0
  %502 = vmatpush1.bf16.msra.mxu0 0
  %503 = vmatprep.subr.bf16.mxu0 0
  %504 = vmatpush1.bf16.msra.mxu0 0
  %505 = vmatprep.subr.bf16.mxu0 0
  %506 = vmatpush1.bf16.msra.mxu0 0
  %507 = vmatprep.subr.bf16.mxu0 0
  %508 = vmatpush1.bf16.msra.mxu0 0
  %509 = vmatprep.subr.bf16.mxu0 0
  %510 = vmatpush1.bf16.msra.mxu0 0
  %511 = vmatprep.mubr.bf16.mxu0 0
  %512 = vmatmul.mubr.bf16.gmra.mrb[0].mxu0 %v477
  %v513 = vpop.f32.mrb[0].mxu0
  %v514 = vadd.f32 %v464, %v513
  %v515 = vpop.f32.mrb[0].mxu0
  %v516 = vpop.f32.mrb[0].mxu0
  %v517 = vadd.f32 %v467, %v516
  %v518 = vpop.f32.mrb[0].mxu0
  %519 = vdwg.mxu0
  %v520 = vld [vmem:[%s6 + $0x10] sm:$0xf]
  %v521 = vld [vmem:[%s6 + $0x14] sm:$0xf]
  %v524 = vunpack.c.l.b16 %v520
  %v525 = vunpack.c.l.b16 %v521
  %v526 = vpack.c.b16 %v525, %v524
  %v529 = vsel %vm113, %v409, 0
  %531 = vmatprep.subr.bf16.mxu0 0
  %532 = vmatpush1.bf16.msra.mxu0 %v526
  %533 = vmatprep.subr.bf16.mxu0 0
  %534 = vmatpush1.bf16.msra.mxu0 0
  %535 = vmatprep.subr.bf16.mxu0 0
  %536 = vmatpush1.bf16.msra.mxu0 0
  %537 = vmatprep.subr.bf16.mxu0 0
  %538 = vmatpush1.bf16.msra.mxu0 0
  %539 = vmatprep.subr.bf16.mxu0 0
  %540 = vmatpush1.bf16.msra.mxu0 0
  %541 = vmatprep.subr.bf16.mxu0 0
  %542 = vmatpush1.bf16.msra.mxu0 0
  %543 = vmatprep.subr.bf16.mxu0 0
  %544 = vmatpush1.bf16.msra.mxu0 0
  %545 = vmatprep.subr.bf16.mxu0 0
  %546 = vmatpush1.bf16.msra.mxu0 0
  %547 = vmatprep.subr.bf16.mxu0 0
  %548 = vmatpush1.bf16.msra.mxu0 0
  %549 = vmatprep.subr.bf16.mxu0 0
  %550 = vmatpush1.bf16.msra.mxu0 0
  %551 = vmatprep.subr.bf16.mxu0 0
  %552 = vmatpush1.bf16.msra.mxu0 0
  %553 = vmatprep.subr.bf16.mxu0 0
  %554 = vmatpush1.bf16.msra.mxu0 0
  %555 = vmatprep.subr.bf16.mxu0 0
  %556 = vmatpush1.bf16.msra.mxu0 0
  %557 = vmatprep.subr.bf16.mxu0 0
  %558 = vmatpush1.bf16.msra.mxu0 0
  %559 = vmatprep.subr.bf16.mxu0 0
  %560 = vmatpush1.bf16.msra.mxu0 0
  %561 = vmatprep.subr.bf16.mxu0 0
  %562 = vmatpush1.bf16.msra.mxu0 0
  %563 = vmatprep.mubr.bf16.mxu0 0
  %564 = vmatmul.mubr.bf16.gmra.mrb[0].mxu0 %v529
  %v565 = vpop.f32.mrb[0].mxu0
  %v566 = vadd.f32 0.0, %v565
  %v567 = vpop.f32.mrb[0].mxu0
  %v568 = vpop.f32.mrb[0].mxu0
  %v569 = vadd.f32 0.0, %v568
  %v570 = vpop.f32.mrb[0].mxu0
  %571 = vdwg.mxu0
  %v572 = vadd.f32 %v514, %v566
  %v573 = vadd.f32 %v517, %v569
  %v574 = vld [vmem:[%s6 + $0x18] sm:$0xf]
  %v575 = vld [vmem:[%s6 + $0x1c] sm:$0xf]
  %v578 = vunpack.c.l.b16 %v574
  %v579 = vunpack.c.l.b16 %v575
  %v580 = vpack.c.b16 %v579, %v578
  %v583 = vsel %vm113, %v410, 0
  %585 = vmatprep.subr.bf16.mxu0 0
  %586 = vmatpush1.bf16.msra.mxu0 %v580
  %587 = vmatprep.subr.bf16.mxu0 0
  %588 = vmatpush1.bf16.msra.mxu0 0
  %589 = vmatprep.subr.bf16.mxu0 0
  %590 = vmatpush1.bf16.msra.mxu0 0
  %591 = vmatprep.subr.bf16.mxu0 0
  %592 = vmatpush1.bf16.msra.mxu0 0
  %593 = vmatprep.subr.bf16.mxu0 0
  %594 = vmatpush1.bf16.msra.mxu0 0
  %595 = vmatprep.subr.bf16.mxu0 0
  %596 = vmatpush1.bf16.msra.mxu0 0
  %597 = vmatprep.subr.bf16.mxu0 0
  %598 = vmatpush1.bf16.msra.mxu0 0
  %599 = vmatprep.subr.bf16.mxu0 0
  %600 = vmatpush1.bf16.msra.mxu0 0
  %601 = vmatprep.subr.bf16.mxu0 0
  %602 = vmatpush1.bf16.msra.mxu0 0
  %603 = vmatprep.subr.bf16.mxu0 0
  %604 = vmatpush1.bf16.msra.mxu0 0
  %605 = vmatprep.subr.bf16.mxu0 0
  %606 = vmatpush1.bf16.msra.mxu0 0
  %607 = vmatprep.subr.bf16.mxu0 0
  %608 = vmatpush1.bf16.msra.mxu0 0
  %609 = vmatprep.subr.bf16.mxu0 0
  %610 = vmatpush1.bf16.msra.mxu0 0
  %611 = vmatprep.subr.bf16.mxu0 0
  %612 = vmatpush1.bf16.msra.mxu0 0
  %613 = vmatprep.subr.bf16.mxu0 0
  %614 = vmatpush1.bf16.msra.mxu0 0
  %615 = vmatprep.subr.bf16.mxu0 0
  %616 = vmatpush1.bf16.msra.mxu0 0
  %617 = vmatprep.mubr.bf16.mxu0 0
  %618 = vmatmul.mubr.bf16.gmra.mrb[0].mxu0 %v583
  %v619 = vpop.f32.mrb[0].mxu0
  %v620 = vadd.f32 0.0, %v619
  %v621 = vpop.f32.mrb[0].mxu0
  %v622 = vpop.f32.mrb[0].mxu0
  %v623 = vadd.f32 0.0, %v622
  %v624 = vpop.f32.mrb[0].mxu0
  %625 = vdwg.mxu0
  %v626 = vadd.f32 %v572, %v620
  %v627 = vadd.f32 %v573, %v623
  %v628 = vld [vmem:[%s6 + $0x20] sm:$0xf]
  %v629 = vld [vmem:[%s6 + $0x24] sm:$0xf]
  %v632 = vunpack.c.l.b16 %v628
  %v633 = vunpack.c.l.b16 %v629
  %v634 = vpack.c.b16 %v633, %v632
  %v637 = vsel %vm113, %v411, 0
  %639 = vmatprep.subr.bf16.mxu0 0
  %640 = vmatpush1.bf16.msra.mxu0 %v634
  %641 = vmatprep.subr.bf16.mxu0 0
  %642 = vmatpush1.bf16.msra.mxu0 0
  %643 = vmatprep.subr.bf16.mxu0 0
  %644 = vmatpush1.bf16.msra.mxu0 0
  %645 = vmatprep.subr.bf16.mxu0 0
  %646 = vmatpush1.bf16.msra.mxu0 0
  %647 = vmatprep.subr.bf16.mxu0 0
  %648 = vmatpush1.bf16.msra.mxu0 0
  %649 = vmatprep.subr.bf16.mxu0 0
  %650 = vmatpush1.bf16.msra.mxu0 0
  %651 = vmatprep.subr.bf16.mxu0 0
  %652 = vmatpush1.bf16.msra.mxu0 0
  %653 = vmatprep.subr.bf16.mxu0 0
  %654 = vmatpush1.bf16.msra.mxu0 0
  %655 = vmatprep.subr.bf16.mxu0 0
  %656 = vmatpush1.bf16.msra.mxu0 0
  %657 = vmatprep.subr.bf16.mxu0 0
  %658 = vmatpush1.bf16.msra.mxu0 0
  %659 = vmatprep.subr.bf16.mxu0 0
  %660 = vmatpush1.bf16.msra.mxu0 0
  %661 = vmatprep.subr.bf16.mxu0 0
  %662 = vmatpush1.bf16.msra.mxu0 0
  %663 = vmatprep.subr.bf16.mxu0 0
  %664 = vmatpush1.bf16.msra.mxu0 0
  %665 = vmatprep.subr.bf16.mxu0 0
  %666 = vmatpush1.bf16.msra.mxu0 0
  %667 = vmatprep.subr.bf16.mxu0 0
  %668 = vmatpush1.bf16.msra.mxu0 0
  %669 = vmatprep.subr.bf16.mxu0 0
  %670 = vmatpush1.bf16.msra.mxu0 0
  %671 = vmatprep.mubr.bf16.mxu0 0
  %672 = vmatmul.mubr.bf16.gmra.mrb[0].mxu0 %v637
  %v673 = vpop.f32.mrb[0].mxu0
  %v674 = vadd.f32 0.0, %v673
  %v675 = vpop.f32.mrb[0].mxu0
  %v676 = vpop.f32.mrb[0].mxu0
  %v677 = vadd.f32 0.0, %v676
  %v678 = vpop.f32.mrb[0].mxu0
  %679 = vdwg.mxu0
  %v680 = vadd.f32 %v626, %v674
  %v681 = vadd.f32 %v627, %v677
  %v682 = vld [vmem:[%s6 + $0x28] sm:$0xf]
  %v683 = vld [vmem:[%s6 + $0x2c] sm:$0xf]
  %v686 = vunpack.c.l.b16 %v682
  %v687 = vunpack.c.l.b16 %v683
  %v688 = vpack.c.b16 %v687, %v686
  %v691 = vsel %vm113, %v412, 0
  %693 = vmatprep.subr.bf16.mxu0 0
  %694 = vmatpush1.bf16.msra.mxu0 %v688
  %695 = vmatprep.subr.bf16.mxu0 0
  %696 = vmatpush1.bf16.msra.mxu0 0
  %697 = vmatprep.subr.bf16.mxu0 0
  %698 = vmatpush1.bf16.msra.mxu0 0
  %699 = vmatprep.subr.bf16.mxu0 0
  %700 = vmatpush1.bf16.msra.mxu0 0
  %701 = vmatprep.subr.bf16.mxu0 0
  %702 = vmatpush1.bf16.msra.mxu0 0
  %703 = vmatprep.subr.bf16.mxu0 0
  %704 = vmatpush1.bf16.msra.mxu0 0
  %705 = vmatprep.subr.bf16.mxu0 0
  %706 = vmatpush1.bf16.msra.mxu0 0
  %707 = vmatprep.subr.bf16.mxu0 0
  %708 = vmatpush1.bf16.msra.mxu0 0
  %709 = vmatprep.subr.bf16.mxu0 0
  %710 = vmatpush1.bf16.msra.mxu0 0
  %711 = vmatprep.subr.bf16.mxu0 0
  %712 = vmatpush1.bf16.msra.mxu0 0
  %713 = vmatprep.subr.bf16.mxu0 0
  %714 = vmatpush1.bf16.msra.mxu0 0
  %715 = vmatprep.subr.bf16.mxu0 0
  %716 = vmatpush1.bf16.msra.mxu0 0
  %717 = vmatprep.subr.bf16.mxu0 0
  %718 = vmatpush1.bf16.msra.mxu0 0
  %719 = vmatprep.subr.bf16.mxu0 0
  %720 = vmatpush1.bf16.msra.mxu0 0
  %721 = vmatprep.subr.bf16.mxu0 0
  %722 = vmatpush1.bf16.msra.mxu0 0
  %723 = vmatprep.subr.bf16.mxu0 0
  %724 = vmatpush1.bf16.msra.mxu0 0
  %725 = vmatprep.mubr.bf16.mxu0 0
  %726 = vmatmul.mubr.bf16.gmra.mrb[0].mxu0 %v691
  %v727 = vpop.f32.mrb[0].mxu0
  %v728 = vadd.f32 0.0, %v727
  %v729 = vpop.f32.mrb[0].mxu0
  %v730 = vpop.f32.mrb[0].mxu0
  %v731 = vadd.f32 0.0, %v730
  %v732 = vpop.f32.mrb[0].mxu0
  %733 = vdwg.mxu0
  %v734 = vadd.f32 %v680, %v728
  %v735 = vadd.f32 %v681, %v731
  %v736 = vld [vmem:[%s6 + $0x30] sm:$0xf]
  %v737 = vld [vmem:[%s6 + $0x34] sm:$0xf]
  %v740 = vunpack.c.l.b16 %v736
  %v741 = vunpack.c.l.b16 %v737
  %v742 = vpack.c.b16 %v741, %v740
  %v745 = vsel %vm113, %v413, 0
  %747 = vmatprep.subr.bf16.mxu0 0
  %748 = vmatpush1.bf16.msra.mxu0 %v742
  %749 = vmatprep.subr.bf16.mxu0 0
  %750 = vmatpush1.bf16.msra.mxu0 0
  %751 = vmatprep.subr.bf16.mxu0 0
  %752 = vmatpush1.bf16.msra.mxu0 0
  %753 = vmatprep.subr.bf16.mxu0 0
  %754 = vmatpush1.bf16.msra.mxu0 0
  %755 = vmatprep.subr.bf16.mxu0 0
  %756 = vmatpush1.bf16.msra.mxu0 0
  %757 = vmatprep.subr.bf16.mxu0 0
  %758 = vmatpush1.bf16.msra.mxu0 0
  %759 = vmatprep.subr.bf16.mxu0 0
  %760 = vmatpush1.bf16.msra.mxu0 0
  %761 = vmatprep.subr.bf16.mxu0 0
  %762 = vmatpush1.bf16.msra.mxu0 0
  %763 = vmatprep.subr.bf16.mxu0 0
  %764 = vmatpush1.bf16.msra.mxu0 0
  %765 = vmatprep.subr.bf16.mxu0 0
  %766 = vmatpush1.bf16.msra.mxu0 0
  %767 = vmatprep.subr.bf16.mxu0 0
  %768 = vmatpush1.bf16.msra.mxu0 0
  %769 = vmatprep.subr.bf16.mxu0 0
  %770 = vmatpush1.bf16.msra.mxu0 0
  %771 = vmatprep.subr.bf16.mxu0 0
  %772 = vmatpush1.bf16.msra.mxu0 0
  %773 = vmatprep.subr.bf16.mxu0 0
  %774 = vmatpush1.bf16.msra.mxu0 0
  %775 = vmatprep.subr.bf16.mxu0 0
  %776 = vmatpush1.bf16.msra.mxu0 0
  %777 = vmatprep.subr.bf16.mxu0 0
  %778 = vmatpush1.bf16.msra.mxu0 0
  %779 = vmatprep.mubr.bf16.mxu0 0
  %780 = vmatmul.mubr.bf16.gmra.mrb[0].mxu0 %v745
  %v781 = vpop.f32.mrb[0].mxu0
  %v782 = vadd.f32 0.0, %v781
  %v783 = vpop.f32.mrb[0].mxu0
  %v784 = vpop.f32.mrb[0].mxu0
  %v785 = vadd.f32 0.0, %v784
  %v786 = vpop.f32.mrb[0].mxu0
  %787 = vdwg.mxu0
  %v788 = vadd.f32 %v734, %v782
  %v789 = vadd.f32 %v735, %v785
  %v790 = vld [vmem:[%s6 + $0x38] sm:$0xf]
  %v791 = vld [vmem:[%s6 + $0x3c] sm:$0xf]
  %v794 = vunpack.c.l.b16 %v790
  %v795 = vunpack.c.l.b16 %v791
  %v796 = vpack.c.b16 %v795, %v794
  %v799 = vsel %vm113, %v414, 0
  %801 = vmatprep.subr.bf16.mxu0 0
  %802 = vmatpush1.bf16.msra.mxu0 %v796
  %803 = vmatprep.subr.bf16.mxu0 0
  %804 = vmatpush1.bf16.msra.mxu0 0
  %805 = vmatprep.subr.bf16.mxu0 0
  %806 = vmatpush1.bf16.msra.mxu0 0
  %807 = vmatprep.subr.bf16.mxu0 0
  %808 = vmatpush1.bf16.msra.mxu0 0
  %809 = vmatprep.subr.bf16.mxu0 0
  %810 = vmatpush1.bf16.msra.mxu0 0
  %811 = vmatprep.subr.bf16.mxu0 0
  %812 = vmatpush1.bf16.msra.mxu0 0
  %813 = vmatprep.subr.bf16.mxu0 0
  %814 = vmatpush1.bf16.msra.mxu0 0
  %815 = vmatprep.subr.bf16.mxu0 0
  %816 = vmatpush1.bf16.msra.mxu0 0
  %817 = vmatprep.subr.bf16.mxu0 0
  %818 = vmatpush1.bf16.msra.mxu0 0
  %819 = vmatprep.subr.bf16.mxu0 0
  %820 = vmatpush1.bf16.msra.mxu0 0
  %821 = vmatprep.subr.bf16.mxu0 0
  %822 = vmatpush1.bf16.msra.mxu0 0
  %823 = vmatprep.subr.bf16.mxu0 0
  %824 = vmatpush1.bf16.msra.mxu0 0
  %825 = vmatprep.subr.bf16.mxu0 0
  %826 = vmatpush1.bf16.msra.mxu0 0
  %827 = vmatprep.subr.bf16.mxu0 0
  %828 = vmatpush1.bf16.msra.mxu0 0
  %829 = vmatprep.subr.bf16.mxu0 0
  %830 = vmatpush1.bf16.msra.mxu0 0
  %831 = vmatprep.subr.bf16.mxu0 0
  %832 = vmatpush1.bf16.msra.mxu0 0
  %833 = vmatprep.mubr.bf16.mxu0 0
  %834 = vmatmul.mubr.bf16.gmra.mrb[0].mxu0 %v799
  %v835 = vpop.f32.mrb[0].mxu0
  %v836 = vadd.f32 0.0, %v835
  %v837 = vpop.f32.mrb[0].mxu0
  %v838 = vpop.f32.mrb[0].mxu0
  %v839 = vadd.f32 0.0, %v838
  %v840 = vpop.f32.mrb[0].mxu0
  %841 = vdwg.mxu0
  %v842 = vadd.f32 %v788, %v836
  %v843 = vadd.f32 %v789, %v839
  %v844 = vld [vmem:[%s6 + $0x40] sm:$0xf]
  %v845 = vld [vmem:[%s6 + $0x44] sm:$0xf]
  %v848 = vunpack.c.l.b16 %v844
  %v849 = vunpack.c.l.b16 %v845
  %v850 = vpack.c.b16 %v849, %v848
  %v853 = vsel %vm113, %v415, 0
  %855 = vmatprep.subr.bf16.mxu0 0
  %856 = vmatpush1.bf16.msra.mxu0 %v850
  %857 = vmatprep.subr.bf16.mxu0 0
  %858 = vmatpush1.bf16.msra.mxu0 0
  %859 = vmatprep.subr.bf16.mxu0 0
  %860 = vmatpush1.bf16.msra.mxu0 0
  %861 = vmatprep.subr.bf16.mxu0 0
  %862 = vmatpush1.bf16.msra.mxu0 0
  %863 = vmatprep.subr.bf16.mxu0 0
  %864 = vmatpush1.bf16.msra.mxu0 0
  %865 = vmatprep.subr.bf16.mxu0 0
  %866 = vmatpush1.bf16.msra.mxu0 0
  %867 = vmatprep.subr.bf16.mxu0 0
  %868 = vmatpush1.bf16.msra.mxu0 0
  %869 = vmatprep.subr.bf16.mxu0 0
  %870 = vmatpush1.bf16.msra.mxu0 0
  %871 = vmatprep.subr.bf16.mxu0 0
  %872 = vmatpush1.bf16.msra.mxu0 0
  %873 = vmatprep.subr.bf16.mxu0 0
  %874 = vmatpush1.bf16.msra.mxu0 0
  %875 = vmatprep.subr.bf16.mxu0 0
  %876 = vmatpush1.bf16.msra.mxu0 0
  %877 = vmatprep.subr.bf16.mxu0 0
  %878 = vmatpush1.bf16.msra.mxu0 0
  %879 = vmatprep.subr.bf16.mxu0 0
  %880 = vmatpush1.bf16.msra.mxu0 0
  %881 = vmatprep.subr.bf16.mxu0 0
  %882 = vmatpush1.bf16.msra.mxu0 0
  %883 = vmatprep.subr.bf16.mxu0 0
  %884 = vmatpush1.bf16.msra.mxu0 0
  %885 = vmatprep.subr.bf16.mxu0 0
  %886 = vmatpush1.bf16.msra.mxu0 0
  %887 = vmatprep.mubr.bf16.mxu0 0
  %888 = vmatmul.mubr.bf16.gmra.mrb[0].mxu0 %v853
  %v889 = vpop.f32.mrb[0].mxu0
  %v890 = vadd.f32 0.0, %v889
  %v891 = vpop.f32.mrb[0].mxu0
  %v892 = vpop.f32.mrb[0].mxu0
  %v893 = vadd.f32 0.0, %v892
  %v894 = vpop.f32.mrb[0].mxu0
  %895 = vdwg.mxu0
  %v896 = vadd.f32 %v842, %v890
  %v897 = vadd.f32 %v843, %v893
  %v898 = vld [vmem:[%s7] sm:$0x1]
  %v900 = vlaneseq
  %v901 = vshrl.u32 %v900, 7
  %v902 = vsub.s32 0, %v901
  %v903 = vrot.slane %v898, %v902
  %v905 = vadd.f32 %v896, %v903
  %v906 = vadd.f32 %v897, %v903
  %v907 = vmul.f32 %v905, 0.01
  %v908 = vmul.f32 %v906, 0.01
  %v909 = vmax.f32 %v905, %v907
  %v910 = vmax.f32 %v906, %v908
  %v911 = vpack.c.bf16 %v910, %v909
  %v912 = vld [vmem:[%s8] sm:$0xf]
  %v913 = vld [vmem:[%s8 + $0x4] sm:$0xf]
  %v914 = vld [vmem:[%s8 + $0x8] sm:$0xf]
  %v915 = vld [vmem:[%s8 + $0xc] sm:$0xf]
  %v916 = vld [vmem:[%s8 + $0x10] sm:$0x3]
  %v922 = vunpack.c.l.b16 %v912
  %v923 = vunpack.c.l.b16 %v913
  %v924 = vunpack.c.l.b16 %v914
  %v925 = vunpack.c.l.b16 %v915
  %v926 = vunpack.c.l.b16 %v916
  %v927 = vpack.c.b16 %v923, %v922
  %v928 = vpack.c.b16 %v925, %v924
  %v929 = vpack.c.b16 %v926, %v926
  %v931 = vsel %vm113, %v927, 0
  %v934 = vsel %vm113, %v928, 0
  %v937 = vsel %vm113, %v929, 0
  %939 = vmatprep.subr.bf16.mxu0 0
  %940 = vmatpush1.bf16.msra.mxu0 %v911
  %941 = vmatprep.subr.bf16.mxu0 0
  %942 = vmatpush1.bf16.msra.mxu0 0
  %943 = vmatprep.subr.bf16.mxu0 0
  %944 = vmatpush1.bf16.msra.mxu0 0
  %945 = vmatprep.subr.bf16.mxu0 0
  %946 = vmatpush1.bf16.msra.mxu0 0
  %947 = vmatprep.subr.bf16.mxu0 0
  %948 = vmatpush1.bf16.msra.mxu0 0
  %949 = vmatprep.subr.bf16.mxu0 0
  %950 = vmatpush1.bf16.msra.mxu0 0
  %951 = vmatprep.subr.bf16.mxu0 0
  %952 = vmatpush1.bf16.msra.mxu0 0
  %953 = vmatprep.subr.bf16.mxu0 0
  %954 = vmatpush1.bf16.msra.mxu0 0
  %955 = vmatprep.subr.bf16.mxu0 0
  %956 = vmatpush1.bf16.msra.mxu0 0
  %957 = vmatprep.subr.bf16.mxu0 0
  %958 = vmatpush1.bf16.msra.mxu0 0
  %959 = vmatprep.subr.bf16.mxu0 0
  %960 = vmatpush1.bf16.msra.mxu0 0
  %961 = vmatprep.subr.bf16.mxu0 0
  %962 = vmatpush1.bf16.msra.mxu0 0
  %963 = vmatprep.subr.bf16.mxu0 0
  %964 = vmatpush1.bf16.msra.mxu0 0
  %965 = vmatprep.subr.bf16.mxu0 0
  %966 = vmatpush1.bf16.msra.mxu0 0
  %967 = vmatprep.subr.bf16.mxu0 0
  %968 = vmatpush1.bf16.msra.mxu0 0
  %969 = vmatprep.subr.bf16.mxu0 0
  %970 = vmatpush1.bf16.msra.mxu0 0
  %971 = vmatprep.mubr.bf16.mxu0 0
  %972 = vmatmul.mubr.bf16.gmra.mrb[0].mxu0 %v931
  %v973 = vpop.f32.mrb[0].mxu0
  %v974 = vadd.f32 0.0, %v973
  %v975 = vpop.f32.mrb[0].mxu0
  %v976 = vpop.f32.mrb[0].mxu0
  %v977 = vadd.f32 0.0, %v976
  %v978 = vpop.f32.mrb[0].mxu0
  %979 = vmatprep.mubr.bf16.mxu0 0
  %980 = vmatmul.mubr.bf16.gmra.mrb[0].mxu0 %v934
  %v981 = vpop.f32.mrb[0].mxu0
  %v982 = vadd.f32 0.0, %v981
  %v983 = vpop.f32.mrb[0].mxu0
  %v984 = vpop.f32.mrb[0].mxu0
  %v985 = vadd.f32 0.0, %v984
  %v986 = vpop.f32.mrb[0].mxu0
  %987 = vmatprep.mubr.bf16.mxu0 0
  %988 = vmatmul.mubr.bf16.gmra.mrb[0].mxu0 %v937
  %v989 = vpop.f32.mrb[0].mxu0
  %v990 = vadd.f32 0.0, %v989
  %v991 = vpop.f32.mrb[0].mxu0
  %v992 = vpop.f32.mrb[0].mxu0
  %v993 = vpop.f32.mrb[0].mxu0
  %994 = vdwg.mxu0
  %v995 = vpack.c.bf16 %v977, %v974
  %v996 = vpack.c.bf16 %v985, %v982
  %v997 = vpack.c.bf16 %v990, %v990
  %v998 = vld [vmem:[%s9] sm:$0xf]
  %v999 = vld [vmem:[%s9 + $0x4] sm:$0xf]
  %v1000 = vld [vmem:[%s9 + $0x8] sm:$0xf]
  %v1001 = vld [vmem:[%s9 + $0xc] sm:$0xf]
  %v1002 = vld [vmem:[%s9 + $0x10] sm:$0xf]
  %v1003 = vld [vmem:[%s9 + $0x14] sm:$0xf]
  %v1004 = vld [vmem:[%s9 + $0x18] sm:$0xf]
  %v1005 = vld [vmem:[%s9 + $0x1c] sm:$0xf]
  %v1007 = vrot.slane %v995, 2
  %v1012 = vunpack.c.l.b16 %v1002
  %v1013 = vunpack.c.l.b16 %v1003
  %v1014 = vunpack.c.l.b16 %v1004
  %v1015 = vunpack.c.l.b16 %v1005
  %v1016 = vpack.c.b16 %v1013, %v1012
  %v1017 = vpack.c.b16 %v1015, %v1014
  %vm1020 = vcmask 261120
  %v1022 = vsel %vm1020, %v1007, 0
  %1024 = vmatprep.subr.bf16.mxu0 0
  %1025 = vmatpush1.bf16.msra.mxu0 %v1016
  %1026 = vmatprep.subr.bf16.mxu0 0
  %1027 = vmatpush1.bf16.msra.mxu0 %v1017
  %1028 = vmatprep.subr.bf16.mxu0 0
  %1029 = vmatpush1.bf16.msra.mxu0 0
  %1030 = vmatprep.subr.bf16.mxu0 0
  %1031 = vmatpush1.bf16.msra.mxu0 0
  %1032 = vmatprep.subr.bf16.mxu0 0
  %1033 = vmatpush1.bf16.msra.mxu0 0
  %1034 = vmatprep.subr.bf16.mxu0 0
  %1035 = vmatpush1.bf16.msra.mxu0 0
  %1036 = vmatprep.subr.bf16.mxu0 0
  %1037 = vmatpush1.bf16.msra.mxu0 0
  %1038 = vmatprep.subr.bf16.mxu0 0
  %1039 = vmatpush1.bf16.msra.mxu0 0
  %1040 = vmatprep.subr.bf16.mxu0 0
  %1041 = vmatpush1.bf16.msra.mxu0 0
  %1042 = vmatprep.subr.bf16.mxu0 0
  %1043 = vmatpush1.bf16.msra.mxu0 0
  %1044 = vmatprep.subr.bf16.mxu0 0
  %1045 = vmatpush1.bf16.msra.mxu0 0
  %1046 = vmatprep.subr.bf16.mxu0 0
  %1047 = vmatpush1.bf16.msra.mxu0 0
  %1048 = vmatprep.subr.bf16.mxu0 0
  %1049 = vmatpush1.bf16.msra.mxu0 0
  %1050 = vmatprep.subr.bf16.mxu0 0
  %1051 = vmatpush1.bf16.msra.mxu0 0
  %1052 = vmatprep.subr.bf16.mxu0 0
  %1053 = vmatpush1.bf16.msra.mxu0 0
  %1054 = vmatprep.subr.bf16.mxu0 0
  %1055 = vmatpush1.bf16.msra.mxu0 0
  %1056 = vmatprep.mubr.bf16.mxu0 0
  %1057 = vmatmul.mubr.bf16.gmra.mrb[0].mxu0 %v1022
  %v1058 = vpop.f32.mrb[0].mxu0
  %v1059 = vadd.f32 0.0, %v1058
  %v1060 = vpop.f32.mrb[0].mxu0
  %v1061 = vpop.f32.mrb[0].mxu0
  %v1062 = vpop.f32.mrb[0].mxu0
  %1063 = vdwg.mxu0
  %v1068 = vunpack.c.l.b16 %v998
  %v1069 = vunpack.c.l.b16 %v999
  %v1070 = vunpack.c.l.b16 %v1000
  %v1071 = vunpack.c.l.b16 %v1001
  %v1072 = vpack.c.b16 %v1069, %v1068
  %v1073 = vpack.c.b16 %v1071, %v1070
  %v1077 = vsel %vm1020, %v995, 0
  %1079 = vmatprep.subr.bf16.mxu0 0
  %1080 = vmatpush1.bf16.msra.mxu0 %v1072
  %1081 = vmatprep.subr.bf16.mxu0 0
  %1082 = vmatpush1.bf16.msra.mxu0 %v1073
  %1083 = vmatprep.subr.bf16.mxu0 0
  %1084 = vmatpush1.bf16.msra.mxu0 0
  %1085 = vmatprep.subr.bf16.mxu0 0
  %1086 = vmatpush1.bf16.msra.mxu0 0
  %1087 = vmatprep.subr.bf16.mxu0 0
  %1088 = vmatpush1.bf16.msra.mxu0 0
  %1089 = vmatprep.subr.bf16.mxu0 0
  %1090 = vmatpush1.bf16.msra.mxu0 0
  %1091 = vmatprep.subr.bf16.mxu0 0
  %1092 = vmatpush1.bf16.msra.mxu0 0
  %1093 = vmatprep.subr.bf16.mxu0 0
  %1094 = vmatpush1.bf16.msra.mxu0 0
  %1095 = vmatprep.subr.bf16.mxu0 0
  %1096 = vmatpush1.bf16.msra.mxu0 0
  %1097 = vmatprep.subr.bf16.mxu0 0
  %1098 = vmatpush1.bf16.msra.mxu0 0
  %1099 = vmatprep.subr.bf16.mxu0 0
  %1100 = vmatpush1.bf16.msra.mxu0 0
  %1101 = vmatprep.subr.bf16.mxu0 0
  %1102 = vmatpush1.bf16.msra.mxu0 0
  %1103 = vmatprep.subr.bf16.mxu0 0
  %1104 = vmatpush1.bf16.msra.mxu0 0
  %1105 = vmatprep.subr.bf16.mxu0 0
  %1106 = vmatpush1.bf16.msra.mxu0 0
  %1107 = vmatprep.subr.bf16.mxu0 0
  %1108 = vmatpush1.bf16.msra.mxu0 0
  %1109 = vmatprep.subr.bf16.mxu0 0
  %1110 = vmatpush1.bf16.msra.mxu0 0
  %1111 = vmatprep.mubr.bf16.mxu0 0
  %1112 = vmatmul.mubr.bf16.gmra.mrb[0].mxu0 %v1077
  %v1113 = vpop.f32.mrb[0].mxu0
  %v1114 = vadd.f32 %v1059, %v1113
  %v1115 = vpop.f32.mrb[0].mxu0
  %v1116 = vpop.f32.mrb[0].mxu0
  %v1117 = vpop.f32.mrb[0].mxu0
  %1118 = vdwg.mxu0
  %v1119 = vld [vmem:[%s9 + $0x20] sm:$0xf]
  %v1120 = vld [vmem:[%s9 + $0x24] sm:$0xf]
  %v1121 = vld [vmem:[%s9 + $0x28] sm:$0xf]
  %v1122 = vld [vmem:[%s9 + $0x2c] sm:$0xf]
  %v1123 = vrot.slane %v995, 4
  %v1128 = vunpack.c.l.b16 %v1119
  %v1129 = vunpack.c.l.b16 %v1120
  %v1130 = vunpack.c.l.b16 %v1121
  %v1131 = vunpack.c.l.b16 %v1122
  %v1132 = vpack.c.b16 %v1129, %v1128
  %v1133 = vpack.c.b16 %v1131, %v1130
  %v1137 = vsel %vm1020, %v1123, 0
  %1139 = vmatprep.subr.bf16.mxu0 0
  %1140 = vmatpush1.bf16.msra.mxu0 %v1132
  %1141 = vmatprep.subr.bf16.mxu0 0
  %1142 = vmatpush1.bf16.msra.mxu0 %v1133
  %1143 = vmatprep.subr.bf16.mxu0 0
  %1144 = vmatpush1.bf16.msra.mxu0 0
  %1145 = vmatprep.subr.bf16.mxu0 0
  %1146 = vmatpush1.bf16.msra.mxu0 0
  %1147 = vmatprep.subr.bf16.mxu0 0
  %1148 = vmatpush1.bf16.msra.mxu0 0
  %1149 = vmatprep.subr.bf16.mxu0 0
  %1150 = vmatpush1.bf16.msra.mxu0 0
  %1151 = vmatprep.subr.bf16.mxu0 0
  %1152 = vmatpush1.bf16.msra.mxu0 0
  %1153 = vmatprep.subr.bf16.mxu0 0
  %1154 = vmatpush1.bf16.msra.mxu0 0
  %1155 = vmatprep.subr.bf16.mxu0 0
  %1156 = vmatpush1.bf16.msra.mxu0 0
  %1157 = vmatprep.subr.bf16.mxu0 0
  %1158 = vmatpush1.bf16.msra.mxu0 0
  %1159 = vmatprep.subr.bf16.mxu0 0
  %1160 = vmatpush1.bf16.msra.mxu0 0
  %1161 = vmatprep.subr.bf16.mxu0 0
  %1162 = vmatpush1.bf16.msra.mxu0 0
  %1163 = vmatprep.subr.bf16.mxu0 0
  %1164 = vmatpush1.bf16.msra.mxu0 0
  %1165 = vmatprep.subr.bf16.mxu0 0
  %1166 = vmatpush1.bf16.msra.mxu0 0
  %1167 = vmatprep.subr.bf16.mxu0 0
  %1168 = vmatpush1.bf16.msra.mxu0 0
  %1169 = vmatprep.subr.bf16.mxu0 0
  %1170 = vmatpush1.bf16.msra.mxu0 0
  %1171 = vmatprep.mubr.bf16.mxu0 0
  %1172 = vmatmul.mubr.bf16.gmra.mrb[0].mxu0 %v1137
  %v1173 = vpop.f32.mrb[0].mxu0
  %v1174 = vadd.f32 0.0, %v1173
  %v1175 = vpop.f32.mrb[0].mxu0
  %v1176 = vpop.f32.mrb[0].mxu0
  %v1177 = vpop.f32.mrb[0].mxu0
  %1178 = vdwg.mxu0
  %v1179 = vadd.f32 %v1114, %v1174
  %v1180 = vld [vmem:[%s9 + $0x30] sm:$0xf]
  %v1181 = vld [vmem:[%s9 + $0x34] sm:$0xf]
  %v1182 = vld [vmem:[%s9 + $0x38] sm:$0xf]
  %v1183 = vld [vmem:[%s9 + $0x3c] sm:$0xf]
  %v1184 = vrot.slane %v995, 6
  %v1189 = vunpack.c.l.b16 %v1180
  %v1190 = vunpack.c.l.b16 %v1181
  %v1191 = vunpack.c.l.b16 %v1182
  %v1192 = vunpack.c.l.b16 %v1183
  %v1193 = vpack.c.b16 %v1190, %v1189
  %v1194 = vpack.c.b16 %v1192, %v1191
  %v1198 = vsel %vm1020, %v1184, 0
  %1200 = vmatprep.subr.bf16.mxu0 0
  %1201 = vmatpush1.bf16.msra.mxu0 %v1193
  %1202 = vmatprep.subr.bf16.mxu0 0
  %1203 = vmatpush1.bf16.msra.mxu0 %v1194
  %1204 = vmatprep.subr.bf16.mxu0 0
  %1205 = vmatpush1.bf16.msra.mxu0 0
  %1206 = vmatprep.subr.bf16.mxu0 0
  %1207 = vmatpush1.bf16.msra.mxu0 0
  %1208 = vmatprep.subr.bf16.mxu0 0
  %1209 = vmatpush1.bf16.msra.mxu0 0
  %1210 = vmatprep.subr.bf16.mxu0 0
  %1211 = vmatpush1.bf16.msra.mxu0 0
  %1212 = vmatprep.subr.bf16.mxu0 0
  %1213 = vmatpush1.bf16.msra.mxu0 0
  %1214 = vmatprep.subr.bf16.mxu0 0
  %1215 = vmatpush1.bf16.msra.mxu0 0
  %1216 = vmatprep.subr.bf16.mxu0 0
  %1217 = vmatpush1.bf16.msra.mxu0 0
  %1218 = vmatprep.subr.bf16.mxu0 0
  %1219 = vmatpush1.bf16.msra.mxu0 0
  %1220 = vmatprep.subr.bf16.mxu0 0
  %1221 = vmatpush1.bf16.msra.mxu0 0
  %1222 = vmatprep.subr.bf16.mxu0 0
  %1223 = vmatpush1.bf16.msra.mxu0 0
  %1224 = vmatprep.subr.bf16.mxu0 0
  %1225 = vmatpush1.bf16.msra.mxu0 0
  %1226 = vmatprep.subr.bf16.mxu0 0
  %1227 = vmatpush1.bf16.msra.mxu0 0
  %1228 = vmatprep.subr.bf16.mxu0 0
  %1229 = vmatpush1.bf16.msra.mxu0 0
  %1230 = vmatprep.subr.bf16.mxu0 0
  %1231 = vmatpush1.bf16.msra.mxu0 0
  %1232 = vmatprep.mubr.bf16.mxu0 0
  %1233 = vmatmul.mubr.bf16.gmra.mrb[0].mxu0 %v1198
  %v1234 = vpop.f32.mrb[0].mxu0
  %v1235 = vadd.f32 0.0, %v1234
  %v1236 = vpop.f32.mrb[0].mxu0
  %v1237 = vpop.f32.mrb[0].mxu0
  %v1238 = vpop.f32.mrb[0].mxu0
  %1239 = vdwg.mxu0
  %v1240 = vadd.f32 %v1179, %v1235
  %v1241 = vld [vmem:[%s9 + $0x40] sm:$0xf]
  %v1242 = vld [vmem:[%s9 + $0x44] sm:$0xf]
  %v1243 = vld [vmem:[%s9 + $0x48] sm:$0xf]
  %v1244 = vld [vmem:[%s9 + $0x4c] sm:$0xf]
  %v1249 = vunpack.c.l.b16 %v1241
  %v1250 = vunpack.c.l.b16 %v1242
  %v1251 = vunpack.c.l.b16 %v1243
  %v1252 = vunpack.c.l.b16 %v1244
  %v1253 = vpack.c.b16 %v1250, %v1249
  %v1254 = vpack.c.b16 %v1252, %v1251
  %v1258 = vsel %vm1020, %v996, 0
  %1260 = vmatprep.subr.bf16.mxu0 0
  %1261 = vmatpush1.bf16.msra.mxu0 %v1253
  %1262 = vmatprep.subr.bf16.mxu0 0
  %1263 = vmatpush1.bf16.msra.mxu0 %v1254
  %1264 = vmatprep.subr.bf16.mxu0 0
  %1265 = vmatpush1.bf16.msra.mxu0 0
  %1266 = vmatprep.subr.bf16.mxu0 0
  %1267 = vmatpush1.bf16.msra.mxu0 0
  %1268 = vmatprep.subr.bf16.mxu0 0
  %1269 = vmatpush1.bf16.msra.mxu0 0
  %1270 = vmatprep.subr.bf16.mxu0 0
  %1271 = vmatpush1.bf16.msra.mxu0 0
  %1272 = vmatprep.subr.bf16.mxu0 0
  %1273 = vmatpush1.bf16.msra.mxu0 0
  %1274 = vmatprep.subr.bf16.mxu0 0
  %1275 = vmatpush1.bf16.msra.mxu0 0
  %1276 = vmatprep.subr.bf16.mxu0 0
  %1277 = vmatpush1.bf16.msra.mxu0 0
  %1278 = vmatprep.subr.bf16.mxu0 0
  %1279 = vmatpush1.bf16.msra.mxu0 0
  %1280 = vmatprep.subr.bf16.mxu0 0
  %1281 = vmatpush1.bf16.msra.mxu0 0
  %1282 = vmatprep.subr.bf16.mxu0 0
  %1283 = vmatpush1.bf16.msra.mxu0 0
  %1284 = vmatprep.subr.bf16.mxu0 0
  %1285 = vmatpush1.bf16.msra.mxu0 0
  %1286 = vmatprep.subr.bf16.mxu0 0
  %1287 = vmatpush1.bf16.msra.mxu0 0
  %1288 = vmatprep.subr.bf16.mxu0 0
  %1289 = vmatpush1.bf16.msra.mxu0 0
  %1290 = vmatprep.subr.bf16.mxu0 0
  %1291 = vmatpush1.bf16.msra.mxu0 0
  %1292 = vmatprep.mubr.bf16.mxu0 0
  %1293 = vmatmul.mubr.bf16.gmra.mrb[0].mxu0 %v1258
  %v1294 = vpop.f32.mrb[0].mxu0
  %v1295 = vadd.f32 0.0, %v1294
  %v1296 = vpop.f32.mrb[0].mxu0
  %v1297 = vpop.f32.mrb[0].mxu0
  %v1298 = vpop.f32.mrb[0].mxu0
  %1299 = vdwg.mxu0
  %v1300 = vadd.f32 %v1240, %v1295
  %v1301 = vld [vmem:[%s9 + $0x50] sm:$0xf]
  %v1302 = vld [vmem:[%s9 + $0x54] sm:$0xf]
  %v1303 = vld [vmem:[%s9 + $0x58] sm:$0xf]
  %v1304 = vld [vmem:[%s9 + $0x5c] sm:$0xf]
  %v1306 = vrot.slane %v996, 2
  %v1311 = vunpack.c.l.b16 %v1301
  %v1312 = vunpack.c.l.b16 %v1302
  %v1313 = vunpack.c.l.b16 %v1303
  %v1314 = vunpack.c.l.b16 %v1304
  %v1315 = vpack.c.b16 %v1312, %v1311
  %v1316 = vpack.c.b16 %v1314, %v1313
  %v1320 = vsel %vm1020, %v1306, 0
  %1322 = vmatprep.subr.bf16.mxu0 0
  %1323 = vmatpush1.bf16.msra.mxu0 %v1315
  %1324 = vmatprep.subr.bf16.mxu0 0
  %1325 = vmatpush1.bf16.msra.mxu0 %v1316
  %1326 = vmatprep.subr.bf16.mxu0 0
  %1327 = vmatpush1.bf16.msra.mxu0 0
  %1328 = vmatprep.subr.bf16.mxu0 0
  %1329 = vmatpush1.bf16.msra.mxu0 0
  %1330 = vmatprep.subr.bf16.mxu0 0
  %1331 = vmatpush1.bf16.msra.mxu0 0
  %1332 = vmatprep.subr.bf16.mxu0 0
  %1333 = vmatpush1.bf16.msra.mxu0 0
  %1334 = vmatprep.subr.bf16.mxu0 0
  %1335 = vmatpush1.bf16.msra.mxu0 0
  %1336 = vmatprep.subr.bf16.mxu0 0
  %1337 = vmatpush1.bf16.msra.mxu0 0
  %1338 = vmatprep.subr.bf16.mxu0 0
  %1339 = vmatpush1.bf16.msra.mxu0 0
  %1340 = vmatprep.subr.bf16.mxu0 0
  %1341 = vmatpush1.bf16.msra.mxu0 0
  %1342 = vmatprep.subr.bf16.mxu0 0
  %1343 = vmatpush1.bf16.msra.mxu0 0
  %1344 = vmatprep.subr.bf16.mxu0 0
  %1345 = vmatpush1.bf16.msra.mxu0 0
  %1346 = vmatprep.subr.bf16.mxu0 0
  %1347 = vmatpush1.bf16.msra.mxu0 0
  %1348 = vmatprep.subr.bf16.mxu0 0
  %1349 = vmatpush1.bf16.msra.mxu0 0
  %1350 = vmatprep.subr.bf16.mxu0 0
  %1351 = vmatpush1.bf16.msra.mxu0 0
  %1352 = vmatprep.subr.bf16.mxu0 0
  %1353 = vmatpush1.bf16.msra.mxu0 0
  %1354 = vmatprep.mubr.bf16.mxu0 0
  %1355 = vmatmul.mubr.bf16.gmra.mrb[0].mxu0 %v1320
  %v1356 = vpop.f32.mrb[0].mxu0
  %v1357 = vadd.f32 0.0, %v1356
  %v1358 = vpop.f32.mrb[0].mxu0
  %v1359 = vpop.f32.mrb[0].mxu0
  %v1360 = vpop.f32.mrb[0].mxu0
  %1361 = vdwg.mxu0
  %v1362 = vadd.f32 %v1300, %v1357
  %v1363 = vld [vmem:[%s9 + $0x60] sm:$0xf]
  %v1364 = vld [vmem:[%s9 + $0x64] sm:$0xf]
  %v1365 = vld [vmem:[%s9 + $0x68] sm:$0xf]
  %v1366 = vld [vmem:[%s9 + $0x6c] sm:$0xf]
  %v1367 = vrot.slane %v996, 4
  %v1372 = vunpack.c.l.b16 %v1363
  %v1373 = vunpack.c.l.b16 %v1364
  %v1374 = vunpack.c.l.b16 %v1365
  %v1375 = vunpack.c.l.b16 %v1366
  %v1376 = vpack.c.b16 %v1373, %v1372
  %v1377 = vpack.c.b16 %v1375, %v1374
  %v1381 = vsel %vm1020, %v1367, 0
  %1383 = vmatprep.subr.bf16.mxu0 0
  %1384 = vmatpush1.bf16.msra.mxu0 %v1376
  %1385 = vmatprep.subr.bf16.mxu0 0
  %1386 = vmatpush1.bf16.msra.mxu0 %v1377
  %1387 = vmatprep.subr.bf16.mxu0 0
  %1388 = vmatpush1.bf16.msra.mxu0 0
  %1389 = vmatprep.subr.bf16.mxu0 0
  %1390 = vmatpush1.bf16.msra.mxu0 0
  %1391 = vmatprep.subr.bf16.mxu0 0
  %1392 = vmatpush1.bf16.msra.mxu0 0
  %1393 = vmatprep.subr.bf16.mxu0 0
  %1394 = vmatpush1.bf16.msra.mxu0 0
  %1395 = vmatprep.subr.bf16.mxu0 0
  %1396 = vmatpush1.bf16.msra.mxu0 0
  %1397 = vmatprep.subr.bf16.mxu0 0
  %1398 = vmatpush1.bf16.msra.mxu0 0
  %1399 = vmatprep.subr.bf16.mxu0 0
  %1400 = vmatpush1.bf16.msra.mxu0 0
  %1401 = vmatprep.subr.bf16.mxu0 0
  %1402 = vmatpush1.bf16.msra.mxu0 0
  %1403 = vmatprep.subr.bf16.mxu0 0
  %1404 = vmatpush1.bf16.msra.mxu0 0
  %1405 = vmatprep.subr.bf16.mxu0 0
  %1406 = vmatpush1.bf16.msra.mxu0 0
  %1407 = vmatprep.subr.bf16.mxu0 0
  %1408 = vmatpush1.bf16.msra.mxu0 0
  %1409 = vmatprep.subr.bf16.mxu0 0
  %1410 = vmatpush1.bf16.msra.mxu0 0
  %1411 = vmatprep.subr.bf16.mxu0 0
  %1412 = vmatpush1.bf16.msra.mxu0 0
  %1413 = vmatprep.subr.bf16.mxu0 0
  %1414 = vmatpush1.bf16.msra.mxu0 0
  %1415 = vmatprep.mubr.bf16.mxu0 0
  %1416 = vmatmul.mubr.bf16.gmra.mrb[0].mxu0 %v1381
  %v1417 = vpop.f32.mrb[0].mxu0
  %v1418 = vadd.f32 0.0, %v1417
  %v1419 = vpop.f32.mrb[0].mxu0
  %v1420 = vpop.f32.mrb[0].mxu0
  %v1421 = vpop.f32.mrb[0].mxu0
  %1422 = vdwg.mxu0
  %v1423 = vadd.f32 %v1362, %v1418
  %v1424 = vld [vmem:[%s9 + $0x70] sm:$0xf]
  %v1425 = vld [vmem:[%s9 + $0x74] sm:$0xf]
  %v1426 = vld [vmem:[%s9 + $0x78] sm:$0xf]
  %v1427 = vld [vmem:[%s9 + $0x7c] sm:$0xf]
  %v1428 = vrot.slane %v996, 6
  %v1433 = vunpack.c.l.b16 %v1424
  %v1434 = vunpack.c.l.b16 %v1425
  %v1435 = vunpack.c.l.b16 %v1426
  %v1436 = vunpack.c.l.b16 %v1427
  %v1437 = vpack.c.b16 %v1434, %v1433
  %v1438 = vpack.c.b16 %v1436, %v1435
  %v1442 = vsel %vm1020, %v1428, 0
  %1444 = vmatprep.subr.bf16.mxu0 0
  %1445 = vmatpush1.bf16.msra.mxu0 %v1437
  %1446 = vmatprep.subr.bf16.mxu0 0
  %1447 = vmatpush1.bf16.msra.mxu0 %v1438
  %1448 = vmatprep.subr.bf16.mxu0 0
  %1449 = vmatpush1.bf16.msra.mxu0 0
  %1450 = vmatprep.subr.bf16.mxu0 0
  %1451 = vmatpush1.bf16.msra.mxu0 0
  %1452 = vmatprep.subr.bf16.mxu0 0
  %1453 = vmatpush1.bf16.msra.mxu0 0
  %1454 = vmatprep.subr.bf16.mxu0 0
  %1455 = vmatpush1.bf16.msra.mxu0 0
  %1456 = vmatprep.subr.bf16.mxu0 0
  %1457 = vmatpush1.bf16.msra.mxu0 0
  %1458 = vmatprep.subr.bf16.mxu0 0
  %1459 = vmatpush1.bf16.msra.mxu0 0
  %1460 = vmatprep.subr.bf16.mxu0 0
  %1461 = vmatpush1.bf16.msra.mxu0 0
  %1462 = vmatprep.subr.bf16.mxu0 0
  %1463 = vmatpush1.bf16.msra.mxu0 0
  %1464 = vmatprep.subr.bf16.mxu0 0
  %1465 = vmatpush1.bf16.msra.mxu0 0
  %1466 = vmatprep.subr.bf16.mxu0 0
  %1467 = vmatpush1.bf16.msra.mxu0 0
  %1468 = vmatprep.subr.bf16.mxu0 0
  %1469 = vmatpush1.bf16.msra.mxu0 0
  %1470 = vmatprep.subr.bf16.mxu0 0
  %1471 = vmatpush1.bf16.msra.mxu0 0
  %1472 = vmatprep.subr.bf16.mxu0 0
  %1473 = vmatpush1.bf16.msra.mxu0 0
  %1474 = vmatprep.subr.bf16.mxu0 0
  %1475 = vmatpush1.bf16.msra.mxu0 0
  %1476 = vmatprep.mubr.bf16.mxu0 0
  %1477 = vmatmul.mubr.bf16.gmra.mrb[0].mxu0 %v1442
  %v1478 = vpop.f32.mrb[0].mxu0
  %v1479 = vadd.f32 0.0, %v1478
  %v1480 = vpop.f32.mrb[0].mxu0
  %v1481 = vpop.f32.mrb[0].mxu0
  %v1482 = vpop.f32.mrb[0].mxu0
  %1483 = vdwg.mxu0
  %v1484 = vadd.f32 %v1423, %v1479
  %v1485 = vld [vmem:[%s9 + $0x80] sm:$0xf]
  %v1486 = vld [vmem:[%s9 + $0x84] sm:$0xf]
  %v1487 = vld [vmem:[%s9 + $0x88] sm:$0xf]
  %v1488 = vld [vmem:[%s9 + $0x8c] sm:$0xf]
  %v1493 = vunpack.c.l.b16 %v1485
  %v1494 = vunpack.c.l.b16 %v1486
  %v1495 = vunpack.c.l.b16 %v1487
  %v1496 = vunpack.c.l.b16 %v1488
  %v1497 = vpack.c.b16 %v1494, %v1493
  %v1498 = vpack.c.b16 %v1496, %v1495
  %v1502 = vsel %vm1020, %v997, 0
  %1504 = vmatprep.subr.bf16.mxu0 0
  %1505 = vmatpush1.bf16.msra.mxu0 %v1497
  %1506 = vmatprep.subr.bf16.mxu0 0
  %1507 = vmatpush1.bf16.msra.mxu0 %v1498
  %1508 = vmatprep.subr.bf16.mxu0 0
  %1509 = vmatpush1.bf16.msra.mxu0 0
  %1510 = vmatprep.subr.bf16.mxu0 0
  %1511 = vmatpush1.bf16.msra.mxu0 0
  %1512 = vmatprep.subr.bf16.mxu0 0
  %1513 = vmatpush1.bf16.msra.mxu0 0
  %1514 = vmatprep.subr.bf16.mxu0 0
  %1515 = vmatpush1.bf16.msra.mxu0 0
  %1516 = vmatprep.subr.bf16.mxu0 0
  %1517 = vmatpush1.bf16.msra.mxu0 0
  %1518 = vmatprep.subr.bf16.mxu0 0
  %1519 = vmatpush1.bf16.msra.mxu0 0
  %1520 = vmatprep.subr.bf16.mxu0 0
  %1521 = vmatpush1.bf16.msra.mxu0 0
  %1522 = vmatprep.subr.bf16.mxu0 0
  %1523 = vmatpush1.bf16.msra.mxu0 0
  %1524 = vmatprep.subr.bf16.mxu0 0
  %1525 = vmatpush1.bf16.msra.mxu0 0
  %1526 = vmatprep.subr.bf16.mxu0 0
  %1527 = vmatpush1.bf16.msra.mxu0 0
  %1528 = vmatprep.subr.bf16.mxu0 0
  %1529 = vmatpush1.bf16.msra.mxu0 0
  %1530 = vmatprep.subr.bf16.mxu0 0
  %1531 = vmatpush1.bf16.msra.mxu0 0
  %1532 = vmatprep.subr.bf16.mxu0 0
  %1533 = vmatpush1.bf16.msra.mxu0 0
  %1534 = vmatprep.subr.bf16.mxu0 0
  %1535 = vmatpush1.bf16.msra.mxu0 0
  %1536 = vmatprep.mubr.bf16.mxu0 0
  %1537 = vmatmul.mubr.bf16.gmra.mrb[0].mxu0 %v1502
  %v1538 = vpop.f32.mrb[0].mxu0
  %v1539 = vadd.f32 0.0, %v1538
  %v1540 = vpop.f32.mrb[0].mxu0
  %v1541 = vpop.f32.mrb[0].mxu0
  %v1542 = vpop.f32.mrb[0].mxu0
  %1543 = vdwg.mxu0
  %v1544 = vadd.f32 %v1484, %v1539
  %v1545 = vld [vmem:[%s10] sm:$0x1]
  %v1547 = vlaneseq
  %v1548 = vshrl.u32 %v1547, 7
  %v1549 = vsub.s32 0, %v1548
  %v1550 = vrot.slane %v1545, %v1549
  %v1552 = vadd.f32 %v1544, %v1550
  %v1553 = vmul.f32 %v1552, 0.01
  %v1554 = vmax.f32 %v1552, %v1553
  %v1555 = vpack.c.bf16 %v1554, %v1554
  %v1556 = vld [vmem:[%s11] sm:$0xf]
  %v1557 = vld [vmem:[%s11 + $0x4] sm:$0xf]
  %v1560 = vunpack.c.l.b16 %v1556
  %v1561 = vunpack.c.l.b16 %v1557
  %v1562 = vpack.c.b16 %v1561, %v1560
  %vm1563 = vcmask 31744
  %v1565 = vsel %vm1563, %v1562, 0
  %vm1567 = vcmask 1041408
  %v1569 = vsel %vm1567, %v1555, 0
  %1571 = vmatprep.subr.bf16.mxu0 0
  %1572 = vmatpush1.bf16.msra.mxu0 %v1569
  %1573 = vmatprep.subr.bf16.mxu0 0
  %1574 = vmatpush1.bf16.msra.mxu0 0
  %1575 = vmatprep.subr.bf16.mxu0 0
  %1576 = vmatpush1.bf16.msra.mxu0 0
  %1577 = vmatprep.subr.bf16.mxu0 0
  %1578 = vmatpush1.bf16.msra.mxu0 0
  %1579 = vmatprep.subr.bf16.mxu0 0
  %1580 = vmatpush1.bf16.msra.mxu0 0
  %1581 = vmatprep.subr.bf16.mxu0 0
  %1582 = vmatpush1.bf16.msra.mxu0 0
  %1583 = vmatprep.subr.bf16.mxu0 0
  %1584 = vmatpush1.bf16.msra.mxu0 0
  %1585 = vmatprep.subr.bf16.mxu0 0
  %1586 = vmatpush1.bf16.msra.mxu0 0
  %1587 = vmatprep.subr.bf16.mxu0 0
  %1588 = vmatpush1.bf16.msra.mxu0 0
  %1589 = vmatprep.subr.bf16.mxu0 0
  %1590 = vmatpush1.bf16.msra.mxu0 0
  %1591 = vmatprep.subr.bf16.mxu0 0
  %1592 = vmatpush1.bf16.msra.mxu0 0
  %1593 = vmatprep.subr.bf16.mxu0 0
  %1594 = vmatpush1.bf16.msra.mxu0 0
  %1595 = vmatprep.subr.bf16.mxu0 0
  %1596 = vmatpush1.bf16.msra.mxu0 0
  %1597 = vmatprep.subr.bf16.mxu0 0
  %1598 = vmatpush1.bf16.msra.mxu0 0
  %1599 = vmatprep.subr.bf16.mxu0 0
  %1600 = vmatpush1.bf16.msra.mxu0 0
  %1601 = vmatprep.subr.bf16.mxu0 0
  %1602 = vmatpush1.bf16.msra.mxu0 0
  %1603 = vmatprep.mubr.bf16.mxu0 0
  %1604 = vmatmul.mubr.bf16.gmra.mrb[0].mxu0 %v1565
  %v1605 = vpop.f32.mrb[0].mxu0
  %v1606 = vadd.f32 0.0, %v1605
  %v1607 = vpop.f32.mrb[0].mxu0
  %v1608 = vpop.f32.mrb[0].mxu0
  %v1609 = vadd.f32 0.0, %v1608
  %v1610 = vpop.f32.mrb[0].mxu0
  %1611 = vdwg.mxu0
  %v1612 = vpack.c.bf16 %v1609, %v1606
  %v1613 = vld [vmem:[%s12] sm:$0xf]
  %v1614 = vld [vmem:[%s12 + $0x4] sm:$0xf]
  %v1615 = vld [vmem:[%s12 + $0x8] sm:$0xf]
  %v1616 = vld [vmem:[%s12 + $0xc] sm:$0xf]
  %v1617 = vld [vmem:[%s12 + $0x10] sm:$0xf]
  %v1618 = vld [vmem:[%s12 + $0x14] sm:$0xf]
  %v1619 = vld [vmem:[%s12 + $0x18] sm:$0xf]
  %v1620 = vld [vmem:[%s12 + $0x1c] sm:$0xf]
  %v1621 = vld [vmem:[%s12 + $0x20] sm:$0xf]
  %v1622 = vld [vmem:[%s12 + $0x24] sm:$0xf]
  %v1623 = vld [vmem:[%s12 + $0x28] sm:$0xf]
  %v1624 = vld [vmem:[%s12 + $0x2c] sm:$0xf]
  %v1625 = vld [vmem:[%s12 + $0x30] sm:$0xf]
  %v1626 = vld [vmem:[%s12 + $0x34] sm:$0xf]
  %v1627 = vld [vmem:[%s12 + $0x38] sm:$0xf]
  %v1628 = vld [vmem:[%s12 + $0x3c] sm:$0xf]
  %v1630 = vshrl.u32 %v1612, 16
  %v1640 = vunpack.c.l.b16 %v1621
  %v1641 = vunpack.c.l.b16 %v1622
  %v1642 = vunpack.c.l.b16 %v1623
  %v1643 = vunpack.c.l.b16 %v1624
  %v1644 = vunpack.c.l.b16 %v1625
  %v1645 = vunpack.c.l.b16 %v1626
  %v1646 = vunpack.c.l.b16 %v1627
  %v1647 = vunpack.c.l.b16 %v1628
  %v1648 = vpack.c.b16 %v1641, %v1640
  %v1649 = vpack.c.b16 %v1643, %v1642
  %v1650 = vpack.c.b16 %v1645, %v1644
  %v1651 = vpack.c.b16 %v1647, %v1646
  %v1657 = vsel %vm274, %v1630, 0
  %1659 = vmatprep.subr.bf16.mxu0 0
  %1660 = vmatpush1.bf16.msra.mxu0 %v1648
  %1661 = vmatprep.subr.bf16.mxu0 0
  %1662 = vmatpush1.bf16.msra.mxu0 %v1649
  %1663 = vmatprep.subr.bf16.mxu0 0
  %1664 = vmatpush1.bf16.msra.mxu0 %v1650
  %1665 = vmatprep.subr.bf16.mxu0 0
  %1666 = vmatpush1.bf16.msra.mxu0 %v1651
  %1667 = vmatprep.subr.bf16.mxu0 0
  %1668 = vmatpush1.bf16.msra.mxu0 0
  %1669 = vmatprep.subr.bf16.mxu0 0
  %1670 = vmatpush1.bf16.msra.mxu0 0
  %1671 = vmatprep.subr.bf16.mxu0 0
  %1672 = vmatpush1.bf16.msra.mxu0 0
  %1673 = vmatprep.subr.bf16.mxu0 0
  %1674 = vmatpush1.bf16.msra.mxu0 0
  %1675 = vmatprep.subr.bf16.mxu0 0
  %1676 = vmatpush1.bf16.msra.mxu0 0
  %1677 = vmatprep.subr.bf16.mxu0 0
  %1678 = vmatpush1.bf16.msra.mxu0 0
  %1679 = vmatprep.subr.bf16.mxu0 0
  %1680 = vmatpush1.bf16.msra.mxu0 0
  %1681 = vmatprep.subr.bf16.mxu0 0
  %1682 = vmatpush1.bf16.msra.mxu0 0
  %1683 = vmatprep.subr.bf16.mxu0 0
  %1684 = vmatpush1.bf16.msra.mxu0 0
  %1685 = vmatprep.subr.bf16.mxu0 0
  %1686 = vmatpush1.bf16.msra.mxu0 0
  %1687 = vmatprep.subr.bf16.mxu0 0
  %1688 = vmatpush1.bf16.msra.mxu0 0
  %1689 = vmatprep.subr.bf16.mxu0 0
  %1690 = vmatpush1.bf16.msra.mxu0 0
  %1691 = vmatprep.mubr.bf16.mxu0 0
  %1692 = vmatmul.mubr.bf16.gmra.mrb[0].mxu0 %v1657
  %v1693 = vpop.f32.mrb[0].mxu0
  %v1694 = vadd.f32 0.0, %v1693
  %v1695 = vpop.f32.mrb[0].mxu0
  %v1696 = vpop.f32.mrb[0].mxu0
  %v1697 = vpop.f32.mrb[0].mxu0
  %1698 = vdwg.mxu0
  %v1707 = vunpack.c.l.b16 %v1613
  %v1708 = vunpack.c.l.b16 %v1614
  %v1709 = vunpack.c.l.b16 %v1615
  %v1710 = vunpack.c.l.b16 %v1616
  %v1711 = vunpack.c.l.b16 %v1617
  %v1712 = vunpack.c.l.b16 %v1618
  %v1713 = vunpack.c.l.b16 %v1619
  %v1714 = vunpack.c.l.b16 %v1620
  %v1715 = vpack.c.b16 %v1708, %v1707
  %v1716 = vpack.c.b16 %v1710, %v1709
  %v1717 = vpack.c.b16 %v1712, %v1711
  %v1718 = vpack.c.b16 %v1714, %v1713
  %v1723 = vsel %vm274, %v1612, 0
  %1725 = vmatprep.subr.bf16.mxu0 0
  %1726 = vmatpush1.bf16.msra.mxu0 %v1715
  %1727 = vmatprep.subr.bf16.mxu0 0
  %1728 = vmatpush1.bf16.msra.mxu0 %v1716
  %1729 = vmatprep.subr.bf16.mxu0 0
  %1730 = vmatpush1.bf16.msra.mxu0 %v1717
  %1731 = vmatprep.subr.bf16.mxu0 0
  %1732 = vmatpush1.bf16.msra.mxu0 %v1718
  %1733 = vmatprep.subr.bf16.mxu0 0
  %1734 = vmatpush1.bf16.msra.mxu0 0
  %1735 = vmatprep.subr.bf16.mxu0 0
  %1736 = vmatpush1.bf16.msra.mxu0 0
  %1737 = vmatprep.subr.bf16.mxu0 0
  %1738 = vmatpush1.bf16.msra.mxu0 0
  %1739 = vmatprep.subr.bf16.mxu0 0
  %1740 = vmatpush1.bf16.msra.mxu0 0
  %1741 = vmatprep.subr.bf16.mxu0 0
  %1742 = vmatpush1.bf16.msra.mxu0 0
  %1743 = vmatprep.subr.bf16.mxu0 0
  %1744 = vmatpush1.bf16.msra.mxu0 0
  %1745 = vmatprep.subr.bf16.mxu0 0
  %1746 = vmatpush1.bf16.msra.mxu0 0
  %1747 = vmatprep.subr.bf16.mxu0 0
  %1748 = vmatpush1.bf16.msra.mxu0 0
  %1749 = vmatprep.subr.bf16.mxu0 0
  %1750 = vmatpush1.bf16.msra.mxu0 0
  %1751 = vmatprep.subr.bf16.mxu0 0
  %1752 = vmatpush1.bf16.msra.mxu0 0
  %1753 = vmatprep.subr.bf16.mxu0 0
  %1754 = vmatpush1.bf16.msra.mxu0 0
  %1755 = vmatprep.subr.bf16.mxu0 0
  %1756 = vmatpush1.bf16.msra.mxu0 0
  %1757 = vmatprep.mubr.bf16.mxu0 0
  %1758 = vmatmul.mubr.bf16.gmra.mrb[0].mxu0 %v1723
  %v1759 = vpop.f32.mrb[0].mxu0
  %v1760 = vadd.f32 %v1694, %v1759
  %v1761 = vpop.f32.mrb[0].mxu0
  %v1762 = vpop.f32.mrb[0].mxu0
  %v1763 = vpop.f32.mrb[0].mxu0
  %1764 = vdwg.mxu0
  %v1765 = vld [vmem:[%s12 + $0x40] sm:$0xf]
  %v1766 = vld [vmem:[%s12 + $0x44] sm:$0xf]
  %v1767 = vld [vmem:[%s12 + $0x48] sm:$0xf]
  %v1768 = vld [vmem:[%s12 + $0x4c] sm:$0xf]
  %v1769 = vld [vmem:[%s12 + $0x50] sm:$0xf]
  %v1770 = vld [vmem:[%s12 + $0x54] sm:$0xf]
  %v1771 = vld [vmem:[%s12 + $0x58] sm:$0xf]
  %v1772 = vld [vmem:[%s12 + $0x5c] sm:$0xf]
  %v1774 = vrot.slane %v1612, 1
  %v1783 = vunpack.c.l.b16 %v1765
  %v1784 = vunpack.c.l.b16 %v1766
  %v1785 = vunpack.c.l.b16 %v1767
  %v1786 = vunpack.c.l.b16 %v1768
  %v1787 = vunpack.c.l.b16 %v1769
  %v1788 = vunpack.c.l.b16 %v1770
  %v1789 = vunpack.c.l.b16 %v1771
  %v1790 = vunpack.c.l.b16 %v1772
  %v1791 = vpack.c.b16 %v1784, %v1783
  %v1792 = vpack.c.b16 %v1786, %v1785
  %v1793 = vpack.c.b16 %v1788, %v1787
  %v1794 = vpack.c.b16 %v1790, %v1789
  %v1800 = vsel %vm274, %v1774, 0
  %1802 = vmatprep.subr.bf16.mxu0 0
  %1803 = vmatpush1.bf16.msra.mxu0 %v1791
  %1804 = vmatprep.subr.bf16.mxu0 0
  %1805 = vmatpush1.bf16.msra.mxu0 %v1792
  %1806 = vmatprep.subr.bf16.mxu0 0
  %1807 = vmatpush1.bf16.msra.mxu0 %v1793
  %1808 = vmatprep.subr.bf16.mxu0 0
  %1809 = vmatpush1.bf16.msra.mxu0 %v1794
  %1810 = vmatprep.subr.bf16.mxu0 0
  %1811 = vmatpush1.bf16.msra.mxu0 0
  %1812 = vmatprep.subr.bf16.mxu0 0
  %1813 = vmatpush1.bf16.msra.mxu0 0
  %1814 = vmatprep.subr.bf16.mxu0 0
  %1815 = vmatpush1.bf16.msra.mxu0 0
  %1816 = vmatprep.subr.bf16.mxu0 0
  %1817 = vmatpush1.bf16.msra.mxu0 0
  %1818 = vmatprep.subr.bf16.mxu0 0
  %1819 = vmatpush1.bf16.msra.mxu0 0
  %1820 = vmatprep.subr.bf16.mxu0 0
  %1821 = vmatpush1.bf16.msra.mxu0 0
  %1822 = vmatprep.subr.bf16.mxu0 0
  %1823 = vmatpush1.bf16.msra.mxu0 0
  %1824 = vmatprep.subr.bf16.mxu0 0
  %1825 = vmatpush1.bf16.msra.mxu0 0
  %1826 = vmatprep.subr.bf16.mxu0 0
  %1827 = vmatpush1.bf16.msra.mxu0 0
  %1828 = vmatprep.subr.bf16.mxu0 0
  %1829 = vmatpush1.bf16.msra.mxu0 0
  %1830 = vmatprep.subr.bf16.mxu0 0
  %1831 = vmatpush1.bf16.msra.mxu0 0
  %1832 = vmatprep.subr.bf16.mxu0 0
  %1833 = vmatpush1.bf16.msra.mxu0 0
  %1834 = vmatprep.mubr.bf16.mxu0 0
  %1835 = vmatmul.mubr.bf16.gmra.mrb[0].mxu0 %v1800
  %v1836 = vpop.f32.mrb[0].mxu0
  %v1837 = vadd.f32 0.0, %v1836
  %v1838 = vpop.f32.mrb[0].mxu0
  %v1839 = vpop.f32.mrb[0].mxu0
  %v1840 = vpop.f32.mrb[0].mxu0
  %1841 = vdwg.mxu0
  %v1842 = vadd.f32 %v1760, %v1837
  %v1843 = vld [vmem:[%s12 + $0x60] sm:$0xf]
  %v1844 = vld [vmem:[%s12 + $0x64] sm:$0xf]
  %v1845 = vld [vmem:[%s12 + $0x68] sm:$0xf]
  %v1846 = vld [vmem:[%s12 + $0x6c] sm:$0xf]
  %v1847 = vld [vmem:[%s12 + $0x70] sm:$0xf]
  %v1848 = vld [vmem:[%s12 + $0x74] sm:$0xf]
  %v1849 = vld [vmem:[%s12 + $0x78] sm:$0xf]
  %v1850 = vld [vmem:[%s12 + $0x7c] sm:$0xf]
  %v1851 = vrot.slane %v1630, 1
  %v1860 = vunpack.c.l.b16 %v1843
  %v1861 = vunpack.c.l.b16 %v1844
  %v1862 = vunpack.c.l.b16 %v1845
  %v1863 = vunpack.c.l.b16 %v1846
  %v1864 = vunpack.c.l.b16 %v1847
  %v1865 = vunpack.c.l.b16 %v1848
  %v1866 = vunpack.c.l.b16 %v1849
  %v1867 = vunpack.c.l.b16 %v1850
  %v1868 = vpack.c.b16 %v1861, %v1860
  %v1869 = vpack.c.b16 %v1863, %v1862
  %v1870 = vpack.c.b16 %v1865, %v1864
  %v1871 = vpack.c.b16 %v1867, %v1866
  %v1877 = vsel %vm274, %v1851, 0
  %1879 = vmatprep.subr.bf16.mxu0 0
  %1880 = vmatpush1.bf16.msra.mxu0 %v1868
  %1881 = vmatprep.subr.bf16.mxu0 0
  %1882 = vmatpush1.bf16.msra.mxu0 %v1869
  %1883 = vmatprep.subr.bf16.mxu0 0
  %1884 = vmatpush1.bf16.msra.mxu0 %v1870
  %1885 = vmatprep.subr.bf16.mxu0 0
  %1886 = vmatpush1.bf16.msra.mxu0 %v1871
  %1887 = vmatprep.subr.bf16.mxu0 0
  %1888 = vmatpush1.bf16.msra.mxu0 0
  %1889 = vmatprep.subr.bf16.mxu0 0
  %1890 = vmatpush1.bf16.msra.mxu0 0
  %1891 = vmatprep.subr.bf16.mxu0 0
  %1892 = vmatpush1.bf16.msra.mxu0 0
  %1893 = vmatprep.subr.bf16.mxu0 0
  %1894 = vmatpush1.bf16.msra.mxu0 0
  %1895 = vmatprep.subr.bf16.mxu0 0
  %1896 = vmatpush1.bf16.msra.mxu0 0
  %1897 = vmatprep.subr.bf16.mxu0 0
  %1898 = vmatpush1.bf16.msra.mxu0 0
  %1899 = vmatprep.subr.bf16.mxu0 0
  %1900 = vmatpush1.bf16.msra.mxu0 0
  %1901 = vmatprep.subr.bf16.mxu0 0
  %1902 = vmatpush1.bf16.msra.mxu0 0
  %1903 = vmatprep.subr.bf16.mxu0 0
  %1904 = vmatpush1.bf16.msra.mxu0 0
  %1905 = vmatprep.subr.bf16.mxu0 0
  %1906 = vmatpush1.bf16.msra.mxu0 0
  %1907 = vmatprep.subr.bf16.mxu0 0
  %1908 = vmatpush1.bf16.msra.mxu0 0
  %1909 = vmatprep.subr.bf16.mxu0 0
  %1910 = vmatpush1.bf16.msra.mxu0 0
  %1911 = vmatprep.mubr.bf16.mxu0 0
  %1912 = vmatmul.mubr.bf16.gmra.mrb[0].mxu0 %v1877
  %v1913 = vpop.f32.mrb[0].mxu0
  %v1914 = vadd.f32 0.0, %v1913
  %v1915 = vpop.f32.mrb[0].mxu0
  %v1916 = vpop.f32.mrb[0].mxu0
  %v1917 = vpop.f32.mrb[0].mxu0
  %1918 = vdwg.mxu0
  %v1919 = vadd.f32 %v1842, %v1914
  %v1920 = vld [vmem:[%s12 + $0x80] sm:$0xf]
  %v1921 = vld [vmem:[%s12 + $0x84] sm:$0xf]
  %v1922 = vld [vmem:[%s12 + $0x88] sm:$0xf]
  %v1923 = vld [vmem:[%s12 + $0x8c] sm:$0xf]
  %v1924 = vld [vmem:[%s12 + $0x90] sm:$0xf]
  %v1925 = vld [vmem:[%s12 + $0x94] sm:$0xf]
  %v1926 = vld [vmem:[%s12 + $0x98] sm:$0xf]
  %v1927 = vld [vmem:[%s12 + $0x9c] sm:$0xf]
  %v1928 = vrot.slane %v1612, 2
  %v1937 = vunpack.c.l.b16 %v1920
  %v1938 = vunpack.c.l.b16 %v1921
  %v1939 = vunpack.c.l.b16 %v1922
  %v1940 = vunpack.c.l.b16 %v1923
  %v1941 = vunpack.c.l.b16 %v1924
  %v1942 = vunpack.c.l.b16 %v1925
  %v1943 = vunpack.c.l.b16 %v1926
  %v1944 = vunpack.c.l.b16 %v1927
  %v1945 = vpack.c.b16 %v1938, %v1937
  %v1946 = vpack.c.b16 %v1940, %v1939
  %v1947 = vpack.c.b16 %v1942, %v1941
  %v1948 = vpack.c.b16 %v1944, %v1943
  %v1954 = vsel %vm274, %v1928, 0
  %1956 = vmatprep.subr.bf16.mxu0 0
  %1957 = vmatpush1.bf16.msra.mxu0 %v1945
  %1958 = vmatprep.subr.bf16.mxu0 0
  %1959 = vmatpush1.bf16.msra.mxu0 %v1946
  %1960 = vmatprep.subr.bf16.mxu0 0
  %1961 = vmatpush1.bf16.msra.mxu0 %v1947
  %1962 = vmatprep.subr.bf16.mxu0 0
  %1963 = vmatpush1.bf16.msra.mxu0 %v1948
  %1964 = vmatprep.subr.bf16.mxu0 0
  %1965 = vmatpush1.bf16.msra.mxu0 0
  %1966 = vmatprep.subr.bf16.mxu0 0
  %1967 = vmatpush1.bf16.msra.mxu0 0
  %1968 = vmatprep.subr.bf16.mxu0 0
  %1969 = vmatpush1.bf16.msra.mxu0 0
  %1970 = vmatprep.subr.bf16.mxu0 0
  %1971 = vmatpush1.bf16.msra.mxu0 0
  %1972 = vmatprep.subr.bf16.mxu0 0
  %1973 = vmatpush1.bf16.msra.mxu0 0
  %1974 = vmatprep.subr.bf16.mxu0 0
  %1975 = vmatpush1.bf16.msra.mxu0 0
  %1976 = vmatprep.subr.bf16.mxu0 0
  %1977 = vmatpush1.bf16.msra.mxu0 0
  %1978 = vmatprep.subr.bf16.mxu0 0
  %1979 = vmatpush1.bf16.msra.mxu0 0
  %1980 = vmatprep.subr.bf16.mxu0 0
  %1981 = vmatpush1.bf16.msra.mxu0 0
  %1982 = vmatprep.subr.bf16.mxu0 0
  %1983 = vmatpush1.bf16.msra.mxu0 0
  %1984 = vmatprep.subr.bf16.mxu0 0
  %1985 = vmatpush1.bf16.msra.mxu0 0
  %1986 = vmatprep.subr.bf16.mxu0 0
  %1987 = vmatpush1.bf16.msra.mxu0 0
  %1988 = vmatprep.mubr.bf16.mxu0 0
  %1989 = vmatmul.mubr.bf16.gmra.mrb[0].mxu0 %v1954
  %v1990 = vpop.f32.mrb[0].mxu0
  %v1991 = vadd.f32 0.0, %v1990
  %v1992 = vpop.f32.mrb[0].mxu0
  %v1993 = vpop.f32.mrb[0].mxu0
  %v1994 = vpop.f32.mrb[0].mxu0
  %1995 = vdwg.mxu0
  %v1996 = vadd.f32 %v1919, %v1991
  %v1997 = vld [vmem:[%s12 + $0xa0] sm:$0xf]
  %v1998 = vld [vmem:[%s12 + $0xa4] sm:$0xf]
  %v1999 = vld [vmem:[%s12 + $0xa8] sm:$0xf]
  %v2000 = vld [vmem:[%s12 + $0xac] sm:$0xf]
  %v2001 = vld [vmem:[%s12 + $0xb0] sm:$0xf]
  %v2002 = vld [vmem:[%s12 + $0xb4] sm:$0xf]
  %v2003 = vld [vmem:[%s12 + $0xb8] sm:$0xf]
  %v2004 = vld [vmem:[%s12 + $0xbc] sm:$0xf]
  %v2005 = vrot.slane %v1630, 2
  %v2014 = vunpack.c.l.b16 %v1997
  %v2015 = vunpack.c.l.b16 %v1998
  %v2016 = vunpack.c.l.b16 %v1999
  %v2017 = vunpack.c.l.b16 %v2000
  %v2018 = vunpack.c.l.b16 %v2001
  %v2019 = vunpack.c.l.b16 %v2002
  %v2020 = vunpack.c.l.b16 %v2003
  %v2021 = vunpack.c.l.b16 %v2004
  %v2022 = vpack.c.b16 %v2015, %v2014
  %v2023 = vpack.c.b16 %v2017, %v2016
  %v2024 = vpack.c.b16 %v2019, %v2018
  %v2025 = vpack.c.b16 %v2021, %v2020
  %v2031 = vsel %vm274, %v2005, 0
  %2033 = vmatprep.subr.bf16.mxu0 0
  %2034 = vmatpush1.bf16.msra.mxu0 %v2022
  %2035 = vmatprep.subr.bf16.mxu0 0
  %2036 = vmatpush1.bf16.msra.mxu0 %v2023
  %2037 = vmatprep.subr.bf16.mxu0 0
  %2038 = vmatpush1.bf16.msra.mxu0 %v2024
  %2039 = vmatprep.subr.bf16.mxu0 0
  %2040 = vmatpush1.bf16.msra.mxu0 %v2025
  %2041 = vmatprep.subr.bf16.mxu0 0
  %2042 = vmatpush1.bf16.msra.mxu0 0
  %2043 = vmatprep.subr.bf16.mxu0 0
  %2044 = vmatpush1.bf16.msra.mxu0 0
  %2045 = vmatprep.subr.bf16.mxu0 0
  %2046 = vmatpush1.bf16.msra.mxu0 0
  %2047 = vmatprep.subr.bf16.mxu0 0
  %2048 = vmatpush1.bf16.msra.mxu0 0
  %2049 = vmatprep.subr.bf16.mxu0 0
  %2050 = vmatpush1.bf16.msra.mxu0 0
  %2051 = vmatprep.subr.bf16.mxu0 0
  %2052 = vmatpush1.bf16.msra.mxu0 0
  %2053 = vmatprep.subr.bf16.mxu0 0
  %2054 = vmatpush1.bf16.msra.mxu0 0
  %2055 = vmatprep.subr.bf16.mxu0 0
  %2056 = vmatpush1.bf16.msra.mxu0 0
  %2057 = vmatprep.subr.bf16.mxu0 0
  %2058 = vmatpush1.bf16.msra.mxu0 0
  %2059 = vmatprep.subr.bf16.mxu0 0
  %2060 = vmatpush1.bf16.msra.mxu0 0
  %2061 = vmatprep.subr.bf16.mxu0 0
  %2062 = vmatpush1.bf16.msra.mxu0 0
  %2063 = vmatprep.subr.bf16.mxu0 0
  %2064 = vmatpush1.bf16.msra.mxu0 0
  %2065 = vmatprep.mubr.bf16.mxu0 0
  %2066 = vmatmul.mubr.bf16.gmra.mrb[0].mxu0 %v2031
  %v2067 = vpop.f32.mrb[0].mxu0
  %v2068 = vadd.f32 0.0, %v2067
  %v2069 = vpop.f32.mrb[0].mxu0
  %v2070 = vpop.f32.mrb[0].mxu0
  %v2071 = vpop.f32.mrb[0].mxu0
  %2072 = vdwg.mxu0
  %v2073 = vadd.f32 %v1996, %v2068
  %v2074 = vld [vmem:[%s12 + $0xc0] sm:$0xf]
  %v2075 = vld [vmem:[%s12 + $0xc4] sm:$0xf]
  %v2076 = vld [vmem:[%s12 + $0xc8] sm:$0xf]
  %v2077 = vld [vmem:[%s12 + $0xcc] sm:$0xf]
  %v2078 = vld [vmem:[%s12 + $0xd0] sm:$0xf]
  %v2079 = vld [vmem:[%s12 + $0xd4] sm:$0xf]
  %v2080 = vld [vmem:[%s12 + $0xd8] sm:$0xf]
  %v2081 = vld [vmem:[%s12 + $0xdc] sm:$0xf]
  %v2082 = vrot.slane %v1612, 3
  %v2091 = vunpack.c.l.b16 %v2074
  %v2092 = vunpack.c.l.b16 %v2075
  %v2093 = vunpack.c.l.b16 %v2076
  %v2094 = vunpack.c.l.b16 %v2077
  %v2095 = vunpack.c.l.b16 %v2078
  %v2096 = vunpack.c.l.b16 %v2079
  %v2097 = vunpack.c.l.b16 %v2080
  %v2098 = vunpack.c.l.b16 %v2081
  %v2099 = vpack.c.b16 %v2092, %v2091
  %v2100 = vpack.c.b16 %v2094, %v2093
  %v2101 = vpack.c.b16 %v2096, %v2095
  %v2102 = vpack.c.b16 %v2098, %v2097
  %v2108 = vsel %vm274, %v2082, 0
  %2110 = vmatprep.subr.bf16.mxu0 0
  %2111 = vmatpush1.bf16.msra.mxu0 %v2099
  %2112 = vmatprep.subr.bf16.mxu0 0
  %2113 = vmatpush1.bf16.msra.mxu0 %v2100
  %2114 = vmatprep.subr.bf16.mxu0 0
  %2115 = vmatpush1.bf16.msra.mxu0 %v2101
  %2116 = vmatprep.subr.bf16.mxu0 0
  %2117 = vmatpush1.bf16.msra.mxu0 %v2102
  %2118 = vmatprep.subr.bf16.mxu0 0
  %2119 = vmatpush1.bf16.msra.mxu0 0
  %2120 = vmatprep.subr.bf16.mxu0 0
  %2121 = vmatpush1.bf16.msra.mxu0 0
  %2122 = vmatprep.subr.bf16.mxu0 0
  %2123 = vmatpush1.bf16.msra.mxu0 0
  %2124 = vmatprep.subr.bf16.mxu0 0
  %2125 = vmatpush1.bf16.msra.mxu0 0
  %2126 = vmatprep.subr.bf16.mxu0 0
  %2127 = vmatpush1.bf16.msra.mxu0 0
  %2128 = vmatprep.subr.bf16.mxu0 0
  %2129 = vmatpush1.bf16.msra.mxu0 0
  %2130 = vmatprep.subr.bf16.mxu0 0
  %2131 = vmatpush1.bf16.msra.mxu0 0
  %2132 = vmatprep.subr.bf16.mxu0 0
  %2133 = vmatpush1.bf16.msra.mxu0 0
  %2134 = vmatprep.subr.bf16.mxu0 0
  %2135 = vmatpush1.bf16.msra.mxu0 0
  %2136 = vmatprep.subr.bf16.mxu0 0
  %2137 = vmatpush1.bf16.msra.mxu0 0
  %2138 = vmatprep.subr.bf16.mxu0 0
  %2139 = vmatpush1.bf16.msra.mxu0 0
  %2140 = vmatprep.subr.bf16.mxu0 0
  %2141 = vmatpush1.bf16.msra.mxu0 0
  %2142 = vmatprep.mubr.bf16.mxu0 0
  %2143 = vmatmul.mubr.bf16.gmra.mrb[0].mxu0 %v2108
  %v2144 = vpop.f32.mrb[0].mxu0
  %v2145 = vadd.f32 0.0, %v2144
  %v2146 = vpop.f32.mrb[0].mxu0
  %v2147 = vpop.f32.mrb[0].mxu0
  %v2148 = vpop.f32.mrb[0].mxu0
  %2149 = vdwg.mxu0
  %v2150 = vadd.f32 %v2073, %v2145
  %v2151 = vld [vmem:[%s12 + $0xe0] sm:$0xf]
  %v2152 = vld [vmem:[%s12 + $0xe4] sm:$0xf]
  %v2153 = vld [vmem:[%s12 + $0xe8] sm:$0xf]
  %v2154 = vld [vmem:[%s12 + $0xec] sm:$0xf]
  %v2155 = vld [vmem:[%s12 + $0xf0] sm:$0xf]
  %v2156 = vld [vmem:[%s12 + $0xf4] sm:$0xf]
  %v2157 = vld [vmem:[%s12 + $0xf8] sm:$0xf]
  %v2158 = vld [vmem:[%s12 + $0xfc] sm:$0xf]
  %v2159 = vrot.slane %v1630, 3
  %v2168 = vunpack.c.l.b16 %v2151
  %v2169 = vunpack.c.l.b16 %v2152
  %v2170 = vunpack.c.l.b16 %v2153
  %v2171 = vunpack.c.l.b16 %v2154
  %v2172 = vunpack.c.l.b16 %v2155
  %v2173 = vunpack.c.l.b16 %v2156
  %v2174 = vunpack.c.l.b16 %v2157
  %v2175 = vunpack.c.l.b16 %v2158
  %v2176 = vpack.c.b16 %v2169, %v2168
  %v2177 = vpack.c.b16 %v2171, %v2170
  %v2178 = vpack.c.b16 %v2173, %v2172
  %v2179 = vpack.c.b16 %v2175, %v2174
  %v2185 = vsel %vm274, %v2159, 0
  %2187 = vmatprep.subr.bf16.mxu0 0
  %2188 = vmatpush1.bf16.msra.mxu0 %v2176
  %2189 = vmatprep.subr.bf16.mxu0 0
  %2190 = vmatpush1.bf16.msra.mxu0 %v2177
  %2191 = vmatprep.subr.bf16.mxu0 0
  %2192 = vmatpush1.bf16.msra.mxu0 %v2178
  %2193 = vmatprep.subr.bf16.mxu0 0
  %2194 = vmatpush1.bf16.msra.mxu0 %v2179
  %2195 = vmatprep.subr.bf16.mxu0 0
  %2196 = vmatpush1.bf16.msra.mxu0 0
  %2197 = vmatprep.subr.bf16.mxu0 0
  %2198 = vmatpush1.bf16.msra.mxu0 0
  %2199 = vmatprep.subr.bf16.mxu0 0
  %2200 = vmatpush1.bf16.msra.mxu0 0
  %2201 = vmatprep.subr.bf16.mxu0 0
  %2202 = vmatpush1.bf16.msra.mxu0 0
  %2203 = vmatprep.subr.bf16.mxu0 0
  %2204 = vmatpush1.bf16.msra.mxu0 0
  %2205 = vmatprep.subr.bf16.mxu0 0
  %2206 = vmatpush1.bf16.msra.mxu0 0
  %2207 = vmatprep.subr.bf16.mxu0 0
  %2208 = vmatpush1.bf16.msra.mxu0 0
  %2209 = vmatprep.subr.bf16.mxu0 0
  %2210 = vmatpush1.bf16.msra.mxu0 0
  %2211 = vmatprep.subr.bf16.mxu0 0
  %2212 = vmatpush1.bf16.msra.mxu0 0
  %2213 = vmatprep.subr.bf16.mxu0 0
  %2214 = vmatpush1.bf16.msra.mxu0 0
  %2215 = vmatprep.subr.bf16.mxu0 0
  %2216 = vmatpush1.bf16.msra.mxu0 0
  %2217 = vmatprep.subr.bf16.mxu0 0
  %2218 = vmatpush1.bf16.msra.mxu0 0
  %2219 = vmatprep.mubr.bf16.mxu0 0
  %2220 = vmatmul.mubr.bf16.gmra.mrb[0].mxu0 %v2185
  %v2221 = vpop.f32.mrb[0].mxu0
  %v2222 = vadd.f32 0.0, %v2221
  %v2223 = vpop.f32.mrb[0].mxu0
  %v2224 = vpop.f32.mrb[0].mxu0
  %v2225 = vpop.f32.mrb[0].mxu0
  %2226 = vdwg.mxu0
  %v2227 = vadd.f32 %v2150, %v2222
  %v2228 = vld [vmem:[%s12 + $0x100] sm:$0xf]
  %v2229 = vld [vmem:[%s12 + $0x104] sm:$0xf]
  %v2230 = vld [vmem:[%s12 + $0x108] sm:$0xf]
  %v2231 = vld [vmem:[%s12 + $0x10c] sm:$0xf]
  %v2232 = vld [vmem:[%s12 + $0x110] sm:$0xf]
  %v2233 = vld [vmem:[%s12 + $0x114] sm:$0xf]
  %v2234 = vld [vmem:[%s12 + $0x118] sm:$0xf]
  %v2235 = vld [vmem:[%s12 + $0x11c] sm:$0xf]
  %v2236 = vrot.slane %v1612, 4
  %v2245 = vunpack.c.l.b16 %v2228
  %v2246 = vunpack.c.l.b16 %v2229
  %v2247 = vunpack.c.l.b16 %v2230
  %v2248 = vunpack.c.l.b16 %v2231
  %v2249 = vunpack.c.l.b16 %v2232
  %v2250 = vunpack.c.l.b16 %v2233
  %v2251 = vunpack.c.l.b16 %v2234
  %v2252 = vunpack.c.l.b16 %v2235
  %v2253 = vpack.c.b16 %v2246, %v2245
  %v2254 = vpack.c.b16 %v2248, %v2247
  %v2255 = vpack.c.b16 %v2250, %v2249
  %v2256 = vpack.c.b16 %v2252, %v2251
  %v2262 = vsel %vm274, %v2236, 0
  %2264 = vmatprep.subr.bf16.mxu0 0
  %2265 = vmatpush1.bf16.msra.mxu0 %v2253
  %2266 = vmatprep.subr.bf16.mxu0 0
  %2267 = vmatpush1.bf16.msra.mxu0 %v2254
  %2268 = vmatprep.subr.bf16.mxu0 0
  %2269 = vmatpush1.bf16.msra.mxu0 %v2255
  %2270 = vmatprep.subr.bf16.mxu0 0
  %2271 = vmatpush1.bf16.msra.mxu0 %v2256
  %2272 = vmatprep.subr.bf16.mxu0 0
  %2273 = vmatpush1.bf16.msra.mxu0 0
  %2274 = vmatprep.subr.bf16.mxu0 0
  %2275 = vmatpush1.bf16.msra.mxu0 0
  %2276 = vmatprep.subr.bf16.mxu0 0
  %2277 = vmatpush1.bf16.msra.mxu0 0
  %2278 = vmatprep.subr.bf16.mxu0 0
  %2279 = vmatpush1.bf16.msra.mxu0 0
  %2280 = vmatprep.subr.bf16.mxu0 0
  %2281 = vmatpush1.bf16.msra.mxu0 0
  %2282 = vmatprep.subr.bf16.mxu0 0
  %2283 = vmatpush1.bf16.msra.mxu0 0
  %2284 = vmatprep.subr.bf16.mxu0 0
  %2285 = vmatpush1.bf16.msra.mxu0 0
  %2286 = vmatprep.subr.bf16.mxu0 0
  %2287 = vmatpush1.bf16.msra.mxu0 0
  %2288 = vmatprep.subr.bf16.mxu0 0
  %2289 = vmatpush1.bf16.msra.mxu0 0
  %2290 = vmatprep.subr.bf16.mxu0 0
  %2291 = vmatpush1.bf16.msra.mxu0 0
  %2292 = vmatprep.subr.bf16.mxu0 0
  %2293 = vmatpush1.bf16.msra.mxu0 0
  %2294 = vmatprep.subr.bf16.mxu0 0
  %2295 = vmatpush1.bf16.msra.mxu0 0
  %2296 = vmatprep.mubr.bf16.mxu0 0
  %2297 = vmatmul.mubr.bf16.gmra.mrb[0].mxu0 %v2262
  %v2298 = vpop.f32.mrb[0].mxu0
  %v2299 = vadd.f32 0.0, %v2298
  %v2300 = vpop.f32.mrb[0].mxu0
  %v2301 = vpop.f32.mrb[0].mxu0
  %v2302 = vpop.f32.mrb[0].mxu0
  %2303 = vdwg.mxu0
  %v2304 = vadd.f32 %v2227, %v2299
  %v2305 = vld [vmem:[%s12 + $0x120] sm:$0xf]
  %v2306 = vld [vmem:[%s12 + $0x124] sm:$0xf]
  %v2307 = vld [vmem:[%s12 + $0x128] sm:$0xf]
  %v2308 = vld [vmem:[%s12 + $0x12c] sm:$0xf]
  %v2309 = vld [vmem:[%s12 + $0x130] sm:$0xf]
  %v2310 = vld [vmem:[%s12 + $0x134] sm:$0xf]
  %v2311 = vld [vmem:[%s12 + $0x138] sm:$0xf]
  %v2312 = vld [vmem:[%s12 + $0x13c] sm:$0xf]
  %v2313 = vrot.slane %v1630, 4
  %v2322 = vunpack.c.l.b16 %v2305
  %v2323 = vunpack.c.l.b16 %v2306
  %v2324 = vunpack.c.l.b16 %v2307
  %v2325 = vunpack.c.l.b16 %v2308
  %v2326 = vunpack.c.l.b16 %v2309
  %v2327 = vunpack.c.l.b16 %v2310
  %v2328 = vunpack.c.l.b16 %v2311
  %v2329 = vunpack.c.l.b16 %v2312
  %v2330 = vpack.c.b16 %v2323, %v2322
  %v2331 = vpack.c.b16 %v2325, %v2324
  %v2332 = vpack.c.b16 %v2327, %v2326
  %v2333 = vpack.c.b16 %v2329, %v2328
  %v2339 = vsel %vm274, %v2313, 0
  %2341 = vmatprep.subr.bf16.mxu0 0
  %2342 = vmatpush1.bf16.msra.mxu0 %v2330
  %2343 = vmatprep.subr.bf16.mxu0 0
  %2344 = vmatpush1.bf16.msra.mxu0 %v2331
  %2345 = vmatprep.subr.bf16.mxu0 0
  %2346 = vmatpush1.bf16.msra.mxu0 %v2332
  %2347 = vmatprep.subr.bf16.mxu0 0
  %2348 = vmatpush1.bf16.msra.mxu0 %v2333
  %2349 = vmatprep.subr.bf16.mxu0 0
  %2350 = vmatpush1.bf16.msra.mxu0 0
  %2351 = vmatprep.subr.bf16.mxu0 0
  %2352 = vmatpush1.bf16.msra.mxu0 0
  %2353 = vmatprep.subr.bf16.mxu0 0
  %2354 = vmatpush1.bf16.msra.mxu0 0
  %2355 = vmatprep.subr.bf16.mxu0 0
  %2356 = vmatpush1.bf16.msra.mxu0 0
  %2357 = vmatprep.subr.bf16.mxu0 0
  %2358 = vmatpush1.bf16.msra.mxu0 0
  %2359 = vmatprep.subr.bf16.mxu0 0
  %2360 = vmatpush1.bf16.msra.mxu0 0
  %2361 = vmatprep.subr.bf16.mxu0 0
  %2362 = vmatpush1.bf16.msra.mxu0 0
  %2363 = vmatprep.subr.bf16.mxu0 0
  %2364 = vmatpush1.bf16.msra.mxu0 0
  %2365 = vmatprep.subr.bf16.mxu0 0
  %2366 = vmatpush1.bf16.msra.mxu0 0
  %2367 = vmatprep.subr.bf16.mxu0 0
  %2368 = vmatpush1.bf16.msra.mxu0 0
  %2369 = vmatprep.subr.bf16.mxu0 0
  %2370 = vmatpush1.bf16.msra.mxu0 0
  %2371 = vmatprep.subr.bf16.mxu0 0
  %2372 = vmatpush1.bf16.msra.mxu0 0
  %2373 = vmatprep.mubr.bf16.mxu0 0
  %2374 = vmatmul.mubr.bf16.gmra.mrb[0].mxu0 %v2339
  %v2375 = vpop.f32.mrb[0].mxu0
  %v2376 = vadd.f32 0.0, %v2375
  %v2377 = vpop.f32.mrb[0].mxu0
  %v2378 = vpop.f32.mrb[0].mxu0
  %v2379 = vpop.f32.mrb[0].mxu0
  %2380 = vdwg.mxu0
  %v2381 = vadd.f32 %v2304, %v2376
  %v2382 = vld [vmem:[%s12 + $0x140] sm:$0xf]
  %v2383 = vld [vmem:[%s12 + $0x144] sm:$0xf]
  %v2384 = vld [vmem:[%s12 + $0x148] sm:$0xf]
  %v2385 = vld [vmem:[%s12 + $0x14c] sm:$0xf]
  %v2386 = vld [vmem:[%s12 + $0x150] sm:$0xf]
  %v2387 = vld [vmem:[%s12 + $0x154] sm:$0xf]
  %v2388 = vld [vmem:[%s12 + $0x158] sm:$0xf]
  %v2389 = vld [vmem:[%s12 + $0x15c] sm:$0xf]
  %v2390 = vrot.slane %v1612, 5
  %v2399 = vunpack.c.l.b16 %v2382
  %v2400 = vunpack.c.l.b16 %v2383
  %v2401 = vunpack.c.l.b16 %v2384
  %v2402 = vunpack.c.l.b16 %v2385
  %v2403 = vunpack.c.l.b16 %v2386
  %v2404 = vunpack.c.l.b16 %v2387
  %v2405 = vunpack.c.l.b16 %v2388
  %v2406 = vunpack.c.l.b16 %v2389
  %v2407 = vpack.c.b16 %v2400, %v2399
  %v2408 = vpack.c.b16 %v2402, %v2401
  %v2409 = vpack.c.b16 %v2404, %v2403
  %v2410 = vpack.c.b16 %v2406, %v2405
  %v2416 = vsel %vm274, %v2390, 0
  %2418 = vmatprep.subr.bf16.mxu0 0
  %2419 = vmatpush1.bf16.msra.mxu0 %v2407
  %2420 = vmatprep.subr.bf16.mxu0 0
  %2421 = vmatpush1.bf16.msra.mxu0 %v2408
  %2422 = vmatprep.subr.bf16.mxu0 0
  %2423 = vmatpush1.bf16.msra.mxu0 %v2409
  %2424 = vmatprep.subr.bf16.mxu0 0
  %2425 = vmatpush1.bf16.msra.mxu0 %v2410
  %2426 = vmatprep.subr.bf16.mxu0 0
  %2427 = vmatpush1.bf16.msra.mxu0 0
  %2428 = vmatprep.subr.bf16.mxu0 0
  %2429 = vmatpush1.bf16.msra.mxu0 0
  %2430 = vmatprep.subr.bf16.mxu0 0
  %2431 = vmatpush1.bf16.msra.mxu0 0
  %2432 = vmatprep.subr.bf16.mxu0 0
  %2433 = vmatpush1.bf16.msra.mxu0 0
  %2434 = vmatprep.subr.bf16.mxu0 0
  %2435 = vmatpush1.bf16.msra.mxu0 0
  %2436 = vmatprep.subr.bf16.mxu0 0
  %2437 = vmatpush1.bf16.msra.mxu0 0
  %2438 = vmatprep.subr.bf16.mxu0 0
  %2439 = vmatpush1.bf16.msra.mxu0 0
  %2440 = vmatprep.subr.bf16.mxu0 0
  %2441 = vmatpush1.bf16.msra.mxu0 0
  %2442 = vmatprep.subr.bf16.mxu0 0
  %2443 = vmatpush1.bf16.msra.mxu0 0
  %2444 = vmatprep.subr.bf16.mxu0 0
  %2445 = vmatpush1.bf16.msra.mxu0 0
  %2446 = vmatprep.subr.bf16.mxu0 0
  %2447 = vmatpush1.bf16.msra.mxu0 0
  %2448 = vmatprep.subr.bf16.mxu0 0
  %2449 = vmatpush1.bf16.msra.mxu0 0
  %2450 = vmatprep.mubr.bf16.mxu0 0
  %2451 = vmatmul.mubr.bf16.gmra.mrb[0].mxu0 %v2416
  %v2452 = vpop.f32.mrb[0].mxu0
  %v2453 = vadd.f32 0.0, %v2452
  %v2454 = vpop.f32.mrb[0].mxu0
  %v2455 = vpop.f32.mrb[0].mxu0
  %v2456 = vpop.f32.mrb[0].mxu0
  %2457 = vdwg.mxu0
  %v2458 = vadd.f32 %v2381, %v2453
  %v2459 = vld [vmem:[%s12 + $0x160] sm:$0xf]
  %v2460 = vld [vmem:[%s12 + $0x164] sm:$0xf]
  %v2461 = vld [vmem:[%s12 + $0x168] sm:$0xf]
  %v2462 = vld [vmem:[%s12 + $0x16c] sm:$0xf]
  %v2463 = vld [vmem:[%s12 + $0x170] sm:$0xf]
  %v2464 = vld [vmem:[%s12 + $0x174] sm:$0xf]
  %v2465 = vld [vmem:[%s12 + $0x178] sm:$0xf]
  %v2466 = vld [vmem:[%s12 + $0x17c] sm:$0xf]
  %v2467 = vrot.slane %v1630, 5
  %v2476 = vunpack.c.l.b16 %v2459
  %v2477 = vunpack.c.l.b16 %v2460
  %v2478 = vunpack.c.l.b16 %v2461
  %v2479 = vunpack.c.l.b16 %v2462
  %v2480 = vunpack.c.l.b16 %v2463
  %v2481 = vunpack.c.l.b16 %v2464
  %v2482 = vunpack.c.l.b16 %v2465
  %v2483 = vunpack.c.l.b16 %v2466
  %v2484 = vpack.c.b16 %v2477, %v2476
  %v2485 = vpack.c.b16 %v2479, %v2478
  %v2486 = vpack.c.b16 %v2481, %v2480
  %v2487 = vpack.c.b16 %v2483, %v2482
  %v2493 = vsel %vm274, %v2467, 0
  %2495 = vmatprep.subr.bf16.mxu0 0
  %2496 = vmatpush1.bf16.msra.mxu0 %v2484
  %2497 = vmatprep.subr.bf16.mxu0 0
  %2498 = vmatpush1.bf16.msra.mxu0 %v2485
  %2499 = vmatprep.subr.bf16.mxu0 0
  %2500 = vmatpush1.bf16.msra.mxu0 %v2486
  %2501 = vmatprep.subr.bf16.mxu0 0
  %2502 = vmatpush1.bf16.msra.mxu0 %v2487
  %2503 = vmatprep.subr.bf16.mxu0 0
  %2504 = vmatpush1.bf16.msra.mxu0 0
  %2505 = vmatprep.subr.bf16.mxu0 0
  %2506 = vmatpush1.bf16.msra.mxu0 0
  %2507 = vmatprep.subr.bf16.mxu0 0
  %2508 = vmatpush1.bf16.msra.mxu0 0
  %2509 = vmatprep.subr.bf16.mxu0 0
  %2510 = vmatpush1.bf16.msra.mxu0 0
  %2511 = vmatprep.subr.bf16.mxu0 0
  %2512 = vmatpush1.bf16.msra.mxu0 0
  %2513 = vmatprep.subr.bf16.mxu0 0
  %2514 = vmatpush1.bf16.msra.mxu0 0
  %2515 = vmatprep.subr.bf16.mxu0 0
  %2516 = vmatpush1.bf16.msra.mxu0 0
  %2517 = vmatprep.subr.bf16.mxu0 0
  %2518 = vmatpush1.bf16.msra.mxu0 0
  %2519 = vmatprep.subr.bf16.mxu0 0
  %2520 = vmatpush1.bf16.msra.mxu0 0
  %2521 = vmatprep.subr.bf16.mxu0 0
  %2522 = vmatpush1.bf16.msra.mxu0 0
  %2523 = vmatprep.subr.bf16.mxu0 0
  %2524 = vmatpush1.bf16.msra.mxu0 0
  %2525 = vmatprep.subr.bf16.mxu0 0
  %2526 = vmatpush1.bf16.msra.mxu0 0
  %2527 = vmatprep.mubr.bf16.mxu0 0
  %2528 = vmatmul.mubr.bf16.gmra.mrb[0].mxu0 %v2493
  %v2529 = vpop.f32.mrb[0].mxu0
  %v2530 = vadd.f32 0.0, %v2529
  %v2531 = vpop.f32.mrb[0].mxu0
  %v2532 = vpop.f32.mrb[0].mxu0
  %v2533 = vpop.f32.mrb[0].mxu0
  %2534 = vdwg.mxu0
  %v2535 = vadd.f32 %v2458, %v2530
  %v2536 = vld [vmem:[%s12 + $0x180] sm:$0xf]
  %v2537 = vld [vmem:[%s12 + $0x184] sm:$0xf]
  %v2538 = vld [vmem:[%s12 + $0x188] sm:$0xf]
  %v2539 = vld [vmem:[%s12 + $0x18c] sm:$0xf]
  %v2540 = vld [vmem:[%s12 + $0x190] sm:$0xf]
  %v2541 = vld [vmem:[%s12 + $0x194] sm:$0xf]
  %v2542 = vld [vmem:[%s12 + $0x198] sm:$0xf]
  %v2543 = vld [vmem:[%s12 + $0x19c] sm:$0xf]
  %v2544 = vrot.slane %v1612, 6
  %v2553 = vunpack.c.l.b16 %v2536
  %v2554 = vunpack.c.l.b16 %v2537
  %v2555 = vunpack.c.l.b16 %v2538
  %v2556 = vunpack.c.l.b16 %v2539
  %v2557 = vunpack.c.l.b16 %v2540
  %v2558 = vunpack.c.l.b16 %v2541
  %v2559 = vunpack.c.l.b16 %v2542
  %v2560 = vunpack.c.l.b16 %v2543
  %v2561 = vpack.c.b16 %v2554, %v2553
  %v2562 = vpack.c.b16 %v2556, %v2555
  %v2563 = vpack.c.b16 %v2558, %v2557
  %v2564 = vpack.c.b16 %v2560, %v2559
  %v2570 = vsel %vm274, %v2544, 0
  %2572 = vmatprep.subr.bf16.mxu0 0
  %2573 = vmatpush1.bf16.msra.mxu0 %v2561
  %2574 = vmatprep.subr.bf16.mxu0 0
  %2575 = vmatpush1.bf16.msra.mxu0 %v2562
  %2576 = vmatprep.subr.bf16.mxu0 0
  %2577 = vmatpush1.bf16.msra.mxu0 %v2563
  %2578 = vmatprep.subr.bf16.mxu0 0
  %2579 = vmatpush1.bf16.msra.mxu0 %v2564
  %2580 = vmatprep.subr.bf16.mxu0 0
  %2581 = vmatpush1.bf16.msra.mxu0 0
  %2582 = vmatprep.subr.bf16.mxu0 0
  %2583 = vmatpush1.bf16.msra.mxu0 0
  %2584 = vmatprep.subr.bf16.mxu0 0
  %2585 = vmatpush1.bf16.msra.mxu0 0
  %2586 = vmatprep.subr.bf16.mxu0 0
  %2587 = vmatpush1.bf16.msra.mxu0 0
  %2588 = vmatprep.subr.bf16.mxu0 0
  %2589 = vmatpush1.bf16.msra.mxu0 0
  %2590 = vmatprep.subr.bf16.mxu0 0
  %2591 = vmatpush1.bf16.msra.mxu0 0
  %2592 = vmatprep.subr.bf16.mxu0 0
  %2593 = vmatpush1.bf16.msra.mxu0 0
  %2594 = vmatprep.subr.bf16.mxu0 0
  %2595 = vmatpush1.bf16.msra.mxu0 0
  %2596 = vmatprep.subr.bf16.mxu0 0
  %2597 = vmatpush1.bf16.msra.mxu0 0
  %2598 = vmatprep.subr.bf16.mxu0 0
  %2599 = vmatpush1.bf16.msra.mxu0 0
  %2600 = vmatprep.subr.bf16.mxu0 0
  %2601 = vmatpush1.bf16.msra.mxu0 0
  %2602 = vmatprep.subr.bf16.mxu0 0
  %2603 = vmatpush1.bf16.msra.mxu0 0
  %2604 = vmatprep.mubr.bf16.mxu0 0
  %2605 = vmatmul.mubr.bf16.gmra.mrb[0].mxu0 %v2570
  %v2606 = vpop.f32.mrb[0].mxu0
  %v2607 = vadd.f32 0.0, %v2606
  %v2608 = vpop.f32.mrb[0].mxu0
  %v2609 = vpop.f32.mrb[0].mxu0
  %v2610 = vpop.f32.mrb[0].mxu0
  %2611 = vdwg.mxu0
  %v2612 = vadd.f32 %v2535, %v2607
  %v2613 = vld [vmem:[%s12 + $0x1a0] sm:$0xf]
  %v2614 = vld [vmem:[%s12 + $0x1a4] sm:$0xf]
  %v2615 = vld [vmem:[%s12 + $0x1a8] sm:$0xf]
  %v2616 = vld [vmem:[%s12 + $0x1ac] sm:$0xf]
  %v2617 = vld [vmem:[%s12 + $0x1b0] sm:$0xf]
  %v2618 = vld [vmem:[%s12 + $0x1b4] sm:$0xf]
  %v2619 = vld [vmem:[%s12 + $0x1b8] sm:$0xf]
  %v2620 = vld [vmem:[%s12 + $0x1bc] sm:$0xf]
  %v2621 = vrot.slane %v1630, 6
  %v2630 = vunpack.c.l.b16 %v2613
  %v2631 = vunpack.c.l.b16 %v2614
  %v2632 = vunpack.c.l.b16 %v2615
  %v2633 = vunpack.c.l.b16 %v2616
  %v2634 = vunpack.c.l.b16 %v2617
  %v2635 = vunpack.c.l.b16 %v2618
  %v2636 = vunpack.c.l.b16 %v2619
  %v2637 = vunpack.c.l.b16 %v2620
  %v2638 = vpack.c.b16 %v2631, %v2630
  %v2639 = vpack.c.b16 %v2633, %v2632
  %v2640 = vpack.c.b16 %v2635, %v2634
  %v2641 = vpack.c.b16 %v2637, %v2636
  %v2647 = vsel %vm274, %v2621, 0
  %2649 = vmatprep.subr.bf16.mxu0 0
  %2650 = vmatpush1.bf16.msra.mxu0 %v2638
  %2651 = vmatprep.subr.bf16.mxu0 0
  %2652 = vmatpush1.bf16.msra.mxu0 %v2639
  %2653 = vmatprep.subr.bf16.mxu0 0
  %2654 = vmatpush1.bf16.msra.mxu0 %v2640
  %2655 = vmatprep.subr.bf16.mxu0 0
  %2656 = vmatpush1.bf16.msra.mxu0 %v2641
  %2657 = vmatprep.subr.bf16.mxu0 0
  %2658 = vmatpush1.bf16.msra.mxu0 0
  %2659 = vmatprep.subr.bf16.mxu0 0
  %2660 = vmatpush1.bf16.msra.mxu0 0
  %2661 = vmatprep.subr.bf16.mxu0 0
  %2662 = vmatpush1.bf16.msra.mxu0 0
  %2663 = vmatprep.subr.bf16.mxu0 0
  %2664 = vmatpush1.bf16.msra.mxu0 0
  %2665 = vmatprep.subr.bf16.mxu0 0
  %2666 = vmatpush1.bf16.msra.mxu0 0
  %2667 = vmatprep.subr.bf16.mxu0 0
  %2668 = vmatpush1.bf16.msra.mxu0 0
  %2669 = vmatprep.subr.bf16.mxu0 0
  %2670 = vmatpush1.bf16.msra.mxu0 0
  %2671 = vmatprep.subr.bf16.mxu0 0
  %2672 = vmatpush1.bf16.msra.mxu0 0
  %2673 = vmatprep.subr.bf16.mxu0 0
  %2674 = vmatpush1.bf16.msra.mxu0 0
  %2675 = vmatprep.subr.bf16.mxu0 0
  %2676 = vmatpush1.bf16.msra.mxu0 0
  %2677 = vmatprep.subr.bf16.mxu0 0
  %2678 = vmatpush1.bf16.msra.mxu0 0
  %2679 = vmatprep.subr.bf16.mxu0 0
  %2680 = vmatpush1.bf16.msra.mxu0 0
  %2681 = vmatprep.mubr.bf16.mxu0 0
  %2682 = vmatmul.mubr.bf16.gmra.mrb[0].mxu0 %v2647
  %v2683 = vpop.f32.mrb[0].mxu0
  %v2684 = vadd.f32 0.0, %v2683
  %v2685 = vpop.f32.mrb[0].mxu0
  %v2686 = vpop.f32.mrb[0].mxu0
  %v2687 = vpop.f32.mrb[0].mxu0
  %2688 = vdwg.mxu0
  %v2689 = vadd.f32 %v2612, %v2684
  %v2690 = vld [vmem:[%s12 + $0x1c0] sm:$0xf]
  %v2691 = vld [vmem:[%s12 + $0x1c4] sm:$0xf]
  %v2692 = vld [vmem:[%s12 + $0x1c8] sm:$0xf]
  %v2693 = vld [vmem:[%s12 + $0x1cc] sm:$0xf]
  %v2694 = vld [vmem:[%s12 + $0x1d0] sm:$0xf]
  %v2695 = vld [vmem:[%s12 + $0x1d4] sm:$0xf]
  %v2696 = vld [vmem:[%s12 + $0x1d8] sm:$0xf]
  %v2697 = vld [vmem:[%s12 + $0x1dc] sm:$0xf]
  %v2698 = vrot.slane %v1612, 7
  %v2707 = vunpack.c.l.b16 %v2690
  %v2708 = vunpack.c.l.b16 %v2691
  %v2709 = vunpack.c.l.b16 %v2692
  %v2710 = vunpack.c.l.b16 %v2693
  %v2711 = vunpack.c.l.b16 %v2694
  %v2712 = vunpack.c.l.b16 %v2695
  %v2713 = vunpack.c.l.b16 %v2696
  %v2714 = vunpack.c.l.b16 %v2697
  %v2715 = vpack.c.b16 %v2708, %v2707
  %v2716 = vpack.c.b16 %v2710, %v2709
  %v2717 = vpack.c.b16 %v2712, %v2711
  %v2718 = vpack.c.b16 %v2714, %v2713
  %v2724 = vsel %vm274, %v2698, 0
  %2726 = vmatprep.subr.bf16.mxu0 0
  %2727 = vmatpush1.bf16.msra.mxu0 %v2715
  %2728 = vmatprep.subr.bf16.mxu0 0
  %2729 = vmatpush1.bf16.msra.mxu0 %v2716
  %2730 = vmatprep.subr.bf16.mxu0 0
  %2731 = vmatpush1.bf16.msra.mxu0 %v2717
  %2732 = vmatprep.subr.bf16.mxu0 0
  %2733 = vmatpush1.bf16.msra.mxu0 %v2718
  %2734 = vmatprep.subr.bf16.mxu0 0
  %2735 = vmatpush1.bf16.msra.mxu0 0
  %2736 = vmatprep.subr.bf16.mxu0 0
  %2737 = vmatpush1.bf16.msra.mxu0 0
  %2738 = vmatprep.subr.bf16.mxu0 0
  %2739 = vmatpush1.bf16.msra.mxu0 0
  %2740 = vmatprep.subr.bf16.mxu0 0
  %2741 = vmatpush1.bf16.msra.mxu0 0
  %2742 = vmatprep.subr.bf16.mxu0 0
  %2743 = vmatpush1.bf16.msra.mxu0 0
  %2744 = vmatprep.subr.bf16.mxu0 0
  %2745 = vmatpush1.bf16.msra.mxu0 0
  %2746 = vmatprep.subr.bf16.mxu0 0
  %2747 = vmatpush1.bf16.msra.mxu0 0
  %2748 = vmatprep.subr.bf16.mxu0 0
  %2749 = vmatpush1.bf16.msra.mxu0 0
  %2750 = vmatprep.subr.bf16.mxu0 0
  %2751 = vmatpush1.bf16.msra.mxu0 0
  %2752 = vmatprep.subr.bf16.mxu0 0
  %2753 = vmatpush1.bf16.msra.mxu0 0
  %2754 = vmatprep.subr.bf16.mxu0 0
  %2755 = vmatpush1.bf16.msra.mxu0 0
  %2756 = vmatprep.subr.bf16.mxu0 0
  %2757 = vmatpush1.bf16.msra.mxu0 0
  %2758 = vmatprep.mubr.bf16.mxu0 0
  %2759 = vmatmul.mubr.bf16.gmra.mrb[0].mxu0 %v2724
  %v2760 = vpop.f32.mrb[0].mxu0
  %v2761 = vadd.f32 0.0, %v2760
  %v2762 = vpop.f32.mrb[0].mxu0
  %v2763 = vpop.f32.mrb[0].mxu0
  %v2764 = vpop.f32.mrb[0].mxu0
  %2765 = vdwg.mxu0
  %v2766 = vadd.f32 %v2689, %v2761
  %v2767 = vld [vmem:[%s12 + $0x1e0] sm:$0xf]
  %v2768 = vld [vmem:[%s12 + $0x1e4] sm:$0xf]
  %v2769 = vld [vmem:[%s12 + $0x1e8] sm:$0xf]
  %v2770 = vld [vmem:[%s12 + $0x1ec] sm:$0xf]
  %v2771 = vld [vmem:[%s12 + $0x1f0] sm:$0xf]
  %v2772 = vld [vmem:[%s12 + $0x1f4] sm:$0xf]
  %v2773 = vld [vmem:[%s12 + $0x1f8] sm:$0xf]
  %v2774 = vld [vmem:[%s12 + $0x1fc] sm:$0xf]
  %v2775 = vrot.slane %v1630, 7
  %v2784 = vunpack.c.l.b16 %v2767
  %v2785 = vunpack.c.l.b16 %v2768
  %v2786 = vunpack.c.l.b16 %v2769
  %v2787 = vunpack.c.l.b16 %v2770
  %v2788 = vunpack.c.l.b16 %v2771
  %v2789 = vunpack.c.l.b16 %v2772
  %v2790 = vunpack.c.l.b16 %v2773
  %v2791 = vunpack.c.l.b16 %v2774
  %v2792 = vpack.c.b16 %v2785, %v2784
  %v2793 = vpack.c.b16 %v2787, %v2786
  %v2794 = vpack.c.b16 %v2789, %v2788
  %v2795 = vpack.c.b16 %v2791, %v2790
  %v2801 = vsel %vm274, %v2775, 0
  %2803 = vmatprep.subr.bf16.mxu0 0
  %2804 = vmatpush1.bf16.msra.mxu0 %v2792
  %2805 = vmatprep.subr.bf16.mxu0 0
  %2806 = vmatpush1.bf16.msra.mxu0 %v2793
  %2807 = vmatprep.subr.bf16.mxu0 0
  %2808 = vmatpush1.bf16.msra.mxu0 %v2794
  %2809 = vmatprep.subr.bf16.mxu0 0
  %2810 = vmatpush1.bf16.msra.mxu0 %v2795
  %2811 = vmatprep.subr.bf16.mxu0 0
  %2812 = vmatpush1.bf16.msra.mxu0 0
  %2813 = vmatprep.subr.bf16.mxu0 0
  %2814 = vmatpush1.bf16.msra.mxu0 0
  %2815 = vmatprep.subr.bf16.mxu0 0
  %2816 = vmatpush1.bf16.msra.mxu0 0
  %2817 = vmatprep.subr.bf16.mxu0 0
  %2818 = vmatpush1.bf16.msra.mxu0 0
  %2819 = vmatprep.subr.bf16.mxu0 0
  %2820 = vmatpush1.bf16.msra.mxu0 0
  %2821 = vmatprep.subr.bf16.mxu0 0
  %2822 = vmatpush1.bf16.msra.mxu0 0
  %2823 = vmatprep.subr.bf16.mxu0 0
  %2824 = vmatpush1.bf16.msra.mxu0 0
  %2825 = vmatprep.subr.bf16.mxu0 0
  %2826 = vmatpush1.bf16.msra.mxu0 0
  %2827 = vmatprep.subr.bf16.mxu0 0
  %2828 = vmatpush1.bf16.msra.mxu0 0
  %2829 = vmatprep.subr.bf16.mxu0 0
  %2830 = vmatpush1.bf16.msra.mxu0 0
  %2831 = vmatprep.subr.bf16.mxu0 0
  %2832 = vmatpush1.bf16.msra.mxu0 0
  %2833 = vmatprep.subr.bf16.mxu0 0
  %2834 = vmatpush1.bf16.msra.mxu0 0
  %2835 = vmatprep.mubr.bf16.mxu0 0
  %2836 = vmatmul.mubr.bf16.gmra.mrb[0].mxu0 %v2801
  %v2837 = vpop.f32.mrb[0].mxu0
  %v2838 = vadd.f32 0.0, %v2837
  %v2839 = vpop.f32.mrb[0].mxu0
  %v2840 = vpop.f32.mrb[0].mxu0
  %v2841 = vpop.f32.mrb[0].mxu0
  %2842 = vdwg.mxu0
  %v2843 = vadd.f32 %v2766, %v2838
  %v2844 = vld [vmem:[%s13] sm:$0x1]
  %v2845 = vadd.f32 %v2843, %v2844
  %v2846 = vmul.f32 %v2845, 0.01
  %v2847 = vmax.f32 %v2845, %v2846
  %v2848 = vpack.c.bf16 %v2847, %v2847
  %v2849 = vld [vmem:[%s1] sm:$0x1]
  %v2850 = vpack.c.bf16 %v2849, %v2849
  %v2851 = vld [vmem:[%s14] sm:$0xf]
  %v2852 = vld [vmem:[%s14 + $0x4] sm:$0xf]
  %v2853 = vld [vmem:[%s14 + $0x8] sm:$0xf]
  %v2854 = vld [vmem:[%s14 + $0xc] sm:$0xf]
  %v2855 = vld [vmem:[%s14 + $0x10] sm:$0xf]
  %v2856 = vld [vmem:[%s14 + $0x14] sm:$0xf]
  %v2857 = vld [vmem:[%s14 + $0x18] sm:$0xf]
  %v2858 = vld [vmem:[%s14 + $0x1c] sm:$0xf]
  %v2859 = vld [vmem:[%s14 + $0x20] sm:$0xf]
  %v2860 = vld [vmem:[%s14 + $0x24] sm:$0xf]
  %v2861 = vld [vmem:[%s14 + $0x28] sm:$0xf]
  %v2862 = vld [vmem:[%s14 + $0x2c] sm:$0xf]
  %v2863 = vld [vmem:[%s14 + $0x30] sm:$0xf]
  %v2864 = vld [vmem:[%s14 + $0x34] sm:$0xf]
  %v2865 = vld [vmem:[%s14 + $0x38] sm:$0xf]
  %v2866 = vld [vmem:[%s14 + $0x3c] sm:$0xf]
  %v2867 = vld [vmem:[%s15] sm:$0xf]
  %vm2868 = vcmask 64512
  %v2870 = vsel %vm2868, %v2850, 0
  %vm2872 = vcmask 1043456
  %v2874 = vsel %vm2872, %v2867, 0
  %2876 = vmatprep.subr.bf16.mxu0 0
  %2877 = vmatpush1.bf16.msra.mxu0 %v2874
  %2878 = vmatprep.subr.bf16.mxu0 0
  %2879 = vmatpush1.bf16.msra.mxu0 0
  %2880 = vmatprep.subr.bf16.mxu0 0
  %2881 = vmatpush1.bf16.msra.mxu0 0
  %2882 = vmatprep.subr.bf16.mxu0 0
  %2883 = vmatpush1.bf16.msra.mxu0 0
  %2884 = vmatprep.subr.bf16.mxu0 0
  %2885 = vmatpush1.bf16.msra.mxu0 0
  %2886 = vmatprep.subr.bf16.mxu0 0
  %2887 = vmatpush1.bf16.msra.mxu0 0
  %2888 = vmatprep.subr.bf16.mxu0 0
  %2889 = vmatpush1.bf16.msra.mxu0 0
  %2890 = vmatprep.subr.bf16.mxu0 0
  %2891 = vmatpush1.bf16.msra.mxu0 0
  %2892 = vmatprep.subr.bf16.mxu0 0
  %2893 = vmatpush1.bf16.msra.mxu0 0
  %2894 = vmatprep.subr.bf16.mxu0 0
  %2895 = vmatpush1.bf16.msra.mxu0 0
  %2896 = vmatprep.subr.bf16.mxu0 0
  %2897 = vmatpush1.bf16.msra.mxu0 0
  %2898 = vmatprep.subr.bf16.mxu0 0
  %2899 = vmatpush1.bf16.msra.mxu0 0
  %2900 = vmatprep.subr.bf16.mxu0 0
  %2901 = vmatpush1.bf16.msra.mxu0 0
  %2902 = vmatprep.subr.bf16.mxu0 0
  %2903 = vmatpush1.bf16.msra.mxu0 0
  %2904 = vmatprep.subr.bf16.mxu0 0
  %2905 = vmatpush1.bf16.msra.mxu0 0
  %2906 = vmatprep.subr.bf16.mxu0 0
  %2907 = vmatpush1.bf16.msra.mxu0 0
  %2908 = vmatprep.mubr.bf16.mxu0 0
  %2909 = vmatmul.mubr.bf16.gmra.mrb[0].mxu0 %v2870
  %v2910 = vpop.f32.mrb[0].mxu0
  %v2911 = vadd.f32 0.0, %v2910
  %v2912 = vpop.f32.mrb[0].mxu0
  %v2913 = vpop.f32.mrb[0].mxu0
  %v2914 = vpop.f32.mrb[0].mxu0
  %2915 = vdwg.mxu0
  %v2932 = vunpack.c.l.b16 %v2851
  %v2933 = vunpack.c.l.b16 %v2852
  %v2934 = vunpack.c.l.b16 %v2853
  %v2935 = vunpack.c.l.b16 %v2854
  %v2936 = vunpack.c.l.b16 %v2855
  %v2937 = vunpack.c.l.b16 %v2856
  %v2938 = vunpack.c.l.b16 %v2857
  %v2939 = vunpack.c.l.b16 %v2858
  %v2940 = vunpack.c.l.b16 %v2859
  %v2941 = vunpack.c.l.b16 %v2860
  %v2942 = vunpack.c.l.b16 %v2861
  %v2943 = vunpack.c.l.b16 %v2862
  %v2944 = vunpack.c.l.b16 %v2863
  %v2945 = vunpack.c.l.b16 %v2864
  %v2946 = vunpack.c.l.b16 %v2865
  %v2947 = vunpack.c.l.b16 %v2866
  %v2948 = vpack.c.b16 %v2933, %v2932
  %v2949 = vpack.c.b16 %v2935, %v2934
  %v2950 = vpack.c.b16 %v2937, %v2936
  %v2951 = vpack.c.b16 %v2939, %v2938
  %v2952 = vpack.c.b16 %v2941, %v2940
  %v2953 = vpack.c.b16 %v2943, %v2942
  %v2954 = vpack.c.b16 %v2945, %v2944
  %v2955 = vpack.c.b16 %v2947, %v2946
  %2964 = vmatprep.subr.bf16.mxu0 0
  %2965 = vmatpush1.bf16.msra.mxu0 %v2948
  %2966 = vmatprep.subr.bf16.mxu0 0
  %2967 = vmatpush1.bf16.msra.mxu0 %v2949
  %2968 = vmatprep.subr.bf16.mxu0 0
  %2969 = vmatpush1.bf16.msra.mxu0 %v2950
  %2970 = vmatprep.subr.bf16.mxu0 0
  %2971 = vmatpush1.bf16.msra.mxu0 %v2951
  %2972 = vmatprep.subr.bf16.mxu0 0
  %2973 = vmatpush1.bf16.msra.mxu0 %v2952
  %2974 = vmatprep.subr.bf16.mxu0 0
  %2975 = vmatpush1.bf16.msra.mxu0 %v2953
  %2976 = vmatprep.subr.bf16.mxu0 0
  %2977 = vmatpush1.bf16.msra.mxu0 %v2954
  %2978 = vmatprep.subr.bf16.mxu0 0
  %2979 = vmatpush1.bf16.msra.mxu0 %v2955
  %2980 = vmatprep.subr.bf16.mxu0 0
  %2981 = vmatpush1.bf16.msra.mxu0 0
  %2982 = vmatprep.subr.bf16.mxu0 0
  %2983 = vmatpush1.bf16.msra.mxu0 0
  %2984 = vmatprep.subr.bf16.mxu0 0
  %2985 = vmatpush1.bf16.msra.mxu0 0
  %2986 = vmatprep.subr.bf16.mxu0 0
  %2987 = vmatpush1.bf16.msra.mxu0 0
  %2988 = vmatprep.subr.bf16.mxu0 0
  %2989 = vmatpush1.bf16.msra.mxu0 0
  %2990 = vmatprep.subr.bf16.mxu0 0
  %2991 = vmatpush1.bf16.msra.mxu0 0
  %2992 = vmatprep.subr.bf16.mxu0 0
  %2993 = vmatpush1.bf16.msra.mxu0 0
  %2994 = vmatprep.subr.bf16.mxu0 0
  %2995 = vmatpush1.bf16.msra.mxu0 0
  %2996 = vmatprep.mubr.bf16.mxu0 0
  %2997 = vmatmul.mubr.bf16.gmra.mrb[0].mxu0 %v2848
  %v2998 = vpop.f32.mrb[0].mxu0
  %v2999 = vadd.f32 %v2911, %v2998
  %v3000 = vpop.f32.mrb[0].mxu0
  %v3001 = vpop.f32.mrb[0].mxu0
  %v3002 = vpop.f32.mrb[0].mxu0
  %3003 = vdwg.mxu0
  %v3004 = vld [vmem:[%s17] sm:$0x1]
  %v3005 = vadd.f32 %v2999, %v3004
  %v3006 = vld [vmem:[%s2] sm:$0xf]
  %v3007 = vpack.c.bf16 %v3006, %v3006
  %v3008 = vld [vmem:[%s16] sm:$0xf]
  %v3009 = vlaneseq
  %v3010 = vshrl.u32 %v3009, 7
  %v3011 = vsub.s32 0, %v3010
  %v3012 = vrot.slane %v3005, %v3011
  %v3014 = vsel %vm2868, %v3007, 0
  %v3017 = vsel %vm2872, %v3008, 0
  %3019 = vmatprep.subr.bf16.mxu0 0
  %3020 = vmatpush1.bf16.msra.mxu0 %v3017
  %3021 = vmatprep.subr.bf16.mxu0 0
  %3022 = vmatpush1.bf16.msra.mxu0 0
  %3023 = vmatprep.subr.bf16.mxu0 0
  %3024 = vmatpush1.bf16.msra.mxu0 0
  %3025 = vmatprep.subr.bf16.mxu0 0
  %3026 = vmatpush1.bf16.msra.mxu0 0
  %3027 = vmatprep.subr.bf16.mxu0 0
  %3028 = vmatpush1.bf16.msra.mxu0 0
  %3029 = vmatprep.subr.bf16.mxu0 0
  %3030 = vmatpush1.bf16.msra.mxu0 0
  %3031 = vmatprep.subr.bf16.mxu0 0
  %3032 = vmatpush1.bf16.msra.mxu0 0
  %3033 = vmatprep.subr.bf16.mxu0 0
  %3034 = vmatpush1.bf16.msra.mxu0 0
  %3035 = vmatprep.subr.bf16.mxu0 0
  %3036 = vmatpush1.bf16.msra.mxu0 0
  %3037 = vmatprep.subr.bf16.mxu0 0
  %3038 = vmatpush1.bf16.msra.mxu0 0
  %3039 = vmatprep.subr.bf16.mxu0 0
  %3040 = vmatpush1.bf16.msra.mxu0 0
  %3041 = vmatprep.subr.bf16.mxu0 0
  %3042 = vmatpush1.bf16.msra.mxu0 0
  %3043 = vmatprep.subr.bf16.mxu0 0
  %3044 = vmatpush1.bf16.msra.mxu0 0
  %3045 = vmatprep.subr.bf16.mxu0 0
  %3046 = vmatpush1.bf16.msra.mxu0 0
  %3047 = vmatprep.subr.bf16.mxu0 0
  %3048 = vmatpush1.bf16.msra.mxu0 0
  %3049 = vmatprep.subr.bf16.mxu0 0
  %3050 = vmatpush1.bf16.msra.mxu0 0
  %3051 = vmatprep.mubr.bf16.mxu0 0
  %3052 = vmatmul.mubr.bf16.gmra.mrb[0].mxu0 %v3014
  %v3053 = vpop.f32.mrb[0].mxu0
  %v3054 = vadd.f32 %v3012, %v3053
  %v3055 = vpop.f32.mrb[0].mxu0
  %v3056 = vpop.f32.mrb[0].mxu0
  %v3057 = vpop.f32.mrb[0].mxu0
  %3058 = vdwg.mxu0
  %v3059 = vmul.f32 %v3054, 0.01
  %v3060 = vmax.f32 %v3054, %v3059
  %v3061 = vpack.c.bf16 %v3060, %v3060
  %v3062 = vld [vmem:[%s18] sm:$0xf]
  %v3063 = vld [vmem:[%s18 + $0x4] sm:$0xf]
  %v3064 = vld [vmem:[%s18 + $0x8] sm:$0xf]
  %v3065 = vld [vmem:[%s18 + $0xc] sm:$0xf]
  %v3066 = vld [vmem:[%s18 + $0x10] sm:$0xf]
  %v3067 = vld [vmem:[%s18 + $0x14] sm:$0xf]
  %v3068 = vld [vmem:[%s18 + $0x18] sm:$0xf]
  %v3069 = vld [vmem:[%s18 + $0x1c] sm:$0xf]
  %v3070 = vld [vmem:[%s18 + $0x20] sm:$0xf]
  %v3071 = vld [vmem:[%s18 + $0x24] sm:$0xf]
  %v3072 = vld [vmem:[%s18 + $0x28] sm:$0xf]
  %v3073 = vld [vmem:[%s18 + $0x2c] sm:$0xf]
  %v3074 = vld [vmem:[%s18 + $0x30] sm:$0xf]
  %v3075 = vld [vmem:[%s18 + $0x34] sm:$0xf]
  %v3076 = vld [vmem:[%s18 + $0x38] sm:$0xf]
  %v3077 = vld [vmem:[%s18 + $0x3c] sm:$0xf]
  %v3078 = vld [vmem:[%s19] sm:$0x1]
  %v3080 = vlaneseq
  %v3081 = vshrl.u32 %v3080, 7
  %v3082 = vsub.s32 0, %v3081
  %v3083 = vrot.slane %v3078, %v3082
  %v3101 = vunpack.c.l.b16 %v3062
  %v3102 = vunpack.c.l.b16 %v3063
  %v3103 = vunpack.c.l.b16 %v3064
  %v3104 = vunpack.c.l.b16 %v3065
  %v3105 = vunpack.c.l.b16 %v3066
  %v3106 = vunpack.c.l.b16 %v3067
  %v3107 = vunpack.c.l.b16 %v3068
  %v3108 = vunpack.c.l.b16 %v3069
  %v3109 = vunpack.c.l.b16 %v3070
  %v3110 = vunpack.c.l.b16 %v3071
  %v3111 = vunpack.c.l.b16 %v3072
  %v3112 = vunpack.c.l.b16 %v3073
  %v3113 = vunpack.c.l.b16 %v3074
  %v3114 = vunpack.c.l.b16 %v3075
  %v3115 = vunpack.c.l.b16 %v3076
  %v3116 = vunpack.c.l.b16 %v3077
  %v3117 = vpack.c.b16 %v3102, %v3101
  %v3118 = vpack.c.b16 %v3104, %v3103
  %v3119 = vpack.c.b16 %v3106, %v3105
  %v3120 = vpack.c.b16 %v3108, %v3107
  %v3121 = vpack.c.b16 %v3110, %v3109
  %v3122 = vpack.c.b16 %v3112, %v3111
  %v3123 = vpack.c.b16 %v3114, %v3113
  %v3124 = vpack.c.b16 %v3116, %v3115
  %3133 = vmatprep.subr.bf16.mxu0 0
  %3134 = vmatpush1.bf16.msra.mxu0 %v3117
  %3135 = vmatprep.subr.bf16.mxu0 0
  %3136 = vmatpush1.bf16.msra.mxu0 %v3118
  %3137 = vmatprep.subr.bf16.mxu0 0
  %3138 = vmatpush1.bf16.msra.mxu0 %v3119
  %3139 = vmatprep.subr.bf16.mxu0 0
  %3140 = vmatpush1.bf16.msra.mxu0 %v3120
  %3141 = vmatprep.subr.bf16.mxu0 0
  %3142 = vmatpush1.bf16.msra.mxu0 %v3121
  %3143 = vmatprep.subr.bf16.mxu0 0
  %3144 = vmatpush1.bf16.msra.mxu0 %v3122
  %3145 = vmatprep.subr.bf16.mxu0 0
  %3146 = vmatpush1.bf16.msra.mxu0 %v3123
  %3147 = vmatprep.subr.bf16.mxu0 0
  %3148 = vmatpush1.bf16.msra.mxu0 %v3124
  %3149 = vmatprep.subr.bf16.mxu0 0
  %3150 = vmatpush1.bf16.msra.mxu0 0
  %3151 = vmatprep.subr.bf16.mxu0 0
  %3152 = vmatpush1.bf16.msra.mxu0 0
  %3153 = vmatprep.subr.bf16.mxu0 0
  %3154 = vmatpush1.bf16.msra.mxu0 0
  %3155 = vmatprep.subr.bf16.mxu0 0
  %3156 = vmatpush1.bf16.msra.mxu0 0
  %3157 = vmatprep.subr.bf16.mxu0 0
  %3158 = vmatpush1.bf16.msra.mxu0 0
  %3159 = vmatprep.subr.bf16.mxu0 0
  %3160 = vmatpush1.bf16.msra.mxu0 0
  %3161 = vmatprep.subr.bf16.mxu0 0
  %3162 = vmatpush1.bf16.msra.mxu0 0
  %3163 = vmatprep.subr.bf16.mxu0 0
  %3164 = vmatpush1.bf16.msra.mxu0 0
  %3165 = vmatprep.mubr.bf16.mxu0 0
  %3166 = vmatmul.mubr.bf16.gmra.mrb[0].mxu0 %v3061
  %v3167 = vpop.f32.mrb[0].mxu0
  %v3168 = vadd.f32 %v3083, %v3167
  %v3169 = vpop.f32.mrb[0].mxu0
  %v3170 = vpop.f32.mrb[0].mxu0
  %v3171 = vpop.f32.mrb[0].mxu0
  %3172 = vdwg.mxu0
  %v3173 = vmul.f32 %v3168, 0.01
  %v3174 = vmax.f32 %v3168, %v3173
  %v3175 = vpack.c.bf16 %v3174, %v3174
  %v3176 = vld [vmem:[%s20] sm:$0xf]
  %v3177 = vld [vmem:[%s20 + $0x4] sm:$0xf]
  %v3178 = vld [vmem:[%s20 + $0x8] sm:$0xf]
  %v3179 = vld [vmem:[%s20 + $0xc] sm:$0xf]
  %v3180 = vld [vmem:[%s20 + $0x10] sm:$0xf]
  %v3181 = vld [vmem:[%s20 + $0x14] sm:$0xf]
  %v3182 = vld [vmem:[%s20 + $0x18] sm:$0xf]
  %v3183 = vld [vmem:[%s20 + $0x1c] sm:$0xf]
  %v3184 = vld [vmem:[%s20 + $0x20] sm:$0xf]
  %v3185 = vld [vmem:[%s20 + $0x24] sm:$0xf]
  %v3186 = vld [vmem:[%s20 + $0x28] sm:$0xf]
  %v3187 = vld [vmem:[%s20 + $0x2c] sm:$0xf]
  %v3188 = vld [vmem:[%s20 + $0x30] sm:$0xf]
  %v3189 = vld [vmem:[%s20 + $0x34] sm:$0xf]
  %v3190 = vld [vmem:[%s20 + $0x38] sm:$0xf]
  %v3191 = vld [vmem:[%s20 + $0x3c] sm:$0xf]
  %v3192 = vld [vmem:[%s21] sm:$0x1]
  %v3194 = vlaneseq
  %v3195 = vshrl.u32 %v3194, 7
  %v3196 = vsub.s32 0, %v3195
  %v3197 = vrot.slane %v3192, %v3196
  %v3215 = vunpack.c.l.b16 %v3176
  %v3216 = vunpack.c.l.b16 %v3177
  %v3217 = vunpack.c.l.b16 %v3178
  %v3218 = vunpack.c.l.b16 %v3179
  %v3219 = vunpack.c.l.b16 %v3180
  %v3220 = vunpack.c.l.b16 %v3181
  %v3221 = vunpack.c.l.b16 %v3182
  %v3222 = vunpack.c.l.b16 %v3183
  %v3223 = vunpack.c.l.b16 %v3184
  %v3224 = vunpack.c.l.b16 %v3185
  %v3225 = vunpack.c.l.b16 %v3186
  %v3226 = vunpack.c.l.b16 %v3187
  %v3227 = vunpack.c.l.b16 %v3188
  %v3228 = vunpack.c.l.b16 %v3189
  %v3229 = vunpack.c.l.b16 %v3190
  %v3230 = vunpack.c.l.b16 %v3191
  %v3231 = vpack.c.b16 %v3216, %v3215
  %v3232 = vpack.c.b16 %v3218, %v3217
  %v3233 = vpack.c.b16 %v3220, %v3219
  %v3234 = vpack.c.b16 %v3222, %v3221
  %v3235 = vpack.c.b16 %v3224, %v3223
  %v3236 = vpack.c.b16 %v3226, %v3225
  %v3237 = vpack.c.b16 %v3228, %v3227
  %v3238 = vpack.c.b16 %v3230, %v3229
  %3247 = vmatprep.subr.bf16.mxu0 0
  %3248 = vmatpush1.bf16.msra.mxu0 %v3231
  %3249 = vmatprep.subr.bf16.mxu0 0
  %3250 = vmatpush1.bf16.msra.mxu0 %v3232
  %3251 = vmatprep.subr.bf16.mxu0 0
  %3252 = vmatpush1.bf16.msra.mxu0 %v3233
  %3253 = vmatprep.subr.bf16.mxu0 0
  %3254 = vmatpush1.bf16.msra.mxu0 %v3234
  %3255 = vmatprep.subr.bf16.mxu0 0
  %3256 = vmatpush1.bf16.msra.mxu0 %v3235
  %3257 = vmatprep.subr.bf16.mxu0 0
  %3258 = vmatpush1.bf16.msra.mxu0 %v3236
  %3259 = vmatprep.subr.bf16.mxu0 0
  %3260 = vmatpush1.bf16.msra.mxu0 %v3237
  %3261 = vmatprep.subr.bf16.mxu0 0
  %3262 = vmatpush1.bf16.msra.mxu0 %v3238
  %3263 = vmatprep.subr.bf16.mxu0 0
  %3264 = vmatpush1.bf16.msra.mxu0 0
  %3265 = vmatprep.subr.bf16.mxu0 0
  %3266 = vmatpush1.bf16.msra.mxu0 0
  %3267 = vmatprep.subr.bf16.mxu0 0
  %3268 = vmatpush1.bf16.msra.mxu0 0
  %3269 = vmatprep.subr.bf16.mxu0 0
  %3270 = vmatpush1.bf16.msra.mxu0 0
  %3271 = vmatprep.subr.bf16.mxu0 0
  %3272 = vmatpush1.bf16.msra.mxu0 0
  %3273 = vmatprep.subr.bf16.mxu0 0
  %3274 = vmatpush1.bf16.msra.mxu0 0
  %3275 = vmatprep.subr.bf16.mxu0 0
  %3276 = vmatpush1.bf16.msra.mxu0 0
  %3277 = vmatprep.subr.bf16.mxu0 0
  %3278 = vmatpush1.bf16.msra.mxu0 0
  %3279 = vmatprep.mubr.bf16.mxu0 0
  %3280 = vmatmul.mubr.bf16.gmra.mrb[0].mxu0 %v3175
  %v3281 = vpop.f32.mrb[0].mxu0
  %v3282 = vadd.f32 %v3197, %v3281
  %v3283 = vpop.f32.mrb[0].mxu0
  %v3284 = vpop.f32.mrb[0].mxu0
  %v3285 = vpop.f32.mrb[0].mxu0
  %3286 = vdwg.mxu0
  %v3287 = vmul.f32 %v3282, 0.01
  %v3288 = vmax.f32 %v3282, %v3287
  %v3289 = vpack.c.bf16 %v3288, %v3288
  %v3290 = vld [vmem:[%s22] sm:$0xff]
  %v3291 = vld [vmem:[%s22 + $0x8] sm:$0xff]
  %v3292 = vld [vmem:[%s22 + $0x10] sm:$0xff]
  %v3293 = vld [vmem:[%s22 + $0x18] sm:$0xff]
  %v3294 = vld [vmem:[%s22 + $0x20] sm:$0xff]
  %v3295 = vld [vmem:[%s22 + $0x28] sm:$0xff]
  %v3296 = vld [vmem:[%s22 + $0x30] sm:$0xff]
  %v3297 = vld [vmem:[%s22 + $0x38] sm:$0xff]
  %v3298 = vld [vmem:[%s22 + $0x40] sm:$0xff]
  %v3299 = vld [vmem:[%s22 + $0x48] sm:$0xff]
  %v3300 = vld [vmem:[%s22 + $0x50] sm:$0xff]
  %v3301 = vld [vmem:[%s22 + $0x58] sm:$0xff]
  %v3302 = vld [vmem:[%s22 + $0x60] sm:$0xff]
  %v3303 = vld [vmem:[%s22 + $0x68] sm:$0xff]
  %v3304 = vld [vmem:[%s22 + $0x70] sm:$0xff]
  %v3305 = vld [vmem:[%s22 + $0x78] sm:$0xff]
  %v3306 = vld [vmem:[%s23] sm:$0x3]
  %v3308 = vlaneseq
  %v3309 = vshrl.u32 %v3308, 7
  %v3310 = vsub.s32 0, %v3309
  %v3311 = vrot.slane %v3306, %v3310
  %v3312 = vlaneseq
  %v3313 = vshrl.u32 %v3312, 7
  %v3314 = vsub.s32 1, %v3313
  %v3315 = vrot.slane %v3306, %v3314
  %v3334 = vunpack.c.l.b16 %v3290
  %v3335 = vunpack.c.h.b16 %v3290
  %v3336 = vunpack.c.l.b16 %v3291
  %v3337 = vunpack.c.h.b16 %v3291
  %v3338 = vunpack.c.l.b16 %v3292
  %v3339 = vunpack.c.h.b16 %v3292
  %v3340 = vunpack.c.l.b16 %v3293
  %v3341 = vunpack.c.h.b16 %v3293
  %v3342 = vunpack.c.l.b16 %v3294
  %v3343 = vunpack.c.h.b16 %v3294
  %v3344 = vunpack.c.l.b16 %v3295
  %v3345 = vunpack.c.h.b16 %v3295
  %v3346 = vunpack.c.l.b16 %v3296
  %v3347 = vunpack.c.h.b16 %v3296
  %v3348 = vunpack.c.l.b16 %v3297
  %v3349 = vunpack.c.h.b16 %v3297
  %v3350 = vunpack.c.l.b16 %v3298
  %v3351 = vunpack.c.h.b16 %v3298
  %v3352 = vunpack.c.l.b16 %v3299
  %v3353 = vunpack.c.h.b16 %v3299
  %v3354 = vunpack.c.l.b16 %v3300
  %v3355 = vunpack.c.h.b16 %v3300
  %v3356 = vunpack.c.l.b16 %v3301
  %v3357 = vunpack.c.h.b16 %v3301
  %v3358 = vunpack.c.l.b16 %v3302
  %v3359 = vunpack.c.h.b16 %v3302
  %v3360 = vunpack.c.l.b16 %v3303
  %v3361 = vunpack.c.h.b16 %v3303
  %v3362 = vunpack.c.l.b16 %v3304
  %v3363 = vunpack.c.h.b16 %v3304
  %v3364 = vunpack.c.l.b16 %v3305
  %v3365 = vunpack.c.h.b16 %v3305
  %v3366 = vpack.c.b16 %v3336, %v3334
  %v3367 = vpack.c.b16 %v3337, %v3335
  %v3368 = vpack.c.b16 %v3340, %v3338
  %v3369 = vpack.c.b16 %v3341, %v3339
  %v3370 = vpack.c.b16 %v3344, %v3342
  %v3371 = vpack.c.b16 %v3345, %v3343
  %v3372 = vpack.c.b16 %v3348, %v3346
  %v3373 = vpack.c.b16 %v3349, %v3347
  %v3374 = vpack.c.b16 %v3352, %v3350
  %v3375 = vpack.c.b16 %v3353, %v3351
  %v3376 = vpack.c.b16 %v3356, %v3354
  %v3377 = vpack.c.b16 %v3357, %v3355
  %v3378 = vpack.c.b16 %v3360, %v3358
  %v3379 = vpack.c.b16 %v3361, %v3359
  %v3380 = vpack.c.b16 %v3364, %v3362
  %v3381 = vpack.c.b16 %v3365, %v3363
  %3398 = vmatprep.subr.bf16.mxu0 %v3367
  %3399 = vmatpush1.bf16.msra.mxu0 %v3366
  %3400 = vmatprep.subr.bf16.mxu0 %v3369
  %3401 = vmatpush1.bf16.msra.mxu0 %v3368
  %3402 = vmatprep.subr.bf16.mxu0 %v3371
  %3403 = vmatpush1.bf16.msra.mxu0 %v3370
  %3404 = vmatprep.subr.bf16.mxu0 %v3373
  %3405 = vmatpush1.bf16.msra.mxu0 %v3372
  %3406 = vmatprep.subr.bf16.mxu0 %v3375
  %3407 = vmatpush1.bf16.msra.mxu0 %v3374
  %3408 = vmatprep.subr.bf16.mxu0 %v3377
  %3409 = vmatpush1.bf16.msra.mxu0 %v3376
  %3410 = vmatprep.subr.bf16.mxu0 %v3379
  %3411 = vmatpush1.bf16.msra.mxu0 %v3378
  %3412 = vmatprep.subr.bf16.mxu0 %v3381
  %3413 = vmatpush1.bf16.msra.mxu0 %v3380
  %3414 = vmatprep.subr.bf16.mxu0 0
  %3415 = vmatpush1.bf16.msra.mxu0 0
  %3416 = vmatprep.subr.bf16.mxu0 0
  %3417 = vmatpush1.bf16.msra.mxu0 0
  %3418 = vmatprep.subr.bf16.mxu0 0
  %3419 = vmatpush1.bf16.msra.mxu0 0
  %3420 = vmatprep.subr.bf16.mxu0 0
  %3421 = vmatpush1.bf16.msra.mxu0 0
  %3422 = vmatprep.subr.bf16.mxu0 0
  %3423 = vmatpush1.bf16.msra.mxu0 0
  %3424 = vmatprep.subr.bf16.mxu0 0
  %3425 = vmatpush1.bf16.msra.mxu0 0
  %3426 = vmatprep.subr.bf16.mxu0 0
  %3427 = vmatpush1.bf16.msra.mxu0 0
  %3428 = vmatprep.subr.bf16.mxu0 0
  %3429 = vmatpush1.bf16.msra.mxu0 0
  %3430 = vmatprep.mubr.bf16.mxu0 0
  %3431 = vmatmul.mubr.bf16.gmra.mrb[0].mxu0 %v3289
  %v3432 = vpop.f32.mrb[0].mxu0
  %v3433 = vadd.f32 %v3311, %v3432
  %v3434 = vpop.f32.mrb[0].mxu0
  %v3435 = vadd.f32 %v3315, %v3434
  %v3436 = vpop.f32.mrb[0].mxu0
  %v3437 = vpop.f32.mrb[0].mxu0
  %3438 = vdwg.mxu0
  %v3439 = vmul.f32 %v3433, 0.01
  %v3440 = vmul.f32 %v3435, 0.01
  %v3441 = vmax.f32 %v3433, %v3439
  %v3442 = vmax.f32 %v3435, %v3440
  %v3443 = vld [vmem:[%s24] sm:$0x3]
  %v3444 = vunpack.c.l.bf16 %v3443
  %v3446 = vlaneseq
  %v3447 = vshrl.u32 %v3446, 7
  %v3448 = vsub.s32 0, %v3447
  %v3449 = vrot.slane %v3444, %v3448
  %v3450 = vlaneseq
  %v3451 = vshrl.u32 %v3450, 7
  %v3452 = vsub.s32 2, %v3451
  %v3453 = vrot.slane %v3444, %v3452
  %v3456 = vlaneseq
  %v3457 = vshrl.u32 %v3456, 7
  %v3458 = vsub.s32 0, %v3457
  %v3459 = vrot.slane %v3449, %v3458
  %v3460 = vlaneseq
  %v3461 = vshrl.u32 %v3460, 7
  %v3462 = vsub.s32 0, %v3461
  %v3463 = vrot.slane %v3453, %v3462
  %v3464 = vmul.f32 %v3441, %v3459
  %v3465 = vmul.f32 %v3442, %v3463
  %v3466 = vsel %vm2872, %v3464, 0.0
  %v3467 = vsel %vm2872, %v3465, 0.0
  %v3468 = vadd.f32 %v3466, %v3467
  %3469 = vadd.xlane.f32.xlu0 %v3468
  %v3470 = vpop.xlane.xlu0 %3469
  %v3471 = vld [vmem:[#allocation2] sm:$0x1]
  %v3473 = vlaneseq
  %v3474 = vshrl.u32 %v3473, 7
  %v3475 = vsub.s32 0, %v3474
  %v3476 = vrot.slane %v3471, %v3475
  %v3478 = vadd.f32 %v3470, %v3476
  %v3479 = vmax.f32 %v3478, -30.0
  %v3480 = vmin.f32 %v3479, 30.0
  %v3481 = vsub.f32 0.0, %v3480
  %v3482 = vmul.f32 %v3481, 1.442695
  %v3483 = vpow.pop %v3482
  %v3484 = vadd.f32 %v3483, 1.0
  %v3485 = vrcp.pop %v3484
  %vm3486 = vcmask 3072
  %3487 = vst.msk [vmem:[%s26] sm:$0xf] %vm3486, %v3485
  %s3488 = scalar_lea.vmem %s0, 64
  %v3489 = vld [vmem:[%s3488] sm:$0xff]
  %v3490 = vld [vmem:[%s3488 + $0x8] sm:$0xff]
  %v3491 = vld [vmem:[%s3488 + $0x10] sm:$0xff]
  %v3492 = vld [vmem:[%s3488 + $0x18] sm:$0xff]
  %v3493 = vld [vmem:[%s3488 + $0x20] sm:$0xff]
  %v3494 = vld [vmem:[%s3488 + $0x28] sm:$0xff]
  %v3495 = vld [vmem:[%s3488 + $0x30] sm:$0xff]
  %v3496 = vld [vmem:[%s3488 + $0x38] sm:$0xff]
  %v3497 = vpack.c.bf16 %v3490, %v3489
  %v3498 = vpack.c.bf16 %v3492, %v3491
  %v3499 = vpack.c.bf16 %v3494, %v3493
  %v3500 = vpack.c.bf16 %v3496, %v3495
  %v3501 = vld [vmem:[%s3] sm:$0xf]
  %v3502 = vld [vmem:[%s3 + $0x4] sm:$0xf]
  %v3503 = vld [vmem:[%s4] sm:$0x1]
  %v3505 = vlaneseq
  %v3506 = vshrl.u32 %v3505, 7
  %v3507 = vsub.s32 0, %v3506
  %v3508 = vrot.slane %v3503, %v3507
  %v3512 = vunpack.c.l.b16 %v3501
  %v3513 = vunpack.c.l.b16 %v3502
  %v3514 = vpack.c.b16 %v3513, %v3512
  %v3517 = vsel %vm113, %v3497, 0
  %v3520 = vsel %vm113, %v3498, 0
  %v3523 = vsel %vm113, %v3499, 0
  %v3526 = vsel %vm113, %v3500, 0
  %3528 = vmatprep.subr.bf16.mxu0 0
  %3529 = vmatpush1.bf16.msra.mxu0 %v3514
  %3530 = vmatprep.subr.bf16.mxu0 0
  %3531 = vmatpush1.bf16.msra.mxu0 0
  %3532 = vmatprep.subr.bf16.mxu0 0
  %3533 = vmatpush1.bf16.msra.mxu0 0
  %3534 = vmatprep.subr.bf16.mxu0 0
  %3535 = vmatpush1.bf16.msra.mxu0 0
  %3536 = vmatprep.subr.bf16.mxu0 0
  %3537 = vmatpush1.bf16.msra.mxu0 0
  %3538 = vmatprep.subr.bf16.mxu0 0
  %3539 = vmatpush1.bf16.msra.mxu0 0
  %3540 = vmatprep.subr.bf16.mxu0 0
  %3541 = vmatpush1.bf16.msra.mxu0 0
  %3542 = vmatprep.subr.bf16.mxu0 0
  %3543 = vmatpush1.bf16.msra.mxu0 0
  %3544 = vmatprep.subr.bf16.mxu0 0
  %3545 = vmatpush1.bf16.msra.mxu0 0
  %3546 = vmatprep.subr.bf16.mxu0 0
  %3547 = vmatpush1.bf16.msra.mxu0 0
  %3548 = vmatprep.subr.bf16.mxu0 0
  %3549 = vmatpush1.bf16.msra.mxu0 0
  %3550 = vmatprep.subr.bf16.mxu0 0
  %3551 = vmatpush1.bf16.msra.mxu0 0
  %3552 = vmatprep.subr.bf16.mxu0 0
  %3553 = vmatpush1.bf16.msra.mxu0 0
  %3554 = vmatprep.subr.bf16.mxu0 0
  %3555 = vmatpush1.bf16.msra.mxu0 0
  %3556 = vmatprep.subr.bf16.mxu0 0
  %3557 = vmatpush1.bf16.msra.mxu0 0
  %3558 = vmatprep.subr.bf16.mxu0 0
  %3559 = vmatpush1.bf16.msra.mxu0 0
  %3560 = vmatprep.mubr.bf16.mxu0 0
  %3561 = vmatmul.mubr.bf16.gmra.mrb[0].mxu0 %v3517
  %v3562 = vpop.f32.mrb[0].mxu0
  %v3563 = vadd.f32 %v3508, %v3562
  %v3564 = vpop.f32.mrb[0].mxu0
  %v3565 = vpop.f32.mrb[0].mxu0
  %v3566 = vadd.f32 %v3508, %v3565
  %v3567 = vpop.f32.mrb[0].mxu0
  %3568 = vmatprep.mubr.bf16.mxu0 0
  %3569 = vmatmul.mubr.bf16.gmra.mrb[0].mxu0 %v3520
  %v3570 = vpop.f32.mrb[0].mxu0
  %v3571 = vadd.f32 %v3508, %v3570
  %v3572 = vpop.f32.mrb[0].mxu0
  %v3573 = vpop.f32.mrb[0].mxu0
  %v3574 = vadd.f32 %v3508, %v3573
  %v3575 = vpop.f32.mrb[0].mxu0
  %3576 = vmatprep.mubr.bf16.mxu0 0
  %3577 = vmatmul.mubr.bf16.gmra.mrb[0].mxu0 %v3523
  %v3578 = vpop.f32.mrb[0].mxu0
  %v3579 = vadd.f32 %v3508, %v3578
  %v3580 = vpop.f32.mrb[0].mxu0
  %v3581 = vpop.f32.mrb[0].mxu0
  %v3582 = vadd.f32 %v3508, %v3581
  %v3583 = vpop.f32.mrb[0].mxu0
  %3584 = vmatprep.mubr.bf16.mxu0 0
  %3585 = vmatmul.mubr.bf16.gmra.mrb[0].mxu0 %v3526
  %v3586 = vpop.f32.mrb[0].mxu0
  %v3587 = vadd.f32 %v3508, %v3586
  %v3588 = vpop.f32.mrb[0].mxu0
  %v3589 = vpop.f32.mrb[0].mxu0
  %v3590 = vadd.f32 %v3508, %v3589
  %v3591 = vpop.f32.mrb[0].mxu0
  %3592 = vdwg.mxu0
  %v3593 = vmul.f32 %v3563, 0.01
  %v3594 = vmul.f32 %v3566, 0.01
  %v3595 = vmul.f32 %v3571, 0.01
  %v3596 = vmul.f32 %v3574, 0.01
  %v3597 = vmul.f32 %v3579, 0.01
  %v3598 = vmul.f32 %v3582, 0.01
  %v3599 = vmul.f32 %v3587, 0.01
  %v3600 = vmul.f32 %v3590, 0.01
  %v3601 = vmax.f32 %v3563, %v3593
  %v3602 = vmax.f32 %v3566, %v3594
  %v3603 = vmax.f32 %v3571, %v3595
  %v3604 = vmax.f32 %v3574, %v3596
  %v3605 = vmax.f32 %v3579, %v3597
  %v3606 = vmax.f32 %v3582, %v3598
  %v3607 = vmax.f32 %v3587, %v3599
  %v3608 = vmax.f32 %v3590, %v3600
  %v3609 = vpack.c.bf16 %v3602, %v3601
  %v3610 = vpack.c.bf16 %v3604, %v3603
  %v3611 = vpack.c.bf16 %v3606, %v3605
  %v3612 = vpack.c.bf16 %v3608, %v3607
  %v3613 = vld [vmem:[%s5] sm:$0xf]
  %v3614 = vld [vmem:[%s5 + $0x4] sm:$0xf]
  %v3615 = vld [vmem:[%s5 + $0x8] sm:$0xf]
  %v3616 = vld [vmem:[%s5 + $0xc] sm:$0xf]
  %v3617 = vld [vmem:[%s5 + $0x10] sm:$0xf]
  %v3618 = vld [vmem:[%s5 + $0x14] sm:$0xf]
  %v3619 = vld [vmem:[%s5 + $0x18] sm:$0xf]
  %v3620 = vld [vmem:[%s5 + $0x1c] sm:$0xf]
  %v3621 = vld [vmem:[%s5 + $0x20] sm:$0xf]
  %v3622 = vld [vmem:[%s5 + $0x24] sm:$0xf]
  %v3623 = vld [vmem:[%s5 + $0x28] sm:$0xf]
  %v3624 = vld [vmem:[%s5 + $0x2c] sm:$0xf]
  %v3625 = vld [vmem:[%s5 + $0x30] sm:$0xf]
  %v3626 = vld [vmem:[%s5 + $0x34] sm:$0xf]
  %v3627 = vld [vmem:[%s5 + $0x38] sm:$0xf]
  %v3628 = vld [vmem:[%s5 + $0x3c] sm:$0xf]
  %v3629 = vld [vmem:[%s5 + $0x40] sm:$0xf]
  %v3630 = vld [vmem:[%s5 + $0x44] sm:$0xf]
  %v3649 = vunpack.c.l.b16 %v3613
  %v3650 = vunpack.c.l.b16 %v3614
  %v3651 = vunpack.c.l.b16 %v3615
  %v3652 = vunpack.c.l.b16 %v3616
  %v3653 = vunpack.c.l.b16 %v3617
  %v3654 = vunpack.c.l.b16 %v3618
  %v3655 = vunpack.c.l.b16 %v3619
  %v3656 = vunpack.c.l.b16 %v3620
  %v3657 = vunpack.c.l.b16 %v3621
  %v3658 = vunpack.c.l.b16 %v3622
  %v3659 = vunpack.c.l.b16 %v3623
  %v3660 = vunpack.c.l.b16 %v3624
  %v3661 = vunpack.c.l.b16 %v3625
  %v3662 = vunpack.c.l.b16 %v3626
  %v3663 = vunpack.c.l.b16 %v3627
  %v3664 = vunpack.c.l.b16 %v3628
  %v3665 = vunpack.c.l.b16 %v3629
  %v3666 = vunpack.c.l.b16 %v3630
  %v3667 = vpack.c.b16 %v3650, %v3649
  %v3668 = vpack.c.b16 %v3652, %v3651
  %v3669 = vpack.c.b16 %v3654, %v3653
  %v3670 = vpack.c.b16 %v3656, %v3655
  %v3671 = vpack.c.b16 %v3658, %v3657
  %v3672 = vpack.c.b16 %v3660, %v3659
  %v3673 = vpack.c.b16 %v3662, %v3661
  %v3674 = vpack.c.b16 %v3664, %v3663
  %v3675 = vpack.c.b16 %v3666, %v3665
  %v3677 = vsel %vm274, %v3667, 0
  %v3680 = vsel %vm274, %v3668, 0
  %v3683 = vsel %vm274, %v3669, 0
  %v3686 = vsel %vm274, %v3670, 0
  %v3689 = vsel %vm274, %v3671, 0
  %v3692 = vsel %vm274, %v3672, 0
  %v3695 = vsel %vm274, %v3673, 0
  %v3698 = vsel %vm274, %v3674, 0
  %v3701 = vsel %vm274, %v3675, 0
  %3703 = vmatprep.subr.bf16.mxu0 0
  %3704 = vmatpush1.bf16.msra.mxu0 %v3609
  %3705 = vmatprep.subr.bf16.mxu0 0
  %3706 = vmatpush1.bf16.msra.mxu0 %v3610
  %3707 = vmatprep.subr.bf16.mxu0 0
  %3708 = vmatpush1.bf16.msra.mxu0 %v3611
  %3709 = vmatprep.subr.bf16.mxu0 0
  %3710 = vmatpush1.bf16.msra.mxu0 %v3612
  %3711 = vmatprep.subr.bf16.mxu0 0
  %3712 = vmatpush1.bf16.msra.mxu0 0
  %3713 = vmatprep.subr.bf16.mxu0 0
  %3714 = vmatpush1.bf16.msra.mxu0 0
  %3715 = vmatprep.subr.bf16.mxu0 0
  %3716 = vmatpush1.bf16.msra.mxu0 0
  %3717 = vmatprep.subr.bf16.mxu0 0
  %3718 = vmatpush1.bf16.msra.mxu0 0
  %3719 = vmatprep.subr.bf16.mxu0 0
  %3720 = vmatpush1.bf16.msra.mxu0 0
  %3721 = vmatprep.subr.bf16.mxu0 0
  %3722 = vmatpush1.bf16.msra.mxu0 0
  %3723 = vmatprep.subr.bf16.mxu0 0
  %3724 = vmatpush1.bf16.msra.mxu0 0
  %3725 = vmatprep.subr.bf16.mxu0 0
  %3726 = vmatpush1.bf16.msra.mxu0 0
  %3727 = vmatprep.subr.bf16.mxu0 0
  %3728 = vmatpush1.bf16.msra.mxu0 0
  %3729 = vmatprep.subr.bf16.mxu0 0
  %3730 = vmatpush1.bf16.msra.mxu0 0
  %3731 = vmatprep.subr.bf16.mxu0 0
  %3732 = vmatpush1.bf16.msra.mxu0 0
  %3733 = vmatprep.subr.bf16.mxu0 0
  %3734 = vmatpush1.bf16.msra.mxu0 0
  %3735 = vmatprep.mubr.bf16.mxu0 0
  %3736 = vmatmul.mubr.bf16.gmra.mrb[0].mxu0 %v3677
  %v3737 = vpop.f32.mrb[0].mxu0
  %v3738 = vadd.f32 0.0, %v3737
  %v3739 = vpop.f32.mrb[0].mxu0
  %v3740 = vpop.f32.mrb[0].mxu0
  %v3741 = vadd.f32 0.0, %v3740
  %v3742 = vpop.f32.mrb[0].mxu0
  %3743 = vmatprep.mubr.bf16.mxu0 0
  %3744 = vmatmul.mubr.bf16.gmra.mrb[0].mxu0 %v3680
  %v3745 = vpop.f32.mrb[0].mxu0
  %v3746 = vadd.f32 0.0, %v3745
  %v3747 = vpop.f32.mrb[0].mxu0
  %v3748 = vpop.f32.mrb[0].mxu0
  %v3749 = vadd.f32 0.0, %v3748
  %v3750 = vpop.f32.mrb[0].mxu0
  %3751 = vmatprep.mubr.bf16.mxu0 0
  %3752 = vmatmul.mubr.bf16.gmra.mrb[0].mxu0 %v3683
  %v3753 = vpop.f32.mrb[0].mxu0
  %v3754 = vadd.f32 0.0, %v3753
  %v3755 = vpop.f32.mrb[0].mxu0
  %v3756 = vpop.f32.mrb[0].mxu0
  %v3757 = vadd.f32 0.0, %v3756
  %v3758 = vpop.f32.mrb[0].mxu0
  %3759 = vmatprep.mubr.bf16.mxu0 0
  %3760 = vmatmul.mubr.bf16.gmra.mrb[0].mxu0 %v3686
  %v3761 = vpop.f32.mrb[0].mxu0
  %v3762 = vadd.f32 0.0, %v3761
  %v3763 = vpop.f32.mrb[0].mxu0
  %v3764 = vpop.f32.mrb[0].mxu0
  %v3765 = vadd.f32 0.0, %v3764
  %v3766 = vpop.f32.mrb[0].mxu0
  %3767 = vmatprep.mubr.bf16.mxu0 0
  %3768 = vmatmul.mubr.bf16.gmra.mrb[0].mxu0 %v3689
  %v3769 = vpop.f32.mrb[0].mxu0
  %v3770 = vadd.f32 0.0, %v3769
  %v3771 = vpop.f32.mrb[0].mxu0
  %v3772 = vpop.f32.mrb[0].mxu0
  %v3773 = vadd.f32 0.0, %v3772
  %v3774 = vpop.f32.mrb[0].mxu0
  %3775 = vmatprep.mubr.bf16.mxu0 0
  %3776 = vmatmul.mubr.bf16.gmra.mrb[0].mxu0 %v3692
  %v3777 = vpop.f32.mrb[0].mxu0
  %v3778 = vadd.f32 0.0, %v3777
  %v3779 = vpop.f32.mrb[0].mxu0
  %v3780 = vpop.f32.mrb[0].mxu0
  %v3781 = vadd.f32 0.0, %v3780
  %v3782 = vpop.f32.mrb[0].mxu0
  %3783 = vmatprep.mubr.bf16.mxu0 0
  %3784 = vmatmul.mubr.bf16.gmra.mrb[0].mxu0 %v3695
  %v3785 = vpop.f32.mrb[0].mxu0
  %v3786 = vadd.f32 0.0, %v3785
  %v3787 = vpop.f32.mrb[0].mxu0
  %v3788 = vpop.f32.mrb[0].mxu0
  %v3789 = vadd.f32 0.0, %v3788
  %v3790 = vpop.f32.mrb[0].mxu0
  %3791 = vmatprep.mubr.bf16.mxu0 0
  %3792 = vmatmul.mubr.bf16.gmra.mrb[0].mxu0 %v3698
  %v3793 = vpop.f32.mrb[0].mxu0
  %v3794 = vadd.f32 0.0, %v3793
  %v3795 = vpop.f32.mrb[0].mxu0
  %v3796 = vpop.f32.mrb[0].mxu0
  %v3797 = vadd.f32 0.0, %v3796
  %v3798 = vpop.f32.mrb[0].mxu0
  %3799 = vmatprep.mubr.bf16.mxu0 0
  %3800 = vmatmul.mubr.bf16.gmra.mrb[0].mxu0 %v3701
  %v3801 = vpop.f32.mrb[0].mxu0
  %v3802 = vadd.f32 0.0, %v3801
  %v3803 = vpop.f32.mrb[0].mxu0
  %v3804 = vpop.f32.mrb[0].mxu0
  %v3805 = vadd.f32 0.0, %v3804
  %v3806 = vpop.f32.mrb[0].mxu0
  %3807 = vdwg.mxu0
  %v3808 = vpack.c.bf16 %v3741, %v3738
  %v3809 = vpack.c.bf16 %v3749, %v3746
  %v3810 = vpack.c.bf16 %v3757, %v3754
  %v3811 = vpack.c.bf16 %v3765, %v3762
  %v3812 = vpack.c.bf16 %v3773, %v3770
  %v3813 = vpack.c.bf16 %v3781, %v3778
  %v3814 = vpack.c.bf16 %v3789, %v3786
  %v3815 = vpack.c.bf16 %v3797, %v3794
  %v3816 = vpack.c.bf16 %v3805, %v3802
  %v3817 = vld [vmem:[%s6] sm:$0xf]
  %v3818 = vld [vmem:[%s6 + $0x4] sm:$0xf]
  %v3819 = vld [vmem:[%s6 + $0x8] sm:$0xf]
  %v3820 = vld [vmem:[%s6 + $0xc] sm:$0xf]
  %v3823 = vunpack.c.l.b16 %v3819
  %v3824 = vunpack.c.l.b16 %v3820
  %v3825 = vpack.c.b16 %v3824, %v3823
  %v3828 = vsel %vm113, %v3809, 0
  %3830 = vmatprep.subr.bf16.mxu0 0
  %3831 = vmatpush1.bf16.msra.mxu0 %v3825
  %3832 = vmatprep.subr.bf16.mxu0 0
  %3833 = vmatpush1.bf16.msra.mxu0 0
  %3834 = vmatprep.subr.bf16.mxu0 0
  %3835 = vmatpush1.bf16.msra.mxu0 0
  %3836 = vmatprep.subr.bf16.mxu0 0
  %3837 = vmatpush1.bf16.msra.mxu0 0
  %3838 = vmatprep.subr.bf16.mxu0 0
  %3839 = vmatpush1.bf16.msra.mxu0 0
  %3840 = vmatprep.subr.bf16.mxu0 0
  %3841 = vmatpush1.bf16.msra.mxu0 0
  %3842 = vmatprep.subr.bf16.mxu0 0
  %3843 = vmatpush1.bf16.msra.mxu0 0
  %3844 = vmatprep.subr.bf16.mxu0 0
  %3845 = vmatpush1.bf16.msra.mxu0 0
  %3846 = vmatprep.subr.bf16.mxu0 0
  %3847 = vmatpush1.bf16.msra.mxu0 0
  %3848 = vmatprep.subr.bf16.mxu0 0
  %3849 = vmatpush1.bf16.msra.mxu0 0
  %3850 = vmatprep.subr.bf16.mxu0 0
  %3851 = vmatpush1.bf16.msra.mxu0 0
  %3852 = vmatprep.subr.bf16.mxu0 0
  %3853 = vmatpush1.bf16.msra.mxu0 0
  %3854 = vmatprep.subr.bf16.mxu0 0
  %3855 = vmatpush1.bf16.msra.mxu0 0
  %3856 = vmatprep.subr.bf16.mxu0 0
  %3857 = vmatpush1.bf16.msra.mxu0 0
  %3858 = vmatprep.subr.bf16.mxu0 0
  %3859 = vmatpush1.bf16.msra.mxu0 0
  %3860 = vmatprep.subr.bf16.mxu0 0
  %3861 = vmatpush1.bf16.msra.mxu0 0
  %3862 = vmatprep.mubr.bf16.mxu0 0
  %3863 = vmatmul.mubr.bf16.gmra.mrb[0].mxu0 %v3828
  %v3864 = vpop.f32.mrb[0].mxu0
  %v3865 = vadd.f32 0.0, %v3864
  %v3866 = vpop.f32.mrb[0].mxu0
  %v3867 = vpop.f32.mrb[0].mxu0
  %v3868 = vadd.f32 0.0, %v3867
  %v3869 = vpop.f32.mrb[0].mxu0
  %3870 = vdwg.mxu0
  %v3873 = vunpack.c.l.b16 %v3817
  %v3874 = vunpack.c.l.b16 %v3818
  %v3875 = vpack.c.b16 %v3874, %v3873
  %v3878 = vsel %vm113, %v3808, 0
  %3880 = vmatprep.subr.bf16.mxu0 0
  %3881 = vmatpush1.bf16.msra.mxu0 %v3875
  %3882 = vmatprep.subr.bf16.mxu0 0
  %3883 = vmatpush1.bf16.msra.mxu0 0
  %3884 = vmatprep.subr.bf16.mxu0 0
  %3885 = vmatpush1.bf16.msra.mxu0 0
  %3886 = vmatprep.subr.bf16.mxu0 0
  %3887 = vmatpush1.bf16.msra.mxu0 0
  %3888 = vmatprep.subr.bf16.mxu0 0
  %3889 = vmatpush1.bf16.msra.mxu0 0
  %3890 = vmatprep.subr.bf16.mxu0 0
  %3891 = vmatpush1.bf16.msra.mxu0 0
  %3892 = vmatprep.subr.bf16.mxu0 0
  %3893 = vmatpush1.bf16.msra.mxu0 0
  %3894 = vmatprep.subr.bf16.mxu0 0
  %3895 = vmatpush1.bf16.msra.mxu0 0
  %3896 = vmatprep.subr.bf16.mxu0 0
  %3897 = vmatpush1.bf16.msra.mxu0 0
  %3898 = vmatprep.subr.bf16.mxu0 0
  %3899 = vmatpush1.bf16.msra.mxu0 0
  %3900 = vmatprep.subr.bf16.mxu0 0
  %3901 = vmatpush1.bf16.msra.mxu0 0
  %3902 = vmatprep.subr.bf16.mxu0 0
  %3903 = vmatpush1.bf16.msra.mxu0 0
  %3904 = vmatprep.subr.bf16.mxu0 0
  %3905 = vmatpush1.bf16.msra.mxu0 0
  %3906 = vmatprep.subr.bf16.mxu0 0
  %3907 = vmatpush1.bf16.msra.mxu0 0
  %3908 = vmatprep.subr.bf16.mxu0 0
  %3909 = vmatpush1.bf16.msra.mxu0 0
  %3910 = vmatprep.subr.bf16.mxu0 0
  %3911 = vmatpush1.bf16.msra.mxu0 0
  %3912 = vmatprep.mubr.bf16.mxu0 0
  %3913 = vmatmul.mubr.bf16.gmra.mrb[0].mxu0 %v3878
  %v3914 = vpop.f32.mrb[0].mxu0
  %v3915 = vadd.f32 %v3865, %v3914
  %v3916 = vpop.f32.mrb[0].mxu0
  %v3917 = vpop.f32.mrb[0].mxu0
  %v3918 = vadd.f32 %v3868, %v3917
  %v3919 = vpop.f32.mrb[0].mxu0
  %3920 = vdwg.mxu0
  %v3921 = vld [vmem:[%s6 + $0x10] sm:$0xf]
  %v3922 = vld [vmem:[%s6 + $0x14] sm:$0xf]
  %v3925 = vunpack.c.l.b16 %v3921
  %v3926 = vunpack.c.l.b16 %v3922
  %v3927 = vpack.c.b16 %v3926, %v3925
  %v3930 = vsel %vm113, %v3810, 0
  %3932 = vmatprep.subr.bf16.mxu0 0
  %3933 = vmatpush1.bf16.msra.mxu0 %v3927
  %3934 = vmatprep.subr.bf16.mxu0 0
  %3935 = vmatpush1.bf16.msra.mxu0 0
  %3936 = vmatprep.subr.bf16.mxu0 0
  %3937 = vmatpush1.bf16.msra.mxu0 0
  %3938 = vmatprep.subr.bf16.mxu0 0
  %3939 = vmatpush1.bf16.msra.mxu0 0
  %3940 = vmatprep.subr.bf16.mxu0 0
  %3941 = vmatpush1.bf16.msra.mxu0 0
  %3942 = vmatprep.subr.bf16.mxu0 0
  %3943 = vmatpush1.bf16.msra.mxu0 0
  %3944 = vmatprep.subr.bf16.mxu0 0
  %3945 = vmatpush1.bf16.msra.mxu0 0
  %3946 = vmatprep.subr.bf16.mxu0 0
  %3947 = vmatpush1.bf16.msra.mxu0 0
  %3948 = vmatprep.subr.bf16.mxu0 0
  %3949 = vmatpush1.bf16.msra.mxu0 0
  %3950 = vmatprep.subr.bf16.mxu0 0
  %3951 = vmatpush1.bf16.msra.mxu0 0
  %3952 = vmatprep.subr.bf16.mxu0 0
  %3953 = vmatpush1.bf16.msra.mxu0 0
  %3954 = vmatprep.subr.bf16.mxu0 0
  %3955 = vmatpush1.bf16.msra.mxu0 0
  %3956 = vmatprep.subr.bf16.mxu0 0
  %3957 = vmatpush1.bf16.msra.mxu0 0
  %3958 = vmatprep.subr.bf16.mxu0 0
  %3959 = vmatpush1.bf16.msra.mxu0 0
  %3960 = vmatprep.subr.bf16.mxu0 0
  %3961 = vmatpush1.bf16.msra.mxu0 0
  %3962 = vmatprep.subr.bf16.mxu0 0
  %3963 = vmatpush1.bf16.msra.mxu0 0
  %3964 = vmatprep.mubr.bf16.mxu0 0
  %3965 = vmatmul.mubr.bf16.gmra.mrb[0].mxu0 %v3930
  %v3966 = vpop.f32.mrb[0].mxu0
  %v3967 = vadd.f32 0.0, %v3966
  %v3968 = vpop.f32.mrb[0].mxu0
  %v3969 = vpop.f32.mrb[0].mxu0
  %v3970 = vadd.f32 0.0, %v3969
  %v3971 = vpop.f32.mrb[0].mxu0
  %3972 = vdwg.mxu0
  %v3973 = vadd.f32 %v3915, %v3967
  %v3974 = vadd.f32 %v3918, %v3970
  %v3975 = vld [vmem:[%s6 + $0x18] sm:$0xf]
  %v3976 = vld [vmem:[%s6 + $0x1c] sm:$0xf]
  %v3979 = vunpack.c.l.b16 %v3975
  %v3980 = vunpack.c.l.b16 %v3976
  %v3981 = vpack.c.b16 %v3980, %v3979
  %v3984 = vsel %vm113, %v3811, 0
  %3986 = vmatprep.subr.bf16.mxu0 0
  %3987 = vmatpush1.bf16.msra.mxu0 %v3981
  %3988 = vmatprep.subr.bf16.mxu0 0
  %3989 = vmatpush1.bf16.msra.mxu0 0
  %3990 = vmatprep.subr.bf16.mxu0 0
  %3991 = vmatpush1.bf16.msra.mxu0 0
  %3992 = vmatprep.subr.bf16.mxu0 0
  %3993 = vmatpush1.bf16.msra.mxu0 0
  %3994 = vmatprep.subr.bf16.mxu0 0
  %3995 = vmatpush1.bf16.msra.mxu0 0
  %3996 = vmatprep.subr.bf16.mxu0 0
  %3997 = vmatpush1.bf16.msra.mxu0 0
  %3998 = vmatprep.subr.bf16.mxu0 0
  %3999 = vmatpush1.bf16.msra.mxu0 0
  %4000 = vmatprep.subr.bf16.mxu0 0
  %4001 = vmatpush1.bf16.msra.mxu0 0
  %4002 = vmatprep.subr.bf16.mxu0 0
  %4003 = vmatpush1.bf16.msra.mxu0 0
  %4004 = vmatprep.subr.bf16.mxu0 0
  %4005 = vmatpush1.bf16.msra.mxu0 0
  %4006 = vmatprep.subr.bf16.mxu0 0
  %4007 = vmatpush1.bf16.msra.mxu0 0
  %4008 = vmatprep.subr.bf16.mxu0 0
  %4009 = vmatpush1.bf16.msra.mxu0 0
  %4010 = vmatprep.subr.bf16.mxu0 0
  %4011 = vmatpush1.bf16.msra.mxu0 0
  %4012 = vmatprep.subr.bf16.mxu0 0
  %4013 = vmatpush1.bf16.msra.mxu0 0
  %4014 = vmatprep.subr.bf16.mxu0 0
  %4015 = vmatpush1.bf16.msra.mxu0 0
  %4016 = vmatprep.subr.bf16.mxu0 0
  %4017 = vmatpush1.bf16.msra.mxu0 0
  %4018 = vmatprep.mubr.bf16.mxu0 0
  %4019 = vmatmul.mubr.bf16.gmra.mrb[0].mxu0 %v3984
  %v4020 = vpop.f32.mrb[0].mxu0
  %v4021 = vadd.f32 0.0, %v4020
  %v4022 = vpop.f32.mrb[0].mxu0
  %v4023 = vpop.f32.mrb[0].mxu0
  %v4024 = vadd.f32 0.0, %v4023
  %v4025 = vpop.f32.mrb[0].mxu0
  %4026 = vdwg.mxu0
  %v4027 = vadd.f32 %v3973, %v4021
  %v4028 = vadd.f32 %v3974, %v4024
  %v4029 = vld [vmem:[%s6 + $0x20] sm:$0xf]
  %v4030 = vld [vmem:[%s6 + $0x24] sm:$0xf]
  %v4033 = vunpack.c.l.b16 %v4029
  %v4034 = vunpack.c.l.b16 %v4030
  %v4035 = vpack.c.b16 %v4034, %v4033
  %v4038 = vsel %vm113, %v3812, 0
  %4040 = vmatprep.subr.bf16.mxu0 0
  %4041 = vmatpush1.bf16.msra.mxu0 %v4035
  %4042 = vmatprep.subr.bf16.mxu0 0
  %4043 = vmatpush1.bf16.msra.mxu0 0
  %4044 = vmatprep.subr.bf16.mxu0 0
  %4045 = vmatpush1.bf16.msra.mxu0 0
  %4046 = vmatprep.subr.bf16.mxu0 0
  %4047 = vmatpush1.bf16.msra.mxu0 0
  %4048 = vmatprep.subr.bf16.mxu0 0
  %4049 = vmatpush1.bf16.msra.mxu0 0
  %4050 = vmatprep.subr.bf16.mxu0 0
  %4051 = vmatpush1.bf16.msra.mxu0 0
  %4052 = vmatprep.subr.bf16.mxu0 0
  %4053 = vmatpush1.bf16.msra.mxu0 0
  %4054 = vmatprep.subr.bf16.mxu0 0
  %4055 = vmatpush1.bf16.msra.mxu0 0
  %4056 = vmatprep.subr.bf16.mxu0 0
  %4057 = vmatpush1.bf16.msra.mxu0 0
  %4058 = vmatprep.subr.bf16.mxu0 0
  %4059 = vmatpush1.bf16.msra.mxu0 0
  %4060 = vmatprep.subr.bf16.mxu0 0
  %4061 = vmatpush1.bf16.msra.mxu0 0
  %4062 = vmatprep.subr.bf16.mxu0 0
  %4063 = vmatpush1.bf16.msra.mxu0 0
  %4064 = vmatprep.subr.bf16.mxu0 0
  %4065 = vmatpush1.bf16.msra.mxu0 0
  %4066 = vmatprep.subr.bf16.mxu0 0
  %4067 = vmatpush1.bf16.msra.mxu0 0
  %4068 = vmatprep.subr.bf16.mxu0 0
  %4069 = vmatpush1.bf16.msra.mxu0 0
  %4070 = vmatprep.subr.bf16.mxu0 0
  %4071 = vmatpush1.bf16.msra.mxu0 0
  %4072 = vmatprep.mubr.bf16.mxu0 0
  %4073 = vmatmul.mubr.bf16.gmra.mrb[0].mxu0 %v4038
  %v4074 = vpop.f32.mrb[0].mxu0
  %v4075 = vadd.f32 0.0, %v4074
  %v4076 = vpop.f32.mrb[0].mxu0
  %v4077 = vpop.f32.mrb[0].mxu0
  %v4078 = vadd.f32 0.0, %v4077
  %v4079 = vpop.f32.mrb[0].mxu0
  %4080 = vdwg.mxu0
  %v4081 = vadd.f32 %v4027, %v4075
  %v4082 = vadd.f32 %v4028, %v4078
  %v4083 = vld [vmem:[%s6 + $0x28] sm:$0xf]
  %v4084 = vld [vmem:[%s6 + $0x2c] sm:$0xf]
  %v4087 = vunpack.c.l.b16 %v4083
  %v4088 = vunpack.c.l.b16 %v4084
  %v4089 = vpack.c.b16 %v4088, %v4087
  %v4092 = vsel %vm113, %v3813, 0
  %4094 = vmatprep.subr.bf16.mxu0 0
  %4095 = vmatpush1.bf16.msra.mxu0 %v4089
  %4096 = vmatprep.subr.bf16.mxu0 0
  %4097 = vmatpush1.bf16.msra.mxu0 0
  %4098 = vmatprep.subr.bf16.mxu0 0
  %4099 = vmatpush1.bf16.msra.mxu0 0
  %4100 = vmatprep.subr.bf16.mxu0 0
  %4101 = vmatpush1.bf16.msra.mxu0 0
  %4102 = vmatprep.subr.bf16.mxu0 0
  %4103 = vmatpush1.bf16.msra.mxu0 0
  %4104 = vmatprep.subr.bf16.mxu0 0
  %4105 = vmatpush1.bf16.msra.mxu0 0
  %4106 = vmatprep.subr.bf16.mxu0 0
  %4107 = vmatpush1.bf16.msra.mxu0 0
  %4108 = vmatprep.subr.bf16.mxu0 0
  %4109 = vmatpush1.bf16.msra.mxu0 0
  %4110 = vmatprep.subr.bf16.mxu0 0
  %4111 = vmatpush1.bf16.msra.mxu0 0
  %4112 = vmatprep.subr.bf16.mxu0 0
  %4113 = vmatpush1.bf16.msra.mxu0 0
  %4114 = vmatprep.subr.bf16.mxu0 0
  %4115 = vmatpush1.bf16.msra.mxu0 0
  %4116 = vmatprep.subr.bf16.mxu0 0
  %4117 = vmatpush1.bf16.msra.mxu0 0
  %4118 = vmatprep.subr.bf16.mxu0 0
  %4119 = vmatpush1.bf16.msra.mxu0 0
  %4120 = vmatprep.subr.bf16.mxu0 0
  %4121 = vmatpush1.bf16.msra.mxu0 0
  %4122 = vmatprep.subr.bf16.mxu0 0
  %4123 = vmatpush1.bf16.msra.mxu0 0
  %4124 = vmatprep.subr.bf16.mxu0 0
  %4125 = vmatpush1.bf16.msra.mxu0 0
  %4126 = vmatprep.mubr.bf16.mxu0 0
  %4127 = vmatmul.mubr.bf16.gmra.mrb[0].mxu0 %v4092
  %v4128 = vpop.f32.mrb[0].mxu0
  %v4129 = vadd.f32 0.0, %v4128
  %v4130 = vpop.f32.mrb[0].mxu0
  %v4131 = vpop.f32.mrb[0].mxu0
  %v4132 = vadd.f32 0.0, %v4131
  %v4133 = vpop.f32.mrb[0].mxu0
  %4134 = vdwg.mxu0
  %v4135 = vadd.f32 %v4081, %v4129
  %v4136 = vadd.f32 %v4082, %v4132
  %v4137 = vld [vmem:[%s6 + $0x30] sm:$0xf]
  %v4138 = vld [vmem:[%s6 + $0x34] sm:$0xf]
  %v4141 = vunpack.c.l.b16 %v4137
  %v4142 = vunpack.c.l.b16 %v4138
  %v4143 = vpack.c.b16 %v4142, %v4141
  %v4146 = vsel %vm113, %v3814, 0
  %4148 = vmatprep.subr.bf16.mxu0 0
  %4149 = vmatpush1.bf16.msra.mxu0 %v4143
  %4150 = vmatprep.subr.bf16.mxu0 0
  %4151 = vmatpush1.bf16.msra.mxu0 0
  %4152 = vmatprep.subr.bf16.mxu0 0
  %4153 = vmatpush1.bf16.msra.mxu0 0
  %4154 = vmatprep.subr.bf16.mxu0 0
  %4155 = vmatpush1.bf16.msra.mxu0 0
  %4156 = vmatprep.subr.bf16.mxu0 0
  %4157 = vmatpush1.bf16.msra.mxu0 0
  %4158 = vmatprep.subr.bf16.mxu0 0
  %4159 = vmatpush1.bf16.msra.mxu0 0
  %4160 = vmatprep.subr.bf16.mxu0 0
  %4161 = vmatpush1.bf16.msra.mxu0 0
  %4162 = vmatprep.subr.bf16.mxu0 0
  %4163 = vmatpush1.bf16.msra.mxu0 0
  %4164 = vmatprep.subr.bf16.mxu0 0
  %4165 = vmatpush1.bf16.msra.mxu0 0
  %4166 = vmatprep.subr.bf16.mxu0 0
  %4167 = vmatpush1.bf16.msra.mxu0 0
  %4168 = vmatprep.subr.bf16.mxu0 0
  %4169 = vmatpush1.bf16.msra.mxu0 0
  %4170 = vmatprep.subr.bf16.mxu0 0
  %4171 = vmatpush1.bf16.msra.mxu0 0
  %4172 = vmatprep.subr.bf16.mxu0 0
  %4173 = vmatpush1.bf16.msra.mxu0 0
  %4174 = vmatprep.subr.bf16.mxu0 0
  %4175 = vmatpush1.bf16.msra.mxu0 0
  %4176 = vmatprep.subr.bf16.mxu0 0
  %4177 = vmatpush1.bf16.msra.mxu0 0
  %4178 = vmatprep.subr.bf16.mxu0 0
  %4179 = vmatpush1.bf16.msra.mxu0 0
  %4180 = vmatprep.mubr.bf16.mxu0 0
  %4181 = vmatmul.mubr.bf16.gmra.mrb[0].mxu0 %v4146
  %v4182 = vpop.f32.mrb[0].mxu0
  %v4183 = vadd.f32 0.0, %v4182
  %v4184 = vpop.f32.mrb[0].mxu0
  %v4185 = vpop.f32.mrb[0].mxu0
  %v4186 = vadd.f32 0.0, %v4185
  %v4187 = vpop.f32.mrb[0].mxu0
  %4188 = vdwg.mxu0
  %v4189 = vadd.f32 %v4135, %v4183
  %v4190 = vadd.f32 %v4136, %v4186
  %v4191 = vld [vmem:[%s6 + $0x38] sm:$0xf]
  %v4192 = vld [vmem:[%s6 + $0x3c] sm:$0xf]
  %v4195 = vunpack.c.l.b16 %v4191
  %v4196 = vunpack.c.l.b16 %v4192
  %v4197 = vpack.c.b16 %v4196, %v4195
  %v4200 = vsel %vm113, %v3815, 0
  %4202 = vmatprep.subr.bf16.mxu0 0
  %4203 = vmatpush1.bf16.msra.mxu0 %v4197
  %4204 = vmatprep.subr.bf16.mxu0 0
  %4205 = vmatpush1.bf16.msra.mxu0 0
  %4206 = vmatprep.subr.bf16.mxu0 0
  %4207 = vmatpush1.bf16.msra.mxu0 0
  %4208 = vmatprep.subr.bf16.mxu0 0
  %4209 = vmatpush1.bf16.msra.mxu0 0
  %4210 = vmatprep.subr.bf16.mxu0 0
  %4211 = vmatpush1.bf16.msra.mxu0 0
  %4212 = vmatprep.subr.bf16.mxu0 0
  %4213 = vmatpush1.bf16.msra.mxu0 0
  %4214 = vmatprep.subr.bf16.mxu0 0
  %4215 = vmatpush1.bf16.msra.mxu0 0
  %4216 = vmatprep.subr.bf16.mxu0 0
  %4217 = vmatpush1.bf16.msra.mxu0 0
  %4218 = vmatprep.subr.bf16.mxu0 0
  %4219 = vmatpush1.bf16.msra.mxu0 0
  %4220 = vmatprep.subr.bf16.mxu0 0
  %4221 = vmatpush1.bf16.msra.mxu0 0
  %4222 = vmatprep.subr.bf16.mxu0 0
  %4223 = vmatpush1.bf16.msra.mxu0 0
  %4224 = vmatprep.subr.bf16.mxu0 0
  %4225 = vmatpush1.bf16.msra.mxu0 0
  %4226 = vmatprep.subr.bf16.mxu0 0
  %4227 = vmatpush1.bf16.msra.mxu0 0
  %4228 = vmatprep.subr.bf16.mxu0 0
  %4229 = vmatpush1.bf16.msra.mxu0 0
  %4230 = vmatprep.subr.bf16.mxu0 0
  %4231 = vmatpush1.bf16.msra.mxu0 0
  %4232 = vmatprep.subr.bf16.mxu0 0
  %4233 = vmatpush1.bf16.msra.mxu0 0
  %4234 = vmatprep.mubr.bf16.mxu0 0
  %4235 = vmatmul.mubr.bf16.gmra.mrb[0].mxu0 %v4200
  %v4236 = vpop.f32.mrb[0].mxu0
  %v4237 = vadd.f32 0.0, %v4236
  %v4238 = vpop.f32.mrb[0].mxu0
  %v4239 = vpop.f32.mrb[0].mxu0
  %v4240 = vadd.f32 0.0, %v4239
  %v4241 = vpop.f32.mrb[0].mxu0
  %4242 = vdwg.mxu0
  %v4243 = vadd.f32 %v4189, %v4237
  %v4244 = vadd.f32 %v4190, %v4240
  %v4245 = vld [vmem:[%s6 + $0x40] sm:$0xf]
  %v4246 = vld [vmem:[%s6 + $0x44] sm:$0xf]
  %v4249 = vunpack.c.l.b16 %v4245
  %v4250 = vunpack.c.l.b16 %v4246
  %v4251 = vpack.c.b16 %v4250, %v4249
  %v4254 = vsel %vm113, %v3816, 0
  %4256 = vmatprep.subr.bf16.mxu0 0
  %4257 = vmatpush1.bf16.msra.mxu0 %v4251
  %4258 = vmatprep.subr.bf16.mxu0 0
  %4259 = vmatpush1.bf16.msra.mxu0 0
  %4260 = vmatprep.subr.bf16.mxu0 0
  %4261 = vmatpush1.bf16.msra.mxu0 0
  %4262 = vmatprep.subr.bf16.mxu0 0
  %4263 = vmatpush1.bf16.msra.mxu0 0
  %4264 = vmatprep.subr.bf16.mxu0 0
  %4265 = vmatpush1.bf16.msra.mxu0 0
  %4266 = vmatprep.subr.bf16.mxu0 0
  %4267 = vmatpush1.bf16.msra.mxu0 0
  %4268 = vmatprep.subr.bf16.mxu0 0
  %4269 = vmatpush1.bf16.msra.mxu0 0
  %4270 = vmatprep.subr.bf16.mxu0 0
  %4271 = vmatpush1.bf16.msra.mxu0 0
  %4272 = vmatprep.subr.bf16.mxu0 0
  %4273 = vmatpush1.bf16.msra.mxu0 0
  %4274 = vmatprep.subr.bf16.mxu0 0
  %4275 = vmatpush1.bf16.msra.mxu0 0
  %4276 = vmatprep.subr.bf16.mxu0 0
  %4277 = vmatpush1.bf16.msra.mxu0 0
  %4278 = vmatprep.subr.bf16.mxu0 0
  %4279 = vmatpush1.bf16.msra.mxu0 0
  %4280 = vmatprep.subr.bf16.mxu0 0
  %4281 = vmatpush1.bf16.msra.mxu0 0
  %4282 = vmatprep.subr.bf16.mxu0 0
  %4283 = vmatpush1.bf16.msra.mxu0 0
  %4284 = vmatprep.subr.bf16.mxu0 0
  %4285 = vmatpush1.bf16.msra.mxu0 0
  %4286 = vmatprep.subr.bf16.mxu0 0
  %4287 = vmatpush1.bf16.msra.mxu0 0
  %4288 = vmatprep.mubr.bf16.mxu0 0
  %4289 = vmatmul.mubr.bf16.gmra.mrb[0].mxu0 %v4254
  %v4290 = vpop.f32.mrb[0].mxu0
  %v4291 = vadd.f32 0.0, %v4290
  %v4292 = vpop.f32.mrb[0].mxu0
  %v4293 = vpop.f32.mrb[0].mxu0
  %v4294 = vadd.f32 0.0, %v4293
  %v4295 = vpop.f32.mrb[0].mxu0
  %4296 = vdwg.mxu0
  %v4297 = vadd.f32 %v4243, %v4291
  %v4298 = vadd.f32 %v4244, %v4294
  %v4299 = vld [vmem:[%s7] sm:$0x1]
  %v4301 = vlaneseq
  %v4302 = vshrl.u32 %v4301, 7
  %v4303 = vsub.s32 0, %v4302
  %v4304 = vrot.slane %v4299, %v4303
  %v4306 = vadd.f32 %v4297, %v4304
  %v4307 = vadd.f32 %v4298, %v4304
  %v4308 = vmul.f32 %v4306, 0.01
  %v4309 = vmul.f32 %v4307, 0.01
  %v4310 = vmax.f32 %v4306, %v4308
  %v4311 = vmax.f32 %v4307, %v4309
  %v4312 = vpack.c.bf16 %v4311, %v4310
  %v4313 = vld [vmem:[%s8] sm:$0xf]
  %v4314 = vld [vmem:[%s8 + $0x4] sm:$0xf]
  %v4315 = vld [vmem:[%s8 + $0x8] sm:$0xf]
  %v4316 = vld [vmem:[%s8 + $0xc] sm:$0xf]
  %v4317 = vld [vmem:[%s8 + $0x10] sm:$0x3]
  %v4323 = vunpack.c.l.b16 %v4313
  %v4324 = vunpack.c.l.b16 %v4314
  %v4325 = vunpack.c.l.b16 %v4315
  %v4326 = vunpack.c.l.b16 %v4316
  %v4327 = vunpack.c.l.b16 %v4317
  %v4328 = vpack.c.b16 %v4324, %v4323
  %v4329 = vpack.c.b16 %v4326, %v4325
  %v4330 = vpack.c.b16 %v4327, %v4327
  %v4332 = vsel %vm113, %v4328, 0
  %v4335 = vsel %vm113, %v4329, 0
  %v4338 = vsel %vm113, %v4330, 0
  %4340 = vmatprep.subr.bf16.mxu0 0
  %4341 = vmatpush1.bf16.msra.mxu0 %v4312
  %4342 = vmatprep.subr.bf16.mxu0 0
  %4343 = vmatpush1.bf16.msra.mxu0 0
  %4344 = vmatprep.subr.bf16.mxu0 0
  %4345 = vmatpush1.bf16.msra.mxu0 0
  %4346 = vmatprep.subr.bf16.mxu0 0
  %4347 = vmatpush1.bf16.msra.mxu0 0
  %4348 = vmatprep.subr.bf16.mxu0 0
  %4349 = vmatpush1.bf16.msra.mxu0 0
  %4350 = vmatprep.subr.bf16.mxu0 0
  %4351 = vmatpush1.bf16.msra.mxu0 0
  %4352 = vmatprep.subr.bf16.mxu0 0
  %4353 = vmatpush1.bf16.msra.mxu0 0
  %4354 = vmatprep.subr.bf16.mxu0 0
  %4355 = vmatpush1.bf16.msra.mxu0 0
  %4356 = vmatprep.subr.bf16.mxu0 0
  %4357 = vmatpush1.bf16.msra.mxu0 0
  %4358 = vmatprep.subr.bf16.mxu0 0
  %4359 = vmatpush1.bf16.msra.mxu0 0
  %4360 = vmatprep.subr.bf16.mxu0 0
  %4361 = vmatpush1.bf16.msra.mxu0 0
  %4362 = vmatprep.subr.bf16.mxu0 0
  %4363 = vmatpush1.bf16.msra.mxu0 0
  %4364 = vmatprep.subr.bf16.mxu0 0
  %4365 = vmatpush1.bf16.msra.mxu0 0
  %4366 = vmatprep.subr.bf16.mxu0 0
  %4367 = vmatpush1.bf16.msra.mxu0 0
  %4368 = vmatprep.subr.bf16.mxu0 0
  %4369 = vmatpush1.bf16.msra.mxu0 0
  %4370 = vmatprep.subr.bf16.mxu0 0
  %4371 = vmatpush1.bf16.msra.mxu0 0
  %4372 = vmatprep.mubr.bf16.mxu0 0
  %4373 = vmatmul.mubr.bf16.gmra.mrb[0].mxu0 %v4332
  %v4374 = vpop.f32.mrb[0].mxu0
  %v4375 = vadd.f32 0.0, %v4374
  %v4376 = vpop.f32.mrb[0].mxu0
  %v4377 = vpop.f32.mrb[0].mxu0
  %v4378 = vadd.f32 0.0, %v4377
  %v4379 = vpop.f32.mrb[0].mxu0
  %4380 = vmatprep.mubr.bf16.mxu0 0
  %4381 = vmatmul.mubr.bf16.gmra.mrb[0].mxu0 %v4335
  %v4382 = vpop.f32.mrb[0].mxu0
  %v4383 = vadd.f32 0.0, %v4382
  %v4384 = vpop.f32.mrb[0].mxu0
  %v4385 = vpop.f32.mrb[0].mxu0
  %v4386 = vadd.f32 0.0, %v4385
  %v4387 = vpop.f32.mrb[0].mxu0
  %4388 = vmatprep.mubr.bf16.mxu0 0
  %4389 = vmatmul.mubr.bf16.gmra.mrb[0].mxu0 %v4338
  %v4390 = vpop.f32.mrb[0].mxu0
  %v4391 = vadd.f32 0.0, %v4390
  %v4392 = vpop.f32.mrb[0].mxu0
  %v4393 = vpop.f32.mrb[0].mxu0
  %v4394 = vpop.f32.mrb[0].mxu0
  %4395 = vdwg.mxu0
  %v4396 = vpack.c.bf16 %v4378, %v4375
  %v4397 = vpack.c.bf16 %v4386, %v4383
  %v4398 = vpack.c.bf16 %v4391, %v4391
  %v4399 = vld [vmem:[%s9] sm:$0xf]
  %v4400 = vld [vmem:[%s9 + $0x4] sm:$0xf]
  %v4401 = vld [vmem:[%s9 + $0x8] sm:$0xf]
  %v4402 = vld [vmem:[%s9 + $0xc] sm:$0xf]
  %v4403 = vld [vmem:[%s9 + $0x10] sm:$0xf]
  %v4404 = vld [vmem:[%s9 + $0x14] sm:$0xf]
  %v4405 = vld [vmem:[%s9 + $0x18] sm:$0xf]
  %v4406 = vld [vmem:[%s9 + $0x1c] sm:$0xf]
  %v4408 = vrot.slane %v4396, 2
  %v4413 = vunpack.c.l.b16 %v4403
  %v4414 = vunpack.c.l.b16 %v4404
  %v4415 = vunpack.c.l.b16 %v4405
  %v4416 = vunpack.c.l.b16 %v4406
  %v4417 = vpack.c.b16 %v4414, %v4413
  %v4418 = vpack.c.b16 %v4416, %v4415
  %v4422 = vsel %vm1020, %v4408, 0
  %4424 = vmatprep.subr.bf16.mxu0 0
  %4425 = vmatpush1.bf16.msra.mxu0 %v4417
  %4426 = vmatprep.subr.bf16.mxu0 0
  %4427 = vmatpush1.bf16.msra.mxu0 %v4418
  %4428 = vmatprep.subr.bf16.mxu0 0
  %4429 = vmatpush1.bf16.msra.mxu0 0
  %4430 = vmatprep.subr.bf16.mxu0 0
  %4431 = vmatpush1.bf16.msra.mxu0 0
  %4432 = vmatprep.subr.bf16.mxu0 0
  %4433 = vmatpush1.bf16.msra.mxu0 0
  %4434 = vmatprep.subr.bf16.mxu0 0
  %4435 = vmatpush1.bf16.msra.mxu0 0
  %4436 = vmatprep.subr.bf16.mxu0 0
  %4437 = vmatpush1.bf16.msra.mxu0 0
  %4438 = vmatprep.subr.bf16.mxu0 0
  %4439 = vmatpush1.bf16.msra.mxu0 0
  %4440 = vmatprep.subr.bf16.mxu0 0
  %4441 = vmatpush1.bf16.msra.mxu0 0
  %4442 = vmatprep.subr.bf16.mxu0 0
  %4443 = vmatpush1.bf16.msra.mxu0 0
  %4444 = vmatprep.subr.bf16.mxu0 0
  %4445 = vmatpush1.bf16.msra.mxu0 0
  %4446 = vmatprep.subr.bf16.mxu0 0
  %4447 = vmatpush1.bf16.msra.mxu0 0
  %4448 = vmatprep.subr.bf16.mxu0 0
  %4449 = vmatpush1.bf16.msra.mxu0 0
  %4450 = vmatprep.subr.bf16.mxu0 0
  %4451 = vmatpush1.bf16.msra.mxu0 0
  %4452 = vmatprep.subr.bf16.mxu0 0
  %4453 = vmatpush1.bf16.msra.mxu0 0
  %4454 = vmatprep.subr.bf16.mxu0 0
  %4455 = vmatpush1.bf16.msra.mxu0 0
  %4456 = vmatprep.mubr.bf16.mxu0 0
  %4457 = vmatmul.mubr.bf16.gmra.mrb[0].mxu0 %v4422
  %v4458 = vpop.f32.mrb[0].mxu0
  %v4459 = vadd.f32 0.0, %v4458
  %v4460 = vpop.f32.mrb[0].mxu0
  %v4461 = vpop.f32.mrb[0].mxu0
  %v4462 = vpop.f32.mrb[0].mxu0
  %4463 = vdwg.mxu0
  %v4468 = vunpack.c.l.b16 %v4399
  %v4469 = vunpack.c.l.b16 %v4400
  %v4470 = vunpack.c.l.b16 %v4401
  %v4471 = vunpack.c.l.b16 %v4402
  %v4472 = vpack.c.b16 %v4469, %v4468
  %v4473 = vpack.c.b16 %v4471, %v4470
  %v4477 = vsel %vm1020, %v4396, 0
  %4479 = vmatprep.subr.bf16.mxu0 0
  %4480 = vmatpush1.bf16.msra.mxu0 %v4472
  %4481 = vmatprep.subr.bf16.mxu0 0
  %4482 = vmatpush1.bf16.msra.mxu0 %v4473
  %4483 = vmatprep.subr.bf16.mxu0 0
  %4484 = vmatpush1.bf16.msra.mxu0 0
  %4485 = vmatprep.subr.bf16.mxu0 0
  %4486 = vmatpush1.bf16.msra.mxu0 0
  %4487 = vmatprep.subr.bf16.mxu0 0
  %4488 = vmatpush1.bf16.msra.mxu0 0
  %4489 = vmatprep.subr.bf16.mxu0 0
  %4490 = vmatpush1.bf16.msra.mxu0 0
  %4491 = vmatprep.subr.bf16.mxu0 0
  %4492 = vmatpush1.bf16.msra.mxu0 0
  %4493 = vmatprep.subr.bf16.mxu0 0
  %4494 = vmatpush1.bf16.msra.mxu0 0
  %4495 = vmatprep.subr.bf16.mxu0 0
  %4496 = vmatpush1.bf16.msra.mxu0 0
  %4497 = vmatprep.subr.bf16.mxu0 0
  %4498 = vmatpush1.bf16.msra.mxu0 0
  %4499 = vmatprep.subr.bf16.mxu0 0
  %4500 = vmatpush1.bf16.msra.mxu0 0
  %4501 = vmatprep.subr.bf16.mxu0 0
  %4502 = vmatpush1.bf16.msra.mxu0 0
  %4503 = vmatprep.subr.bf16.mxu0 0
  %4504 = vmatpush1.bf16.msra.mxu0 0
  %4505 = vmatprep.subr.bf16.mxu0 0
  %4506 = vmatpush1.bf16.msra.mxu0 0
  %4507 = vmatprep.subr.bf16.mxu0 0
  %4508 = vmatpush1.bf16.msra.mxu0 0
  %4509 = vmatprep.subr.bf16.mxu0 0
  %4510 = vmatpush1.bf16.msra.mxu0 0
  %4511 = vmatprep.mubr.bf16.mxu0 0
  %4512 = vmatmul.mubr.bf16.gmra.mrb[0].mxu0 %v4477
  %v4513 = vpop.f32.mrb[0].mxu0
  %v4514 = vadd.f32 %v4459, %v4513
  %v4515 = vpop.f32.mrb[0].mxu0
  %v4516 = vpop.f32.mrb[0].mxu0
  %v4517 = vpop.f32.mrb[0].mxu0
  %4518 = vdwg.mxu0
  %v4519 = vld [vmem:[%s9 + $0x20] sm:$0xf]
  %v4520 = vld [vmem:[%s9 + $0x24] sm:$0xf]
  %v4521 = vld [vmem:[%s9 + $0x28] sm:$0xf]
  %v4522 = vld [vmem:[%s9 + $0x2c] sm:$0xf]
  %v4523 = vrot.slane %v4396, 4
  %v4528 = vunpack.c.l.b16 %v4519
  %v4529 = vunpack.c.l.b16 %v4520
  %v4530 = vunpack.c.l.b16 %v4521
  %v4531 = vunpack.c.l.b16 %v4522
  %v4532 = vpack.c.b16 %v4529, %v4528
  %v4533 = vpack.c.b16 %v4531, %v4530
  %v4537 = vsel %vm1020, %v4523, 0
  %4539 = vmatprep.subr.bf16.mxu0 0
  %4540 = vmatpush1.bf16.msra.mxu0 %v4532
  %4541 = vmatprep.subr.bf16.mxu0 0
  %4542 = vmatpush1.bf16.msra.mxu0 %v4533
  %4543 = vmatprep.subr.bf16.mxu0 0
  %4544 = vmatpush1.bf16.msra.mxu0 0
  %4545 = vmatprep.subr.bf16.mxu0 0
  %4546 = vmatpush1.bf16.msra.mxu0 0
  %4547 = vmatprep.subr.bf16.mxu0 0
  %4548 = vmatpush1.bf16.msra.mxu0 0
  %4549 = vmatprep.subr.bf16.mxu0 0
  %4550 = vmatpush1.bf16.msra.mxu0 0
  %4551 = vmatprep.subr.bf16.mxu0 0
  %4552 = vmatpush1.bf16.msra.mxu0 0
  %4553 = vmatprep.subr.bf16.mxu0 0
  %4554 = vmatpush1.bf16.msra.mxu0 0
  %4555 = vmatprep.subr.bf16.mxu0 0
  %4556 = vmatpush1.bf16.msra.mxu0 0
  %4557 = vmatprep.subr.bf16.mxu0 0
  %4558 = vmatpush1.bf16.msra.mxu0 0
  %4559 = vmatprep.subr.bf16.mxu0 0
  %4560 = vmatpush1.bf16.msra.mxu0 0
  %4561 = vmatprep.subr.bf16.mxu0 0
  %4562 = vmatpush1.bf16.msra.mxu0 0
  %4563 = vmatprep.subr.bf16.mxu0 0
  %4564 = vmatpush1.bf16.msra.mxu0 0
  %4565 = vmatprep.subr.bf16.mxu0 0
  %4566 = vmatpush1.bf16.msra.mxu0 0
  %4567 = vmatprep.subr.bf16.mxu0 0
  %4568 = vmatpush1.bf16.msra.mxu0 0
  %4569 = vmatprep.subr.bf16.mxu0 0
  %4570 = vmatpush1.bf16.msra.mxu0 0
  %4571 = vmatprep.mubr.bf16.mxu0 0
  %4572 = vmatmul.mubr.bf16.gmra.mrb[0].mxu0 %v4537
  %v4573 = vpop.f32.mrb[0].mxu0
  %v4574 = vadd.f32 0.0, %v4573
  %v4575 = vpop.f32.mrb[0].mxu0
  %v4576 = vpop.f32.mrb[0].mxu0
  %v4577 = vpop.f32.mrb[0].mxu0
  %4578 = vdwg.mxu0
  %v4579 = vadd.f32 %v4514, %v4574
  %v4580 = vld [vmem:[%s9 + $0x30] sm:$0xf]
  %v4581 = vld [vmem:[%s9 + $0x34] sm:$0xf]
  %v4582 = vld [vmem:[%s9 + $0x38] sm:$0xf]
  %v4583 = vld [vmem:[%s9 + $0x3c] sm:$0xf]
  %v4584 = vrot.slane %v4396, 6
  %v4589 = vunpack.c.l.b16 %v4580
  %v4590 = vunpack.c.l.b16 %v4581
  %v4591 = vunpack.c.l.b16 %v4582
  %v4592 = vunpack.c.l.b16 %v4583
  %v4593 = vpack.c.b16 %v4590, %v4589
  %v4594 = vpack.c.b16 %v4592, %v4591
  %v4598 = vsel %vm1020, %v4584, 0
  %4600 = vmatprep.subr.bf16.mxu0 0
  %4601 = vmatpush1.bf16.msra.mxu0 %v4593
  %4602 = vmatprep.subr.bf16.mxu0 0
  %4603 = vmatpush1.bf16.msra.mxu0 %v4594
  %4604 = vmatprep.subr.bf16.mxu0 0
  %4605 = vmatpush1.bf16.msra.mxu0 0
  %4606 = vmatprep.subr.bf16.mxu0 0
  %4607 = vmatpush1.bf16.msra.mxu0 0
  %4608 = vmatprep.subr.bf16.mxu0 0
  %4609 = vmatpush1.bf16.msra.mxu0 0
  %4610 = vmatprep.subr.bf16.mxu0 0
  %4611 = vmatpush1.bf16.msra.mxu0 0
  %4612 = vmatprep.subr.bf16.mxu0 0
  %4613 = vmatpush1.bf16.msra.mxu0 0
  %4614 = vmatprep.subr.bf16.mxu0 0
  %4615 = vmatpush1.bf16.msra.mxu0 0
  %4616 = vmatprep.subr.bf16.mxu0 0
  %4617 = vmatpush1.bf16.msra.mxu0 0
  %4618 = vmatprep.subr.bf16.mxu0 0
  %4619 = vmatpush1.bf16.msra.mxu0 0
  %4620 = vmatprep.subr.bf16.mxu0 0
  %4621 = vmatpush1.bf16.msra.mxu0 0
  %4622 = vmatprep.subr.bf16.mxu0 0
  %4623 = vmatpush1.bf16.msra.mxu0 0
  %4624 = vmatprep.subr.bf16.mxu0 0
  %4625 = vmatpush1.bf16.msra.mxu0 0
  %4626 = vmatprep.subr.bf16.mxu0 0
  %4627 = vmatpush1.bf16.msra.mxu0 0
  %4628 = vmatprep.subr.bf16.mxu0 0
  %4629 = vmatpush1.bf16.msra.mxu0 0
  %4630 = vmatprep.subr.bf16.mxu0 0
  %4631 = vmatpush1.bf16.msra.mxu0 0
  %4632 = vmatprep.mubr.bf16.mxu0 0
  %4633 = vmatmul.mubr.bf16.gmra.mrb[0].mxu0 %v4598
  %v4634 = vpop.f32.mrb[0].mxu0
  %v4635 = vadd.f32 0.0, %v4634
  %v4636 = vpop.f32.mrb[0].mxu0
  %v4637 = vpop.f32.mrb[0].mxu0
  %v4638 = vpop.f32.mrb[0].mxu0
  %4639 = vdwg.mxu0
  %v4640 = vadd.f32 %v4579, %v4635
  %v4641 = vld [vmem:[%s9 + $0x40] sm:$0xf]
  %v4642 = vld [vmem:[%s9 + $0x44] sm:$0xf]
  %v4643 = vld [vmem:[%s9 + $0x48] sm:$0xf]
  %v4644 = vld [vmem:[%s9 + $0x4c] sm:$0xf]
  %v4649 = vunpack.c.l.b16 %v4641
  %v4650 = vunpack.c.l.b16 %v4642
  %v4651 = vunpack.c.l.b16 %v4643
  %v4652 = vunpack.c.l.b16 %v4644
  %v4653 = vpack.c.b16 %v4650, %v4649
  %v4654 = vpack.c.b16 %v4652, %v4651
  %v4658 = vsel %vm1020, %v4397, 0
  %4660 = vmatprep.subr.bf16.mxu0 0
  %4661 = vmatpush1.bf16.msra.mxu0 %v4653
  %4662 = vmatprep.subr.bf16.mxu0 0
  %4663 = vmatpush1.bf16.msra.mxu0 %v4654
  %4664 = vmatprep.subr.bf16.mxu0 0
  %4665 = vmatpush1.bf16.msra.mxu0 0
  %4666 = vmatprep.subr.bf16.mxu0 0
  %4667 = vmatpush1.bf16.msra.mxu0 0
  %4668 = vmatprep.subr.bf16.mxu0 0
  %4669 = vmatpush1.bf16.msra.mxu0 0
  %4670 = vmatprep.subr.bf16.mxu0 0
  %4671 = vmatpush1.bf16.msra.mxu0 0
  %4672 = vmatprep.subr.bf16.mxu0 0
  %4673 = vmatpush1.bf16.msra.mxu0 0
  %4674 = vmatprep.subr.bf16.mxu0 0
  %4675 = vmatpush1.bf16.msra.mxu0 0
  %4676 = vmatprep.subr.bf16.mxu0 0
  %4677 = vmatpush1.bf16.msra.mxu0 0
  %4678 = vmatprep.subr.bf16.mxu0 0
  %4679 = vmatpush1.bf16.msra.mxu0 0
  %4680 = vmatprep.subr.bf16.mxu0 0
  %4681 = vmatpush1.bf16.msra.mxu0 0
  %4682 = vmatprep.subr.bf16.mxu0 0
  %4683 = vmatpush1.bf16.msra.mxu0 0
  %4684 = vmatprep.subr.bf16.mxu0 0
  %4685 = vmatpush1.bf16.msra.mxu0 0
  %4686 = vmatprep.subr.bf16.mxu0 0
  %4687 = vmatpush1.bf16.msra.mxu0 0
  %4688 = vmatprep.subr.bf16.mxu0 0
  %4689 = vmatpush1.bf16.msra.mxu0 0
  %4690 = vmatprep.subr.bf16.mxu0 0
  %4691 = vmatpush1.bf16.msra.mxu0 0
  %4692 = vmatprep.mubr.bf16.mxu0 0
  %4693 = vmatmul.mubr.bf16.gmra.mrb[0].mxu0 %v4658
  %v4694 = vpop.f32.mrb[0].mxu0
  %v4695 = vadd.f32 0.0, %v4694
  %v4696 = vpop.f32.mrb[0].mxu0
  %v4697 = vpop.f32.mrb[0].mxu0
  %v4698 = vpop.f32.mrb[0].mxu0
  %4699 = vdwg.mxu0
  %v4700 = vadd.f32 %v4640, %v4695
  %v4701 = vld [vmem:[%s9 + $0x50] sm:$0xf]
  %v4702 = vld [vmem:[%s9 + $0x54] sm:$0xf]
  %v4703 = vld [vmem:[%s9 + $0x58] sm:$0xf]
  %v4704 = vld [vmem:[%s9 + $0x5c] sm:$0xf]
  %v4706 = vrot.slane %v4397, 2
  %v4711 = vunpack.c.l.b16 %v4701
  %v4712 = vunpack.c.l.b16 %v4702
  %v4713 = vunpack.c.l.b16 %v4703
  %v4714 = vunpack.c.l.b16 %v4704
  %v4715 = vpack.c.b16 %v4712, %v4711
  %v4716 = vpack.c.b16 %v4714, %v4713
  %v4720 = vsel %vm1020, %v4706, 0
  %4722 = vmatprep.subr.bf16.mxu0 0
  %4723 = vmatpush1.bf16.msra.mxu0 %v4715
  %4724 = vmatprep.subr.bf16.mxu0 0
  %4725 = vmatpush1.bf16.msra.mxu0 %v4716
  %4726 = vmatprep.subr.bf16.mxu0 0
  %4727 = vmatpush1.bf16.msra.mxu0 0
  %4728 = vmatprep.subr.bf16.mxu0 0
  %4729 = vmatpush1.bf16.msra.mxu0 0
  %4730 = vmatprep.subr.bf16.mxu0 0
  %4731 = vmatpush1.bf16.msra.mxu0 0
  %4732 = vmatprep.subr.bf16.mxu0 0
  %4733 = vmatpush1.bf16.msra.mxu0 0
  %4734 = vmatprep.subr.bf16.mxu0 0
  %4735 = vmatpush1.bf16.msra.mxu0 0
  %4736 = vmatprep.subr.bf16.mxu0 0
  %4737 = vmatpush1.bf16.msra.mxu0 0
  %4738 = vmatprep.subr.bf16.mxu0 0
  %4739 = vmatpush1.bf16.msra.mxu0 0
  %4740 = vmatprep.subr.bf16.mxu0 0
  %4741 = vmatpush1.bf16.msra.mxu0 0
  %4742 = vmatprep.subr.bf16.mxu0 0
  %4743 = vmatpush1.bf16.msra.mxu0 0
  %4744 = vmatprep.subr.bf16.mxu0 0
  %4745 = vmatpush1.bf16.msra.mxu0 0
  %4746 = vmatprep.subr.bf16.mxu0 0
  %4747 = vmatpush1.bf16.msra.mxu0 0
  %4748 = vmatprep.subr.bf16.mxu0 0
  %4749 = vmatpush1.bf16.msra.mxu0 0
  %4750 = vmatprep.subr.bf16.mxu0 0
  %4751 = vmatpush1.bf16.msra.mxu0 0
  %4752 = vmatprep.subr.bf16.mxu0 0
  %4753 = vmatpush1.bf16.msra.mxu0 0
  %4754 = vmatprep.mubr.bf16.mxu0 0
  %4755 = vmatmul.mubr.bf16.gmra.mrb[0].mxu0 %v4720
  %v4756 = vpop.f32.mrb[0].mxu0
  %v4757 = vadd.f32 0.0, %v4756
  %v4758 = vpop.f32.mrb[0].mxu0
  %v4759 = vpop.f32.mrb[0].mxu0
  %v4760 = vpop.f32.mrb[0].mxu0
  %4761 = vdwg.mxu0
  %v4762 = vadd.f32 %v4700, %v4757
  %v4763 = vld [vmem:[%s9 + $0x60] sm:$0xf]
  %v4764 = vld [vmem:[%s9 + $0x64] sm:$0xf]
  %v4765 = vld [vmem:[%s9 + $0x68] sm:$0xf]
  %v4766 = vld [vmem:[%s9 + $0x6c] sm:$0xf]
  %v4767 = vrot.slane %v4397, 4
  %v4772 = vunpack.c.l.b16 %v4763
  %v4773 = vunpack.c.l.b16 %v4764
  %v4774 = vunpack.c.l.b16 %v4765
  %v4775 = vunpack.c.l.b16 %v4766
  %v4776 = vpack.c.b16 %v4773, %v4772
  %v4777 = vpack.c.b16 %v4775, %v4774
  %v4781 = vsel %vm1020, %v4767, 0
  %4783 = vmatprep.subr.bf16.mxu0 0
  %4784 = vmatpush1.bf16.msra.mxu0 %v4776
  %4785 = vmatprep.subr.bf16.mxu0 0
  %4786 = vmatpush1.bf16.msra.mxu0 %v4777
  %4787 = vmatprep.subr.bf16.mxu0 0
  %4788 = vmatpush1.bf16.msra.mxu0 0
  %4789 = vmatprep.subr.bf16.mxu0 0
  %4790 = vmatpush1.bf16.msra.mxu0 0
  %4791 = vmatprep.subr.bf16.mxu0 0
  %4792 = vmatpush1.bf16.msra.mxu0 0
  %4793 = vmatprep.subr.bf16.mxu0 0
  %4794 = vmatpush1.bf16.msra.mxu0 0
  %4795 = vmatprep.subr.bf16.mxu0 0
  %4796 = vmatpush1.bf16.msra.mxu0 0
  %4797 = vmatprep.subr.bf16.mxu0 0
  %4798 = vmatpush1.bf16.msra.mxu0 0
  %4799 = vmatprep.subr.bf16.mxu0 0
  %4800 = vmatpush1.bf16.msra.mxu0 0
  %4801 = vmatprep.subr.bf16.mxu0 0
  %4802 = vmatpush1.bf16.msra.mxu0 0
  %4803 = vmatprep.subr.bf16.mxu0 0
  %4804 = vmatpush1.bf16.msra.mxu0 0
  %4805 = vmatprep.subr.bf16.mxu0 0
  %4806 = vmatpush1.bf16.msra.mxu0 0
  %4807 = vmatprep.subr.bf16.mxu0 0
  %4808 = vmatpush1.bf16.msra.mxu0 0
  %4809 = vmatprep.subr.bf16.mxu0 0
  %4810 = vmatpush1.bf16.msra.mxu0 0
  %4811 = vmatprep.subr.bf16.mxu0 0
  %4812 = vmatpush1.bf16.msra.mxu0 0
  %4813 = vmatprep.subr.bf16.mxu0 0
  %4814 = vmatpush1.bf16.msra.mxu0 0
  %4815 = vmatprep.mubr.bf16.mxu0 0
  %4816 = vmatmul.mubr.bf16.gmra.mrb[0].mxu0 %v4781
  %v4817 = vpop.f32.mrb[0].mxu0
  %v4818 = vadd.f32 0.0, %v4817
  %v4819 = vpop.f32.mrb[0].mxu0
  %v4820 = vpop.f32.mrb[0].mxu0
  %v4821 = vpop.f32.mrb[0].mxu0
  %4822 = vdwg.mxu0
  %v4823 = vadd.f32 %v4762, %v4818
  %v4824 = vld [vmem:[%s9 + $0x70] sm:$0xf]
  %v4825 = vld [vmem:[%s9 + $0x74] sm:$0xf]
  %v4826 = vld [vmem:[%s9 + $0x78] sm:$0xf]
  %v4827 = vld [vmem:[%s9 + $0x7c] sm:$0xf]
  %v4828 = vrot.slane %v4397, 6
  %v4833 = vunpack.c.l.b16 %v4824
  %v4834 = vunpack.c.l.b16 %v4825
  %v4835 = vunpack.c.l.b16 %v4826
  %v4836 = vunpack.c.l.b16 %v4827
  %v4837 = vpack.c.b16 %v4834, %v4833
  %v4838 = vpack.c.b16 %v4836, %v4835
  %v4842 = vsel %vm1020, %v4828, 0
  %4844 = vmatprep.subr.bf16.mxu0 0
  %4845 = vmatpush1.bf16.msra.mxu0 %v4837
  %4846 = vmatprep.subr.bf16.mxu0 0
  %4847 = vmatpush1.bf16.msra.mxu0 %v4838
  %4848 = vmatprep.subr.bf16.mxu0 0
  %4849 = vmatpush1.bf16.msra.mxu0 0
  %4850 = vmatprep.subr.bf16.mxu0 0
  %4851 = vmatpush1.bf16.msra.mxu0 0
  %4852 = vmatprep.subr.bf16.mxu0 0
  %4853 = vmatpush1.bf16.msra.mxu0 0
  %4854 = vmatprep.subr.bf16.mxu0 0
  %4855 = vmatpush1.bf16.msra.mxu0 0
  %4856 = vmatprep.subr.bf16.mxu0 0
  %4857 = vmatpush1.bf16.msra.mxu0 0
  %4858 = vmatprep.subr.bf16.mxu0 0
  %4859 = vmatpush1.bf16.msra.mxu0 0
  %4860 = vmatprep.subr.bf16.mxu0 0
  %4861 = vmatpush1.bf16.msra.mxu0 0
  %4862 = vmatprep.subr.bf16.mxu0 0
  %4863 = vmatpush1.bf16.msra.mxu0 0
  %4864 = vmatprep.subr.bf16.mxu0 0
  %4865 = vmatpush1.bf16.msra.mxu0 0
  %4866 = vmatprep.subr.bf16.mxu0 0
  %4867 = vmatpush1.bf16.msra.mxu0 0
  %4868 = vmatprep.subr.bf16.mxu0 0
  %4869 = vmatpush1.bf16.msra.mxu0 0
  %4870 = vmatprep.subr.bf16.mxu0 0
  %4871 = vmatpush1.bf16.msra.mxu0 0
  %4872 = vmatprep.subr.bf16.mxu0 0
  %4873 = vmatpush1.bf16.msra.mxu0 0
  %4874 = vmatprep.subr.bf16.mxu0 0
  %4875 = vmatpush1.bf16.msra.mxu0 0
  %4876 = vmatprep.mubr.bf16.mxu0 0
  %4877 = vmatmul.mubr.bf16.gmra.mrb[0].mxu0 %v4842
  %v4878 = vpop.f32.mrb[0].mxu0
  %v4879 = vadd.f32 0.0, %v4878
  %v4880 = vpop.f32.mrb[0].mxu0
  %v4881 = vpop.f32.mrb[0].mxu0
  %v4882 = vpop.f32.mrb[0].mxu0
  %4883 = vdwg.mxu0
  %v4884 = vadd.f32 %v4823, %v4879
  %v4885 = vld [vmem:[%s9 + $0x80] sm:$0xf]
  %v4886 = vld [vmem:[%s9 + $0x84] sm:$0xf]
  %v4887 = vld [vmem:[%s9 + $0x88] sm:$0xf]
  %v4888 = vld [vmem:[%s9 + $0x8c] sm:$0xf]
  %v4893 = vunpack.c.l.b16 %v4885
  %v4894 = vunpack.c.l.b16 %v4886
  %v4895 = vunpack.c.l.b16 %v4887
  %v4896 = vunpack.c.l.b16 %v4888
  %v4897 = vpack.c.b16 %v4894, %v4893
  %v4898 = vpack.c.b16 %v4896, %v4895
  %v4902 = vsel %vm1020, %v4398, 0
  %4904 = vmatprep.subr.bf16.mxu0 0
  %4905 = vmatpush1.bf16.msra.mxu0 %v4897
  %4906 = vmatprep.subr.bf16.mxu0 0
  %4907 = vmatpush1.bf16.msra.mxu0 %v4898
  %4908 = vmatprep.subr.bf16.mxu0 0
  %4909 = vmatpush1.bf16.msra.mxu0 0
  %4910 = vmatprep.subr.bf16.mxu0 0
  %4911 = vmatpush1.bf16.msra.mxu0 0
  %4912 = vmatprep.subr.bf16.mxu0 0
  %4913 = vmatpush1.bf16.msra.mxu0 0
  %4914 = vmatprep.subr.bf16.mxu0 0
  %4915 = vmatpush1.bf16.msra.mxu0 0
  %4916 = vmatprep.subr.bf16.mxu0 0
  %4917 = vmatpush1.bf16.msra.mxu0 0
  %4918 = vmatprep.subr.bf16.mxu0 0
  %4919 = vmatpush1.bf16.msra.mxu0 0
  %4920 = vmatprep.subr.bf16.mxu0 0
  %4921 = vmatpush1.bf16.msra.mxu0 0
  %4922 = vmatprep.subr.bf16.mxu0 0
  %4923 = vmatpush1.bf16.msra.mxu0 0
  %4924 = vmatprep.subr.bf16.mxu0 0
  %4925 = vmatpush1.bf16.msra.mxu0 0
  %4926 = vmatprep.subr.bf16.mxu0 0
  %4927 = vmatpush1.bf16.msra.mxu0 0
  %4928 = vmatprep.subr.bf16.mxu0 0
  %4929 = vmatpush1.bf16.msra.mxu0 0
  %4930 = vmatprep.subr.bf16.mxu0 0
  %4931 = vmatpush1.bf16.msra.mxu0 0
  %4932 = vmatprep.subr.bf16.mxu0 0
  %4933 = vmatpush1.bf16.msra.mxu0 0
  %4934 = vmatprep.subr.bf16.mxu0 0
  %4935 = vmatpush1.bf16.msra.mxu0 0
  %4936 = vmatprep.mubr.bf16.mxu0 0
  %4937 = vmatmul.mubr.bf16.gmra.mrb[0].mxu0 %v4902
  %v4938 = vpop.f32.mrb[0].mxu0
  %v4939 = vadd.f32 0.0, %v4938
  %v4940 = vpop.f32.mrb[0].mxu0
  %v4941 = vpop.f32.mrb[0].mxu0
  %v4942 = vpop.f32.mrb[0].mxu0
  %4943 = vdwg.mxu0
  %v4944 = vadd.f32 %v4884, %v4939
  %v4945 = vld [vmem:[%s10] sm:$0x1]
  %v4947 = vlaneseq
  %v4948 = vshrl.u32 %v4947, 7
  %v4949 = vsub.s32 0, %v4948
  %v4950 = vrot.slane %v4945, %v4949
  %v4952 = vadd.f32 %v4944, %v4950
  %v4953 = vmul.f32 %v4952, 0.01
  %v4954 = vmax.f32 %v4952, %v4953
  %v4955 = vpack.c.bf16 %v4954, %v4954
  %v4956 = vld [vmem:[%s11] sm:$0xf]
  %v4957 = vld [vmem:[%s11 + $0x4] sm:$0xf]
  %v4960 = vunpack.c.l.b16 %v4956
  %v4961 = vunpack.c.l.b16 %v4957
  %v4962 = vpack.c.b16 %v4961, %v4960
  %v4964 = vsel %vm1563, %v4962, 0
  %v4967 = vsel %vm1567, %v4955, 0
  %4969 = vmatprep.subr.bf16.mxu0 0
  %4970 = vmatpush1.bf16.msra.mxu0 %v4967
  %4971 = vmatprep.subr.bf16.mxu0 0
  %4972 = vmatpush1.bf16.msra.mxu0 0
  %4973 = vmatprep.subr.bf16.mxu0 0
  %4974 = vmatpush1.bf16.msra.mxu0 0
  %4975 = vmatprep.subr.bf16.mxu0 0
  %4976 = vmatpush1.bf16.msra.mxu0 0
  %4977 = vmatprep.subr.bf16.mxu0 0
  %4978 = vmatpush1.bf16.msra.mxu0 0
  %4979 = vmatprep.subr.bf16.mxu0 0
  %4980 = vmatpush1.bf16.msra.mxu0 0
  %4981 = vmatprep.subr.bf16.mxu0 0
  %4982 = vmatpush1.bf16.msra.mxu0 0
  %4983 = vmatprep.subr.bf16.mxu0 0
  %4984 = vmatpush1.bf16.msra.mxu0 0
  %4985 = vmatprep.subr.bf16.mxu0 0
  %4986 = vmatpush1.bf16.msra.mxu0 0
  %4987 = vmatprep.subr.bf16.mxu0 0
  %4988 = vmatpush1.bf16.msra.mxu0 0
  %4989 = vmatprep.subr.bf16.mxu0 0
  %4990 = vmatpush1.bf16.msra.mxu0 0
  %4991 = vmatprep.subr.bf16.mxu0 0
  %4992 = vmatpush1.bf16.msra.mxu0 0
  %4993 = vmatprep.subr.bf16.mxu0 0
  %4994 = vmatpush1.bf16.msra.mxu0 0
  %4995 = vmatprep.subr.bf16.mxu0 0
  %4996 = vmatpush1.bf16.msra.mxu0 0
  %4997 = vmatprep.subr.bf16.mxu0 0
  %4998 = vmatpush1.bf16.msra.mxu0 0
  %4999 = vmatprep.subr.bf16.mxu0 0
  %5000 = vmatpush1.bf16.msra.mxu0 0
  %5001 = vmatprep.mubr.bf16.mxu0 0
  %5002 = vmatmul.mubr.bf16.gmra.mrb[0].mxu0 %v4964
  %v5003 = vpop.f32.mrb[0].mxu0
  %v5004 = vadd.f32 0.0, %v5003
  %v5005 = vpop.f32.mrb[0].mxu0
  %v5006 = vpop.f32.mrb[0].mxu0
  %v5007 = vadd.f32 0.0, %v5006
  %v5008 = vpop.f32.mrb[0].mxu0
  %5009 = vdwg.mxu0
  %v5010 = vpack.c.bf16 %v5007, %v5004
  %v5011 = vld [vmem:[%s12] sm:$0xf]
  %v5012 = vld [vmem:[%s12 + $0x4] sm:$0xf]
  %v5013 = vld [vmem:[%s12 + $0x8] sm:$0xf]
  %v5014 = vld [vmem:[%s12 + $0xc] sm:$0xf]
  %v5015 = vld [vmem:[%s12 + $0x10] sm:$0xf]
  %v5016 = vld [vmem:[%s12 + $0x14] sm:$0xf]
  %v5017 = vld [vmem:[%s12 + $0x18] sm:$0xf]
  %v5018 = vld [vmem:[%s12 + $0x1c] sm:$0xf]
  %v5019 = vld [vmem:[%s12 + $0x20] sm:$0xf]
  %v5020 = vld [vmem:[%s12 + $0x24] sm:$0xf]
  %v5021 = vld [vmem:[%s12 + $0x28] sm:$0xf]
  %v5022 = vld [vmem:[%s12 + $0x2c] sm:$0xf]
  %v5023 = vld [vmem:[%s12 + $0x30] sm:$0xf]
  %v5024 = vld [vmem:[%s12 + $0x34] sm:$0xf]
  %v5025 = vld [vmem:[%s12 + $0x38] sm:$0xf]
  %v5026 = vld [vmem:[%s12 + $0x3c] sm:$0xf]
  %v5028 = vshrl.u32 %v5010, 16
  %v5038 = vunpack.c.l.b16 %v5019
  %v5039 = vunpack.c.l.b16 %v5020
  %v5040 = vunpack.c.l.b16 %v5021
  %v5041 = vunpack.c.l.b16 %v5022
  %v5042 = vunpack.c.l.b16 %v5023
  %v5043 = vunpack.c.l.b16 %v5024
  %v5044 = vunpack.c.l.b16 %v5025
  %v5045 = vunpack.c.l.b16 %v5026
  %v5046 = vpack.c.b16 %v5039, %v5038
  %v5047 = vpack.c.b16 %v5041, %v5040
  %v5048 = vpack.c.b16 %v5043, %v5042
  %v5049 = vpack.c.b16 %v5045, %v5044
  %v5055 = vsel %vm274, %v5028, 0
  %5057 = vmatprep.subr.bf16.mxu0 0
  %5058 = vmatpush1.bf16.msra.mxu0 %v5046
  %5059 = vmatprep.subr.bf16.mxu0 0
  %5060 = vmatpush1.bf16.msra.mxu0 %v5047
  %5061 = vmatprep.subr.bf16.mxu0 0
  %5062 = vmatpush1.bf16.msra.mxu0 %v5048
  %5063 = vmatprep.subr.bf16.mxu0 0
  %5064 = vmatpush1.bf16.msra.mxu0 %v5049
  %5065 = vmatprep.subr.bf16.mxu0 0
  %5066 = vmatpush1.bf16.msra.mxu0 0
  %5067 = vmatprep.subr.bf16.mxu0 0
  %5068 = vmatpush1.bf16.msra.mxu0 0
  %5069 = vmatprep.subr.bf16.mxu0 0
  %5070 = vmatpush1.bf16.msra.mxu0 0
  %5071 = vmatprep.subr.bf16.mxu0 0
  %5072 = vmatpush1.bf16.msra.mxu0 0
  %5073 = vmatprep.subr.bf16.mxu0 0
  %5074 = vmatpush1.bf16.msra.mxu0 0
  %5075 = vmatprep.subr.bf16.mxu0 0
  %5076 = vmatpush1.bf16.msra.mxu0 0
  %5077 = vmatprep.subr.bf16.mxu0 0
  %5078 = vmatpush1.bf16.msra.mxu0 0
  %5079 = vmatprep.subr.bf16.mxu0 0
  %5080 = vmatpush1.bf16.msra.mxu0 0
  %5081 = vmatprep.subr.bf16.mxu0 0
  %5082 = vmatpush1.bf16.msra.mxu0 0
  %5083 = vmatprep.subr.bf16.mxu0 0
  %5084 = vmatpush1.bf16.msra.mxu0 0
  %5085 = vmatprep.subr.bf16.mxu0 0
  %5086 = vmatpush1.bf16.msra.mxu0 0
  %5087 = vmatprep.subr.bf16.mxu0 0
  %5088 = vmatpush1.bf16.msra.mxu0 0
  %5089 = vmatprep.mubr.bf16.mxu0 0
  %5090 = vmatmul.mubr.bf16.gmra.mrb[0].mxu0 %v5055
  %v5091 = vpop.f32.mrb[0].mxu0
  %v5092 = vadd.f32 0.0, %v5091
  %v5093 = vpop.f32.mrb[0].mxu0
  %v5094 = vpop.f32.mrb[0].mxu0
  %v5095 = vpop.f32.mrb[0].mxu0
  %5096 = vdwg.mxu0
  %v5105 = vunpack.c.l.b16 %v5011
  %v5106 = vunpack.c.l.b16 %v5012
  %v5107 = vunpack.c.l.b16 %v5013
  %v5108 = vunpack.c.l.b16 %v5014
  %v5109 = vunpack.c.l.b16 %v5015
  %v5110 = vunpack.c.l.b16 %v5016
  %v5111 = vunpack.c.l.b16 %v5017
  %v5112 = vunpack.c.l.b16 %v5018
  %v5113 = vpack.c.b16 %v5106, %v5105
  %v5114 = vpack.c.b16 %v5108, %v5107
  %v5115 = vpack.c.b16 %v5110, %v5109
  %v5116 = vpack.c.b16 %v5112, %v5111
  %v5121 = vsel %vm274, %v5010, 0
  %5123 = vmatprep.subr.bf16.mxu0 0
  %5124 = vmatpush1.bf16.msra.mxu0 %v5113
  %5125 = vmatprep.subr.bf16.mxu0 0
  %5126 = vmatpush1.bf16.msra.mxu0 %v5114
  %5127 = vmatprep.subr.bf16.mxu0 0
  %5128 = vmatpush1.bf16.msra.mxu0 %v5115
  %5129 = vmatprep.subr.bf16.mxu0 0
  %5130 = vmatpush1.bf16.msra.mxu0 %v5116
  %5131 = vmatprep.subr.bf16.mxu0 0
  %5132 = vmatpush1.bf16.msra.mxu0 0
  %5133 = vmatprep.subr.bf16.mxu0 0
  %5134 = vmatpush1.bf16.msra.mxu0 0
  %5135 = vmatprep.subr.bf16.mxu0 0
  %5136 = vmatpush1.bf16.msra.mxu0 0
  %5137 = vmatprep.subr.bf16.mxu0 0
  %5138 = vmatpush1.bf16.msra.mxu0 0
  %5139 = vmatprep.subr.bf16.mxu0 0
  %5140 = vmatpush1.bf16.msra.mxu0 0
  %5141 = vmatprep.subr.bf16.mxu0 0
  %5142 = vmatpush1.bf16.msra.mxu0 0
  %5143 = vmatprep.subr.bf16.mxu0 0
  %5144 = vmatpush1.bf16.msra.mxu0 0
  %5145 = vmatprep.subr.bf16.mxu0 0
  %5146 = vmatpush1.bf16.msra.mxu0 0
  %5147 = vmatprep.subr.bf16.mxu0 0
  %5148 = vmatpush1.bf16.msra.mxu0 0
  %5149 = vmatprep.subr.bf16.mxu0 0
  %5150 = vmatpush1.bf16.msra.mxu0 0
  %5151 = vmatprep.subr.bf16.mxu0 0
  %5152 = vmatpush1.bf16.msra.mxu0 0
  %5153 = vmatprep.subr.bf16.mxu0 0
  %5154 = vmatpush1.bf16.msra.mxu0 0
  %5155 = vmatprep.mubr.bf16.mxu0 0
  %5156 = vmatmul.mubr.bf16.gmra.mrb[0].mxu0 %v5121
  %v5157 = vpop.f32.mrb[0].mxu0
  %v5158 = vadd.f32 %v5092, %v5157
  %v5159 = vpop.f32.mrb[0].mxu0
  %v5160 = vpop.f32.mrb[0].mxu0
  %v5161 = vpop.f32.mrb[0].mxu0
  %5162 = vdwg.mxu0
  %v5163 = vld [vmem:[%s12 + $0x40] sm:$0xf]
  %v5164 = vld [vmem:[%s12 + $0x44] sm:$0xf]
  %v5165 = vld [vmem:[%s12 + $0x48] sm:$0xf]
  %v5166 = vld [vmem:[%s12 + $0x4c] sm:$0xf]
  %v5167 = vld [vmem:[%s12 + $0x50] sm:$0xf]
  %v5168 = vld [vmem:[%s12 + $0x54] sm:$0xf]
  %v5169 = vld [vmem:[%s12 + $0x58] sm:$0xf]
  %v5170 = vld [vmem:[%s12 + $0x5c] sm:$0xf]
  %v5172 = vrot.slane %v5010, 1
  %v5181 = vunpack.c.l.b16 %v5163
  %v5182 = vunpack.c.l.b16 %v5164
  %v5183 = vunpack.c.l.b16 %v5165
  %v5184 = vunpack.c.l.b16 %v5166
  %v5185 = vunpack.c.l.b16 %v5167
  %v5186 = vunpack.c.l.b16 %v5168
  %v5187 = vunpack.c.l.b16 %v5169
  %v5188 = vunpack.c.l.b16 %v5170
  %v5189 = vpack.c.b16 %v5182, %v5181
  %v5190 = vpack.c.b16 %v5184, %v5183
  %v5191 = vpack.c.b16 %v5186, %v5185
  %v5192 = vpack.c.b16 %v5188, %v5187
  %v5198 = vsel %vm274, %v5172, 0
  %5200 = vmatprep.subr.bf16.mxu0 0
  %5201 = vmatpush1.bf16.msra.mxu0 %v5189
  %5202 = vmatprep.subr.bf16.mxu0 0
  %5203 = vmatpush1.bf16.msra.mxu0 %v5190
  %5204 = vmatprep.subr.bf16.mxu0 0
  %5205 = vmatpush1.bf16.msra.mxu0 %v5191
  %5206 = vmatprep.subr.bf16.mxu0 0
  %5207 = vmatpush1.bf16.msra.mxu0 %v5192
  %5208 = vmatprep.subr.bf16.mxu0 0
  %5209 = vmatpush1.bf16.msra.mxu0 0
  %5210 = vmatprep.subr.bf16.mxu0 0
  %5211 = vmatpush1.bf16.msra.mxu0 0
  %5212 = vmatprep.subr.bf16.mxu0 0
  %5213 = vmatpush1.bf16.msra.mxu0 0
  %5214 = vmatprep.subr.bf16.mxu0 0
  %5215 = vmatpush1.bf16.msra.mxu0 0
  %5216 = vmatprep.subr.bf16.mxu0 0
  %5217 = vmatpush1.bf16.msra.mxu0 0
  %5218 = vmatprep.subr.bf16.mxu0 0
  %5219 = vmatpush1.bf16.msra.mxu0 0
  %5220 = vmatprep.subr.bf16.mxu0 0
  %5221 = vmatpush1.bf16.msra.mxu0 0
  %5222 = vmatprep.subr.bf16.mxu0 0
  %5223 = vmatpush1.bf16.msra.mxu0 0
  %5224 = vmatprep.subr.bf16.mxu0 0
  %5225 = vmatpush1.bf16.msra.mxu0 0
  %5226 = vmatprep.subr.bf16.mxu0 0
  %5227 = vmatpush1.bf16.msra.mxu0 0
  %5228 = vmatprep.subr.bf16.mxu0 0
  %5229 = vmatpush1.bf16.msra.mxu0 0
  %5230 = vmatprep.subr.bf16.mxu0 0
  %5231 = vmatpush1.bf16.msra.mxu0 0
  %5232 = vmatprep.mubr.bf16.mxu0 0
  %5233 = vmatmul.mubr.bf16.gmra.mrb[0].mxu0 %v5198
  %v5234 = vpop.f32.mrb[0].mxu0
  %v5235 = vadd.f32 0.0, %v5234
  %v5236 = vpop.f32.mrb[0].mxu0
  %v5237 = vpop.f32.mrb[0].mxu0
  %v5238 = vpop.f32.mrb[0].mxu0
  %5239 = vdwg.mxu0
  %v5240 = vadd.f32 %v5158, %v5235
  %v5241 = vld [vmem:[%s12 + $0x60] sm:$0xf]
  %v5242 = vld [vmem:[%s12 + $0x64] sm:$0xf]
  %v5243 = vld [vmem:[%s12 + $0x68] sm:$0xf]
  %v5244 = vld [vmem:[%s12 + $0x6c] sm:$0xf]
  %v5245 = vld [vmem:[%s12 + $0x70] sm:$0xf]
  %v5246 = vld [vmem:[%s12 + $0x74] sm:$0xf]
  %v5247 = vld [vmem:[%s12 + $0x78] sm:$0xf]
  %v5248 = vld [vmem:[%s12 + $0x7c] sm:$0xf]
  %v5249 = vrot.slane %v5028, 1
  %v5258 = vunpack.c.l.b16 %v5241
  %v5259 = vunpack.c.l.b16 %v5242
  %v5260 = vunpack.c.l.b16 %v5243
  %v5261 = vunpack.c.l.b16 %v5244
  %v5262 = vunpack.c.l.b16 %v5245
  %v5263 = vunpack.c.l.b16 %v5246
  %v5264 = vunpack.c.l.b16 %v5247
  %v5265 = vunpack.c.l.b16 %v5248
  %v5266 = vpack.c.b16 %v5259, %v5258
  %v5267 = vpack.c.b16 %v5261, %v5260
  %v5268 = vpack.c.b16 %v5263, %v5262
  %v5269 = vpack.c.b16 %v5265, %v5264
  %v5275 = vsel %vm274, %v5249, 0
  %5277 = vmatprep.subr.bf16.mxu0 0
  %5278 = vmatpush1.bf16.msra.mxu0 %v5266
  %5279 = vmatprep.subr.bf16.mxu0 0
  %5280 = vmatpush1.bf16.msra.mxu0 %v5267
  %5281 = vmatprep.subr.bf16.mxu0 0
  %5282 = vmatpush1.bf16.msra.mxu0 %v5268
  %5283 = vmatprep.subr.bf16.mxu0 0
  %5284 = vmatpush1.bf16.msra.mxu0 %v5269
  %5285 = vmatprep.subr.bf16.mxu0 0
  %5286 = vmatpush1.bf16.msra.mxu0 0
  %5287 = vmatprep.subr.bf16.mxu0 0
  %5288 = vmatpush1.bf16.msra.mxu0 0
  %5289 = vmatprep.subr.bf16.mxu0 0
  %5290 = vmatpush1.bf16.msra.mxu0 0
  %5291 = vmatprep.subr.bf16.mxu0 0
  %5292 = vmatpush1.bf16.msra.mxu0 0
  %5293 = vmatprep.subr.bf16.mxu0 0
  %5294 = vmatpush1.bf16.msra.mxu0 0
  %5295 = vmatprep.subr.bf16.mxu0 0
  %5296 = vmatpush1.bf16.msra.mxu0 0
  %5297 = vmatprep.subr.bf16.mxu0 0
  %5298 = vmatpush1.bf16.msra.mxu0 0
  %5299 = vmatprep.subr.bf16.mxu0 0
  %5300 = vmatpush1.bf16.msra.mxu0 0
  %5301 = vmatprep.subr.bf16.mxu0 0
  %5302 = vmatpush1.bf16.msra.mxu0 0
  %5303 = vmatprep.subr.bf16.mxu0 0
  %5304 = vmatpush1.bf16.msra.mxu0 0
  %5305 = vmatprep.subr.bf16.mxu0 0
  %5306 = vmatpush1.bf16.msra.mxu0 0
  %5307 = vmatprep.subr.bf16.mxu0 0
  %5308 = vmatpush1.bf16.msra.mxu0 0
  %5309 = vmatprep.mubr.bf16.mxu0 0
  %5310 = vmatmul.mubr.bf16.gmra.mrb[0].mxu0 %v5275
  %v5311 = vpop.f32.mrb[0].mxu0
  %v5312 = vadd.f32 0.0, %v5311
  %v5313 = vpop.f32.mrb[0].mxu0
  %v5314 = vpop.f32.mrb[0].mxu0
  %v5315 = vpop.f32.mrb[0].mxu0
  %5316 = vdwg.mxu0
  %v5317 = vadd.f32 %v5240, %v5312
  %v5318 = vld [vmem:[%s12 + $0x80] sm:$0xf]
  %v5319 = vld [vmem:[%s12 + $0x84] sm:$0xf]
  %v5320 = vld [vmem:[%s12 + $0x88] sm:$0xf]
  %v5321 = vld [vmem:[%s12 + $0x8c] sm:$0xf]
  %v5322 = vld [vmem:[%s12 + $0x90] sm:$0xf]
  %v5323 = vld [vmem:[%s12 + $0x94] sm:$0xf]
  %v5324 = vld [vmem:[%s12 + $0x98] sm:$0xf]
  %v5325 = vld [vmem:[%s12 + $0x9c] sm:$0xf]
  %v5326 = vrot.slane %v5010, 2
  %v5335 = vunpack.c.l.b16 %v5318
  %v5336 = vunpack.c.l.b16 %v5319
  %v5337 = vunpack.c.l.b16 %v5320
  %v5338 = vunpack.c.l.b16 %v5321
  %v5339 = vunpack.c.l.b16 %v5322
  %v5340 = vunpack.c.l.b16 %v5323
  %v5341 = vunpack.c.l.b16 %v5324
  %v5342 = vunpack.c.l.b16 %v5325
  %v5343 = vpack.c.b16 %v5336, %v5335
  %v5344 = vpack.c.b16 %v5338, %v5337
  %v5345 = vpack.c.b16 %v5340, %v5339
  %v5346 = vpack.c.b16 %v5342, %v5341
  %v5352 = vsel %vm274, %v5326, 0
  %5354 = vmatprep.subr.bf16.mxu0 0
  %5355 = vmatpush1.bf16.msra.mxu0 %v5343
  %5356 = vmatprep.subr.bf16.mxu0 0
  %5357 = vmatpush1.bf16.msra.mxu0 %v5344
  %5358 = vmatprep.subr.bf16.mxu0 0
  %5359 = vmatpush1.bf16.msra.mxu0 %v5345
  %5360 = vmatprep.subr.bf16.mxu0 0
  %5361 = vmatpush1.bf16.msra.mxu0 %v5346
  %5362 = vmatprep.subr.bf16.mxu0 0
  %5363 = vmatpush1.bf16.msra.mxu0 0
  %5364 = vmatprep.subr.bf16.mxu0 0
  %5365 = vmatpush1.bf16.msra.mxu0 0
  %5366 = vmatprep.subr.bf16.mxu0 0
  %5367 = vmatpush1.bf16.msra.mxu0 0
  %5368 = vmatprep.subr.bf16.mxu0 0
  %5369 = vmatpush1.bf16.msra.mxu0 0
  %5370 = vmatprep.subr.bf16.mxu0 0
  %5371 = vmatpush1.bf16.msra.mxu0 0
  %5372 = vmatprep.subr.bf16.mxu0 0
  %5373 = vmatpush1.bf16.msra.mxu0 0
  %5374 = vmatprep.subr.bf16.mxu0 0
  %5375 = vmatpush1.bf16.msra.mxu0 0
  %5376 = vmatprep.subr.bf16.mxu0 0
  %5377 = vmatpush1.bf16.msra.mxu0 0
  %5378 = vmatprep.subr.bf16.mxu0 0
  %5379 = vmatpush1.bf16.msra.mxu0 0
  %5380 = vmatprep.subr.bf16.mxu0 0
  %5381 = vmatpush1.bf16.msra.mxu0 0
  %5382 = vmatprep.subr.bf16.mxu0 0
  %5383 = vmatpush1.bf16.msra.mxu0 0
  %5384 = vmatprep.subr.bf16.mxu0 0
  %5385 = vmatpush1.bf16.msra.mxu0 0
  %5386 = vmatprep.mubr.bf16.mxu0 0
  %5387 = vmatmul.mubr.bf16.gmra.mrb[0].mxu0 %v5352
  %v5388 = vpop.f32.mrb[0].mxu0
  %v5389 = vadd.f32 0.0, %v5388
  %v5390 = vpop.f32.mrb[0].mxu0
  %v5391 = vpop.f32.mrb[0].mxu0
  %v5392 = vpop.f32.mrb[0].mxu0
  %5393 = vdwg.mxu0
  %v5394 = vadd.f32 %v5317, %v5389
  %v5395 = vld [vmem:[%s12 + $0xa0] sm:$0xf]
  %v5396 = vld [vmem:[%s12 + $0xa4] sm:$0xf]
  %v5397 = vld [vmem:[%s12 + $0xa8] sm:$0xf]
  %v5398 = vld [vmem:[%s12 + $0xac] sm:$0xf]
  %v5399 = vld [vmem:[%s12 + $0xb0] sm:$0xf]
  %v5400 = vld [vmem:[%s12 + $0xb4] sm:$0xf]
  %v5401 = vld [vmem:[%s12 + $0xb8] sm:$0xf]
  %v5402 = vld [vmem:[%s12 + $0xbc] sm:$0xf]
  %v5403 = vrot.slane %v5028, 2
  %v5412 = vunpack.c.l.b16 %v5395
  %v5413 = vunpack.c.l.b16 %v5396
  %v5414 = vunpack.c.l.b16 %v5397
  %v5415 = vunpack.c.l.b16 %v5398
  %v5416 = vunpack.c.l.b16 %v5399
  %v5417 = vunpack.c.l.b16 %v5400
  %v5418 = vunpack.c.l.b16 %v5401
  %v5419 = vunpack.c.l.b16 %v5402
  %v5420 = vpack.c.b16 %v5413, %v5412
  %v5421 = vpack.c.b16 %v5415, %v5414
  %v5422 = vpack.c.b16 %v5417, %v5416
  %v5423 = vpack.c.b16 %v5419, %v5418
  %v5429 = vsel %vm274, %v5403, 0
  %5431 = vmatprep.subr.bf16.mxu0 0
  %5432 = vmatpush1.bf16.msra.mxu0 %v5420
  %5433 = vmatprep.subr.bf16.mxu0 0
  %5434 = vmatpush1.bf16.msra.mxu0 %v5421
  %5435 = vmatprep.subr.bf16.mxu0 0
  %5436 = vmatpush1.bf16.msra.mxu0 %v5422
  %5437 = vmatprep.subr.bf16.mxu0 0
  %5438 = vmatpush1.bf16.msra.mxu0 %v5423
  %5439 = vmatprep.subr.bf16.mxu0 0
  %5440 = vmatpush1.bf16.msra.mxu0 0
  %5441 = vmatprep.subr.bf16.mxu0 0
  %5442 = vmatpush1.bf16.msra.mxu0 0
  %5443 = vmatprep.subr.bf16.mxu0 0
  %5444 = vmatpush1.bf16.msra.mxu0 0
  %5445 = vmatprep.subr.bf16.mxu0 0
  %5446 = vmatpush1.bf16.msra.mxu0 0
  %5447 = vmatprep.subr.bf16.mxu0 0
  %5448 = vmatpush1.bf16.msra.mxu0 0
  %5449 = vmatprep.subr.bf16.mxu0 0
  %5450 = vmatpush1.bf16.msra.mxu0 0
  %5451 = vmatprep.subr.bf16.mxu0 0
  %5452 = vmatpush1.bf16.msra.mxu0 0
  %5453 = vmatprep.subr.bf16.mxu0 0
  %5454 = vmatpush1.bf16.msra.mxu0 0
  %5455 = vmatprep.subr.bf16.mxu0 0
  %5456 = vmatpush1.bf16.msra.mxu0 0
  %5457 = vmatprep.subr.bf16.mxu0 0
  %5458 = vmatpush1.bf16.msra.mxu0 0
  %5459 = vmatprep.subr.bf16.mxu0 0
  %5460 = vmatpush1.bf16.msra.mxu0 0
  %5461 = vmatprep.subr.bf16.mxu0 0
  %5462 = vmatpush1.bf16.msra.mxu0 0
  %5463 = vmatprep.mubr.bf16.mxu0 0
  %5464 = vmatmul.mubr.bf16.gmra.mrb[0].mxu0 %v5429
  %v5465 = vpop.f32.mrb[0].mxu0
  %v5466 = vadd.f32 0.0, %v5465
  %v5467 = vpop.f32.mrb[0].mxu0
  %v5468 = vpop.f32.mrb[0].mxu0
  %v5469 = vpop.f32.mrb[0].mxu0
  %5470 = vdwg.mxu0
  %v5471 = vadd.f32 %v5394, %v5466
  %v5472 = vld [vmem:[%s12 + $0xc0] sm:$0xf]
  %v5473 = vld [vmem:[%s12 + $0xc4] sm:$0xf]
  %v5474 = vld [vmem:[%s12 + $0xc8] sm:$0xf]
  %v5475 = vld [vmem:[%s12 + $0xcc] sm:$0xf]
  %v5476 = vld [vmem:[%s12 + $0xd0] sm:$0xf]
  %v5477 = vld [vmem:[%s12 + $0xd4] sm:$0xf]
  %v5478 = vld [vmem:[%s12 + $0xd8] sm:$0xf]
  %v5479 = vld [vmem:[%s12 + $0xdc] sm:$0xf]
  %v5480 = vrot.slane %v5010, 3
  %v5489 = vunpack.c.l.b16 %v5472
  %v5490 = vunpack.c.l.b16 %v5473
  %v5491 = vunpack.c.l.b16 %v5474
  %v5492 = vunpack.c.l.b16 %v5475
  %v5493 = vunpack.c.l.b16 %v5476
  %v5494 = vunpack.c.l.b16 %v5477
  %v5495 = vunpack.c.l.b16 %v5478
  %v5496 = vunpack.c.l.b16 %v5479
  %v5497 = vpack.c.b16 %v5490, %v5489
  %v5498 = vpack.c.b16 %v5492, %v5491
  %v5499 = vpack.c.b16 %v5494, %v5493
  %v5500 = vpack.c.b16 %v5496, %v5495
  %v5506 = vsel %vm274, %v5480, 0
  %5508 = vmatprep.subr.bf16.mxu0 0
  %5509 = vmatpush1.bf16.msra.mxu0 %v5497
  %5510 = vmatprep.subr.bf16.mxu0 0
  %5511 = vmatpush1.bf16.msra.mxu0 %v5498
  %5512 = vmatprep.subr.bf16.mxu0 0
  %5513 = vmatpush1.bf16.msra.mxu0 %v5499
  %5514 = vmatprep.subr.bf16.mxu0 0
  %5515 = vmatpush1.bf16.msra.mxu0 %v5500
  %5516 = vmatprep.subr.bf16.mxu0 0
  %5517 = vmatpush1.bf16.msra.mxu0 0
  %5518 = vmatprep.subr.bf16.mxu0 0
  %5519 = vmatpush1.bf16.msra.mxu0 0
  %5520 = vmatprep.subr.bf16.mxu0 0
  %5521 = vmatpush1.bf16.msra.mxu0 0
  %5522 = vmatprep.subr.bf16.mxu0 0
  %5523 = vmatpush1.bf16.msra.mxu0 0
  %5524 = vmatprep.subr.bf16.mxu0 0
  %5525 = vmatpush1.bf16.msra.mxu0 0
  %5526 = vmatprep.subr.bf16.mxu0 0
  %5527 = vmatpush1.bf16.msra.mxu0 0
  %5528 = vmatprep.subr.bf16.mxu0 0
  %5529 = vmatpush1.bf16.msra.mxu0 0
  %5530 = vmatprep.subr.bf16.mxu0 0
  %5531 = vmatpush1.bf16.msra.mxu0 0
  %5532 = vmatprep.subr.bf16.mxu0 0
  %5533 = vmatpush1.bf16.msra.mxu0 0
  %5534 = vmatprep.subr.bf16.mxu0 0
  %5535 = vmatpush1.bf16.msra.mxu0 0
  %5536 = vmatprep.subr.bf16.mxu0 0
  %5537 = vmatpush1.bf16.msra.mxu0 0
  %5538 = vmatprep.subr.bf16.mxu0 0
  %5539 = vmatpush1.bf16.msra.mxu0 0
  %5540 = vmatprep.mubr.bf16.mxu0 0
  %5541 = vmatmul.mubr.bf16.gmra.mrb[0].mxu0 %v5506
  %v5542 = vpop.f32.mrb[0].mxu0
  %v5543 = vadd.f32 0.0, %v5542
  %v5544 = vpop.f32.mrb[0].mxu0
  %v5545 = vpop.f32.mrb[0].mxu0
  %v5546 = vpop.f32.mrb[0].mxu0
  %5547 = vdwg.mxu0
  %v5548 = vadd.f32 %v5471, %v5543
  %v5549 = vld [vmem:[%s12 + $0xe0] sm:$0xf]
  %v5550 = vld [vmem:[%s12 + $0xe4] sm:$0xf]
  %v5551 = vld [vmem:[%s12 + $0xe8] sm:$0xf]
  %v5552 = vld [vmem:[%s12 + $0xec] sm:$0xf]
  %v5553 = vld [vmem:[%s12 + $0xf0] sm:$0xf]
  %v5554 = vld [vmem:[%s12 + $0xf4] sm:$0xf]
  %v5555 = vld [vmem:[%s12 + $0xf8] sm:$0xf]
  %v5556 = vld [vmem:[%s12 + $0xfc] sm:$0xf]
  %v5557 = vrot.slane %v5028, 3
  %v5566 = vunpack.c.l.b16 %v5549
  %v5567 = vunpack.c.l.b16 %v5550
  %v5568 = vunpack.c.l.b16 %v5551
  %v5569 = vunpack.c.l.b16 %v5552
  %v5570 = vunpack.c.l.b16 %v5553
  %v5571 = vunpack.c.l.b16 %v5554
  %v5572 = vunpack.c.l.b16 %v5555
  %v5573 = vunpack.c.l.b16 %v5556
  %v5574 = vpack.c.b16 %v5567, %v5566
  %v5575 = vpack.c.b16 %v5569, %v5568
  %v5576 = vpack.c.b16 %v5571, %v5570
  %v5577 = vpack.c.b16 %v5573, %v5572
  %v5583 = vsel %vm274, %v5557, 0
  %5585 = vmatprep.subr.bf16.mxu0 0
  %5586 = vmatpush1.bf16.msra.mxu0 %v5574
  %5587 = vmatprep.subr.bf16.mxu0 0
  %5588 = vmatpush1.bf16.msra.mxu0 %v5575
  %5589 = vmatprep.subr.bf16.mxu0 0
  %5590 = vmatpush1.bf16.msra.mxu0 %v5576
  %5591 = vmatprep.subr.bf16.mxu0 0
  %5592 = vmatpush1.bf16.msra.mxu0 %v5577
  %5593 = vmatprep.subr.bf16.mxu0 0
  %5594 = vmatpush1.bf16.msra.mxu0 0
  %5595 = vmatprep.subr.bf16.mxu0 0
  %5596 = vmatpush1.bf16.msra.mxu0 0
  %5597 = vmatprep.subr.bf16.mxu0 0
  %5598 = vmatpush1.bf16.msra.mxu0 0
  %5599 = vmatprep.subr.bf16.mxu0 0
  %5600 = vmatpush1.bf16.msra.mxu0 0
  %5601 = vmatprep.subr.bf16.mxu0 0
  %5602 = vmatpush1.bf16.msra.mxu0 0
  %5603 = vmatprep.subr.bf16.mxu0 0
  %5604 = vmatpush1.bf16.msra.mxu0 0
  %5605 = vmatprep.subr.bf16.mxu0 0
  %5606 = vmatpush1.bf16.msra.mxu0 0
  %5607 = vmatprep.subr.bf16.mxu0 0
  %5608 = vmatpush1.bf16.msra.mxu0 0
  %5609 = vmatprep.subr.bf16.mxu0 0
  %5610 = vmatpush1.bf16.msra.mxu0 0
  %5611 = vmatprep.subr.bf16.mxu0 0
  %5612 = vmatpush1.bf16.msra.mxu0 0
  %5613 = vmatprep.subr.bf16.mxu0 0
  %5614 = vmatpush1.bf16.msra.mxu0 0
  %5615 = vmatprep.subr.bf16.mxu0 0
  %5616 = vmatpush1.bf16.msra.mxu0 0
  %5617 = vmatprep.mubr.bf16.mxu0 0
  %5618 = vmatmul.mubr.bf16.gmra.mrb[0].mxu0 %v5583
  %v5619 = vpop.f32.mrb[0].mxu0
  %v5620 = vadd.f32 0.0, %v5619
  %v5621 = vpop.f32.mrb[0].mxu0
  %v5622 = vpop.f32.mrb[0].mxu0
  %v5623 = vpop.f32.mrb[0].mxu0
  %5624 = vdwg.mxu0
  %v5625 = vadd.f32 %v5548, %v5620
  %v5626 = vld [vmem:[%s12 + $0x100] sm:$0xf]
  %v5627 = vld [vmem:[%s12 + $0x104] sm:$0xf]
  %v5628 = vld [vmem:[%s12 + $0x108] sm:$0xf]
  %v5629 = vld [vmem:[%s12 + $0x10c] sm:$0xf]
  %v5630 = vld [vmem:[%s12 + $0x110] sm:$0xf]
  %v5631 = vld [vmem:[%s12 + $0x114] sm:$0xf]
  %v5632 = vld [vmem:[%s12 + $0x118] sm:$0xf]
  %v5633 = vld [vmem:[%s12 + $0x11c] sm:$0xf]
  %v5634 = vrot.slane %v5010, 4
  %v5643 = vunpack.c.l.b16 %v5626
  %v5644 = vunpack.c.l.b16 %v5627
  %v5645 = vunpack.c.l.b16 %v5628
  %v5646 = vunpack.c.l.b16 %v5629
  %v5647 = vunpack.c.l.b16 %v5630
  %v5648 = vunpack.c.l.b16 %v5631
  %v5649 = vunpack.c.l.b16 %v5632
  %v5650 = vunpack.c.l.b16 %v5633
  %v5651 = vpack.c.b16 %v5644, %v5643
  %v5652 = vpack.c.b16 %v5646, %v5645
  %v5653 = vpack.c.b16 %v5648, %v5647
  %v5654 = vpack.c.b16 %v5650, %v5649
  %v5660 = vsel %vm274, %v5634, 0
  %5662 = vmatprep.subr.bf16.mxu0 0
  %5663 = vmatpush1.bf16.msra.mxu0 %v5651
  %5664 = vmatprep.subr.bf16.mxu0 0
  %5665 = vmatpush1.bf16.msra.mxu0 %v5652
  %5666 = vmatprep.subr.bf16.mxu0 0
  %5667 = vmatpush1.bf16.msra.mxu0 %v5653
  %5668 = vmatprep.subr.bf16.mxu0 0
  %5669 = vmatpush1.bf16.msra.mxu0 %v5654
  %5670 = vmatprep.subr.bf16.mxu0 0
  %5671 = vmatpush1.bf16.msra.mxu0 0
  %5672 = vmatprep.subr.bf16.mxu0 0
  %5673 = vmatpush1.bf16.msra.mxu0 0
  %5674 = vmatprep.subr.bf16.mxu0 0
  %5675 = vmatpush1.bf16.msra.mxu0 0
  %5676 = vmatprep.subr.bf16.mxu0 0
  %5677 = vmatpush1.bf16.msra.mxu0 0
  %5678 = vmatprep.subr.bf16.mxu0 0
  %5679 = vmatpush1.bf16.msra.mxu0 0
  %5680 = vmatprep.subr.bf16.mxu0 0
  %5681 = vmatpush1.bf16.msra.mxu0 0
  %5682 = vmatprep.subr.bf16.mxu0 0
  %5683 = vmatpush1.bf16.msra.mxu0 0
  %5684 = vmatprep.subr.bf16.mxu0 0
  %5685 = vmatpush1.bf16.msra.mxu0 0
  %5686 = vmatprep.subr.bf16.mxu0 0
  %5687 = vmatpush1.bf16.msra.mxu0 0
  %5688 = vmatprep.subr.bf16.mxu0 0
  %5689 = vmatpush1.bf16.msra.mxu0 0
  %5690 = vmatprep.subr.bf16.mxu0 0
  %5691 = vmatpush1.bf16.msra.mxu0 0
  %5692 = vmatprep.subr.bf16.mxu0 0
  %5693 = vmatpush1.bf16.msra.mxu0 0
  %5694 = vmatprep.mubr.bf16.mxu0 0
  %5695 = vmatmul.mubr.bf16.gmra.mrb[0].mxu0 %v5660
  %v5696 = vpop.f32.mrb[0].mxu0
  %v5697 = vadd.f32 0.0, %v5696
  %v5698 = vpop.f32.mrb[0].mxu0
  %v5699 = vpop.f32.mrb[0].mxu0
  %v5700 = vpop.f32.mrb[0].mxu0
  %5701 = vdwg.mxu0
  %v5702 = vadd.f32 %v5625, %v5697
  %v5703 = vld [vmem:[%s12 + $0x120] sm:$0xf]
  %v5704 = vld [vmem:[%s12 + $0x124] sm:$0xf]
  %v5705 = vld [vmem:[%s12 + $0x128] sm:$0xf]
  %v5706 = vld [vmem:[%s12 + $0x12c] sm:$0xf]
  %v5707 = vld [vmem:[%s12 + $0x130] sm:$0xf]
  %v5708 = vld [vmem:[%s12 + $0x134] sm:$0xf]
  %v5709 = vld [vmem:[%s12 + $0x138] sm:$0xf]
  %v5710 = vld [vmem:[%s12 + $0x13c] sm:$0xf]
  %v5711 = vrot.slane %v5028, 4
  %v5720 = vunpack.c.l.b16 %v5703
  %v5721 = vunpack.c.l.b16 %v5704
  %v5722 = vunpack.c.l.b16 %v5705
  %v5723 = vunpack.c.l.b16 %v5706
  %v5724 = vunpack.c.l.b16 %v5707
  %v5725 = vunpack.c.l.b16 %v5708
  %v5726 = vunpack.c.l.b16 %v5709
  %v5727 = vunpack.c.l.b16 %v5710
  %v5728 = vpack.c.b16 %v5721, %v5720
  %v5729 = vpack.c.b16 %v5723, %v5722
  %v5730 = vpack.c.b16 %v5725, %v5724
  %v5731 = vpack.c.b16 %v5727, %v5726
  %v5737 = vsel %vm274, %v5711, 0
  %5739 = vmatprep.subr.bf16.mxu0 0
  %5740 = vmatpush1.bf16.msra.mxu0 %v5728
  %5741 = vmatprep.subr.bf16.mxu0 0
  %5742 = vmatpush1.bf16.msra.mxu0 %v5729
  %5743 = vmatprep.subr.bf16.mxu0 0
  %5744 = vmatpush1.bf16.msra.mxu0 %v5730
  %5745 = vmatprep.subr.bf16.mxu0 0
  %5746 = vmatpush1.bf16.msra.mxu0 %v5731
  %5747 = vmatprep.subr.bf16.mxu0 0
  %5748 = vmatpush1.bf16.msra.mxu0 0
  %5749 = vmatprep.subr.bf16.mxu0 0
  %5750 = vmatpush1.bf16.msra.mxu0 0
  %5751 = vmatprep.subr.bf16.mxu0 0
  %5752 = vmatpush1.bf16.msra.mxu0 0
  %5753 = vmatprep.subr.bf16.mxu0 0
  %5754 = vmatpush1.bf16.msra.mxu0 0
  %5755 = vmatprep.subr.bf16.mxu0 0
  %5756 = vmatpush1.bf16.msra.mxu0 0
  %5757 = vmatprep.subr.bf16.mxu0 0
  %5758 = vmatpush1.bf16.msra.mxu0 0
  %5759 = vmatprep.subr.bf16.mxu0 0
  %5760 = vmatpush1.bf16.msra.mxu0 0
  %5761 = vmatprep.subr.bf16.mxu0 0
  %5762 = vmatpush1.bf16.msra.mxu0 0
  %5763 = vmatprep.subr.bf16.mxu0 0
  %5764 = vmatpush1.bf16.msra.mxu0 0
  %5765 = vmatprep.subr.bf16.mxu0 0
  %5766 = vmatpush1.bf16.msra.mxu0 0
  %5767 = vmatprep.subr.bf16.mxu0 0
  %5768 = vmatpush1.bf16.msra.mxu0 0
  %5769 = vmatprep.subr.bf16.mxu0 0
  %5770 = vmatpush1.bf16.msra.mxu0 0
  %5771 = vmatprep.mubr.bf16.mxu0 0
  %5772 = vmatmul.mubr.bf16.gmra.mrb[0].mxu0 %v5737
  %v5773 = vpop.f32.mrb[0].mxu0
  %v5774 = vadd.f32 0.0, %v5773
  %v5775 = vpop.f32.mrb[0].mxu0
  %v5776 = vpop.f32.mrb[0].mxu0
  %v5777 = vpop.f32.mrb[0].mxu0
  %5778 = vdwg.mxu0
  %v5779 = vadd.f32 %v5702, %v5774
  %v5780 = vld [vmem:[%s12 + $0x140] sm:$0xf]
  %v5781 = vld [vmem:[%s12 + $0x144] sm:$0xf]
  %v5782 = vld [vmem:[%s12 + $0x148] sm:$0xf]
  %v5783 = vld [vmem:[%s12 + $0x14c] sm:$0xf]
  %v5784 = vld [vmem:[%s12 + $0x150] sm:$0xf]
  %v5785 = vld [vmem:[%s12 + $0x154] sm:$0xf]
  %v5786 = vld [vmem:[%s12 + $0x158] sm:$0xf]
  %v5787 = vld [vmem:[%s12 + $0x15c] sm:$0xf]
  %v5788 = vrot.slane %v5010, 5
  %v5797 = vunpack.c.l.b16 %v5780
  %v5798 = vunpack.c.l.b16 %v5781
  %v5799 = vunpack.c.l.b16 %v5782
  %v5800 = vunpack.c.l.b16 %v5783
  %v5801 = vunpack.c.l.b16 %v5784
  %v5802 = vunpack.c.l.b16 %v5785
  %v5803 = vunpack.c.l.b16 %v5786
  %v5804 = vunpack.c.l.b16 %v5787
  %v5805 = vpack.c.b16 %v5798, %v5797
  %v5806 = vpack.c.b16 %v5800, %v5799
  %v5807 = vpack.c.b16 %v5802, %v5801
  %v5808 = vpack.c.b16 %v5804, %v5803
  %v5814 = vsel %vm274, %v5788, 0
  %5816 = vmatprep.subr.bf16.mxu0 0
  %5817 = vmatpush1.bf16.msra.mxu0 %v5805
  %5818 = vmatprep.subr.bf16.mxu0 0
  %5819 = vmatpush1.bf16.msra.mxu0 %v5806
  %5820 = vmatprep.subr.bf16.mxu0 0
  %5821 = vmatpush1.bf16.msra.mxu0 %v5807
  %5822 = vmatprep.subr.bf16.mxu0 0
  %5823 = vmatpush1.bf16.msra.mxu0 %v5808
  %5824 = vmatprep.subr.bf16.mxu0 0
  %5825 = vmatpush1.bf16.msra.mxu0 0
  %5826 = vmatprep.subr.bf16.mxu0 0
  %5827 = vmatpush1.bf16.msra.mxu0 0
  %5828 = vmatprep.subr.bf16.mxu0 0
  %5829 = vmatpush1.bf16.msra.mxu0 0
  %5830 = vmatprep.subr.bf16.mxu0 0
  %5831 = vmatpush1.bf16.msra.mxu0 0
  %5832 = vmatprep.subr.bf16.mxu0 0
  %5833 = vmatpush1.bf16.msra.mxu0 0
  %5834 = vmatprep.subr.bf16.mxu0 0
  %5835 = vmatpush1.bf16.msra.mxu0 0
  %5836 = vmatprep.subr.bf16.mxu0 0
  %5837 = vmatpush1.bf16.msra.mxu0 0
  %5838 = vmatprep.subr.bf16.mxu0 0
  %5839 = vmatpush1.bf16.msra.mxu0 0
  %5840 = vmatprep.subr.bf16.mxu0 0
  %5841 = vmatpush1.bf16.msra.mxu0 0
  %5842 = vmatprep.subr.bf16.mxu0 0
  %5843 = vmatpush1.bf16.msra.mxu0 0
  %5844 = vmatprep.subr.bf16.mxu0 0
  %5845 = vmatpush1.bf16.msra.mxu0 0
  %5846 = vmatprep.subr.bf16.mxu0 0
  %5847 = vmatpush1.bf16.msra.mxu0 0
  %5848 = vmatprep.mubr.bf16.mxu0 0
  %5849 = vmatmul.mubr.bf16.gmra.mrb[0].mxu0 %v5814
  %v5850 = vpop.f32.mrb[0].mxu0
  %v5851 = vadd.f32 0.0, %v5850
  %v5852 = vpop.f32.mrb[0].mxu0
  %v5853 = vpop.f32.mrb[0].mxu0
  %v5854 = vpop.f32.mrb[0].mxu0
  %5855 = vdwg.mxu0
  %v5856 = vadd.f32 %v5779, %v5851
  %v5857 = vld [vmem:[%s12 + $0x160] sm:$0xf]
  %v5858 = vld [vmem:[%s12 + $0x164] sm:$0xf]
  %v5859 = vld [vmem:[%s12 + $0x168] sm:$0xf]
  %v5860 = vld [vmem:[%s12 + $0x16c] sm:$0xf]
  %v5861 = vld [vmem:[%s12 + $0x170] sm:$0xf]
  %v5862 = vld [vmem:[%s12 + $0x174] sm:$0xf]
  %v5863 = vld [vmem:[%s12 + $0x178] sm:$0xf]
  %v5864 = vld [vmem:[%s12 + $0x17c] sm:$0xf]
  %v5865 = vrot.slane %v5028, 5
  %v5874 = vunpack.c.l.b16 %v5857
  %v5875 = vunpack.c.l.b16 %v5858
  %v5876 = vunpack.c.l.b16 %v5859
  %v5877 = vunpack.c.l.b16 %v5860
  %v5878 = vunpack.c.l.b16 %v5861
  %v5879 = vunpack.c.l.b16 %v5862
  %v5880 = vunpack.c.l.b16 %v5863
  %v5881 = vunpack.c.l.b16 %v5864
  %v5882 = vpack.c.b16 %v5875, %v5874
  %v5883 = vpack.c.b16 %v5877, %v5876
  %v5884 = vpack.c.b16 %v5879, %v5878
  %v5885 = vpack.c.b16 %v5881, %v5880
  %v5891 = vsel %vm274, %v5865, 0
  %5893 = vmatprep.subr.bf16.mxu0 0
  %5894 = vmatpush1.bf16.msra.mxu0 %v5882
  %5895 = vmatprep.subr.bf16.mxu0 0
  %5896 = vmatpush1.bf16.msra.mxu0 %v5883
  %5897 = vmatprep.subr.bf16.mxu0 0
  %5898 = vmatpush1.bf16.msra.mxu0 %v5884
  %5899 = vmatprep.subr.bf16.mxu0 0
  %5900 = vmatpush1.bf16.msra.mxu0 %v5885
  %5901 = vmatprep.subr.bf16.mxu0 0
  %5902 = vmatpush1.bf16.msra.mxu0 0
  %5903 = vmatprep.subr.bf16.mxu0 0
  %5904 = vmatpush1.bf16.msra.mxu0 0
  %5905 = vmatprep.subr.bf16.mxu0 0
  %5906 = vmatpush1.bf16.msra.mxu0 0
  %5907 = vmatprep.subr.bf16.mxu0 0
  %5908 = vmatpush1.bf16.msra.mxu0 0
  %5909 = vmatprep.subr.bf16.mxu0 0
  %5910 = vmatpush1.bf16.msra.mxu0 0
  %5911 = vmatprep.subr.bf16.mxu0 0
  %5912 = vmatpush1.bf16.msra.mxu0 0
  %5913 = vmatprep.subr.bf16.mxu0 0
  %5914 = vmatpush1.bf16.msra.mxu0 0
  %5915 = vmatprep.subr.bf16.mxu0 0
  %5916 = vmatpush1.bf16.msra.mxu0 0
  %5917 = vmatprep.subr.bf16.mxu0 0
  %5918 = vmatpush1.bf16.msra.mxu0 0
  %5919 = vmatprep.subr.bf16.mxu0 0
  %5920 = vmatpush1.bf16.msra.mxu0 0
  %5921 = vmatprep.subr.bf16.mxu0 0
  %5922 = vmatpush1.bf16.msra.mxu0 0
  %5923 = vmatprep.subr.bf16.mxu0 0
  %5924 = vmatpush1.bf16.msra.mxu0 0
  %5925 = vmatprep.mubr.bf16.mxu0 0
  %5926 = vmatmul.mubr.bf16.gmra.mrb[0].mxu0 %v5891
  %v5927 = vpop.f32.mrb[0].mxu0
  %v5928 = vadd.f32 0.0, %v5927
  %v5929 = vpop.f32.mrb[0].mxu0
  %v5930 = vpop.f32.mrb[0].mxu0
  %v5931 = vpop.f32.mrb[0].mxu0
  %5932 = vdwg.mxu0
  %v5933 = vadd.f32 %v5856, %v5928
  %v5934 = vld [vmem:[%s12 + $0x180] sm:$0xf]
  %v5935 = vld [vmem:[%s12 + $0x184] sm:$0xf]
  %v5936 = vld [vmem:[%s12 + $0x188] sm:$0xf]
  %v5937 = vld [vmem:[%s12 + $0x18c] sm:$0xf]
  %v5938 = vld [vmem:[%s12 + $0x190] sm:$0xf]
  %v5939 = vld [vmem:[%s12 + $0x194] sm:$0xf]
  %v5940 = vld [vmem:[%s12 + $0x198] sm:$0xf]
  %v5941 = vld [vmem:[%s12 + $0x19c] sm:$0xf]
  %v5942 = vrot.slane %v5010, 6
  %v5951 = vunpack.c.l.b16 %v5934
  %v5952 = vunpack.c.l.b16 %v5935
  %v5953 = vunpack.c.l.b16 %v5936
  %v5954 = vunpack.c.l.b16 %v5937
  %v5955 = vunpack.c.l.b16 %v5938
  %v5956 = vunpack.c.l.b16 %v5939
  %v5957 = vunpack.c.l.b16 %v5940
  %v5958 = vunpack.c.l.b16 %v5941
  %v5959 = vpack.c.b16 %v5952, %v5951
  %v5960 = vpack.c.b16 %v5954, %v5953
  %v5961 = vpack.c.b16 %v5956, %v5955
  %v5962 = vpack.c.b16 %v5958, %v5957
  %v5968 = vsel %vm274, %v5942, 0
  %5970 = vmatprep.subr.bf16.mxu0 0
  %5971 = vmatpush1.bf16.msra.mxu0 %v5959
  %5972 = vmatprep.subr.bf16.mxu0 0
  %5973 = vmatpush1.bf16.msra.mxu0 %v5960
  %5974 = vmatprep.subr.bf16.mxu0 0
  %5975 = vmatpush1.bf16.msra.mxu0 %v5961
  %5976 = vmatprep.subr.bf16.mxu0 0
  %5977 = vmatpush1.bf16.msra.mxu0 %v5962
  %5978 = vmatprep.subr.bf16.mxu0 0
  %5979 = vmatpush1.bf16.msra.mxu0 0
  %5980 = vmatprep.subr.bf16.mxu0 0
  %5981 = vmatpush1.bf16.msra.mxu0 0
  %5982 = vmatprep.subr.bf16.mxu0 0
  %5983 = vmatpush1.bf16.msra.mxu0 0
  %5984 = vmatprep.subr.bf16.mxu0 0
  %5985 = vmatpush1.bf16.msra.mxu0 0
  %5986 = vmatprep.subr.bf16.mxu0 0
  %5987 = vmatpush1.bf16.msra.mxu0 0
  %5988 = vmatprep.subr.bf16.mxu0 0
  %5989 = vmatpush1.bf16.msra.mxu0 0
  %5990 = vmatprep.subr.bf16.mxu0 0
  %5991 = vmatpush1.bf16.msra.mxu0 0
  %5992 = vmatprep.subr.bf16.mxu0 0
  %5993 = vmatpush1.bf16.msra.mxu0 0
  %5994 = vmatprep.subr.bf16.mxu0 0
  %5995 = vmatpush1.bf16.msra.mxu0 0
  %5996 = vmatprep.subr.bf16.mxu0 0
  %5997 = vmatpush1.bf16.msra.mxu0 0
  %5998 = vmatprep.subr.bf16.mxu0 0
  %5999 = vmatpush1.bf16.msra.mxu0 0
  %6000 = vmatprep.subr.bf16.mxu0 0
  %6001 = vmatpush1.bf16.msra.mxu0 0
  %6002 = vmatprep.mubr.bf16.mxu0 0
  %6003 = vmatmul.mubr.bf16.gmra.mrb[0].mxu0 %v5968
  %v6004 = vpop.f32.mrb[0].mxu0
  %v6005 = vadd.f32 0.0, %v6004
  %v6006 = vpop.f32.mrb[0].mxu0
  %v6007 = vpop.f32.mrb[0].mxu0
  %v6008 = vpop.f32.mrb[0].mxu0
  %6009 = vdwg.mxu0
  %v6010 = vadd.f32 %v5933, %v6005
  %v6011 = vld [vmem:[%s12 + $0x1a0] sm:$0xf]
  %v6012 = vld [vmem:[%s12 + $0x1a4] sm:$0xf]
  %v6013 = vld [vmem:[%s12 + $0x1a8] sm:$0xf]
  %v6014 = vld [vmem:[%s12 + $0x1ac] sm:$0xf]
  %v6015 = vld [vmem:[%s12 + $0x1b0] sm:$0xf]
  %v6016 = vld [vmem:[%s12 + $0x1b4] sm:$0xf]
  %v6017 = vld [vmem:[%s12 + $0x1b8] sm:$0xf]
  %v6018 = vld [vmem:[%s12 + $0x1bc] sm:$0xf]
  %v6019 = vrot.slane %v5028, 6
  %v6028 = vunpack.c.l.b16 %v6011
  %v6029 = vunpack.c.l.b16 %v6012
  %v6030 = vunpack.c.l.b16 %v6013
  %v6031 = vunpack.c.l.b16 %v6014
  %v6032 = vunpack.c.l.b16 %v6015
  %v6033 = vunpack.c.l.b16 %v6016
  %v6034 = vunpack.c.l.b16 %v6017
  %v6035 = vunpack.c.l.b16 %v6018
  %v6036 = vpack.c.b16 %v6029, %v6028
  %v6037 = vpack.c.b16 %v6031, %v6030
  %v6038 = vpack.c.b16 %v6033, %v6032
  %v6039 = vpack.c.b16 %v6035, %v6034
  %v6045 = vsel %vm274, %v6019, 0
  %6047 = vmatprep.subr.bf16.mxu0 0
  %6048 = vmatpush1.bf16.msra.mxu0 %v6036
  %6049 = vmatprep.subr.bf16.mxu0 0
  %6050 = vmatpush1.bf16.msra.mxu0 %v6037
  %6051 = vmatprep.subr.bf16.mxu0 0
  %6052 = vmatpush1.bf16.msra.mxu0 %v6038
  %6053 = vmatprep.subr.bf16.mxu0 0
  %6054 = vmatpush1.bf16.msra.mxu0 %v6039
  %6055 = vmatprep.subr.bf16.mxu0 0
  %6056 = vmatpush1.bf16.msra.mxu0 0
  %6057 = vmatprep.subr.bf16.mxu0 0
  %6058 = vmatpush1.bf16.msra.mxu0 0
  %6059 = vmatprep.subr.bf16.mxu0 0
  %6060 = vmatpush1.bf16.msra.mxu0 0
  %6061 = vmatprep.subr.bf16.mxu0 0
  %6062 = vmatpush1.bf16.msra.mxu0 0
  %6063 = vmatprep.subr.bf16.mxu0 0
  %6064 = vmatpush1.bf16.msra.mxu0 0
  %6065 = vmatprep.subr.bf16.mxu0 0
  %6066 = vmatpush1.bf16.msra.mxu0 0
  %6067 = vmatprep.subr.bf16.mxu0 0
  %6068 = vmatpush1.bf16.msra.mxu0 0
  %6069 = vmatprep.subr.bf16.mxu0 0
  %6070 = vmatpush1.bf16.msra.mxu0 0
  %6071 = vmatprep.subr.bf16.mxu0 0
  %6072 = vmatpush1.bf16.msra.mxu0 0
  %6073 = vmatprep.subr.bf16.mxu0 0
  %6074 = vmatpush1.bf16.msra.mxu0 0
  %6075 = vmatprep.subr.bf16.mxu0 0
  %6076 = vmatpush1.bf16.msra.mxu0 0
  %6077 = vmatprep.subr.bf16.mxu0 0
  %6078 = vmatpush1.bf16.msra.mxu0 0
  %6079 = vmatprep.mubr.bf16.mxu0 0
  %6080 = vmatmul.mubr.bf16.gmra.mrb[0].mxu0 %v6045
  %v6081 = vpop.f32.mrb[0].mxu0
  %v6082 = vadd.f32 0.0, %v6081
  %v6083 = vpop.f32.mrb[0].mxu0
  %v6084 = vpop.f32.mrb[0].mxu0
  %v6085 = vpop.f32.mrb[0].mxu0
  %6086 = vdwg.mxu0
  %v6087 = vadd.f32 %v6010, %v6082
  %v6088 = vld [vmem:[%s12 + $0x1c0] sm:$0xf]
  %v6089 = vld [vmem:[%s12 + $0x1c4] sm:$0xf]
  %v6090 = vld [vmem:[%s12 + $0x1c8] sm:$0xf]
  %v6091 = vld [vmem:[%s12 + $0x1cc] sm:$0xf]
  %v6092 = vld [vmem:[%s12 + $0x1d0] sm:$0xf]
  %v6093 = vld [vmem:[%s12 + $0x1d4] sm:$0xf]
  %v6094 = vld [vmem:[%s12 + $0x1d8] sm:$0xf]
  %v6095 = vld [vmem:[%s12 + $0x1dc] sm:$0xf]
  %v6096 = vrot.slane %v5010, 7
  %v6105 = vunpack.c.l.b16 %v6088
  %v6106 = vunpack.c.l.b16 %v6089
  %v6107 = vunpack.c.l.b16 %v6090
  %v6108 = vunpack.c.l.b16 %v6091
  %v6109 = vunpack.c.l.b16 %v6092
  %v6110 = vunpack.c.l.b16 %v6093
  %v6111 = vunpack.c.l.b16 %v6094
  %v6112 = vunpack.c.l.b16 %v6095
  %v6113 = vpack.c.b16 %v6106, %v6105
  %v6114 = vpack.c.b16 %v6108, %v6107
  %v6115 = vpack.c.b16 %v6110, %v6109
  %v6116 = vpack.c.b16 %v6112, %v6111
  %v6122 = vsel %vm274, %v6096, 0
  %6124 = vmatprep.subr.bf16.mxu0 0
  %6125 = vmatpush1.bf16.msra.mxu0 %v6113
  %6126 = vmatprep.subr.bf16.mxu0 0
  %6127 = vmatpush1.bf16.msra.mxu0 %v6114
  %6128 = vmatprep.subr.bf16.mxu0 0
  %6129 = vmatpush1.bf16.msra.mxu0 %v6115
  %6130 = vmatprep.subr.bf16.mxu0 0
  %6131 = vmatpush1.bf16.msra.mxu0 %v6116
  %6132 = vmatprep.subr.bf16.mxu0 0
  %6133 = vmatpush1.bf16.msra.mxu0 0
  %6134 = vmatprep.subr.bf16.mxu0 0
  %6135 = vmatpush1.bf16.msra.mxu0 0
  %6136 = vmatprep.subr.bf16.mxu0 0
  %6137 = vmatpush1.bf16.msra.mxu0 0
  %6138 = vmatprep.subr.bf16.mxu0 0
  %6139 = vmatpush1.bf16.msra.mxu0 0
  %6140 = vmatprep.subr.bf16.mxu0 0
  %6141 = vmatpush1.bf16.msra.mxu0 0
  %6142 = vmatprep.subr.bf16.mxu0 0
  %6143 = vmatpush1.bf16.msra.mxu0 0
  %6144 = vmatprep.subr.bf16.mxu0 0
  %6145 = vmatpush1.bf16.msra.mxu0 0
  %6146 = vmatprep.subr.bf16.mxu0 0
  %6147 = vmatpush1.bf16.msra.mxu0 0
  %6148 = vmatprep.subr.bf16.mxu0 0
  %6149 = vmatpush1.bf16.msra.mxu0 0
  %6150 = vmatprep.subr.bf16.mxu0 0
  %6151 = vmatpush1.bf16.msra.mxu0 0
  %6152 = vmatprep.subr.bf16.mxu0 0
  %6153 = vmatpush1.bf16.msra.mxu0 0
  %6154 = vmatprep.subr.bf16.mxu0 0
  %6155 = vmatpush1.bf16.msra.mxu0 0
  %6156 = vmatprep.mubr.bf16.mxu0 0
  %6157 = vmatmul.mubr.bf16.gmra.mrb[0].mxu0 %v6122
  %v6158 = vpop.f32.mrb[0].mxu0
  %v6159 = vadd.f32 0.0, %v6158
  %v6160 = vpop.f32.mrb[0].mxu0
  %v6161 = vpop.f32.mrb[0].mxu0
  %v6162 = vpop.f32.mrb[0].mxu0
  %6163 = vdwg.mxu0
  %v6164 = vadd.f32 %v6087, %v6159
  %v6165 = vld [vmem:[%s12 + $0x1e0] sm:$0xf]
  %v6166 = vld [vmem:[%s12 + $0x1e4] sm:$0xf]
  %v6167 = vld [vmem:[%s12 + $0x1e8] sm:$0xf]
  %v6168 = vld [vmem:[%s12 + $0x1ec] sm:$0xf]
  %v6169 = vld [vmem:[%s12 + $0x1f0] sm:$0xf]
  %v6170 = vld [vmem:[%s12 + $0x1f4] sm:$0xf]
  %v6171 = vld [vmem:[%s12 + $0x1f8] sm:$0xf]
  %v6172 = vld [vmem:[%s12 + $0x1fc] sm:$0xf]
  %v6173 = vrot.slane %v5028, 7
  %v6182 = vunpack.c.l.b16 %v6165
  %v6183 = vunpack.c.l.b16 %v6166
  %v6184 = vunpack.c.l.b16 %v6167
  %v6185 = vunpack.c.l.b16 %v6168
  %v6186 = vunpack.c.l.b16 %v6169
  %v6187 = vunpack.c.l.b16 %v6170
  %v6188 = vunpack.c.l.b16 %v6171
  %v6189 = vunpack.c.l.b16 %v6172
  %v6190 = vpack.c.b16 %v6183, %v6182
  %v6191 = vpack.c.b16 %v6185, %v6184
  %v6192 = vpack.c.b16 %v6187, %v6186
  %v6193 = vpack.c.b16 %v6189, %v6188
  %v6199 = vsel %vm274, %v6173, 0
  %6201 = vmatprep.subr.bf16.mxu0 0
  %6202 = vmatpush1.bf16.msra.mxu0 %v6190
  %6203 = vmatprep.subr.bf16.mxu0 0
  %6204 = vmatpush1.bf16.msra.mxu0 %v6191
  %6205 = vmatprep.subr.bf16.mxu0 0
  %6206 = vmatpush1.bf16.msra.mxu0 %v6192
  %6207 = vmatprep.subr.bf16.mxu0 0
  %6208 = vmatpush1.bf16.msra.mxu0 %v6193
  %6209 = vmatprep.subr.bf16.mxu0 0
  %6210 = vmatpush1.bf16.msra.mxu0 0
  %6211 = vmatprep.subr.bf16.mxu0 0
  %6212 = vmatpush1.bf16.msra.mxu0 0
  %6213 = vmatprep.subr.bf16.mxu0 0
  %6214 = vmatpush1.bf16.msra.mxu0 0
  %6215 = vmatprep.subr.bf16.mxu0 0
  %6216 = vmatpush1.bf16.msra.mxu0 0
  %6217 = vmatprep.subr.bf16.mxu0 0
  %6218 = vmatpush1.bf16.msra.mxu0 0
  %6219 = vmatprep.subr.bf16.mxu0 0
  %6220 = vmatpush1.bf16.msra.mxu0 0
  %6221 = vmatprep.subr.bf16.mxu0 0
  %6222 = vmatpush1.bf16.msra.mxu0 0
  %6223 = vmatprep.subr.bf16.mxu0 0
  %6224 = vmatpush1.bf16.msra.mxu0 0
  %6225 = vmatprep.subr.bf16.mxu0 0
  %6226 = vmatpush1.bf16.msra.mxu0 0
  %6227 = vmatprep.subr.bf16.mxu0 0
  %6228 = vmatpush1.bf16.msra.mxu0 0
  %6229 = vmatprep.subr.bf16.mxu0 0
  %6230 = vmatpush1.bf16.msra.mxu0 0
  %6231 = vmatprep.subr.bf16.mxu0 0
  %6232 = vmatpush1.bf16.msra.mxu0 0
  %6233 = vmatprep.mubr.bf16.mxu0 0
  %6234 = vmatmul.mubr.bf16.gmra.mrb[0].mxu0 %v6199
  %v6235 = vpop.f32.mrb[0].mxu0
  %v6236 = vadd.f32 0.0, %v6235
  %v6237 = vpop.f32.mrb[0].mxu0
  %v6238 = vpop.f32.mrb[0].mxu0
  %v6239 = vpop.f32.mrb[0].mxu0
  %6240 = vdwg.mxu0
  %v6241 = vadd.f32 %v6164, %v6236
  %v6242 = vld [vmem:[%s13] sm:$0x1]
  %v6243 = vadd.f32 %v6241, %v6242
  %v6244 = vmul.f32 %v6243, 0.01
  %v6245 = vmax.f32 %v6243, %v6244
  %v6246 = vpack.c.bf16 %v6245, %v6245
  %v6247 = vld [vmem:[%s1 + $0x1] sm:$0x1]
  %v6248 = vpack.c.bf16 %v6247, %v6247
  %v6249 = vld [vmem:[%s14] sm:$0xf]
  %v6250 = vld [vmem:[%s14 + $0x4] sm:$0xf]
  %v6251 = vld [vmem:[%s14 + $0x8] sm:$0xf]
  %v6252 = vld [vmem:[%s14 + $0xc] sm:$0xf]
  %v6253 = vld [vmem:[%s14 + $0x10] sm:$0xf]
  %v6254 = vld [vmem:[%s14 + $0x14] sm:$0xf]
  %v6255 = vld [vmem:[%s14 + $0x18] sm:$0xf]
  %v6256 = vld [vmem:[%s14 + $0x1c] sm:$0xf]
  %v6257 = vld [vmem:[%s14 + $0x20] sm:$0xf]
  %v6258 = vld [vmem:[%s14 + $0x24] sm:$0xf]
  %v6259 = vld [vmem:[%s14 + $0x28] sm:$0xf]
  %v6260 = vld [vmem:[%s14 + $0x2c] sm:$0xf]
  %v6261 = vld [vmem:[%s14 + $0x30] sm:$0xf]
  %v6262 = vld [vmem:[%s14 + $0x34] sm:$0xf]
  %v6263 = vld [vmem:[%s14 + $0x38] sm:$0xf]
  %v6264 = vld [vmem:[%s14 + $0x3c] sm:$0xf]
  %v6265 = vld [vmem:[%s15] sm:$0xf]
  %v6267 = vsel %vm2868, %v6248, 0
  %v6270 = vsel %vm2872, %v6265, 0
  %6272 = vmatprep.subr.bf16.mxu0 0
  %6273 = vmatpush1.bf16.msra.mxu0 %v6270
  %6274 = vmatprep.subr.bf16.mxu0 0
  %6275 = vmatpush1.bf16.msra.mxu0 0
  %6276 = vmatprep.subr.bf16.mxu0 0
  %6277 = vmatpush1.bf16.msra.mxu0 0
  %6278 = vmatprep.subr.bf16.mxu0 0
  %6279 = vmatpush1.bf16.msra.mxu0 0
  %6280 = vmatprep.subr.bf16.mxu0 0
  %6281 = vmatpush1.bf16.msra.mxu0 0
  %6282 = vmatprep.subr.bf16.mxu0 0
  %6283 = vmatpush1.bf16.msra.mxu0 0
  %6284 = vmatprep.subr.bf16.mxu0 0
  %6285 = vmatpush1.bf16.msra.mxu0 0
  %6286 = vmatprep.subr.bf16.mxu0 0
  %6287 = vmatpush1.bf16.msra.mxu0 0
  %6288 = vmatprep.subr.bf16.mxu0 0
  %6289 = vmatpush1.bf16.msra.mxu0 0
  %6290 = vmatprep.subr.bf16.mxu0 0
  %6291 = vmatpush1.bf16.msra.mxu0 0
  %6292 = vmatprep.subr.bf16.mxu0 0
  %6293 = vmatpush1.bf16.msra.mxu0 0
  %6294 = vmatprep.subr.bf16.mxu0 0
  %6295 = vmatpush1.bf16.msra.mxu0 0
  %6296 = vmatprep.subr.bf16.mxu0 0
  %6297 = vmatpush1.bf16.msra.mxu0 0
  %6298 = vmatprep.subr.bf16.mxu0 0
  %6299 = vmatpush1.bf16.msra.mxu0 0
  %6300 = vmatprep.subr.bf16.mxu0 0
  %6301 = vmatpush1.bf16.msra.mxu0 0
  %6302 = vmatprep.subr.bf16.mxu0 0
  %6303 = vmatpush1.bf16.msra.mxu0 0
  %6304 = vmatprep.mubr.bf16.mxu0 0
  %6305 = vmatmul.mubr.bf16.gmra.mrb[0].mxu0 %v6267
  %v6306 = vpop.f32.mrb[0].mxu0
  %v6307 = vadd.f32 0.0, %v6306
  %v6308 = vpop.f32.mrb[0].mxu0
  %v6309 = vpop.f32.mrb[0].mxu0
  %v6310 = vpop.f32.mrb[0].mxu0
  %6311 = vdwg.mxu0
  %v6328 = vunpack.c.l.b16 %v6249
  %v6329 = vunpack.c.l.b16 %v6250
  %v6330 = vunpack.c.l.b16 %v6251
  %v6331 = vunpack.c.l.b16 %v6252
  %v6332 = vunpack.c.l.b16 %v6253
  %v6333 = vunpack.c.l.b16 %v6254
  %v6334 = vunpack.c.l.b16 %v6255
  %v6335 = vunpack.c.l.b16 %v6256
  %v6336 = vunpack.c.l.b16 %v6257
  %v6337 = vunpack.c.l.b16 %v6258
  %v6338 = vunpack.c.l.b16 %v6259
  %v6339 = vunpack.c.l.b16 %v6260
  %v6340 = vunpack.c.l.b16 %v6261
  %v6341 = vunpack.c.l.b16 %v6262
  %v6342 = vunpack.c.l.b16 %v6263
  %v6343 = vunpack.c.l.b16 %v6264
  %v6344 = vpack.c.b16 %v6329, %v6328
  %v6345 = vpack.c.b16 %v6331, %v6330
  %v6346 = vpack.c.b16 %v6333, %v6332
  %v6347 = vpack.c.b16 %v6335, %v6334
  %v6348 = vpack.c.b16 %v6337, %v6336
  %v6349 = vpack.c.b16 %v6339, %v6338
  %v6350 = vpack.c.b16 %v6341, %v6340
  %v6351 = vpack.c.b16 %v6343, %v6342
  %6360 = vmatprep.subr.bf16.mxu0 0
  %6361 = vmatpush1.bf16.msra.mxu0 %v6344
  %6362 = vmatprep.subr.bf16.mxu0 0
  %6363 = vmatpush1.bf16.msra.mxu0 %v6345
  %6364 = vmatprep.subr.bf16.mxu0 0
  %6365 = vmatpush1.bf16.msra.mxu0 %v6346
  %6366 = vmatprep.subr.bf16.mxu0 0
  %6367 = vmatpush1.bf16.msra.mxu0 %v6347
  %6368 = vmatprep.subr.bf16.mxu0 0
  %6369 = vmatpush1.bf16.msra.mxu0 %v6348
  %6370 = vmatprep.subr.bf16.mxu0 0
  %6371 = vmatpush1.bf16.msra.mxu0 %v6349
  %6372 = vmatprep.subr.bf16.mxu0 0
  %6373 = vmatpush1.bf16.msra.mxu0 %v6350
  %6374 = vmatprep.subr.bf16.mxu0 0
  %6375 = vmatpush1.bf16.msra.mxu0 %v6351
  %6376 = vmatprep.subr.bf16.mxu0 0
  %6377 = vmatpush1.bf16.msra.mxu0 0
  %6378 = vmatprep.subr.bf16.mxu0 0
  %6379 = vmatpush1.bf16.msra.mxu0 0
  %6380 = vmatprep.subr.bf16.mxu0 0
  %6381 = vmatpush1.bf16.msra.mxu0 0
  %6382 = vmatprep.subr.bf16.mxu0 0
  %6383 = vmatpush1.bf16.msra.mxu0 0
  %6384 = vmatprep.subr.bf16.mxu0 0
  %6385 = vmatpush1.bf16.msra.mxu0 0
  %6386 = vmatprep.subr.bf16.mxu0 0
  %6387 = vmatpush1.bf16.msra.mxu0 0
  %6388 = vmatprep.subr.bf16.mxu0 0
  %6389 = vmatpush1.bf16.msra.mxu0 0
  %6390 = vmatprep.subr.bf16.mxu0 0
  %6391 = vmatpush1.bf16.msra.mxu0 0
  %6392 = vmatprep.mubr.bf16.mxu0 0
  %6393 = vmatmul.mubr.bf16.gmra.mrb[0].mxu0 %v6246
  %v6394 = vpop.f32.mrb[0].mxu0
  %v6395 = vadd.f32 %v6307, %v6394
  %v6396 = vpop.f32.mrb[0].mxu0
  %v6397 = vpop.f32.mrb[0].mxu0
  %v6398 = vpop.f32.mrb[0].mxu0
  %6399 = vdwg.mxu0
  %v6400 = vld [vmem:[%s17] sm:$0x1]
  %v6401 = vadd.f32 %v6395, %v6400
  %v6402 = vld [vmem:[%s2 + $0x4] sm:$0xf]
  %v6403 = vpack.c.bf16 %v6402, %v6402
  %v6404 = vld [vmem:[%s16] sm:$0xf]
  %v6405 = vlaneseq
  %v6406 = vshrl.u32 %v6405, 7
  %v6407 = vsub.s32 0, %v6406
  %v6408 = vrot.slane %v6401, %v6407
  %v6410 = vsel %vm2868, %v6403, 0
  %v6413 = vsel %vm2872, %v6404, 0
  %6415 = vmatprep.subr.bf16.mxu0 0
  %6416 = vmatpush1.bf16.msra.mxu0 %v6413
  %6417 = vmatprep.subr.bf16.mxu0 0
  %6418 = vmatpush1.bf16.msra.mxu0 0
  %6419 = vmatprep.subr.bf16.mxu0 0
  %6420 = vmatpush1.bf16.msra.mxu0 0
  %6421 = vmatprep.subr.bf16.mxu0 0
  %6422 = vmatpush1.bf16.msra.mxu0 0
  %6423 = vmatprep.subr.bf16.mxu0 0
  %6424 = vmatpush1.bf16.msra.mxu0 0
  %6425 = vmatprep.subr.bf16.mxu0 0
  %6426 = vmatpush1.bf16.msra.mxu0 0
  %6427 = vmatprep.subr.bf16.mxu0 0
  %6428 = vmatpush1.bf16.msra.mxu0 0
  %6429 = vmatprep.subr.bf16.mxu0 0
  %6430 = vmatpush1.bf16.msra.mxu0 0
  %6431 = vmatprep.subr.bf16.mxu0 0
  %6432 = vmatpush1.bf16.msra.mxu0 0
  %6433 = vmatprep.subr.bf16.mxu0 0
  %6434 = vmatpush1.bf16.msra.mxu0 0
  %6435 = vmatprep.subr.bf16.mxu0 0
  %6436 = vmatpush1.bf16.msra.mxu0 0
  %6437 = vmatprep.subr.bf16.mxu0 0
  %6438 = vmatpush1.bf16.msra.mxu0 0
  %6439 = vmatprep.subr.bf16.mxu0 0
  %6440 = vmatpush1.bf16.msra.mxu0 0
  %6441 = vmatprep.subr.bf16.mxu0 0
  %6442 = vmatpush1.bf16.msra.mxu0 0
  %6443 = vmatprep.subr.bf16.mxu0 0
  %6444 = vmatpush1.bf16.msra.mxu0 0
  %6445 = vmatprep.subr.bf16.mxu0 0
  %6446 = vmatpush1.bf16.msra.mxu0 0
  %6447 = vmatprep.mubr.bf16.mxu0 0
  %6448 = vmatmul.mubr.bf16.gmra.mrb[0].mxu0 %v6410
  %v6449 = vpop.f32.mrb[0].mxu0
  %v6450 = vadd.f32 %v6408, %v6449
  %v6451 = vpop.f32.mrb[0].mxu0
  %v6452 = vpop.f32.mrb[0].mxu0
  %v6453 = vpop.f32.mrb[0].mxu0
  %6454 = vdwg.mxu0
  %v6455 = vmul.f32 %v6450, 0.01
  %v6456 = vmax.f32 %v6450, %v6455
  %v6457 = vpack.c.bf16 %v6456, %v6456
  %v6458 = vld [vmem:[%s18] sm:$0xf]
  %v6459 = vld [vmem:[%s18 + $0x4] sm:$0xf]
  %v6460 = vld [vmem:[%s18 + $0x8] sm:$0xf]
  %v6461 = vld [vmem:[%s18 + $0xc] sm:$0xf]
  %v6462 = vld [vmem:[%s18 + $0x10] sm:$0xf]
  %v6463 = vld [vmem:[%s18 + $0x14] sm:$0xf]
  %v6464 = vld [vmem:[%s18 + $0x18] sm:$0xf]
  %v6465 = vld [vmem:[%s18 + $0x1c] sm:$0xf]
  %v6466 = vld [vmem:[%s18 + $0x20] sm:$0xf]
  %v6467 = vld [vmem:[%s18 + $0x24] sm:$0xf]
  %v6468 = vld [vmem:[%s18 + $0x28] sm:$0xf]
  %v6469 = vld [vmem:[%s18 + $0x2c] sm:$0xf]
  %v6470 = vld [vmem:[%s18 + $0x30] sm:$0xf]
  %v6471 = vld [vmem:[%s18 + $0x34] sm:$0xf]
  %v6472 = vld [vmem:[%s18 + $0x38] sm:$0xf]
  %v6473 = vld [vmem:[%s18 + $0x3c] sm:$0xf]
  %v6474 = vld [vmem:[%s19] sm:$0x1]
  %v6476 = vlaneseq
  %v6477 = vshrl.u32 %v6476, 7
  %v6478 = vsub.s32 0, %v6477
  %v6479 = vrot.slane %v6474, %v6478
  %v6497 = vunpack.c.l.b16 %v6458
  %v6498 = vunpack.c.l.b16 %v6459
  %v6499 = vunpack.c.l.b16 %v6460
  %v6500 = vunpack.c.l.b16 %v6461
  %v6501 = vunpack.c.l.b16 %v6462
  %v6502 = vunpack.c.l.b16 %v6463
  %v6503 = vunpack.c.l.b16 %v6464
  %v6504 = vunpack.c.l.b16 %v6465
  %v6505 = vunpack.c.l.b16 %v6466
  %v6506 = vunpack.c.l.b16 %v6467
  %v6507 = vunpack.c.l.b16 %v6468
  %v6508 = vunpack.c.l.b16 %v6469
  %v6509 = vunpack.c.l.b16 %v6470
  %v6510 = vunpack.c.l.b16 %v6471
  %v6511 = vunpack.c.l.b16 %v6472
  %v6512 = vunpack.c.l.b16 %v6473
  %v6513 = vpack.c.b16 %v6498, %v6497
  %v6514 = vpack.c.b16 %v6500, %v6499
  %v6515 = vpack.c.b16 %v6502, %v6501
  %v6516 = vpack.c.b16 %v6504, %v6503
  %v6517 = vpack.c.b16 %v6506, %v6505
  %v6518 = vpack.c.b16 %v6508, %v6507
  %v6519 = vpack.c.b16 %v6510, %v6509
  %v6520 = vpack.c.b16 %v6512, %v6511
  %6529 = vmatprep.subr.bf16.mxu0 0
  %6530 = vmatpush1.bf16.msra.mxu0 %v6513
  %6531 = vmatprep.subr.bf16.mxu0 0
  %6532 = vmatpush1.bf16.msra.mxu0 %v6514
  %6533 = vmatprep.subr.bf16.mxu0 0
  %6534 = vmatpush1.bf16.msra.mxu0 %v6515
  %6535 = vmatprep.subr.bf16.mxu0 0
  %6536 = vmatpush1.bf16.msra.mxu0 %v6516
  %6537 = vmatprep.subr.bf16.mxu0 0
  %6538 = vmatpush1.bf16.msra.mxu0 %v6517
  %6539 = vmatprep.subr.bf16.mxu0 0
  %6540 = vmatpush1.bf16.msra.mxu0 %v6518
  %6541 = vmatprep.subr.bf16.mxu0 0
  %6542 = vmatpush1.bf16.msra.mxu0 %v6519
  %6543 = vmatprep.subr.bf16.mxu0 0
  %6544 = vmatpush1.bf16.msra.mxu0 %v6520
  %6545 = vmatprep.subr.bf16.mxu0 0
  %6546 = vmatpush1.bf16.msra.mxu0 0
  %6547 = vmatprep.subr.bf16.mxu0 0
  %6548 = vmatpush1.bf16.msra.mxu0 0
  %6549 = vmatprep.subr.bf16.mxu0 0
  %6550 = vmatpush1.bf16.msra.mxu0 0
  %6551 = vmatprep.subr.bf16.mxu0 0
  %6552 = vmatpush1.bf16.msra.mxu0 0
  %6553 = vmatprep.subr.bf16.mxu0 0
  %6554 = vmatpush1.bf16.msra.mxu0 0
  %6555 = vmatprep.subr.bf16.mxu0 0
  %6556 = vmatpush1.bf16.msra.mxu0 0
  %6557 = vmatprep.subr.bf16.mxu0 0
  %6558 = vmatpush1.bf16.msra.mxu0 0
  %6559 = vmatprep.subr.bf16.mxu0 0
  %6560 = vmatpush1.bf16.msra.mxu0 0
  %6561 = vmatprep.mubr.bf16.mxu0 0
  %6562 = vmatmul.mubr.bf16.gmra.mrb[0].mxu0 %v6457
  %v6563 = vpop.f32.mrb[0].mxu0
  %v6564 = vadd.f32 %v6479, %v6563
  %v6565 = vpop.f32.mrb[0].mxu0
  %v6566 = vpop.f32.mrb[0].mxu0
  %v6567 = vpop.f32.mrb[0].mxu0
  %6568 = vdwg.mxu0
  %v6569 = vmul.f32 %v6564, 0.01
  %v6570 = vmax.f32 %v6564, %v6569
  %v6571 = vpack.c.bf16 %v6570, %v6570
  %v6572 = vld [vmem:[%s20] sm:$0xf]
  %v6573 = vld [vmem:[%s20 + $0x4] sm:$0xf]
  %v6574 = vld [vmem:[%s20 + $0x8] sm:$0xf]
  %v6575 = vld [vmem:[%s20 + $0xc] sm:$0xf]
  %v6576 = vld [vmem:[%s20 + $0x10] sm:$0xf]
  %v6577 = vld [vmem:[%s20 + $0x14] sm:$0xf]
  %v6578 = vld [vmem:[%s20 + $0x18] sm:$0xf]
  %v6579 = vld [vmem:[%s20 + $0x1c] sm:$0xf]
  %v6580 = vld [vmem:[%s20 + $0x20] sm:$0xf]
  %v6581 = vld [vmem:[%s20 + $0x24] sm:$0xf]
  %v6582 = vld [vmem:[%s20 + $0x28] sm:$0xf]
  %v6583 = vld [vmem:[%s20 + $0x2c] sm:$0xf]
  %v6584 = vld [vmem:[%s20 + $0x30] sm:$0xf]
  %v6585 = vld [vmem:[%s20 + $0x34] sm:$0xf]
  %v6586 = vld [vmem:[%s20 + $0x38] sm:$0xf]
  %v6587 = vld [vmem:[%s20 + $0x3c] sm:$0xf]
  %v6588 = vld [vmem:[%s21] sm:$0x1]
  %v6590 = vlaneseq
  %v6591 = vshrl.u32 %v6590, 7
  %v6592 = vsub.s32 0, %v6591
  %v6593 = vrot.slane %v6588, %v6592
  %v6611 = vunpack.c.l.b16 %v6572
  %v6612 = vunpack.c.l.b16 %v6573
  %v6613 = vunpack.c.l.b16 %v6574
  %v6614 = vunpack.c.l.b16 %v6575
  %v6615 = vunpack.c.l.b16 %v6576
  %v6616 = vunpack.c.l.b16 %v6577
  %v6617 = vunpack.c.l.b16 %v6578
  %v6618 = vunpack.c.l.b16 %v6579
  %v6619 = vunpack.c.l.b16 %v6580
  %v6620 = vunpack.c.l.b16 %v6581
  %v6621 = vunpack.c.l.b16 %v6582
  %v6622 = vunpack.c.l.b16 %v6583
  %v6623 = vunpack.c.l.b16 %v6584
  %v6624 = vunpack.c.l.b16 %v6585
  %v6625 = vunpack.c.l.b16 %v6586
  %v6626 = vunpack.c.l.b16 %v6587
  %v6627 = vpack.c.b16 %v6612, %v6611
  %v6628 = vpack.c.b16 %v6614, %v6613
  %v6629 = vpack.c.b16 %v6616, %v6615
  %v6630 = vpack.c.b16 %v6618, %v6617
  %v6631 = vpack.c.b16 %v6620, %v6619
  %v6632 = vpack.c.b16 %v6622, %v6621
  %v6633 = vpack.c.b16 %v6624, %v6623
  %v6634 = vpack.c.b16 %v6626, %v6625
  %6643 = vmatprep.subr.bf16.mxu0 0
  %6644 = vmatpush1.bf16.msra.mxu0 %v6627
  %6645 = vmatprep.subr.bf16.mxu0 0
  %6646 = vmatpush1.bf16.msra.mxu0 %v6628
  %6647 = vmatprep.subr.bf16.mxu0 0
  %6648 = vmatpush1.bf16.msra.mxu0 %v6629
  %6649 = vmatprep.subr.bf16.mxu0 0
  %6650 = vmatpush1.bf16.msra.mxu0 %v6630
  %6651 = vmatprep.subr.bf16.mxu0 0
  %6652 = vmatpush1.bf16.msra.mxu0 %v6631
  %6653 = vmatprep.subr.bf16.mxu0 0
  %6654 = vmatpush1.bf16.msra.mxu0 %v6632
  %6655 = vmatprep.subr.bf16.mxu0 0
  %6656 = vmatpush1.bf16.msra.mxu0 %v6633
  %6657 = vmatprep.subr.bf16.mxu0 0
  %6658 = vmatpush1.bf16.msra.mxu0 %v6634
  %6659 = vmatprep.subr.bf16.mxu0 0
  %6660 = vmatpush1.bf16.msra.mxu0 0
  %6661 = vmatprep.subr.bf16.mxu0 0
  %6662 = vmatpush1.bf16.msra.mxu0 0
  %6663 = vmatprep.subr.bf16.mxu0 0
  %6664 = vmatpush1.bf16.msra.mxu0 0
  %6665 = vmatprep.subr.bf16.mxu0 0
  %6666 = vmatpush1.bf16.msra.mxu0 0
  %6667 = vmatprep.subr.bf16.mxu0 0
  %6668 = vmatpush1.bf16.msra.mxu0 0
  %6669 = vmatprep.subr.bf16.mxu0 0
  %6670 = vmatpush1.bf16.msra.mxu0 0
  %6671 = vmatprep.subr.bf16.mxu0 0
  %6672 = vmatpush1.bf16.msra.mxu0 0
  %6673 = vmatprep.subr.bf16.mxu0 0
  %6674 = vmatpush1.bf16.msra.mxu0 0
  %6675 = vmatprep.mubr.bf16.mxu0 0
  %6676 = vmatmul.mubr.bf16.gmra.mrb[0].mxu0 %v6571
  %v6677 = vpop.f32.mrb[0].mxu0
  %v6678 = vadd.f32 %v6593, %v6677
  %v6679 = vpop.f32.mrb[0].mxu0
  %v6680 = vpop.f32.mrb[0].mxu0
  %v6681 = vpop.f32.mrb[0].mxu0
  %6682 = vdwg.mxu0
  %v6683 = vmul.f32 %v6678, 0.01
  %v6684 = vmax.f32 %v6678, %v6683
  %v6685 = vpack.c.bf16 %v6684, %v6684
  %v6686 = vld [vmem:[%s22] sm:$0xff]
  %v6687 = vld [vmem:[%s22 + $0x8] sm:$0xff]
  %v6688 = vld [vmem:[%s22 + $0x10] sm:$0xff]
  %v6689 = vld [vmem:[%s22 + $0x18] sm:$0xff]
  %v6690 = vld [vmem:[%s22 + $0x20] sm:$0xff]
  %v6691 = vld [vmem:[%s22 + $0x28] sm:$0xff]
  %v6692 = vld [vmem:[%s22 + $0x30] sm:$0xff]
  %v6693 = vld [vmem:[%s22 + $0x38] sm:$0xff]
  %v6694 = vld [vmem:[%s22 + $0x40] sm:$0xff]
  %v6695 = vld [vmem:[%s22 + $0x48] sm:$0xff]
  %v6696 = vld [vmem:[%s22 + $0x50] sm:$0xff]
  %v6697 = vld [vmem:[%s22 + $0x58] sm:$0xff]
  %v6698 = vld [vmem:[%s22 + $0x60] sm:$0xff]
  %v6699 = vld [vmem:[%s22 + $0x68] sm:$0xff]
  %v6700 = vld [vmem:[%s22 + $0x70] sm:$0xff]
  %v6701 = vld [vmem:[%s22 + $0x78] sm:$0xff]
  %v6702 = vld [vmem:[%s23] sm:$0x3]
  %v6704 = vlaneseq
  %v6705 = vshrl.u32 %v6704, 7
  %v6706 = vsub.s32 0, %v6705
  %v6707 = vrot.slane %v6702, %v6706
  %v6708 = vlaneseq
  %v6709 = vshrl.u32 %v6708, 7
  %v6710 = vsub.s32 1, %v6709
  %v6711 = vrot.slane %v6702, %v6710
  %v6730 = vunpack.c.l.b16 %v6686
  %v6731 = vunpack.c.h.b16 %v6686
  %v6732 = vunpack.c.l.b16 %v6687
  %v6733 = vunpack.c.h.b16 %v6687
  %v6734 = vunpack.c.l.b16 %v6688
  %v6735 = vunpack.c.h.b16 %v6688
  %v6736 = vunpack.c.l.b16 %v6689
  %v6737 = vunpack.c.h.b16 %v6689
  %v6738 = vunpack.c.l.b16 %v6690
  %v6739 = vunpack.c.h.b16 %v6690
  %v6740 = vunpack.c.l.b16 %v6691
  %v6741 = vunpack.c.h.b16 %v6691
  %v6742 = vunpack.c.l.b16 %v6692
  %v6743 = vunpack.c.h.b16 %v6692
  %v6744 = vunpack.c.l.b16 %v6693
  %v6745 = vunpack.c.h.b16 %v6693
  %v6746 = vunpack.c.l.b16 %v6694
  %v6747 = vunpack.c.h.b16 %v6694
  %v6748 = vunpack.c.l.b16 %v6695
  %v6749 = vunpack.c.h.b16 %v6695
  %v6750 = vunpack.c.l.b16 %v6696
  %v6751 = vunpack.c.h.b16 %v6696
  %v6752 = vunpack.c.l.b16 %v6697
  %v6753 = vunpack.c.h.b16 %v6697
  %v6754 = vunpack.c.l.b16 %v6698
  %v6755 = vunpack.c.h.b16 %v6698
  %v6756 = vunpack.c.l.b16 %v6699
  %v6757 = vunpack.c.h.b16 %v6699
  %v6758 = vunpack.c.l.b16 %v6700
  %v6759 = vunpack.c.h.b16 %v6700
  %v6760 = vunpack.c.l.b16 %v6701
  %v6761 = vunpack.c.h.b16 %v6701
  %v6762 = vpack.c.b16 %v6732, %v6730
  %v6763 = vpack.c.b16 %v6733, %v6731
  %v6764 = vpack.c.b16 %v6736, %v6734
  %v6765 = vpack.c.b16 %v6737, %v6735
  %v6766 = vpack.c.b16 %v6740, %v6738
  %v6767 = vpack.c.b16 %v6741, %v6739
  %v6768 = vpack.c.b16 %v6744, %v6742
  %v6769 = vpack.c.b16 %v6745, %v6743
  %v6770 = vpack.c.b16 %v6748, %v6746
  %v6771 = vpack.c.b16 %v6749, %v6747
  %v6772 = vpack.c.b16 %v6752, %v6750
  %v6773 = vpack.c.b16 %v6753, %v6751
  %v6774 = vpack.c.b16 %v6756, %v6754
  %v6775 = vpack.c.b16 %v6757, %v6755
  %v6776 = vpack.c.b16 %v6760, %v6758
  %v6777 = vpack.c.b16 %v6761, %v6759
  %6794 = vmatprep.subr.bf16.mxu0 %v6763
  %6795 = vmatpush1.bf16.msra.mxu0 %v6762
  %6796 = vmatprep.subr.bf16.mxu0 %v6765
  %6797 = vmatpush1.bf16.msra.mxu0 %v6764
  %6798 = vmatprep.subr.bf16.mxu0 %v6767
  %6799 = vmatpush1.bf16.msra.mxu0 %v6766
  %6800 = vmatprep.subr.bf16.mxu0 %v6769
  %6801 = vmatpush1.bf16.msra.mxu0 %v6768
  %6802 = vmatprep.subr.bf16.mxu0 %v6771
  %6803 = vmatpush1.bf16.msra.mxu0 %v6770
  %6804 = vmatprep.subr.bf16.mxu0 %v6773
  %6805 = vmatpush1.bf16.msra.mxu0 %v6772
  %6806 = vmatprep.subr.bf16.mxu0 %v6775
  %6807 = vmatpush1.bf16.msra.mxu0 %v6774
  %6808 = vmatprep.subr.bf16.mxu0 %v6777
  %6809 = vmatpush1.bf16.msra.mxu0 %v6776
  %6810 = vmatprep.subr.bf16.mxu0 0
  %6811 = vmatpush1.bf16.msra.mxu0 0
  %6812 = vmatprep.subr.bf16.mxu0 0
  %6813 = vmatpush1.bf16.msra.mxu0 0
  %6814 = vmatprep.subr.bf16.mxu0 0
  %6815 = vmatpush1.bf16.msra.mxu0 0
  %6816 = vmatprep.subr.bf16.mxu0 0
  %6817 = vmatpush1.bf16.msra.mxu0 0
  %6818 = vmatprep.subr.bf16.mxu0 0
  %6819 = vmatpush1.bf16.msra.mxu0 0
  %6820 = vmatprep.subr.bf16.mxu0 0
  %6821 = vmatpush1.bf16.msra.mxu0 0
  %6822 = vmatprep.subr.bf16.mxu0 0
  %6823 = vmatpush1.bf16.msra.mxu0 0
  %6824 = vmatprep.subr.bf16.mxu0 0
  %6825 = vmatpush1.bf16.msra.mxu0 0
  %6826 = vmatprep.mubr.bf16.mxu0 0
  %6827 = vmatmul.mubr.bf16.gmra.mrb[0].mxu0 %v6685
  %v6828 = vpop.f32.mrb[0].mxu0
  %v6829 = vadd.f32 %v6707, %v6828
  %v6830 = vpop.f32.mrb[0].mxu0
  %v6831 = vadd.f32 %v6711, %v6830
  %v6832 = vpop.f32.mrb[0].mxu0
  %v6833 = vpop.f32.mrb[0].mxu0
  %6834 = vdwg.mxu0
  %v6835 = vmul.f32 %v6829, 0.01
  %v6836 = vmul.f32 %v6831, 0.01
  %v6837 = vmax.f32 %v6829, %v6835
  %v6838 = vmax.f32 %v6831, %v6836
  %v6839 = vld [vmem:[%s24] sm:$0x3]
  %v6840 = vunpack.c.l.bf16 %v6839
  %v6842 = vlaneseq
  %v6843 = vshrl.u32 %v6842, 7
  %v6844 = vsub.s32 0, %v6843
  %v6845 = vrot.slane %v6840, %v6844
  %v6846 = vlaneseq
  %v6847 = vshrl.u32 %v6846, 7
  %v6848 = vsub.s32 2, %v6847
  %v6849 = vrot.slane %v6840, %v6848
  %v6852 = vlaneseq
  %v6853 = vshrl.u32 %v6852, 7
  %v6854 = vsub.s32 0, %v6853
  %v6855 = vrot.slane %v6845, %v6854
  %v6856 = vlaneseq
  %v6857 = vshrl.u32 %v6856, 7
  %v6858 = vsub.s32 0, %v6857
  %v6859 = vrot.slane %v6849, %v6858
  %v6860 = vmul.f32 %v6837, %v6855
  %v6861 = vmul.f32 %v6838, %v6859
  %v6862 = vsel %vm2872, %v6860, 0.0
  %v6863 = vsel %vm2872, %v6861, 0.0
  %v6864 = vadd.f32 %v6862, %v6863
  %6865 = vadd.xlane.f32.xlu0 %v6864
  %v6866 = vpop.xlane.xlu0 %6865
  %v6867 = vld [vmem:[#allocation2] sm:$0x1]
  %v6869 = vlaneseq
  %v6870 = vshrl.u32 %v6869, 7
  %v6871 = vsub.s32 0, %v6870
  %v6872 = vrot.slane %v6867, %v6871
  %v6874 = vadd.f32 %v6866, %v6872
  %v6875 = vmax.f32 %v6874, -30.0
  %v6876 = vmin.f32 %v6875, 30.0
  %v6877 = vsub.f32 0.0, %v6876
  %v6878 = vmul.f32 %v6877, 1.442695
  %v6879 = vpow.pop %v6878
  %v6880 = vadd.f32 %v6879, 1.0
  %v6881 = vrcp.pop %v6880
  %6882 = vst.msk [vmem:[%s26 + $0x4] sm:$0xf] %vm3486, %v6881
  // Predicated region
  $region106: #{col_checker_forward.1} parent=0 // pred_check
    _
  $region107: #{col_checker_forward.1} parent=0 // pred_check_branch
    %6884 = sbr.rel (0) target = $region109
  $region108: #{col_checker_forward.1} parent=0 // pred_region
    _
  $region109: #{col_checker_forward.1} parent=0 // pred_fallthru
    _
  // Predicated region
  $region110: #{col_checker_forward.1} parent=0 // pred_check
    _
  $region111: #{col_checker_forward.1} parent=0 // pred_check_branch
    %6886 = sbr.rel (0) target = $region113
  $region112: #{col_checker_forward.1} parent=0 // pred_region
    _
  $region113: #{col_checker_forward.1} parent=0 // pred_fallthru
    _

</llo_original>
